<compile_context>
chip_gen: v7x
topology: tpu7x:2x2x1
jax: 0.10.0
libtpu: 0.0.40
codegen_flags: <defaults>
</compile_context>

<pallas_src>
import jax
import jax.numpy as jnp
from jax.experimental import pallas as pl
from jax.experimental.pallas import tpu as pltpu

NEG_SLOPE = 0.01   # nn.LeakyReLU default
BN_EPS = 1e-5      # nn.BatchNorm2d default


def _vmem():
    return pl.BlockSpec(memory_space=pltpu.MemorySpace.VMEM)


_CPARAMS = pltpu.CompilerParams(vmem_limit_bytes=32 * 1024 * 1024)


# ----------------------------- Pallas kernels -----------------------------

def make_conv_bn_lrelu_kernel(num_phases, num_rows):
    """Matmul (im2col conv or 4-phase convT) + training-mode BN + LeakyReLU.

    The matmul output columns are grouped [phase0 | phase1 | ...], each `oc`
    wide. BN stats for a channel are accumulated across all phases, i.e. over
    every output spatial position, matching BatchNorm2d on the interleaved
    feature map exactly. The conv bias is omitted: a per-channel bias added
    before batch-mean subtraction cancels bit-exactly.
    """
    def kernel(p_ref, w_ref, g_ref, beta_ref, o_ref):
        # bf16 x bf16 -> f32 accumulation on the MXU
        y = jnp.dot(p_ref[...], w_ref[...], preferred_element_type=jnp.float32)
        oc = y.shape[1] // num_phases
        # single-pass stats: sum and sum of squares (f32)
        s = jnp.sum(y, axis=0, keepdims=True)          # [1, phases*oc]
        ss = jnp.sum(y * y, axis=0, keepdims=True)
        if num_phases > 1:
            s = sum(s[:, i * oc:(i + 1) * oc] for i in range(num_phases))
            ss = sum(ss[:, i * oc:(i + 1) * oc] for i in range(num_phases))
        count = float(num_rows * num_phases)
        mean = s / count
        var = ss / count - mean * mean                 # biased var (PyTorch fwd)
        inv = jax.lax.rsqrt(var + BN_EPS)
        scale = g_ref[...] * inv                       # [1, oc]
        shift = beta_ref[...] - mean * scale
        if num_phases > 1:
            scale = jnp.concatenate([scale] * num_phases, axis=1)
            shift = jnp.concatenate([shift] * num_phases, axis=1)
        yn = y * scale + shift
        out = jnp.where(yn >= 0, yn, NEG_SLOPE * yn)
        o_ref[...] = out.astype(o_ref.dtype)
    return kernel


def latent_kernel(flat_ref, wmv_ref, bmv_ref, eps_ref, wdec_ref, bdec_ref,
                  mu_ref, lv_ref, d_ref):
    """fc_mu & fc_var (one concatenated matmul) + reparameterize + decoder_input."""
    mv = jnp.dot(flat_ref[...], wmv_ref[...],
                 preferred_element_type=jnp.float32) + bmv_ref[...]
    latent = mu_ref.shape[1]
    mu = mv[:, :latent]
    lv = mv[:, latent:]
    mu_ref[...] = mu
    lv_ref[...] = lv
    z = eps_ref[...] * jnp.exp(0.5 * lv) + mu          # reparameterize
    d = jnp.dot(z.astype(jnp.bfloat16), wdec_ref[...],
                preferred_element_type=jnp.float32) + bdec_ref[...]
    d_ref[...] = d.astype(d_ref.dtype)


def conv_tanh_kernel(p_ref, w_ref, b_ref, o_ref):
    y = jnp.dot(p_ref[...], w_ref[...], preferred_element_type=jnp.float32)
    o_ref[...] = jnp.tanh(y + b_ref[...])


# ----------------------------- JAX glue (layout) -----------------------------

def im2col(x_nhwc, kh, kw, stride, pad):
    """3x3 patches -> [N*OH*OW, kh*kw*C] (tap-major, channels-last)."""
    n, h, w, c = x_nhwc.shape
    xp = jnp.pad(x_nhwc, ((0, 0), (pad, pad), (pad, pad), (0, 0)))
    oh = (h + 2 * pad - kh) // stride + 1
    ow = (w + 2 * pad - kw) // stride + 1
    cols = []
    for i in range(kh):
        for j in range(kw):
            cols.append(xp[:, i:i + stride * oh:stride, j:j + stride * ow:stride, :])
    patches = jnp.concatenate(cols, axis=-1)
    return patches.reshape(n * oh * ow, kh * kw * c), oh, ow


def conv_weight_to_mat(w_oihw):
    """PyTorch Conv2d weight [OC, IC, KH, KW] -> matmul matrix [KH*KW*IC, OC]."""
    oc, ic, kh, kw = w_oihw.shape
    return w_oihw.transpose(2, 3, 1, 0).reshape(kh * kw * ic, oc)


def convt_patches(x_nhwc):
    """4 shifted taps {x[m,n], x[m,n+1], x[m+1,n], x[m+1,n+1]} -> [N*H*W, 4*IC]."""
    n, h, w, c = x_nhwc.shape
    xp = jnp.pad(x_nhwc, ((0, 0), (0, 1), (0, 1), (0, 0)))
    taps = [xp[:, :h, :w, :], xp[:, :h, 1:, :], xp[:, 1:, :w, :], xp[:, 1:, 1:, :]]
    return jnp.concatenate(taps, axis=-1).reshape(n * h * w, 4 * c)


def convt_weight_4phase(wt_iohw):
    """ConvTranspose2d(k3,s2,p1,op1) weight [IC,OC,3,3] -> [4*IC, 4*OC].

    Output column groups are phases (row, col parity): [ee | eo | oe | oo].
    Row groups are the 4 input taps in the order produced by convt_patches.
    """
    ic, oc = wt_iohw.shape[0], wt_iohw.shape[1]
    z = jnp.zeros((ic, oc), wt_iohw.dtype)
    W = lambda kh, kw: wt_iohw[:, :, kh, kw]
    rows = [
        jnp.concatenate([W(1, 1), W(1, 2), W(2, 1), W(2, 2)], axis=1),  # tap (m,   n)
        jnp.concatenate([z,       W(1, 0), z,       W(2, 0)], axis=1),  # tap (m,   n+1)
        jnp.concatenate([z,       z,       W(0, 1), W(0, 2)], axis=1),  # tap (m+1, n)
        jnp.concatenate([z,       z,       z,       W(0, 0)], axis=1),  # tap (m+1, n+1)
    ]
    return jnp.concatenate(rows, axis=0)


# ----------------------------- fused layer wrappers -----------------------------

def _conv_bn_lrelu_call(patches, wmat, gamma, beta, num_phases):
    m = patches.shape[0]
    return pl.pallas_call(
        make_conv_bn_lrelu_kernel(num_phases, m),
        out_shape=jax.ShapeDtypeStruct((m, wmat.shape[1]), jnp.bfloat16),
        in_specs=[_vmem()] * 4,
        out_specs=_vmem(),
        compiler_params=_CPARAMS,
    )(patches.astype(jnp.bfloat16), wmat.astype(jnp.bfloat16),
      gamma.reshape(1, -1).astype(jnp.float32),
      beta.reshape(1, -1).astype(jnp.float32))


def conv_bn_lrelu(x_nhwc, w_oihw, gamma, beta, stride, pad):
    n = x_nhwc.shape[0]
    patches, oh, ow = im2col(x_nhwc, 3, 3, stride, pad)
    out = _conv_bn_lrelu_call(patches, conv_weight_to_mat(w_oihw),
                              gamma, beta, num_phases=1)
    return out.reshape(n, oh, ow, -1)


def convt_bn_lrelu(x_nhwc, wt_iohw, gamma, beta):
    """ConvTranspose2d(k3,s2,p1,op1) + BN + LeakyReLU via 4-phase decomposition."""
    n, h, w, _ = x_nhwc.shape
    oc = wt_iohw.shape[1]
    out = _conv_bn_lrelu_call(convt_patches(x_nhwc), convt_weight_4phase(wt_iohw),
                              gamma, beta, num_phases=4)
    # interleave the 4 phases: [N, H, W, (rp, cp), OC] -> [N, 2H, 2W, OC]
    out = out.reshape(n, h, w, 2, 2, oc).transpose(0, 1, 3, 2, 4, 5)
    return out.reshape(n, 2 * h, 2 * w, oc)


def conv_tanh(x_nhwc, w_oihw, b):
    n = x_nhwc.shape[0]
    patches, oh, ow = im2col(x_nhwc, 3, 3, 1, 1)
    wm = conv_weight_to_mat(w_oihw)
    # TODO(synk): OC=1 makes this a lane-sparse [M, 1] store; a lane-dense
    # restructure (emit [N*28, 28] rows) is left for a follow-up.
    out = pl.pallas_call(
        conv_tanh_kernel,
        out_shape=jax.ShapeDtypeStruct((n * oh * ow, wm.shape[1]), jnp.float32),
        in_specs=[_vmem()] * 3,
        out_specs=_vmem(),
        compiler_params=_CPARAMS,
    )(patches.astype(jnp.bfloat16), wm.astype(jnp.bfloat16),
      b.reshape(1, -1).astype(jnp.float32))
    return out.reshape(n, oh, ow, -1)


def latent_and_decoder_input(flat_hwc, params, eps):
    """Fused fc_mu + fc_var + reparameterize + decoder_input (one pallas_call)."""
    n = flat_hwc.shape[0]
    latent_dim = params["fc_mu_w"].shape[1]
    feat = params["fc_mu_w"].shape[0]           # hidden_dims[-1] * 49
    c = feat // 49

    def rows_chw_to_hwc(w):                     # torch flatten is (C,H,W)-ordered
        return w.reshape(c, 7, 7, -1).transpose(1, 2, 0, 3).reshape(feat, -1)

    wmv = jnp.concatenate([rows_chw_to_hwc(params["fc_mu_w"]),
                           rows_chw_to_hwc(params["fc_var_w"])], axis=1)
    bmv = jnp.concatenate([params["fc_mu_b"], params["fc_var_b"]])
    wdec = (params["dec_in_w"].reshape(latent_dim, c, 7, 7)
            .transpose(0, 2, 3, 1).reshape(latent_dim, feat))
    bdec = params["dec_in_b"].reshape(c, 7, 7).transpose(1, 2, 0).reshape(feat)

    mu, log_var, d = pl.pallas_call(
        latent_kernel,
        out_shape=(jax.ShapeDtypeStruct((n, latent_dim), jnp.float32),
                   jax.ShapeDtypeStruct((n, latent_dim), jnp.float32),
                   jax.ShapeDtypeStruct((n, feat), jnp.bfloat16)),
        in_specs=[_vmem()] * 6,
        out_specs=(_vmem(), _vmem(), _vmem()),
        compiler_params=_CPARAMS,
    )(flat_hwc.astype(jnp.bfloat16), wmv.astype(jnp.bfloat16),
      bmv.reshape(1, -1).astype(jnp.float32), eps.astype(jnp.float32),
      wdec.astype(jnp.bfloat16), bdec.reshape(1, -1).astype(jnp.float32))
    return mu, log_var, d.reshape(n, 7, 7, c)   # decoder input already NHWC


# ----------------------------- parameters -----------------------------

def init_params(key, in_channels=1, latent_dim=10, hidden_dims=(32, 64)):
    ks = jax.random.split(key, 16)
    s = 0.05
    h0, h1 = hidden_dims
    p = {
        # encoder (conv biases are kept for layout fidelity but never passed to
        # the kernels: bias before BatchNorm cancels exactly in the forward)
        "enc1_w": jax.random.normal(ks[0], (h0, in_channels, 3, 3)) * s,
        "enc1_b": jnp.zeros((h0,)),
        "bn1_g": jnp.ones((h0,)), "bn1_b": jnp.zeros((h0,)),
        "enc2_w": jax.random.normal(ks[1], (h1, h0, 3, 3)) * s,
        "enc2_b": jnp.zeros((h1,)),
        "bn2_g": jnp.ones((h1,)), "bn2_b": jnp.zeros((h1,)),
        # latent heads (stored as [in, out] == PyTorch W.T, (C,H,W) row order)
        "fc_mu_w": jax.random.normal(ks[2], (h1 * 49, latent_dim)) * s,
        "fc_mu_b": jnp.zeros((latent_dim,)),
        "fc_var_w": jax.random.normal(ks[3], (h1 * 49, latent_dim)) * s,
        "fc_var_b": jnp.zeros((latent_dim,)),
        # decoder input
        "dec_in_w": jax.random.normal(ks[4], (latent_dim, h1 * 49)) * s,
        "dec_in_b": jnp.zeros((h1 * 49,)),
        # decoder: ConvTranspose2d(64 -> 32), weight layout [IC, OC, KH, KW]
        "dec1_wt": jax.random.normal(ks[5], (h1, h0, 3, 3)) * s,
        "dec1_b": jnp.zeros((h0,)),
        "dbn1_g": jnp.ones((h0,)), "dbn1_b": jnp.zeros((h0,)),
        # final layer: ConvTranspose2d(32 -> 32)
        "fin_wt": jax.random.normal(ks[6], (h0, h0, 3, 3)) * s,
        "fin_b": jnp.zeros((h0,)),
        "fbn_g": jnp.ones((h0,)), "fbn_b": jnp.zeros((h0,)),
        # final Conv2d(32 -> 1) + Tanh
        "fin_conv_w": jax.random.normal(ks[7], (1, h0, 3, 3)) * s,
        "fin_conv_b": jnp.zeros((1,)),
    }
    return {k: v.astype(jnp.float32) for k, v in p.items()}


# ----------------------------- forward -----------------------------

def vae_forward(params, x_nchw, eps):
    """Returns [reconstruction, input, mu, log_var] exactly like VAE.forward."""
    n = x_nchw.shape[0]
    x = x_nchw.transpose(0, 2, 3, 1).astype(jnp.bfloat16)  # NCHW -> NHWC, bf16 MXU

    # encoder: two (Conv2d s2 p1 -> BN -> LeakyReLU) blocks: 28 -> 14 -> 7
    h = conv_bn_lrelu(x, params["enc1_w"], params["bn1_g"], params["bn1_b"], 2, 1)
    h = conv_bn_lrelu(h, params["enc2_w"], params["bn2_g"], params["bn2_b"], 2, 1)

    # NHWC flatten; fc weights are row-reordered inside the fused latent wrapper
    flat = h.reshape(n, -1)                                 # [N, 64*49]

    # fc_mu + fc_var + reparameterize + decoder_input in a single kernel
    mu, log_var, d = latent_and_decoder_input(flat, params, eps)

    # decoder: ConvTranspose(64->32,s2)+BN+LReLU : 7 -> 14
    d = convt_bn_lrelu(d, params["dec1_wt"], params["dbn1_g"], params["dbn1_b"])
    # final: ConvTranspose(32->32,s2)+BN+LReLU : 14 -> 28
    d = convt_bn_lrelu(d, params["fin_wt"], params["fbn_g"], params["fbn_b"])
    # Conv2d(32->1, k3 p1) + Tanh
    d = conv_tanh(d, params["fin_conv_w"], params["fin_conv_b"])  # [N,28,28,1]

    recon = d.transpose(0, 3, 1, 2)                         # NCHW [N,1,28,28]
    return [recon, x_nchw, mu, log_var]


# ----------------------------- main -----------------------------

if __name__ == "__main__":
    key = jax.random.PRNGKey(0)
    k_param, k_x, k_eps = jax.random.split(key, 3)

    batch, in_channels, latent_dim = 2, 1, 10
    # fc layers are sized for 7x7 feature maps => input spatial must be 28x28
    x = jax.random.normal(k_x, (batch, in_channels, 28, 28), dtype=jnp.float32)
    # TODO(synk): torch.randn_like(eps) has no in-kernel equivalent tied to the
    # Torch RNG; eps is drawn with the JAX RNG and consumed inside the kernel.
    eps = jax.random.normal(k_eps, (batch, latent_dim), dtype=jnp.float32)

    params = init_params(k_param, in_channels=in_channels, latent_dim=latent_dim)

    recon, inp, mu, log_var = jax.block_until_ready(
        jax.jit(vae_forward)(params, x, eps))

    assert recon.shape == (batch, 1, 28, 28)
    assert inp.shape == x.shape
    assert mu.shape == (batch, latent_dim)
    assert log_var.shape == (batch, latent_dim)
    assert bool(jnp.all(jnp.isfinite(recon)))
    assert bool(jnp.all(jnp.isfinite(mu))) and bool(jnp.all(jnp.isfinite(log_var)))
    print("KERNEL_OK")
</pallas_src>

<mosaic_0001>
module attributes {stable_mosaic.version = 11 : i64} {
  func.func @kernel(%arg0: memref<392x9xbf16, #tpu.memory_space<vmem>>, %arg1: memref<9x32xbf16, #tpu.memory_space<vmem>>, %arg2: memref<1x32xf32, #tpu.memory_space<vmem>>, %arg3: memref<1x32xf32, #tpu.memory_space<vmem>>, %arg4: memref<392x32xbf16, #tpu.memory_space<vmem>>) attributes {dimension_semantics = [], scalar_prefetch = 0 : i64, scratch_operands = 0 : i64, tpu.core_type = #tpu.core_type<tc>} {
    %c0 = arith.constant 0 : index
    %c0_0 = arith.constant 0 : index
    %0 = vector.load %arg0[%c0, %c0_0] : memref<392x9xbf16, #tpu.memory_space<vmem>>, vector<392x9xbf16>
    %c0_1 = arith.constant 0 : index
    %c0_2 = arith.constant 0 : index
    %1 = vector.load %arg1[%c0_1, %c0_2] : memref<9x32xbf16, #tpu.memory_space<vmem>>, vector<9x32xbf16>
    %cst = arith.constant dense<0.000000e+00> : vector<392x32xf32>
    %2 = tpu.matmul %0, %1, %cst {dimension_numbers = #tpu.dot_dimension_numbers<[1], [0], [0], [1], [0, 0, 1, 1], [], []>} : vector<392x9xbf16>, vector<9x32xbf16>, vector<392x32xf32> -> vector<392x32xf32>
    %cst_3 = arith.constant dense<0.000000e+00> : vector<32xf32>
    %3 = vector.multi_reduction <add>, %2, %cst_3 [0] : vector<392x32xf32> to vector<32xf32>
    %4 = vector.shape_cast %3 : vector<32xf32> to vector<1x32xf32>
    %5 = arith.mulf %2, %2 : vector<392x32xf32>
    %cst_4 = arith.constant dense<0.000000e+00> : vector<32xf32>
    %6 = vector.multi_reduction <add>, %5, %cst_4 [0] : vector<392x32xf32> to vector<32xf32>
    %7 = vector.shape_cast %6 : vector<32xf32> to vector<1x32xf32>
    %cst_5 = arith.constant 3.920000e+02 : f32
    %8 = vector.broadcast %cst_5 : f32 to vector<1x32xf32>
    %9 = arith.divf %4, %8 : vector<1x32xf32>
    %cst_6 = arith.constant 3.920000e+02 : f32
    %10 = vector.broadcast %cst_6 : f32 to vector<1x32xf32>
    %11 = arith.divf %7, %10 : vector<1x32xf32>
    %12 = arith.mulf %9, %9 : vector<1x32xf32>
    %13 = arith.subf %11, %12 : vector<1x32xf32>
    %cst_7 = arith.constant 9.99999974E-6 : f32
    %14 = vector.broadcast %cst_7 : f32 to vector<1x32xf32>
    %15 = arith.addf %13, %14 : vector<1x32xf32>
    %16 = math.rsqrt %15 : vector<1x32xf32>
    %c0_8 = arith.constant 0 : index
    %c0_9 = arith.constant 0 : index
    %17 = vector.load %arg2[%c0_8, %c0_9] : memref<1x32xf32, #tpu.memory_space<vmem>>, vector<1x32xf32>
    %18 = arith.mulf %17, %16 : vector<1x32xf32>
    %c0_10 = arith.constant 0 : index
    %c0_11 = arith.constant 0 : index
    %19 = vector.load %arg3[%c0_10, %c0_11] : memref<1x32xf32, #tpu.memory_space<vmem>>, vector<1x32xf32>
    %20 = arith.mulf %9, %18 : vector<1x32xf32>
    %21 = arith.subf %19, %20 : vector<1x32xf32>
    %22 = vector.broadcast %18 : vector<1x32xf32> to vector<392x32xf32>
    %23 = arith.mulf %2, %22 : vector<392x32xf32>
    %24 = vector.broadcast %21 : vector<1x32xf32> to vector<392x32xf32>
    %25 = arith.addf %23, %24 : vector<392x32xf32>
    %cst_12 = arith.constant 0.000000e+00 : f32
    %26 = vector.broadcast %cst_12 : f32 to vector<392x32xf32>
    %27 = arith.cmpf oge, %25, %26 : vector<392x32xf32>
    %cst_13 = arith.constant 0.00999999977 : f32
    %28 = vector.broadcast %cst_13 : f32 to vector<392x32xf32>
    %29 = arith.mulf %28, %25 : vector<392x32xf32>
    %30 = arith.select %27, %25, %29 : vector<392x32xi1>, vector<392x32xf32>
    %31 = arith.truncf %30 : vector<392x32xf32> to vector<392x32xbf16>
    %c0_14 = arith.constant 0 : index
    %c0_15 = arith.constant 0 : index
    %32 = vector.load %arg4[%c0_14, %c0_15] : memref<392x32xbf16, #tpu.memory_space<vmem>>, vector<392x32xbf16>
    tpu.vector_store %arg4[%c0_14, %c0_15], %31 {strides = array<i32>} : memref<392x32xbf16, #tpu.memory_space<vmem>>, vector<392x32xbf16>,
    return
  }
}

module attributes {stable_mosaic.version = 11 : i64} {
  func.func @kernel(%arg0: memref<98x288xbf16, #tpu.memory_space<vmem>>, %arg1: memref<288x64xbf16, #tpu.memory_space<vmem>>, %arg2: memref<1x64xf32, #tpu.memory_space<vmem>>, %arg3: memref<1x64xf32, #tpu.memory_space<vmem>>, %arg4: memref<98x64xbf16, #tpu.memory_space<vmem>>) attributes {dimension_semantics = [], scalar_prefetch = 0 : i64, scratch_operands = 0 : i64, tpu.core_type = #tpu.core_type<tc>} {
    %c0 = arith.constant 0 : index
    %c0_0 = arith.constant 0 : index
    %0 = vector.load %arg0[%c0, %c0_0] : memref<98x288xbf16, #tpu.memory_space<vmem>>, vector<98x288xbf16>
    %c0_1 = arith.constant 0 : index
    %c0_2 = arith.constant 0 : index
    %1 = vector.load %arg1[%c0_1, %c0_2] : memref<288x64xbf16, #tpu.memory_space<vmem>>, vector<288x64xbf16>
    %cst = arith.constant dense<0.000000e+00> : vector<98x64xf32>
    %2 = tpu.matmul %0, %1, %cst {dimension_numbers = #tpu.dot_dimension_numbers<[1], [0], [0], [1], [0, 0, 1, 1], [], []>} : vector<98x288xbf16>, vector<288x64xbf16>, vector<98x64xf32> -> vector<98x64xf32>
    %cst_3 = arith.constant dense<0.000000e+00> : vector<64xf32>
    %3 = vector.multi_reduction <add>, %2, %cst_3 [0] : vector<98x64xf32> to vector<64xf32>
    %4 = vector.shape_cast %3 : vector<64xf32> to vector<1x64xf32>
    %5 = arith.mulf %2, %2 : vector<98x64xf32>
    %cst_4 = arith.constant dense<0.000000e+00> : vector<64xf32>
    %6 = vector.multi_reduction <add>, %5, %cst_4 [0] : vector<98x64xf32> to vector<64xf32>
    %7 = vector.shape_cast %6 : vector<64xf32> to vector<1x64xf32>
    %cst_5 = arith.constant 9.800000e+01 : f32
    %8 = vector.broadcast %cst_5 : f32 to vector<1x64xf32>
    %9 = arith.divf %4, %8 : vector<1x64xf32>
    %cst_6 = arith.constant 9.800000e+01 : f32
    %10 = vector.broadcast %cst_6 : f32 to vector<1x64xf32>
    %11 = arith.divf %7, %10 : vector<1x64xf32>
    %12 = arith.mulf %9, %9 : vector<1x64xf32>
    %13 = arith.subf %11, %12 : vector<1x64xf32>
    %cst_7 = arith.constant 9.99999974E-6 : f32
    %14 = vector.broadcast %cst_7 : f32 to vector<1x64xf32>
    %15 = arith.addf %13, %14 : vector<1x64xf32>
    %16 = math.rsqrt %15 : vector<1x64xf32>
    %c0_8 = arith.constant 0 : index
    %c0_9 = arith.constant 0 : index
    %17 = vector.load %arg2[%c0_8, %c0_9] : memref<1x64xf32, #tpu.memory_space<vmem>>, vector<1x64xf32>
    %18 = arith.mulf %17, %16 : vector<1x64xf32>
    %c0_10 = arith.constant 0 : index
    %c0_11 = arith.constant 0 : index
    %19 = vector.load %arg3[%c0_10, %c0_11] : memref<1x64xf32, #tpu.memory_space<vmem>>, vector<1x64xf32>
    %20 = arith.mulf %9, %18 : vector<1x64xf32>
    %21 = arith.subf %19, %20 : vector<1x64xf32>
    %22 = vector.broadcast %18 : vector<1x64xf32> to vector<98x64xf32>
    %23 = arith.mulf %2, %22 : vector<98x64xf32>
    %24 = vector.broadcast %21 : vector<1x64xf32> to vector<98x64xf32>
    %25 = arith.addf %23, %24 : vector<98x64xf32>
    %cst_12 = arith.constant 0.000000e+00 : f32
    %26 = vector.broadcast %cst_12 : f32 to vector<98x64xf32>
    %27 = arith.cmpf oge, %25, %26 : vector<98x64xf32>
    %cst_13 = arith.constant 0.00999999977 : f32
    %28 = vector.broadcast %cst_13 : f32 to vector<98x64xf32>
    %29 = arith.mulf %28, %25 : vector<98x64xf32>
    %30 = arith.select %27, %25, %29 : vector<98x64xi1>, vector<98x64xf32>
    %31 = arith.truncf %30 : vector<98x64xf32> to vector<98x64xbf16>
    %c0_14 = arith.constant 0 : index
    %c0_15 = arith.constant 0 : index
    %32 = vector.load %arg4[%c0_14, %c0_15] : memref<98x64xbf16, #tpu.memory_space<vmem>>, vector<98x64xbf16>
    tpu.vector_store %arg4[%c0_14, %c0_15], %31 {strides = array<i32>} : memref<98x64xbf16, #tpu.memory_space<vmem>>, vector<98x64xbf16>,
    return
  }
}

module attributes {stable_mosaic.version = 11 : i64} {
  func.func @latent_kernel(%arg0: memref<2x3136xbf16, #tpu.memory_space<vmem>>, %arg1: memref<3136x20xbf16, #tpu.memory_space<vmem>>, %arg2: memref<1x20xf32, #tpu.memory_space<vmem>>, %arg3: memref<2x10xf32, #tpu.memory_space<vmem>>, %arg4: memref<10x3136xbf16, #tpu.memory_space<vmem>>, %arg5: memref<1x3136xf32, #tpu.memory_space<vmem>>, %arg6: memref<2x10xf32, #tpu.memory_space<vmem>>, %arg7: memref<2x10xf32, #tpu.memory_space<vmem>>, %arg8: memref<2x3136xbf16, #tpu.memory_space<vmem>>) attributes {dimension_semantics = [], scalar_prefetch = 0 : i64, scratch_operands = 0 : i64, tpu.core_type = #tpu.core_type<tc>} {
    %c0 = arith.constant 0 : index
    %c0_0 = arith.constant 0 : index
    %0 = vector.load %arg0[%c0, %c0_0] : memref<2x3136xbf16, #tpu.memory_space<vmem>>, vector<2x3136xbf16>
    %c0_1 = arith.constant 0 : index
    %c0_2 = arith.constant 0 : index
    %1 = vector.load %arg1[%c0_1, %c0_2] : memref<3136x20xbf16, #tpu.memory_space<vmem>>, vector<3136x20xbf16>
    %cst = arith.constant dense<0.000000e+00> : vector<2x20xf32>
    %2 = tpu.matmul %0, %1, %cst {dimension_numbers = #tpu.dot_dimension_numbers<[1], [0], [0], [1], [0, 0, 1, 1], [], []>} : vector<2x3136xbf16>, vector<3136x20xbf16>, vector<2x20xf32> -> vector<2x20xf32>
    %c0_3 = arith.constant 0 : index
    %c0_4 = arith.constant 0 : index
    %3 = vector.load %arg2[%c0_3, %c0_4] : memref<1x20xf32, #tpu.memory_space<vmem>>, vector<1x20xf32>
    %4 = vector.broadcast %3 : vector<1x20xf32> to vector<2x20xf32>
    %5 = arith.addf %2, %4 : vector<2x20xf32>
    %6 = vector.extract_strided_slice %5 {offsets = [0, 0], sizes = [2, 10], strides = [1, 1]} : vector<2x20xf32> to vector<2x10xf32>
    %7 = vector.extract_strided_slice %5 {offsets = [0, 10], sizes = [2, 10], strides = [1, 1]} : vector<2x20xf32> to vector<2x10xf32>
    %c0_5 = arith.constant 0 : index
    %c0_6 = arith.constant 0 : index
    %8 = vector.load %arg6[%c0_5, %c0_6] : memref<2x10xf32, #tpu.memory_space<vmem>>, vector<2x10xf32>
    tpu.vector_store %arg6[%c0_5, %c0_6], %6 {strides = array<i32>} : memref<2x10xf32, #tpu.memory_space<vmem>>, vector<2x10xf32>,
    %c0_7 = arith.constant 0 : index
    %c0_8 = arith.constant 0 : index
    %9 = vector.load %arg7[%c0_7, %c0_8] : memref<2x10xf32, #tpu.memory_space<vmem>>, vector<2x10xf32>
    tpu.vector_store %arg7[%c0_7, %c0_8], %7 {strides = array<i32>} : memref<2x10xf32, #tpu.memory_space<vmem>>, vector<2x10xf32>,
    %c0_9 = arith.constant 0 : index
    %c0_10 = arith.constant 0 : index
    %10 = vector.load %arg3[%c0_9, %c0_10] : memref<2x10xf32, #tpu.memory_space<vmem>>, vector<2x10xf32>
    %cst_11 = arith.constant 5.000000e-01 : f32
    %11 = vector.broadcast %cst_11 : f32 to vector<2x10xf32>
    %12 = arith.mulf %11, %7 : vector<2x10xf32>
    %13 = math.exp %12 : vector<2x10xf32>
    %14 = arith.mulf %10, %13 : vector<2x10xf32>
    %15 = arith.addf %14, %6 : vector<2x10xf32>
    %16 = arith.truncf %15 : vector<2x10xf32> to vector<2x10xbf16>
    %c0_12 = arith.constant 0 : index
    %c0_13 = arith.constant 0 : index
    %17 = vector.load %arg4[%c0_12, %c0_13] : memref<10x3136xbf16, #tpu.memory_space<vmem>>, vector<10x3136xbf16>
    %cst_14 = arith.constant dense<0.000000e+00> : vector<2x3136xf32>
    %18 = tpu.matmul %16, %17, %cst_14 {dimension_numbers = #tpu.dot_dimension_numbers<[1], [0], [0], [1], [0, 0, 1, 1], [], []>} : vector<2x10xbf16>, vector<10x3136xbf16>, vector<2x3136xf32> -> vector<2x3136xf32>
    %c0_15 = arith.constant 0 : index
    %c0_16 = arith.constant 0 : index
    %19 = vector.load %arg5[%c0_15, %c0_16] : memref<1x3136xf32, #tpu.memory_space<vmem>>, vector<1x3136xf32>
    %20 = vector.broadcast %19 : vector<1x3136xf32> to vector<2x3136xf32>
    %21 = arith.addf %18, %20 : vector<2x3136xf32>
    %22 = arith.truncf %21 : vector<2x3136xf32> to vector<2x3136xbf16>
    %c0_17 = arith.constant 0 : index
    %c0_18 = arith.constant 0 : index
    %23 = vector.load %arg8[%c0_17, %c0_18] : memref<2x3136xbf16, #tpu.memory_space<vmem>>, vector<2x3136xbf16>
    tpu.vector_store %arg8[%c0_17, %c0_18], %22 {strides = array<i32>} : memref<2x3136xbf16, #tpu.memory_space<vmem>>, vector<2x3136xbf16>,
    return
  }
}

module attributes {stable_mosaic.version = 11 : i64} {
  func.func @kernel(%arg0: memref<98x256xbf16, #tpu.memory_space<vmem>>, %arg1: memref<256x128xbf16, #tpu.memory_space<vmem>>, %arg2: memref<1x32xf32, #tpu.memory_space<vmem>>, %arg3: memref<1x32xf32, #tpu.memory_space<vmem>>, %arg4: memref<98x128xbf16, #tpu.memory_space<vmem>>) attributes {dimension_semantics = [], scalar_prefetch = 0 : i64, scratch_operands = 0 : i64, tpu.core_type = #tpu.core_type<tc>} {
    %c0 = arith.constant 0 : index
    %c0_0 = arith.constant 0 : index
    %0 = vector.load %arg0[%c0, %c0_0] : memref<98x256xbf16, #tpu.memory_space<vmem>>, vector<98x256xbf16>
    %c0_1 = arith.constant 0 : index
    %c0_2 = arith.constant 0 : index
    %1 = vector.load %arg1[%c0_1, %c0_2] : memref<256x128xbf16, #tpu.memory_space<vmem>>, vector<256x128xbf16>
    %cst = arith.constant dense<0.000000e+00> : vector<98x128xf32>
    %2 = tpu.matmul %0, %1, %cst {dimension_numbers = #tpu.dot_dimension_numbers<[1], [0], [0], [1], [0, 0, 1, 1], [], []>} : vector<98x256xbf16>, vector<256x128xbf16>, vector<98x128xf32> -> vector<98x128xf32>
    %cst_3 = arith.constant dense<0.000000e+00> : vector<128xf32>
    %3 = vector.multi_reduction <add>, %2, %cst_3 [0] : vector<98x128xf32> to vector<128xf32>
    %4 = vector.shape_cast %3 : vector<128xf32> to vector<1x128xf32>
    %5 = arith.mulf %2, %2 : vector<98x128xf32>
    %cst_4 = arith.constant dense<0.000000e+00> : vector<128xf32>
    %6 = vector.multi_reduction <add>, %5, %cst_4 [0] : vector<98x128xf32> to vector<128xf32>
    %7 = vector.shape_cast %6 : vector<128xf32> to vector<1x128xf32>
    %8 = vector.extract_strided_slice %4 {offsets = [0, 0], sizes = [1, 32], strides = [1, 1]} : vector<1x128xf32> to vector<1x32xf32>
    %cst_5 = arith.constant 0.000000e+00 : f32
    %9 = vector.broadcast %cst_5 : f32 to vector<1x32xf32>
    %10 = arith.addf %9, %8 : vector<1x32xf32>
    %11 = vector.extract_strided_slice %4 {offsets = [0, 32], sizes = [1, 32], strides = [1, 1]} : vector<1x128xf32> to vector<1x32xf32>
    %12 = arith.addf %10, %11 : vector<1x32xf32>
    %13 = vector.extract_strided_slice %4 {offsets = [0, 64], sizes = [1, 32], strides = [1, 1]} : vector<1x128xf32> to vector<1x32xf32>
    %14 = arith.addf %12, %13 : vector<1x32xf32>
    %15 = vector.extract_strided_slice %4 {offsets = [0, 96], sizes = [1, 32], strides = [1, 1]} : vector<1x128xf32> to vector<1x32xf32>
    %16 = arith.addf %14, %15 : vector<1x32xf32>
    %17 = vector.extract_strided_slice %7 {offsets = [0, 0], sizes = [1, 32], strides = [1, 1]} : vector<1x128xf32> to vector<1x32xf32>
    %cst_6 = arith.constant 0.000000e+00 : f32
    %18 = vector.broadcast %cst_6 : f32 to vector<1x32xf32>
    %19 = arith.addf %18, %17 : vector<1x32xf32>
    %20 = vector.extract_strided_slice %7 {offsets = [0, 32], sizes = [1, 32], strides = [1, 1]} : vector<1x128xf32> to vector<1x32xf32>
    %21 = arith.addf %19, %20 : vector<1x32xf32>
    %22 = vector.extract_strided_slice %7 {offsets = [0, 64], sizes = [1, 32], strides = [1, 1]} : vector<1x128xf32> to vector<1x32xf32>
    %23 = arith.addf %21, %22 : vector<1x32xf32>
    %24 = vector.extract_strided_slice %7 {offsets = [0, 96], sizes = [1, 32], strides = [1, 1]} : vector<1x128xf32> to vector<1x32xf32>
    %25 = arith.addf %23, %24 : vector<1x32xf32>
    %cst_7 = arith.constant 3.920000e+02 : f32
    %26 = vector.broadcast %cst_7 : f32 to vector<1x32xf32>
    %27 = arith.divf %16, %26 : vector<1x32xf32>
    %cst_8 = arith.constant 3.920000e+02 : f32
    %28 = vector.broadcast %cst_8 : f32 to vector<1x32xf32>
    %29 = arith.divf %25, %28 : vector<1x32xf32>
    %30 = arith.mulf %27, %27 : vector<1x32xf32>
    %31 = arith.subf %29, %30 : vector<1x32xf32>
    %cst_9 = arith.constant 9.99999974E-6 : f32
    %32 = vector.broadcast %cst_9 : f32 to vector<1x32xf32>
    %33 = arith.addf %31, %32 : vector<1x32xf32>
    %34 = math.rsqrt %33 : vector<1x32xf32>
    %c0_10 = arith.constant 0 : index
    %c0_11 = arith.constant 0 : index
    %35 = vector.load %arg2[%c0_10, %c0_11] : memref<1x32xf32, #tpu.memory_space<vmem>>, vector<1x32xf32>
    %36 = arith.mulf %35, %34 : vector<1x32xf32>
    %c0_12 = arith.constant 0 : index
    %c0_13 = arith.constant 0 : index
    %37 = vector.load %arg3[%c0_12, %c0_13] : memref<1x32xf32, #tpu.memory_space<vmem>>, vector<1x32xf32>
    %38 = arith.mulf %27, %36 : vector<1x32xf32>
    %39 = arith.subf %37, %38 : vector<1x32xf32>
    %40 = tpu.concatenate %36, %36, %36, %36 in 1 : vector<1x32xf32>, vector<1x32xf32>, vector<1x32xf32>, vector<1x32xf32> -> vector<1x128xf32>
    %41 = tpu.concatenate %39, %39, %39, %39 in 1 : vector<1x32xf32>, vector<1x32xf32>, vector<1x32xf32>, vector<1x32xf32> -> vector<1x128xf32>
    %42 = vector.broadcast %40 : vector<1x128xf32> to vector<98x128xf32>
    %43 = arith.mulf %2, %42 : vector<98x128xf32>
    %44 = vector.broadcast %41 : vector<1x128xf32> to vector<98x128xf32>
    %45 = arith.addf %43, %44 : vector<98x128xf32>
    %cst_14 = arith.constant 0.000000e+00 : f32
    %46 = vector.broadcast %cst_14 : f32 to vector<98x128xf32>
    %47 = arith.cmpf oge, %45, %46 : vector<98x128xf32>
    %cst_15 = arith.constant 0.00999999977 : f32
    %48 = vector.broadcast %cst_15 : f32 to vector<98x128xf32>
    %49 = arith.mulf %48, %45 : vector<98x128xf32>
    %50 = arith.select %47, %45, %49 : vector<98x128xi1>, vector<98x128xf32>
    %51 = arith.truncf %50 : vector<98x128xf32> to vector<98x128xbf16>
    %c0_16 = arith.constant 0 : index
    %c0_17 = arith.constant 0 : index
    %52 = vector.load %arg4[%c0_16, %c0_17] : memref<98x128xbf16, #tpu.memory_space<vmem>>, vector<98x128xbf16>
    tpu.vector_store %arg4[%c0_16, %c0_17], %51 {strides = array<i32>} : memref<98x128xbf16, #tpu.memory_space<vmem>>, vector<98x128xbf16>,
    return
  }
}

module attributes {stable_mosaic.version = 11 : i64} {
  func.func @kernel(%arg0: memref<392x128xbf16, #tpu.memory_space<vmem>>, %arg1: memref<128x128xbf16, #tpu.memory_space<vmem>>, %arg2: memref<1x32xf32, #tpu.memory_space<vmem>>, %arg3: memref<1x32xf32, #tpu.memory_space<vmem>>, %arg4: memref<392x128xbf16, #tpu.memory_space<vmem>>) attributes {dimension_semantics = [], scalar_prefetch = 0 : i64, scratch_operands = 0 : i64, tpu.core_type = #tpu.core_type<tc>} {
    %c0 = arith.constant 0 : index
    %c0_0 = arith.constant 0 : index
    %0 = vector.load %arg0[%c0, %c0_0] : memref<392x128xbf16, #tpu.memory_space<vmem>>, vector<392x128xbf16>
    %c0_1 = arith.constant 0 : index
    %c0_2 = arith.constant 0 : index
    %1 = vector.load %arg1[%c0_1, %c0_2] : memref<128x128xbf16, #tpu.memory_space<vmem>>, vector<128x128xbf16>
    %cst = arith.constant dense<0.000000e+00> : vector<392x128xf32>
    %2 = tpu.matmul %0, %1, %cst {dimension_numbers = #tpu.dot_dimension_numbers<[1], [0], [0], [1], [0, 0, 1, 1], [], []>} : vector<392x128xbf16>, vector<128x128xbf16>, vector<392x128xf32> -> vector<392x128xf32>
    %cst_3 = arith.constant dense<0.000000e+00> : vector<128xf32>
    %3 = vector.multi_reduction <add>, %2, %cst_3 [0] : vector<392x128xf32> to vector<128xf32>
    %4 = vector.shape_cast %3 : vector<128xf32> to vector<1x128xf32>
    %5 = arith.mulf %2, %2 : vector<392x128xf32>
    %cst_4 = arith.constant dense<0.000000e+00> : vector<128xf32>
    %6 = vector.multi_reduction <add>, %5, %cst_4 [0] : vector<392x128xf32> to vector<128xf32>
    %7 = vector.shape_cast %6 : vector<128xf32> to vector<1x128xf32>
    %8 = vector.extract_strided_slice %4 {offsets = [0, 0], sizes = [1, 32], strides = [1, 1]} : vector<1x128xf32> to vector<1x32xf32>
    %cst_5 = arith.constant 0.000000e+00 : f32
    %9 = vector.broadcast %cst_5 : f32 to vector<1x32xf32>
    %10 = arith.addf %9, %8 : vector<1x32xf32>
    %11 = vector.extract_strided_slice %4 {offsets = [0, 32], sizes = [1, 32], strides = [1, 1]} : vector<1x128xf32> to vector<1x32xf32>
    %12 = arith.addf %10, %11 : vector<1x32xf32>
    %13 = vector.extract_strided_slice %4 {offsets = [0, 64], sizes = [1, 32], strides = [1, 1]} : vector<1x128xf32> to vector<1x32xf32>
    %14 = arith.addf %12, %13 : vector<1x32xf32>
    %15 = vector.extract_strided_slice %4 {offsets = [0, 96], sizes = [1, 32], strides = [1, 1]} : vector<1x128xf32> to vector<1x32xf32>
    %16 = arith.addf %14, %15 : vector<1x32xf32>
    %17 = vector.extract_strided_slice %7 {offsets = [0, 0], sizes = [1, 32], strides = [1, 1]} : vector<1x128xf32> to vector<1x32xf32>
    %cst_6 = arith.constant 0.000000e+00 : f32
    %18 = vector.broadcast %cst_6 : f32 to vector<1x32xf32>
    %19 = arith.addf %18, %17 : vector<1x32xf32>
    %20 = vector.extract_strided_slice %7 {offsets = [0, 32], sizes = [1, 32], strides = [1, 1]} : vector<1x128xf32> to vector<1x32xf32>
    %21 = arith.addf %19, %20 : vector<1x32xf32>
    %22 = vector.extract_strided_slice %7 {offsets = [0, 64], sizes = [1, 32], strides = [1, 1]} : vector<1x128xf32> to vector<1x32xf32>
    %23 = arith.addf %21, %22 : vector<1x32xf32>
    %24 = vector.extract_strided_slice %7 {offsets = [0, 96], sizes = [1, 32], strides = [1, 1]} : vector<1x128xf32> to vector<1x32xf32>
    %25 = arith.addf %23, %24 : vector<1x32xf32>
    %cst_7 = arith.constant 1.568000e+03 : f32
    %26 = vector.broadcast %cst_7 : f32 to vector<1x32xf32>
    %27 = arith.divf %16, %26 : vector<1x32xf32>
    %cst_8 = arith.constant 1.568000e+03 : f32
    %28 = vector.broadcast %cst_8 : f32 to vector<1x32xf32>
    %29 = arith.divf %25, %28 : vector<1x32xf32>
    %30 = arith.mulf %27, %27 : vector<1x32xf32>
    %31 = arith.subf %29, %30 : vector<1x32xf32>
    %cst_9 = arith.constant 9.99999974E-6 : f32
    %32 = vector.broadcast %cst_9 : f32 to vector<1x32xf32>
    %33 = arith.addf %31, %32 : vector<1x32xf32>
    %34 = math.rsqrt %33 : vector<1x32xf32>
    %c0_10 = arith.constant 0 : index
    %c0_11 = arith.constant 0 : index
    %35 = vector.load %arg2[%c0_10, %c0_11] : memref<1x32xf32, #tpu.memory_space<vmem>>, vector<1x32xf32>
    %36 = arith.mulf %35, %34 : vector<1x32xf32>
    %c0_12 = arith.constant 0 : index
    %c0_13 = arith.constant 0 : index
    %37 = vector.load %arg3[%c0_12, %c0_13] : memref<1x32xf32, #tpu.memory_space<vmem>>, vector<1x32xf32>
    %38 = arith.mulf %27, %36 : vector<1x32xf32>
    %39 = arith.subf %37, %38 : vector<1x32xf32>
    %40 = tpu.concatenate %36, %36, %36, %36 in 1 : vector<1x32xf32>, vector<1x32xf32>, vector<1x32xf32>, vector<1x32xf32> -> vector<1x128xf32>
    %41 = tpu.concatenate %39, %39, %39, %39 in 1 : vector<1x32xf32>, vector<1x32xf32>, vector<1x32xf32>, vector<1x32xf32> -> vector<1x128xf32>
    %42 = vector.broadcast %40 : vector<1x128xf32> to vector<392x128xf32>
    %43 = arith.mulf %2, %42 : vector<392x128xf32>
    %44 = vector.broadcast %41 : vector<1x128xf32> to vector<392x128xf32>
    %45 = arith.addf %43, %44 : vector<392x128xf32>
    %cst_14 = arith.constant 0.000000e+00 : f32
    %46 = vector.broadcast %cst_14 : f32 to vector<392x128xf32>
    %47 = arith.cmpf oge, %45, %46 : vector<392x128xf32>
    %cst_15 = arith.constant 0.00999999977 : f32
    %48 = vector.broadcast %cst_15 : f32 to vector<392x128xf32>
    %49 = arith.mulf %48, %45 : vector<392x128xf32>
    %50 = arith.select %47, %45, %49 : vector<392x128xi1>, vector<392x128xf32>
    %51 = arith.truncf %50 : vector<392x128xf32> to vector<392x128xbf16>
    %c0_16 = arith.constant 0 : index
    %c0_17 = arith.constant 0 : index
    %52 = vector.load %arg4[%c0_16, %c0_17] : memref<392x128xbf16, #tpu.memory_space<vmem>>, vector<392x128xbf16>
    tpu.vector_store %arg4[%c0_16, %c0_17], %51 {strides = array<i32>} : memref<392x128xbf16, #tpu.memory_space<vmem>>, vector<392x128xbf16>,
    return
  }
}

module attributes {stable_mosaic.version = 11 : i64} {
  func.func @conv_tanh_kernel(%arg0: memref<1568x288xbf16, #tpu.memory_space<vmem>>, %arg1: memref<288x1xbf16, #tpu.memory_space<vmem>>, %arg2: memref<1x1xf32, #tpu.memory_space<vmem>>, %arg3: memref<1568x1xf32, #tpu.memory_space<vmem>>) attributes {dimension_semantics = [], scalar_prefetch = 0 : i64, scratch_operands = 0 : i64, tpu.core_type = #tpu.core_type<tc>} {
    %c0 = arith.constant 0 : index
    %c0_0 = arith.constant 0 : index
    %0 = vector.load %arg0[%c0, %c0_0] : memref<1568x288xbf16, #tpu.memory_space<vmem>>, vector<1568x288xbf16>
    %c0_1 = arith.constant 0 : index
    %c0_2 = arith.constant 0 : index
    %1 = vector.load %arg1[%c0_1, %c0_2] : memref<288x1xbf16, #tpu.memory_space<vmem>>, vector<288x1xbf16>
    %cst = arith.constant dense<0.000000e+00> : vector<1568x1xf32>
    %2 = tpu.matmul %0, %1, %cst {dimension_numbers = #tpu.dot_dimension_numbers<[1], [0], [0], [1], [0, 0, 1, 1], [], []>} : vector<1568x288xbf16>, vector<288x1xbf16>, vector<1568x1xf32> -> vector<1568x1xf32>
    %c0_3 = arith.constant 0 : index
    %c0_4 = arith.constant 0 : index
    %3 = vector.load %arg2[%c0_3, %c0_4] : memref<1x1xf32, #tpu.memory_space<vmem>>, vector<1x1xf32>
    %4 = vector.broadcast %3 : vector<1x1xf32> to vector<1568x1xf32>
    %5 = arith.addf %2, %4 : vector<1568x1xf32>
    %6 = math.tanh %5 : vector<1568x1xf32>
    %c0_5 = arith.constant 0 : index
    %c0_6 = arith.constant 0 : index
    %7 = vector.load %arg3[%c0_5, %c0_6] : memref<1568x1xf32, #tpu.memory_space<vmem>>, vector<1568x1xf32>
    tpu.vector_store %arg3[%c0_5, %c0_6], %6 {strides = array<i32>} : memref<1568x1xf32, #tpu.memory_space<vmem>>, vector<1568x1xf32>,
    return
  }
}

</mosaic_0001>

<llo_original>
// kernel: vae_forward.6
$region0: #{vae_forward.6}
  #allocation0 [shape = 'u32[]', space=smem, size = 0x4, offset = 0x4, fixed_abs, tag = 'smem constant byte address 0x4 - core index']
  #allocation1 [shape = 'u32[144,128]{1,0:T(1,128)}', space=vmem, size = 0x12000, scoped, tag = 'internal scratch']
  %s0 = inlined_call_operand.vmem [shape: bf16[392,9], index: 0, kind: input, shape index: {}]
  %s1 = inlined_call_operand.vmem [shape: bf16[9,32], index: 1, kind: input, shape index: {}]
  %s2 = inlined_call_operand.hbm [shape: f32[1,32], index: 2, kind: input, shape index: {}]
  %s3 = inlined_call_operand.hbm [shape: f32[1,32], index: 3, kind: input, shape index: {}]
  %s4 = inlined_call_operand.vmem [shape: bf16[392,32], index: 4, kind: output, shape index: {}]
  %s5 = sld [smem:[#allocation0]]
  $region34: #{vae_forward.6} parent=0
    _
  %s7 = ssub.s32 1, %s5
  %s8 = scalar_select 0, %s7, %s5
  $region1: #{vae_forward.6} parent=0
    #allocation2 [shape = 'u8[512]{0}', space=vmem, size = 0x400, scoped, tag = 'input window, operand 2, single buffered']
    #allocation3 [shape = 's32[1]{0}', space=sflag, size = 0x4, scoped, tag = 'scoped memory for vae_forward.6']
    #allocation4 [shape = 'u8[512]{0}', space=vmem, size = 0x400, scoped, tag = 'input window, operand 3, single buffered']
    #allocation5 [shape = 's32[1]{0}', space=sflag, size = 0x4, scoped, tag = 'scoped memory for vae_forward.6']
    %9 = vsyncpa [#allocation3], 0
    %10 = vsyncpa [#allocation5], 0
    // Predicated region
    $region2: #{vae_forward.6} parent=1 // pred_check
      _
    $region3: #{vae_forward.6} parent=1 // pred_check_branch
      %12 = sbr.rel (0) target = $region5
    $region4: #{vae_forward.6} parent=1 // pred_region
      _
    $region5: #{vae_forward.6} parent=1 // pred_fallthru
      _
    // Predicated region
    $region6: #{vae_forward.6} parent=1 // pred_check
      _
    $region7: #{vae_forward.6} parent=1 // pred_check_branch
      %14 = sbr.rel (0) target = $region9
    $region8: #{vae_forward.6} parent=1 // pred_region
      _
    $region9: #{vae_forward.6} parent=1 // pred_fallthru
      _
    // Predicated region
    $region10: #{vae_forward.6} parent=1 // pred_check
      _
    $region11: #{vae_forward.6} parent=1 // pred_check_branch
      %16 = sbr.rel (0) target = $region13
    $region12: #{vae_forward.6} parent=1 // pred_region
      %s18 = ssub.s32 16, 16
      %19 = vsyncadd [#allocation3], %s18
      %s21 = sshll.u32 [#allocation2], 4
      %s22 = int_to_ptr.vmem [resolvable:$true] %s21
      %24 = dma.hbm_to_vmem [thread:$0]  %s2, 16, %s22, [#allocation3]
    $region13: #{vae_forward.6} parent=1 // pred_fallthru
      _
    // Predicated region
    $region14: #{vae_forward.6} parent=1 // pred_check
      _
    $region15: #{vae_forward.6} parent=1 // pred_check_branch
      %26 = sbr.rel (0) target = $region17
    $region16: #{vae_forward.6} parent=1 // pred_region
      %s28 = ssub.s32 16, 16
      %29 = vsyncadd [#allocation5], %s28
      %s31 = sshll.u32 [#allocation4], 4
      %s32 = int_to_ptr.vmem [resolvable:$true] %s31
      %34 = dma.hbm_to_vmem [thread:$0]  %s3, 16, %s32, [#allocation5]
    $region17: #{vae_forward.6} parent=1 // pred_fallthru
      _
    // Predicated region
    $region18: #{vae_forward.6} parent=1 // pred_check
      _
    $region19: #{vae_forward.6} parent=1 // pred_check_branch
      %36 = sbr.rel (0) target = $region21
    $region20: #{vae_forward.6} parent=1 // pred_region
      %37 = dma.done [#allocation3], 16
    $region21: #{vae_forward.6} parent=1 // pred_fallthru
      _
    // Predicated region
    $region22: #{vae_forward.6} parent=1 // pred_check
      _
    $region23: #{vae_forward.6} parent=1 // pred_check_branch
      %39 = sbr.rel (0) target = $region25
    $region24: #{vae_forward.6} parent=1 // pred_region
      %40 = dma.done [#allocation5], 16
    $region25: #{vae_forward.6} parent=1 // pred_fallthru
      _
    %v42 = vld [vmem:[%s0] sm:$0xf]
    %v43 = vld [vmem:[%s0 + $0x4] sm:$0xf]
    %v44 = vld [vmem:[%s0 + $0x8] sm:$0xf]
    %v45 = vld [vmem:[%s0 + $0xc] sm:$0xf]
    %v46 = vld [vmem:[%s0 + $0x10] sm:$0xf]
    %v47 = vld [vmem:[%s0 + $0x14] sm:$0xf]
    %v48 = vld [vmem:[%s0 + $0x18] sm:$0xf]
    %v49 = vld [vmem:[%s0 + $0x1c] sm:$0xf]
    %v50 = vld [vmem:[%s0 + $0x20] sm:$0xf]
    %v51 = vld [vmem:[%s0 + $0x24] sm:$0xf]
    %v52 = vld [vmem:[%s0 + $0x28] sm:$0xf]
    %v53 = vld [vmem:[%s0 + $0x2c] sm:$0xf]
    %v54 = vld [vmem:[%s0 + $0x30] sm:$0xf]
    %v55 = vld [vmem:[%s0 + $0x34] sm:$0xf]
    %v56 = vld [vmem:[%s0 + $0x38] sm:$0xf]
    %v57 = vld [vmem:[%s0 + $0x3c] sm:$0xf]
    %v58 = vld [vmem:[%s0 + $0x40] sm:$0xf]
    %v59 = vld [vmem:[%s0 + $0x44] sm:$0xf]
    %v60 = vld [vmem:[%s0 + $0x48] sm:$0xf]
    %v61 = vld [vmem:[%s0 + $0x4c] sm:$0xf]
    %v62 = vld [vmem:[%s0 + $0x50] sm:$0xf]
    %v63 = vld [vmem:[%s0 + $0x54] sm:$0xf]
    %v64 = vld [vmem:[%s0 + $0x58] sm:$0xf]
    %v65 = vld [vmem:[%s0 + $0x5c] sm:$0xf]
    %v66 = vld [vmem:[%s0 + $0x60] sm:$0xf]
    %v67 = vld [vmem:[%s0 + $0x64] sm:$0xf]
    %v68 = vld [vmem:[%s0 + $0x68] sm:$0xf]
    %v69 = vld [vmem:[%s0 + $0x6c] sm:$0xf]
    %v70 = vld [vmem:[%s0 + $0x70] sm:$0xf]
    %v71 = vld [vmem:[%s0 + $0x74] sm:$0xf]
    %v72 = vld [vmem:[%s0 + $0x78] sm:$0xf]
    %v73 = vld [vmem:[%s0 + $0x7c] sm:$0xf]
    %v74 = vld [vmem:[%s0 + $0x80] sm:$0xf]
    %v75 = vld [vmem:[%s0 + $0x84] sm:$0xf]
    %v76 = vld [vmem:[%s0 + $0x88] sm:$0xf]
    %v77 = vld [vmem:[%s0 + $0x8c] sm:$0xf]
    %v78 = vld [vmem:[%s0 + $0x90] sm:$0xf]
    %v79 = vld [vmem:[%s0 + $0x94] sm:$0xf]
    %v80 = vld [vmem:[%s0 + $0x98] sm:$0xf]
    %v81 = vld [vmem:[%s0 + $0x9c] sm:$0xf]
    %v82 = vld [vmem:[%s0 + $0xa0] sm:$0xf]
    %v83 = vld [vmem:[%s0 + $0xa4] sm:$0xf]
    %v84 = vld [vmem:[%s0 + $0xa8] sm:$0xf]
    %v85 = vld [vmem:[%s0 + $0xac] sm:$0xf]
    %v86 = vld [vmem:[%s0 + $0xb0] sm:$0xf]
    %v87 = vld [vmem:[%s0 + $0xb4] sm:$0xf]
    %v88 = vld [vmem:[%s0 + $0xb8] sm:$0xf]
    %v89 = vld [vmem:[%s0 + $0xbc] sm:$0xf]
    %v90 = vld [vmem:[%s0 + $0xc0] sm:$0xf]
    %v91 = vld [vmem:[%s1] sm:$0xf]
    %v92 = vld [vmem:[%s1 + $0x4] sm:$0x1]
    %v142 = vunpack.c.l.b16 %v42
    %v143 = vunpack.c.l.b16 %v43
    %v144 = vunpack.c.l.b16 %v44
    %v145 = vunpack.c.l.b16 %v45
    %v146 = vunpack.c.l.b16 %v46
    %v147 = vunpack.c.l.b16 %v47
    %v148 = vunpack.c.l.b16 %v48
    %v149 = vunpack.c.l.b16 %v49
    %v150 = vunpack.c.l.b16 %v50
    %v151 = vunpack.c.l.b16 %v51
    %v152 = vunpack.c.l.b16 %v52
    %v153 = vunpack.c.l.b16 %v53
    %v154 = vunpack.c.l.b16 %v54
    %v155 = vunpack.c.l.b16 %v55
    %v156 = vunpack.c.l.b16 %v56
    %v157 = vunpack.c.l.b16 %v57
    %v158 = vunpack.c.l.b16 %v58
    %v159 = vunpack.c.l.b16 %v59
    %v160 = vunpack.c.l.b16 %v60
    %v161 = vunpack.c.l.b16 %v61
    %v162 = vunpack.c.l.b16 %v62
    %v163 = vunpack.c.l.b16 %v63
    %v164 = vunpack.c.l.b16 %v64
    %v165 = vunpack.c.l.b16 %v65
    %v166 = vunpack.c.l.b16 %v66
    %v167 = vunpack.c.l.b16 %v67
    %v168 = vunpack.c.l.b16 %v68
    %v169 = vunpack.c.l.b16 %v69
    %v170 = vunpack.c.l.b16 %v70
    %v171 = vunpack.c.l.b16 %v71
    %v172 = vunpack.c.l.b16 %v72
    %v173 = vunpack.c.l.b16 %v73
    %v174 = vunpack.c.l.b16 %v74
    %v175 = vunpack.c.l.b16 %v75
    %v176 = vunpack.c.l.b16 %v76
    %v177 = vunpack.c.l.b16 %v77
    %v178 = vunpack.c.l.b16 %v78
    %v179 = vunpack.c.l.b16 %v79
    %v180 = vunpack.c.l.b16 %v80
    %v181 = vunpack.c.l.b16 %v81
    %v182 = vunpack.c.l.b16 %v82
    %v183 = vunpack.c.l.b16 %v83
    %v184 = vunpack.c.l.b16 %v84
    %v185 = vunpack.c.l.b16 %v85
    %v186 = vunpack.c.l.b16 %v86
    %v187 = vunpack.c.l.b16 %v87
    %v188 = vunpack.c.l.b16 %v88
    %v189 = vunpack.c.l.b16 %v89
    %v190 = vunpack.c.l.b16 %v90
    %v191 = vpack.c.b16 %v143, %v142
    %v192 = vpack.c.b16 %v145, %v144
    %v193 = vpack.c.b16 %v147, %v146
    %v194 = vpack.c.b16 %v149, %v148
    %v195 = vpack.c.b16 %v151, %v150
    %v196 = vpack.c.b16 %v153, %v152
    %v197 = vpack.c.b16 %v155, %v154
    %v198 = vpack.c.b16 %v157, %v156
    %v199 = vpack.c.b16 %v159, %v158
    %v200 = vpack.c.b16 %v161, %v160
    %v201 = vpack.c.b16 %v163, %v162
    %v202 = vpack.c.b16 %v165, %v164
    %v203 = vpack.c.b16 %v167, %v166
    %v204 = vpack.c.b16 %v169, %v168
    %v205 = vpack.c.b16 %v171, %v170
    %v206 = vpack.c.b16 %v173, %v172
    %v207 = vpack.c.b16 %v175, %v174
    %v208 = vpack.c.b16 %v177, %v176
    %v209 = vpack.c.b16 %v179, %v178
    %v210 = vpack.c.b16 %v181, %v180
    %v211 = vpack.c.b16 %v183, %v182
    %v212 = vpack.c.b16 %v185, %v184
    %v213 = vpack.c.b16 %v187, %v186
    %v214 = vpack.c.b16 %v189, %v188
    %v215 = vpack.c.b16 %v190, %v190
    %v218 = vunpack.c.l.b16 %v91
    %v219 = vunpack.c.l.b16 %v92
    %v220 = vpack.c.b16 %v219, %v218
    %vm221 = vcmask 72704
    %v223 = vsel %vm221, %v191, 0
    %v226 = vsel %vm221, %v192, 0
    %v229 = vsel %vm221, %v193, 0
    %v232 = vsel %vm221, %v194, 0
    %v235 = vsel %vm221, %v195, 0
    %v238 = vsel %vm221, %v196, 0
    %v241 = vsel %vm221, %v197, 0
    %v244 = vsel %vm221, %v198, 0
    %v247 = vsel %vm221, %v199, 0
    %v250 = vsel %vm221, %v200, 0
    %v253 = vsel %vm221, %v201, 0
    %v256 = vsel %vm221, %v202, 0
    %v259 = vsel %vm221, %v203, 0
    %v262 = vsel %vm221, %v204, 0
    %v265 = vsel %vm221, %v205, 0
    %v268 = vsel %vm221, %v206, 0
    %v271 = vsel %vm221, %v207, 0
    %v274 = vsel %vm221, %v208, 0
    %v277 = vsel %vm221, %v209, 0
    %v280 = vsel %vm221, %v210, 0
    %v283 = vsel %vm221, %v211, 0
    %v286 = vsel %vm221, %v212, 0
    %v289 = vsel %vm221, %v213, 0
    %v292 = vsel %vm221, %v214, 0
    %v295 = vsel %vm221, %v215, 0
    %vm297 = vcmask 1043456
    %vm298 = vcmask 1044480
    %v299 = vsel %vm297, 4294967295, 65535
    %v300 = vsel %vm298, %v299, 0
    %v302 = vand.u32 %v220, %v300
    %304 = vmatprep.subr.bf16.mxu0 0
    %305 = vmatpush1.bf16.msra.mxu0 %v302
    %306 = vmatprep.subr.bf16.mxu0 0
    %307 = vmatpush1.bf16.msra.mxu0 0
    %308 = vmatprep.subr.bf16.mxu0 0
    %309 = vmatpush1.bf16.msra.mxu0 0
    %310 = vmatprep.subr.bf16.mxu0 0
    %311 = vmatpush1.bf16.msra.mxu0 0
    %312 = vmatprep.subr.bf16.mxu0 0
    %313 = vmatpush1.bf16.msra.mxu0 0
    %314 = vmatprep.subr.bf16.mxu0 0
    %315 = vmatpush1.bf16.msra.mxu0 0
    %316 = vmatprep.subr.bf16.mxu0 0
    %317 = vmatpush1.bf16.msra.mxu0 0
    %318 = vmatprep.subr.bf16.mxu0 0
    %319 = vmatpush1.bf16.msra.mxu0 0
    %320 = vmatprep.subr.bf16.mxu0 0
    %321 = vmatpush1.bf16.msra.mxu0 0
    %322 = vmatprep.subr.bf16.mxu0 0
    %323 = vmatpush1.bf16.msra.mxu0 0
    %324 = vmatprep.subr.bf16.mxu0 0
    %325 = vmatpush1.bf16.msra.mxu0 0
    %326 = vmatprep.subr.bf16.mxu0 0
    %327 = vmatpush1.bf16.msra.mxu0 0
    %328 = vmatprep.subr.bf16.mxu0 0
    %329 = vmatpush1.bf16.msra.mxu0 0
    %330 = vmatprep.subr.bf16.mxu0 0
    %331 = vmatpush1.bf16.msra.mxu0 0
    %332 = vmatprep.subr.bf16.mxu0 0
    %333 = vmatpush1.bf16.msra.mxu0 0
    %334 = vmatprep.subr.bf16.mxu0 0
    %335 = vmatpush1.bf16.msra.mxu0 0
    %336 = vmatprep.mubr.bf16.mxu0 0
    %337 = vmatmul.mubr.bf16.gmra.mrb[0].mxu0 %v223
    %v338 = vpop.f32.mrb[0].mxu0
    %v339 = vadd.f32 0.0, %v338
    %v340 = vpop.f32.mrb[0].mxu0
    %v341 = vpop.f32.mrb[0].mxu0
    %v342 = vadd.f32 0.0, %v341
    %v343 = vpop.f32.mrb[0].mxu0
    %344 = vmatprep.mubr.bf16.mxu0 0
    %345 = vmatmul.mubr.bf16.gmra.mrb[0].mxu0 %v226
    %v346 = vpop.f32.mrb[0].mxu0
    %v347 = vadd.f32 0.0, %v346
    %v348 = vpop.f32.mrb[0].mxu0
    %v349 = vpop.f32.mrb[0].mxu0
    %v350 = vadd.f32 0.0, %v349
    %v351 = vpop.f32.mrb[0].mxu0
    %352 = vmatprep.mubr.bf16.mxu0 0
    %353 = vmatmul.mubr.bf16.gmra.mrb[0].mxu0 %v229
    %v354 = vpop.f32.mrb[0].mxu0
    %v355 = vadd.f32 0.0, %v354
    %v356 = vpop.f32.mrb[0].mxu0
    %v357 = vpop.f32.mrb[0].mxu0
    %v358 = vadd.f32 0.0, %v357
    %v359 = vpop.f32.mrb[0].mxu0
    %360 = vmatprep.mubr.bf16.mxu0 0
    %361 = vmatmul.mubr.bf16.gmra.mrb[0].mxu0 %v232
    %v362 = vpop.f32.mrb[0].mxu0
    %v363 = vadd.f32 0.0, %v362
    %v364 = vpop.f32.mrb[0].mxu0
    %v365 = vpop.f32.mrb[0].mxu0
    %v366 = vadd.f32 0.0, %v365
    %v367 = vpop.f32.mrb[0].mxu0
    %368 = vmatprep.mubr.bf16.mxu0 0
    %369 = vmatmul.mubr.bf16.gmra.mrb[0].mxu0 %v235
    %v370 = vpop.f32.mrb[0].mxu0
    %v371 = vadd.f32 0.0, %v370
    %v372 = vpop.f32.mrb[0].mxu0
    %v373 = vpop.f32.mrb[0].mxu0
    %v374 = vadd.f32 0.0, %v373
    %v375 = vpop.f32.mrb[0].mxu0
    %376 = vmatprep.mubr.bf16.mxu0 0
    %377 = vmatmul.mubr.bf16.gmra.mrb[0].mxu0 %v238
    %v378 = vpop.f32.mrb[0].mxu0
    %v379 = vadd.f32 0.0, %v378
    %v380 = vpop.f32.mrb[0].mxu0
    %v381 = vpop.f32.mrb[0].mxu0
    %v382 = vadd.f32 0.0, %v381
    %v383 = vpop.f32.mrb[0].mxu0
    %384 = vmatprep.mubr.bf16.mxu0 0
    %385 = vmatmul.mubr.bf16.gmra.mrb[0].mxu0 %v241
    %v386 = vpop.f32.mrb[0].mxu0
    %v387 = vadd.f32 0.0, %v386
    %v388 = vpop.f32.mrb[0].mxu0
    %v389 = vpop.f32.mrb[0].mxu0
    %v390 = vadd.f32 0.0, %v389
    %v391 = vpop.f32.mrb[0].mxu0
    %392 = vmatprep.mubr.bf16.mxu0 0
    %393 = vmatmul.mubr.bf16.gmra.mrb[0].mxu0 %v244
    %v394 = vpop.f32.mrb[0].mxu0
    %v395 = vadd.f32 0.0, %v394
    %v396 = vpop.f32.mrb[0].mxu0
    %v397 = vpop.f32.mrb[0].mxu0
    %v398 = vadd.f32 0.0, %v397
    %v399 = vpop.f32.mrb[0].mxu0
    %400 = vmatprep.mubr.bf16.mxu0 0
    %401 = vmatmul.mubr.bf16.gmra.mrb[0].mxu0 %v247
    %v402 = vpop.f32.mrb[0].mxu0
    %v403 = vadd.f32 0.0, %v402
    %v404 = vpop.f32.mrb[0].mxu0
    %v405 = vpop.f32.mrb[0].mxu0
    %v406 = vadd.f32 0.0, %v405
    %v407 = vpop.f32.mrb[0].mxu0
    %408 = vmatprep.mubr.bf16.mxu0 0
    %409 = vmatmul.mubr.bf16.gmra.mrb[0].mxu0 %v250
    %v410 = vpop.f32.mrb[0].mxu0
    %v411 = vadd.f32 0.0, %v410
    %v412 = vpop.f32.mrb[0].mxu0
    %v413 = vpop.f32.mrb[0].mxu0
    %v414 = vadd.f32 0.0, %v413
    %v415 = vpop.f32.mrb[0].mxu0
    %416 = vmatprep.mubr.bf16.mxu0 0
    %417 = vmatmul.mubr.bf16.gmra.mrb[0].mxu0 %v253
    %v418 = vpop.f32.mrb[0].mxu0
    %v419 = vadd.f32 0.0, %v418
    %v420 = vpop.f32.mrb[0].mxu0
    %v421 = vpop.f32.mrb[0].mxu0
    %v422 = vadd.f32 0.0, %v421
    %v423 = vpop.f32.mrb[0].mxu0
    %424 = vmatprep.mubr.bf16.mxu0 0
    %425 = vmatmul.mubr.bf16.gmra.mrb[0].mxu0 %v256
    %v426 = vpop.f32.mrb[0].mxu0
    %v427 = vadd.f32 0.0, %v426
    %v428 = vpop.f32.mrb[0].mxu0
    %v429 = vpop.f32.mrb[0].mxu0
    %v430 = vadd.f32 0.0, %v429
    %v431 = vpop.f32.mrb[0].mxu0
    %432 = vmatprep.mubr.bf16.mxu0 0
    %433 = vmatmul.mubr.bf16.gmra.mrb[0].mxu0 %v259
    %v434 = vpop.f32.mrb[0].mxu0
    %v435 = vadd.f32 0.0, %v434
    %v436 = vpop.f32.mrb[0].mxu0
    %v437 = vpop.f32.mrb[0].mxu0
    %v438 = vadd.f32 0.0, %v437
    %v439 = vpop.f32.mrb[0].mxu0
    %440 = vmatprep.mubr.bf16.mxu0 0
    %441 = vmatmul.mubr.bf16.gmra.mrb[0].mxu0 %v262
    %v442 = vpop.f32.mrb[0].mxu0
    %v443 = vadd.f32 0.0, %v442
    %v444 = vpop.f32.mrb[0].mxu0
    %v445 = vpop.f32.mrb[0].mxu0
    %v446 = vadd.f32 0.0, %v445
    %v447 = vpop.f32.mrb[0].mxu0
    %448 = vmatprep.mubr.bf16.mxu0 0
    %449 = vmatmul.mubr.bf16.gmra.mrb[0].mxu0 %v265
    %v450 = vpop.f32.mrb[0].mxu0
    %v451 = vadd.f32 0.0, %v450
    %v452 = vpop.f32.mrb[0].mxu0
    %v453 = vpop.f32.mrb[0].mxu0
    %v454 = vadd.f32 0.0, %v453
    %v455 = vpop.f32.mrb[0].mxu0
    %456 = vmatprep.mubr.bf16.mxu0 0
    %457 = vmatmul.mubr.bf16.gmra.mrb[0].mxu0 %v268
    %v458 = vpop.f32.mrb[0].mxu0
    %v459 = vadd.f32 0.0, %v458
    %v460 = vpop.f32.mrb[0].mxu0
    %v461 = vpop.f32.mrb[0].mxu0
    %v462 = vadd.f32 0.0, %v461
    %v463 = vpop.f32.mrb[0].mxu0
    %464 = vmatprep.mubr.bf16.mxu0 0
    %465 = vmatmul.mubr.bf16.gmra.mrb[0].mxu0 %v271
    %v466 = vpop.f32.mrb[0].mxu0
    %v467 = vadd.f32 0.0, %v466
    %v468 = vpop.f32.mrb[0].mxu0
    %v469 = vpop.f32.mrb[0].mxu0
    %v470 = vadd.f32 0.0, %v469
    %v471 = vpop.f32.mrb[0].mxu0
    %472 = vmatprep.mubr.bf16.mxu0 0
    %473 = vmatmul.mubr.bf16.gmra.mrb[0].mxu0 %v274
    %v474 = vpop.f32.mrb[0].mxu0
    %v475 = vadd.f32 0.0, %v474
    %v476 = vpop.f32.mrb[0].mxu0
    %v477 = vpop.f32.mrb[0].mxu0
    %v478 = vadd.f32 0.0, %v477
    %v479 = vpop.f32.mrb[0].mxu0
    %480 = vmatprep.mubr.bf16.mxu0 0
    %481 = vmatmul.mubr.bf16.gmra.mrb[0].mxu0 %v277
    %v482 = vpop.f32.mrb[0].mxu0
    %v483 = vadd.f32 0.0, %v482
    %v484 = vpop.f32.mrb[0].mxu0
    %v485 = vpop.f32.mrb[0].mxu0
    %v486 = vadd.f32 0.0, %v485
    %v487 = vpop.f32.mrb[0].mxu0
    %488 = vmatprep.mubr.bf16.mxu0 0
    %489 = vmatmul.mubr.bf16.gmra.mrb[0].mxu0 %v280
    %v490 = vpop.f32.mrb[0].mxu0
    %v491 = vadd.f32 0.0, %v490
    %v492 = vpop.f32.mrb[0].mxu0
    %v493 = vpop.f32.mrb[0].mxu0
    %v494 = vadd.f32 0.0, %v493
    %v495 = vpop.f32.mrb[0].mxu0
    %496 = vmatprep.mubr.bf16.mxu0 0
    %497 = vmatmul.mubr.bf16.gmra.mrb[0].mxu0 %v283
    %v498 = vpop.f32.mrb[0].mxu0
    %v499 = vadd.f32 0.0, %v498
    %v500 = vpop.f32.mrb[0].mxu0
    %v501 = vpop.f32.mrb[0].mxu0
    %v502 = vadd.f32 0.0, %v501
    %v503 = vpop.f32.mrb[0].mxu0
    %504 = vmatprep.mubr.bf16.mxu0 0
    %505 = vmatmul.mubr.bf16.gmra.mrb[0].mxu0 %v286
    %v506 = vpop.f32.mrb[0].mxu0
    %v507 = vadd.f32 0.0, %v506
    %v508 = vpop.f32.mrb[0].mxu0
    %v509 = vpop.f32.mrb[0].mxu0
    %v510 = vadd.f32 0.0, %v509
    %v511 = vpop.f32.mrb[0].mxu0
    %512 = vmatprep.mubr.bf16.mxu0 0
    %513 = vmatmul.mubr.bf16.gmra.mrb[0].mxu0 %v289
    %v514 = vpop.f32.mrb[0].mxu0
    %v515 = vadd.f32 0.0, %v514
    %v516 = vpop.f32.mrb[0].mxu0
    %v517 = vpop.f32.mrb[0].mxu0
    %v518 = vadd.f32 0.0, %v517
    %v519 = vpop.f32.mrb[0].mxu0
    %520 = vmatprep.mubr.bf16.mxu0 0
    %521 = vmatmul.mubr.bf16.gmra.mrb[0].mxu0 %v292
    %v522 = vpop.f32.mrb[0].mxu0
    %v523 = vadd.f32 0.0, %v522
    %v524 = vpop.f32.mrb[0].mxu0
    %v525 = vpop.f32.mrb[0].mxu0
    %v526 = vadd.f32 0.0, %v525
    %v527 = vpop.f32.mrb[0].mxu0
    %528 = vmatprep.mubr.bf16.mxu0 0
    %529 = vmatmul.mubr.bf16.gmra.mrb[0].mxu0 %v295
    %v530 = vpop.f32.mrb[0].mxu0
    %v531 = vadd.f32 0.0, %v530
    %v532 = vpop.f32.mrb[0].mxu0
    %v533 = vpop.f32.mrb[0].mxu0
    %v534 = vpop.f32.mrb[0].mxu0
    %535 = vdwg.mxu0
    %vm536 = vcmask 261120
    %v537 = vsel %vm536, %v339, 0.0
    %v538 = vsel %vm536, %v342, 0.0
    %v539 = vadd.f32 %v537, %v538
    %v540 = vsel %vm536, %v347, 0.0
    %v541 = vadd.f32 %v539, %v540
    %v542 = vsel %vm536, %v350, 0.0
    %v543 = vadd.f32 %v541, %v542
    %v544 = vsel %vm536, %v355, 0.0
    %v545 = vadd.f32 %v543, %v544
    %v546 = vsel %vm536, %v358, 0.0
    %v547 = vadd.f32 %v545, %v546
    %v548 = vsel %vm536, %v363, 0.0
    %v549 = vadd.f32 %v547, %v548
    %v550 = vsel %vm536, %v366, 0.0
    %v551 = vadd.f32 %v549, %v550
    %v552 = vsel %vm536, %v371, 0.0
    %v553 = vadd.f32 %v551, %v552
    %v554 = vsel %vm536, %v374, 0.0
    %v555 = vadd.f32 %v553, %v554
    %v556 = vsel %vm536, %v379, 0.0
    %v557 = vadd.f32 %v555, %v556
    %v558 = vsel %vm536, %v382, 0.0
    %v559 = vadd.f32 %v557, %v558
    %v560 = vsel %vm536, %v387, 0.0
    %v561 = vadd.f32 %v559, %v560
    %v562 = vsel %vm536, %v390, 0.0
    %v563 = vadd.f32 %v561, %v562
    %v564 = vsel %vm536, %v395, 0.0
    %v565 = vadd.f32 %v563, %v564
    %v566 = vsel %vm536, %v398, 0.0
    %v567 = vadd.f32 %v565, %v566
    %v568 = vsel %vm536, %v403, 0.0
    %v569 = vadd.f32 %v567, %v568
    %v570 = vsel %vm536, %v406, 0.0
    %v571 = vadd.f32 %v569, %v570
    %v572 = vsel %vm536, %v411, 0.0
    %v573 = vadd.f32 %v571, %v572
    %v574 = vsel %vm536, %v414, 0.0
    %v575 = vadd.f32 %v573, %v574
    %v576 = vsel %vm536, %v419, 0.0
    %v577 = vadd.f32 %v575, %v576
    %v578 = vsel %vm536, %v422, 0.0
    %v579 = vadd.f32 %v577, %v578
    %v580 = vsel %vm536, %v427, 0.0
    %v581 = vadd.f32 %v579, %v580
    %v582 = vsel %vm536, %v430, 0.0
    %v583 = vadd.f32 %v581, %v582
    %v584 = vsel %vm536, %v435, 0.0
    %v585 = vadd.f32 %v583, %v584
    %v586 = vsel %vm536, %v438, 0.0
    %v587 = vadd.f32 %v585, %v586
    %v588 = vsel %vm536, %v443, 0.0
    %v589 = vadd.f32 %v587, %v588
    %v590 = vsel %vm536, %v446, 0.0
    %v591 = vadd.f32 %v589, %v590
    %v592 = vsel %vm536, %v451, 0.0
    %v593 = vadd.f32 %v591, %v592
    %v594 = vsel %vm536, %v454, 0.0
    %v595 = vadd.f32 %v593, %v594
    %v596 = vsel %vm536, %v459, 0.0
    %v597 = vadd.f32 %v595, %v596
    %v598 = vsel %vm536, %v462, 0.0
    %v599 = vadd.f32 %v597, %v598
    %v600 = vsel %vm536, %v467, 0.0
    %v601 = vadd.f32 %v599, %v600
    %v602 = vsel %vm536, %v470, 0.0
    %v603 = vadd.f32 %v601, %v602
    %v604 = vsel %vm536, %v475, 0.0
    %v605 = vadd.f32 %v603, %v604
    %v606 = vsel %vm536, %v478, 0.0
    %v607 = vadd.f32 %v605, %v606
    %v608 = vsel %vm536, %v483, 0.0
    %v609 = vadd.f32 %v607, %v608
    %v610 = vsel %vm536, %v486, 0.0
    %v611 = vadd.f32 %v609, %v610
    %v612 = vsel %vm536, %v491, 0.0
    %v613 = vadd.f32 %v611, %v612
    %v614 = vsel %vm536, %v494, 0.0
    %v615 = vadd.f32 %v613, %v614
    %v616 = vsel %vm536, %v499, 0.0
    %v617 = vadd.f32 %v615, %v616
    %v618 = vsel %vm536, %v502, 0.0
    %v619 = vadd.f32 %v617, %v618
    %v620 = vsel %vm536, %v507, 0.0
    %v621 = vadd.f32 %v619, %v620
    %v622 = vsel %vm536, %v510, 0.0
    %v623 = vadd.f32 %v621, %v622
    %v624 = vsel %vm536, %v515, 0.0
    %v625 = vadd.f32 %v623, %v624
    %v626 = vsel %vm536, %v518, 0.0
    %v627 = vadd.f32 %v625, %v626
    %v628 = vsel %vm536, %v523, 0.0
    %v629 = vadd.f32 %v627, %v628
    %v630 = vsel %vm536, %v526, 0.0
    %v631 = vadd.f32 %v629, %v630
    %v632 = vsel %vm536, %v531, 0.0
    %v633 = vadd.f32 %v631, %v632
    %v634 = vrot.slane %v633, 4
    %v635 = vadd.f32 %v633, %v634
    %v636 = vrot.slane %v635, 2
    %v637 = vadd.f32 %v635, %v636
    %v638 = vrot.slane %v637, 1
    %v639 = vadd.f32 %v637, %v638
    %v640 = vmul.f32 %v339, %v339
    %v641 = vmul.f32 %v342, %v342
    %v642 = vmul.f32 %v347, %v347
    %v643 = vmul.f32 %v350, %v350
    %v644 = vmul.f32 %v355, %v355
    %v645 = vmul.f32 %v358, %v358
    %v646 = vmul.f32 %v363, %v363
    %v647 = vmul.f32 %v366, %v366
    %v648 = vmul.f32 %v371, %v371
    %v649 = vmul.f32 %v374, %v374
    %v650 = vmul.f32 %v379, %v379
    %v651 = vmul.f32 %v382, %v382
    %v652 = vmul.f32 %v387, %v387
    %v653 = vmul.f32 %v390, %v390
    %v654 = vmul.f32 %v395, %v395
    %v655 = vmul.f32 %v398, %v398
    %v656 = vmul.f32 %v403, %v403
    %v657 = vmul.f32 %v406, %v406
    %v658 = vmul.f32 %v411, %v411
    %v659 = vmul.f32 %v414, %v414
    %v660 = vmul.f32 %v419, %v419
    %v661 = vmul.f32 %v422, %v422
    %v662 = vmul.f32 %v427, %v427
    %v663 = vmul.f32 %v430, %v430
    %v664 = vmul.f32 %v435, %v435
    %v665 = vmul.f32 %v438, %v438
    %v666 = vmul.f32 %v443, %v443
    %v667 = vmul.f32 %v446, %v446
    %v668 = vmul.f32 %v451, %v451
    %v669 = vmul.f32 %v454, %v454
    %v670 = vmul.f32 %v459, %v459
    %v671 = vmul.f32 %v462, %v462
    %v672 = vmul.f32 %v467, %v467
    %v673 = vmul.f32 %v470, %v470
    %v674 = vmul.f32 %v475, %v475
    %v675 = vmul.f32 %v478, %v478
    %v676 = vmul.f32 %v483, %v483
    %v677 = vmul.f32 %v486, %v486
    %v678 = vmul.f32 %v491, %v491
    %v679 = vmul.f32 %v494, %v494
    %v680 = vmul.f32 %v499, %v499
    %v681 = vmul.f32 %v502, %v502
    %v682 = vmul.f32 %v507, %v507
    %v683 = vmul.f32 %v510, %v510
    %v684 = vmul.f32 %v515, %v515
    %v685 = vmul.f32 %v518, %v518
    %v686 = vmul.f32 %v523, %v523
    %v687 = vmul.f32 %v526, %v526
    %v688 = vmul.f32 %v531, %v531
    %v689 = vsel %vm536, %v640, 0.0
    %v690 = vsel %vm536, %v641, 0.0
    %v691 = vadd.f32 %v689, %v690
    %v692 = vsel %vm536, %v642, 0.0
    %v693 = vadd.f32 %v691, %v692
    %v694 = vsel %vm536, %v643, 0.0
    %v695 = vadd.f32 %v693, %v694
    %v696 = vsel %vm536, %v644, 0.0
    %v697 = vadd.f32 %v695, %v696
    %v698 = vsel %vm536, %v645, 0.0
    %v699 = vadd.f32 %v697, %v698
    %v700 = vsel %vm536, %v646, 0.0
    %v701 = vadd.f32 %v699, %v700
    %v702 = vsel %vm536, %v647, 0.0
    %v703 = vadd.f32 %v701, %v702
    %v704 = vsel %vm536, %v648, 0.0
    %v705 = vadd.f32 %v703, %v704
    %v706 = vsel %vm536, %v649, 0.0
    %v707 = vadd.f32 %v705, %v706
    %v708 = vsel %vm536, %v650, 0.0
    %v709 = vadd.f32 %v707, %v708
    %v710 = vsel %vm536, %v651, 0.0
    %v711 = vadd.f32 %v709, %v710
    %v712 = vsel %vm536, %v652, 0.0
    %v713 = vadd.f32 %v711, %v712
    %v714 = vsel %vm536, %v653, 0.0
    %v715 = vadd.f32 %v713, %v714
    %v716 = vsel %vm536, %v654, 0.0
    %v717 = vadd.f32 %v715, %v716
    %v718 = vsel %vm536, %v655, 0.0
    %v719 = vadd.f32 %v717, %v718
    %v720 = vsel %vm536, %v656, 0.0
    %v721 = vadd.f32 %v719, %v720
    %v722 = vsel %vm536, %v657, 0.0
    %v723 = vadd.f32 %v721, %v722
    %v724 = vsel %vm536, %v658, 0.0
    %v725 = vadd.f32 %v723, %v724
    %v726 = vsel %vm536, %v659, 0.0
    %v727 = vadd.f32 %v725, %v726
    %v728 = vsel %vm536, %v660, 0.0
    %v729 = vadd.f32 %v727, %v728
    %v730 = vsel %vm536, %v661, 0.0
    %v731 = vadd.f32 %v729, %v730
    %v732 = vsel %vm536, %v662, 0.0
    %v733 = vadd.f32 %v731, %v732
    %v734 = vsel %vm536, %v663, 0.0
    %v735 = vadd.f32 %v733, %v734
    %v736 = vsel %vm536, %v664, 0.0
    %v737 = vadd.f32 %v735, %v736
    %v738 = vsel %vm536, %v665, 0.0
    %v739 = vadd.f32 %v737, %v738
    %v740 = vsel %vm536, %v666, 0.0
    %v741 = vadd.f32 %v739, %v740
    %v742 = vsel %vm536, %v667, 0.0
    %v743 = vadd.f32 %v741, %v742
    %v744 = vsel %vm536, %v668, 0.0
    %v745 = vadd.f32 %v743, %v744
    %v746 = vsel %vm536, %v669, 0.0
    %v747 = vadd.f32 %v745, %v746
    %v748 = vsel %vm536, %v670, 0.0
    %v749 = vadd.f32 %v747, %v748
    %v750 = vsel %vm536, %v671, 0.0
    %v751 = vadd.f32 %v749, %v750
    %v752 = vsel %vm536, %v672, 0.0
    %v753 = vadd.f32 %v751, %v752
    %v754 = vsel %vm536, %v673, 0.0
    %v755 = vadd.f32 %v753, %v754
    %v756 = vsel %vm536, %v674, 0.0
    %v757 = vadd.f32 %v755, %v756
    %v758 = vsel %vm536, %v675, 0.0
    %v759 = vadd.f32 %v757, %v758
    %v760 = vsel %vm536, %v676, 0.0
    %v761 = vadd.f32 %v759, %v760
    %v762 = vsel %vm536, %v677, 0.0
    %v763 = vadd.f32 %v761, %v762
    %v764 = vsel %vm536, %v678, 0.0
    %v765 = vadd.f32 %v763, %v764
    %v766 = vsel %vm536, %v679, 0.0
    %v767 = vadd.f32 %v765, %v766
    %v768 = vsel %vm536, %v680, 0.0
    %v769 = vadd.f32 %v767, %v768
    %v770 = vsel %vm536, %v681, 0.0
    %v771 = vadd.f32 %v769, %v770
    %v772 = vsel %vm536, %v682, 0.0
    %v773 = vadd.f32 %v771, %v772
    %v774 = vsel %vm536, %v683, 0.0
    %v775 = vadd.f32 %v773, %v774
    %v776 = vsel %vm536, %v684, 0.0
    %v777 = vadd.f32 %v775, %v776
    %v778 = vsel %vm536, %v685, 0.0
    %v779 = vadd.f32 %v777, %v778
    %v780 = vsel %vm536, %v686, 0.0
    %v781 = vadd.f32 %v779, %v780
    %v782 = vsel %vm536, %v687, 0.0
    %v783 = vadd.f32 %v781, %v782
    %v784 = vsel %vm536, %v688, 0.0
    %v785 = vadd.f32 %v783, %v784
    %v786 = vrot.slane %v785, 4
    %v787 = vadd.f32 %v785, %v786
    %v788 = vrot.slane %v787, 2
    %v789 = vadd.f32 %v787, %v788
    %v790 = vrot.slane %v789, 1
    %v791 = vadd.f32 %v789, %v790
    %v792 = vrcp.pop 392.0
    %v793 = vmul.f32 %v639, %v792
    %v794 = vmul.f32 %v791, %v792
    %v795 = vmul.f32 %v793, %v793
    %v796 = vsub.f32 %v794, %v795
    %v797 = vadd.f32 %v796, 1e-05
    %v798 = vrsqrt.pop %v797
    %v799 = vld [vmem:[#allocation2] sm:$0x1]
    %v800 = vmul.f32 %v799, %v798
    %v801 = vld [vmem:[#allocation4] sm:$0x1]
    %v802 = vmul.f32 %v793, %v800
    %v803 = vsub.f32 %v801, %v802
    %v805 = vlaneseq
    %v806 = vshrl.u32 %v805, 7
    %v807 = vsub.s32 0, %v806
    %v808 = vrot.slane %v800, %v807
    %v810 = vmul.f32 %v339, %v808
    %v811 = vmul.f32 %v342, %v808
    %v812 = vmul.f32 %v347, %v808
    %v813 = vmul.f32 %v350, %v808
    %v814 = vmul.f32 %v355, %v808
    %v815 = vmul.f32 %v358, %v808
    %v816 = vmul.f32 %v363, %v808
    %v817 = vmul.f32 %v366, %v808
    %v818 = vmul.f32 %v371, %v808
    %v819 = vmul.f32 %v374, %v808
    %v820 = vmul.f32 %v379, %v808
    %v821 = vmul.f32 %v382, %v808
    %v822 = vmul.f32 %v387, %v808
    %v823 = vmul.f32 %v390, %v808
    %v824 = vmul.f32 %v395, %v808
    %v825 = vmul.f32 %v398, %v808
    %v826 = vmul.f32 %v403, %v808
    %v827 = vmul.f32 %v406, %v808
    %v828 = vmul.f32 %v411, %v808
    %v829 = vmul.f32 %v414, %v808
    %v830 = vmul.f32 %v419, %v808
    %v831 = vmul.f32 %v422, %v808
    %v832 = vmul.f32 %v427, %v808
    %v833 = vmul.f32 %v430, %v808
    %v834 = vmul.f32 %v435, %v808
    %v835 = vmul.f32 %v438, %v808
    %v836 = vmul.f32 %v443, %v808
    %v837 = vmul.f32 %v446, %v808
    %v838 = vmul.f32 %v451, %v808
    %v839 = vmul.f32 %v454, %v808
    %v840 = vmul.f32 %v459, %v808
    %v841 = vmul.f32 %v462, %v808
    %v842 = vmul.f32 %v467, %v808
    %v843 = vmul.f32 %v470, %v808
    %v844 = vmul.f32 %v475, %v808
    %v845 = vmul.f32 %v478, %v808
    %v846 = vmul.f32 %v483, %v808
    %v847 = vmul.f32 %v486, %v808
    %v848 = vmul.f32 %v491, %v808
    %v849 = vmul.f32 %v494, %v808
    %v850 = vmul.f32 %v499, %v808
    %v851 = vmul.f32 %v502, %v808
    %v852 = vmul.f32 %v507, %v808
    %v853 = vmul.f32 %v510, %v808
    %v854 = vmul.f32 %v515, %v808
    %v855 = vmul.f32 %v518, %v808
    %v856 = vmul.f32 %v523, %v808
    %v857 = vmul.f32 %v526, %v808
    %v858 = vmul.f32 %v531, %v808
    %v860 = vlaneseq
    %v861 = vshrl.u32 %v860, 7
    %v862 = vsub.s32 0, %v861
    %v863 = vrot.slane %v803, %v862
    %v865 = vadd.f32 %v810, %v863
    %v866 = vadd.f32 %v811, %v863
    %v867 = vadd.f32 %v812, %v863
    %v868 = vadd.f32 %v813, %v863
    %v869 = vadd.f32 %v814, %v863
    %v870 = vadd.f32 %v815, %v863
    %v871 = vadd.f32 %v816, %v863
    %v872 = vadd.f32 %v817, %v863
    %v873 = vadd.f32 %v818, %v863
    %v874 = vadd.f32 %v819, %v863
    %v875 = vadd.f32 %v820, %v863
    %v876 = vadd.f32 %v821, %v863
    %v877 = vadd.f32 %v822, %v863
    %v878 = vadd.f32 %v823, %v863
    %v879 = vadd.f32 %v824, %v863
    %v880 = vadd.f32 %v825, %v863
    %v881 = vadd.f32 %v826, %v863
    %v882 = vadd.f32 %v827, %v863
    %v883 = vadd.f32 %v828, %v863
    %v884 = vadd.f32 %v829, %v863
    %v885 = vadd.f32 %v830, %v863
    %v886 = vadd.f32 %v831, %v863
    %v887 = vadd.f32 %v832, %v863
    %v888 = vadd.f32 %v833, %v863
    %v889 = vadd.f32 %v834, %v863
    %v890 = vadd.f32 %v835, %v863
    %v891 = vadd.f32 %v836, %v863
    %v892 = vadd.f32 %v837, %v863
    %v893 = vadd.f32 %v838, %v863
    %v894 = vadd.f32 %v839, %v863
    %v895 = vadd.f32 %v840, %v863
    %v896 = vadd.f32 %v841, %v863
    %v897 = vadd.f32 %v842, %v863
    %v898 = vadd.f32 %v843, %v863
    %v899 = vadd.f32 %v844, %v863
    %v900 = vadd.f32 %v845, %v863
    %v901 = vadd.f32 %v846, %v863
    %v902 = vadd.f32 %v847, %v863
    %v903 = vadd.f32 %v848, %v863
    %v904 = vadd.f32 %v849, %v863
    %v905 = vadd.f32 %v850, %v863
    %v906 = vadd.f32 %v851, %v863
    %v907 = vadd.f32 %v852, %v863
    %v908 = vadd.f32 %v853, %v863
    %v909 = vadd.f32 %v854, %v863
    %v910 = vadd.f32 %v855, %v863
    %v911 = vadd.f32 %v856, %v863
    %v912 = vadd.f32 %v857, %v863
    %v913 = vadd.f32 %v858, %v863
    %vm914 = vcmp.ge.f32.partialorder %v865, 0.0
    %vm915 = vcmp.ge.f32.partialorder %v866, 0.0
    %vm916 = vcmp.ge.f32.partialorder %v867, 0.0
    %vm917 = vcmp.ge.f32.partialorder %v868, 0.0
    %vm918 = vcmp.ge.f32.partialorder %v869, 0.0
    %vm919 = vcmp.ge.f32.partialorder %v870, 0.0
    %vm920 = vcmp.ge.f32.partialorder %v871, 0.0
    %vm921 = vcmp.ge.f32.partialorder %v872, 0.0
    %vm922 = vcmp.ge.f32.partialorder %v873, 0.0
    %vm923 = vcmp.ge.f32.partialorder %v874, 0.0
    %vm924 = vcmp.ge.f32.partialorder %v875, 0.0
    %vm925 = vcmp.ge.f32.partialorder %v876, 0.0
    %vm926 = vcmp.ge.f32.partialorder %v877, 0.0
    %vm927 = vcmp.ge.f32.partialorder %v878, 0.0
    %vm928 = vcmp.ge.f32.partialorder %v879, 0.0
    %vm929 = vcmp.ge.f32.partialorder %v880, 0.0
    %vm930 = vcmp.ge.f32.partialorder %v881, 0.0
    %vm931 = vcmp.ge.f32.partialorder %v882, 0.0
    %vm932 = vcmp.ge.f32.partialorder %v883, 0.0
    %vm933 = vcmp.ge.f32.partialorder %v884, 0.0
    %vm934 = vcmp.ge.f32.partialorder %v885, 0.0
    %vm935 = vcmp.ge.f32.partialorder %v886, 0.0
    %vm936 = vcmp.ge.f32.partialorder %v887, 0.0
    %vm937 = vcmp.ge.f32.partialorder %v888, 0.0
    %vm938 = vcmp.ge.f32.partialorder %v889, 0.0
    %vm939 = vcmp.ge.f32.partialorder %v890, 0.0
    %vm940 = vcmp.ge.f32.partialorder %v891, 0.0
    %vm941 = vcmp.ge.f32.partialorder %v892, 0.0
    %vm942 = vcmp.ge.f32.partialorder %v893, 0.0
    %vm943 = vcmp.ge.f32.partialorder %v894, 0.0
    %vm944 = vcmp.ge.f32.partialorder %v895, 0.0
    %vm945 = vcmp.ge.f32.partialorder %v896, 0.0
    %vm946 = vcmp.ge.f32.partialorder %v897, 0.0
    %vm947 = vcmp.ge.f32.partialorder %v898, 0.0
    %vm948 = vcmp.ge.f32.partialorder %v899, 0.0
    %vm949 = vcmp.ge.f32.partialorder %v900, 0.0
    %vm950 = vcmp.ge.f32.partialorder %v901, 0.0
    %vm951 = vcmp.ge.f32.partialorder %v902, 0.0
    %vm952 = vcmp.ge.f32.partialorder %v903, 0.0
    %vm953 = vcmp.ge.f32.partialorder %v904, 0.0
    %vm954 = vcmp.ge.f32.partialorder %v905, 0.0
    %vm955 = vcmp.ge.f32.partialorder %v906, 0.0
    %vm956 = vcmp.ge.f32.partialorder %v907, 0.0
    %vm957 = vcmp.ge.f32.partialorder %v908, 0.0
    %vm958 = vcmp.ge.f32.partialorder %v909, 0.0
    %vm959 = vcmp.ge.f32.partialorder %v910, 0.0
    %vm960 = vcmp.ge.f32.partialorder %v911, 0.0
    %vm961 = vcmp.ge.f32.partialorder %v912, 0.0
    %vm962 = vcmp.ge.f32.partialorder %v913, 0.0
    %v963 = vmul.f32 %v865, 0.01
    %v964 = vmul.f32 %v866, 0.01
    %v965 = vmul.f32 %v867, 0.01
    %v966 = vmul.f32 %v868, 0.01
    %v967 = vmul.f32 %v869, 0.01
    %v968 = vmul.f32 %v870, 0.01
    %v969 = vmul.f32 %v871, 0.01
    %v970 = vmul.f32 %v872, 0.01
    %v971 = vmul.f32 %v873, 0.01
    %v972 = vmul.f32 %v874, 0.01
    %v973 = vmul.f32 %v875, 0.01
    %v974 = vmul.f32 %v876, 0.01
    %v975 = vmul.f32 %v877, 0.01
    %v976 = vmul.f32 %v878, 0.01
    %v977 = vmul.f32 %v879, 0.01
    %v978 = vmul.f32 %v880, 0.01
    %v979 = vmul.f32 %v881, 0.01
    %v980 = vmul.f32 %v882, 0.01
    %v981 = vmul.f32 %v883, 0.01
    %v982 = vmul.f32 %v884, 0.01
    %v983 = vmul.f32 %v885, 0.01
    %v984 = vmul.f32 %v886, 0.01
    %v985 = vmul.f32 %v887, 0.01
    %v986 = vmul.f32 %v888, 0.01
    %v987 = vmul.f32 %v889, 0.01
    %v988 = vmul.f32 %v890, 0.01
    %v989 = vmul.f32 %v891, 0.01
    %v990 = vmul.f32 %v892, 0.01
    %v991 = vmul.f32 %v893, 0.01
    %v992 = vmul.f32 %v894, 0.01
    %v993 = vmul.f32 %v895, 0.01
    %v994 = vmul.f32 %v896, 0.01
    %v995 = vmul.f32 %v897, 0.01
    %v996 = vmul.f32 %v898, 0.01
    %v997 = vmul.f32 %v899, 0.01
    %v998 = vmul.f32 %v900, 0.01
    %v999 = vmul.f32 %v901, 0.01
    %v1000 = vmul.f32 %v902, 0.01
    %v1001 = vmul.f32 %v903, 0.01
    %v1002 = vmul.f32 %v904, 0.01
    %v1003 = vmul.f32 %v905, 0.01
    %v1004 = vmul.f32 %v906, 0.01
    %v1005 = vmul.f32 %v907, 0.01
    %v1006 = vmul.f32 %v908, 0.01
    %v1007 = vmul.f32 %v909, 0.01
    %v1008 = vmul.f32 %v910, 0.01
    %v1009 = vmul.f32 %v911, 0.01
    %v1010 = vmul.f32 %v912, 0.01
    %v1011 = vmul.f32 %v913, 0.01
    %v1012 = vsel %vm914, %v865, %v963
    %v1013 = vsel %vm915, %v866, %v964
    %v1014 = vsel %vm916, %v867, %v965
    %v1015 = vsel %vm917, %v868, %v966
    %v1016 = vsel %vm918, %v869, %v967
    %v1017 = vsel %vm919, %v870, %v968
    %v1018 = vsel %vm920, %v871, %v969
    %v1019 = vsel %vm921, %v872, %v970
    %v1020 = vsel %vm922, %v873, %v971
    %v1021 = vsel %vm923, %v874, %v972
    %v1022 = vsel %vm924, %v875, %v973
    %v1023 = vsel %vm925, %v876, %v974
    %v1024 = vsel %vm926, %v877, %v975
    %v1025 = vsel %vm927, %v878, %v976
    %v1026 = vsel %vm928, %v879, %v977
    %v1027 = vsel %vm929, %v880, %v978
    %v1028 = vsel %vm930, %v881, %v979
    %v1029 = vsel %vm931, %v882, %v980
    %v1030 = vsel %vm932, %v883, %v981
    %v1031 = vsel %vm933, %v884, %v982
    %v1032 = vsel %vm934, %v885, %v983
    %v1033 = vsel %vm935, %v886, %v984
    %v1034 = vsel %vm936, %v887, %v985
    %v1035 = vsel %vm937, %v888, %v986
    %v1036 = vsel %vm938, %v889, %v987
    %v1037 = vsel %vm939, %v890, %v988
    %v1038 = vsel %vm940, %v891, %v989
    %v1039 = vsel %vm941, %v892, %v990
    %v1040 = vsel %vm942, %v893, %v991
    %v1041 = vsel %vm943, %v894, %v992
    %v1042 = vsel %vm944, %v895, %v993
    %v1043 = vsel %vm945, %v896, %v994
    %v1044 = vsel %vm946, %v897, %v995
    %v1045 = vsel %vm947, %v898, %v996
    %v1046 = vsel %vm948, %v899, %v997
    %v1047 = vsel %vm949, %v900, %v998
    %v1048 = vsel %vm950, %v901, %v999
    %v1049 = vsel %vm951, %v902, %v1000
    %v1050 = vsel %vm952, %v903, %v1001
    %v1051 = vsel %vm953, %v904, %v1002
    %v1052 = vsel %vm954, %v905, %v1003
    %v1053 = vsel %vm955, %v906, %v1004
    %v1054 = vsel %vm956, %v907, %v1005
    %v1055 = vsel %vm957, %v908, %v1006
    %v1056 = vsel %vm958, %v909, %v1007
    %v1057 = vsel %vm959, %v910, %v1008
    %v1058 = vsel %vm960, %v911, %v1009
    %v1059 = vsel %vm961, %v912, %v1010
    %v1060 = vsel %vm962, %v913, %v1011
    %v1061 = vpack.c.bf16 %v1013, %v1012
    %v1062 = vpack.c.bf16 %v1015, %v1014
    %v1063 = vpack.c.bf16 %v1017, %v1016
    %v1064 = vpack.c.bf16 %v1019, %v1018
    %v1065 = vpack.c.bf16 %v1021, %v1020
    %v1066 = vpack.c.bf16 %v1023, %v1022
    %v1067 = vpack.c.bf16 %v1025, %v1024
    %v1068 = vpack.c.bf16 %v1027, %v1026
    %v1069 = vpack.c.bf16 %v1029, %v1028
    %v1070 = vpack.c.bf16 %v1031, %v1030
    %v1071 = vpack.c.bf16 %v1033, %v1032
    %v1072 = vpack.c.bf16 %v1035, %v1034
    %v1073 = vpack.c.bf16 %v1037, %v1036
    %v1074 = vpack.c.bf16 %v1039, %v1038
    %v1075 = vpack.c.bf16 %v1041, %v1040
    %v1076 = vpack.c.bf16 %v1043, %v1042
    %v1077 = vpack.c.bf16 %v1045, %v1044
    %v1078 = vpack.c.bf16 %v1047, %v1046
    %v1079 = vpack.c.bf16 %v1049, %v1048
    %v1080 = vpack.c.bf16 %v1051, %v1050
    %v1081 = vpack.c.bf16 %v1053, %v1052
    %v1082 = vpack.c.bf16 %v1055, %v1054
    %v1083 = vpack.c.bf16 %v1057, %v1056
    %v1084 = vpack.c.bf16 %v1059, %v1058
    %v1085 = vpack.c.bf16 %v1060, %v1060
    %v1111 = vunpack.c.l.b16 %v1061
    %v1112 = vunpack.c.h.b16 %v1061
    %v1113 = vunpack.c.l.b16 %v1062
    %v1114 = vunpack.c.h.b16 %v1062
    %v1115 = vunpack.c.l.b16 %v1063
    %v1116 = vunpack.c.h.b16 %v1063
    %v1117 = vunpack.c.l.b16 %v1064
    %v1118 = vunpack.c.h.b16 %v1064
    %v1119 = vunpack.c.l.b16 %v1065
    %v1120 = vunpack.c.h.b16 %v1065
    %v1121 = vunpack.c.l.b16 %v1066
    %v1122 = vunpack.c.h.b16 %v1066
    %v1123 = vunpack.c.l.b16 %v1067
    %v1124 = vunpack.c.h.b16 %v1067
    %v1125 = vunpack.c.l.b16 %v1068
    %v1126 = vunpack.c.h.b16 %v1068
    %v1127 = vunpack.c.l.b16 %v1069
    %v1128 = vunpack.c.h.b16 %v1069
    %v1129 = vunpack.c.l.b16 %v1070
    %v1130 = vunpack.c.h.b16 %v1070
    %v1131 = vunpack.c.l.b16 %v1071
    %v1132 = vunpack.c.h.b16 %v1071
    %v1133 = vunpack.c.l.b16 %v1072
    %v1134 = vunpack.c.h.b16 %v1072
    %v1135 = vunpack.c.l.b16 %v1073
    %v1136 = vunpack.c.h.b16 %v1073
    %v1137 = vunpack.c.l.b16 %v1074
    %v1138 = vunpack.c.h.b16 %v1074
    %v1139 = vunpack.c.l.b16 %v1075
    %v1140 = vunpack.c.h.b16 %v1075
    %v1141 = vunpack.c.l.b16 %v1076
    %v1142 = vunpack.c.h.b16 %v1076
    %v1143 = vunpack.c.l.b16 %v1077
    %v1144 = vunpack.c.h.b16 %v1077
    %v1145 = vunpack.c.l.b16 %v1078
    %v1146 = vunpack.c.h.b16 %v1078
    %v1147 = vunpack.c.l.b16 %v1079
    %v1148 = vunpack.c.h.b16 %v1079
    %v1149 = vunpack.c.l.b16 %v1080
    %v1150 = vunpack.c.h.b16 %v1080
    %v1151 = vunpack.c.l.b16 %v1081
    %v1152 = vunpack.c.h.b16 %v1081
    %v1153 = vunpack.c.l.b16 %v1082
    %v1154 = vunpack.c.h.b16 %v1082
    %v1155 = vunpack.c.l.b16 %v1083
    %v1156 = vunpack.c.h.b16 %v1083
    %v1157 = vunpack.c.l.b16 %v1084
    %v1158 = vunpack.c.h.b16 %v1084
    %v1159 = vunpack.c.l.b16 %v1085
    %v1160 = vpack.c.b16 %v1111, %v1111
    %v1161 = vpack.c.b16 %v1112, %v1112
    %v1162 = vpack.c.b16 %v1113, %v1113
    %v1163 = vpack.c.b16 %v1114, %v1114
    %v1164 = vpack.c.b16 %v1115, %v1115
    %v1165 = vpack.c.b16 %v1116, %v1116
    %v1166 = vpack.c.b16 %v1117, %v1117
    %v1167 = vpack.c.b16 %v1118, %v1118
    %v1168 = vpack.c.b16 %v1119, %v1119
    %v1169 = vpack.c.b16 %v1120, %v1120
    %v1170 = vpack.c.b16 %v1121, %v1121
    %v1171 = vpack.c.b16 %v1122, %v1122
    %v1172 = vpack.c.b16 %v1123, %v1123
    %v1173 = vpack.c.b16 %v1124, %v1124
    %v1174 = vpack.c.b16 %v1125, %v1125
    %v1175 = vpack.c.b16 %v1126, %v1126
    %v1176 = vpack.c.b16 %v1127, %v1127
    %v1177 = vpack.c.b16 %v1128, %v1128
    %v1178 = vpack.c.b16 %v1129, %v1129
    %v1179 = vpack.c.b16 %v1130, %v1130
    %v1180 = vpack.c.b16 %v1131, %v1131
    %v1181 = vpack.c.b16 %v1132, %v1132
    %v1182 = vpack.c.b16 %v1133, %v1133
    %v1183 = vpack.c.b16 %v1134, %v1134
    %v1184 = vpack.c.b16 %v1135, %v1135
    %v1185 = vpack.c.b16 %v1136, %v1136
    %v1186 = vpack.c.b16 %v1137, %v1137
    %v1187 = vpack.c.b16 %v1138, %v1138
    %v1188 = vpack.c.b16 %v1139, %v1139
    %v1189 = vpack.c.b16 %v1140, %v1140
    %v1190 = vpack.c.b16 %v1141, %v1141
    %v1191 = vpack.c.b16 %v1142, %v1142
    %v1192 = vpack.c.b16 %v1143, %v1143
    %v1193 = vpack.c.b16 %v1144, %v1144
    %v1194 = vpack.c.b16 %v1145, %v1145
    %v1195 = vpack.c.b16 %v1146, %v1146
    %v1196 = vpack.c.b16 %v1147, %v1147
    %v1197 = vpack.c.b16 %v1148, %v1148
    %v1198 = vpack.c.b16 %v1149, %v1149
    %v1199 = vpack.c.b16 %v1150, %v1150
    %v1200 = vpack.c.b16 %v1151, %v1151
    %v1201 = vpack.c.b16 %v1152, %v1152
    %v1202 = vpack.c.b16 %v1153, %v1153
    %v1203 = vpack.c.b16 %v1154, %v1154
    %v1204 = vpack.c.b16 %v1155, %v1155
    %v1205 = vpack.c.b16 %v1156, %v1156
    %v1206 = vpack.c.b16 %v1157, %v1157
    %v1207 = vpack.c.b16 %v1158, %v1158
    %v1208 = vpack.c.b16 %v1159, %v1159
    %vm1258 = vcmask 257024
    %1259 = vst.msk [vmem:[%s4] sm:$0xf] %vm1258, %v1160
    %1260 = vst.msk [vmem:[%s4 + $0x4] sm:$0xf] %vm1258, %v1161
    %1261 = vst.msk [vmem:[%s4 + $0x8] sm:$0xf] %vm1258, %v1162
    %1262 = vst.msk [vmem:[%s4 + $0xc] sm:$0xf] %vm1258, %v1163
    %1263 = vst.msk [vmem:[%s4 + $0x10] sm:$0xf] %vm1258, %v1164
    %1264 = vst.msk [vmem:[%s4 + $0x14] sm:$0xf] %vm1258, %v1165
    %1265 = vst.msk [vmem:[%s4 + $0x18] sm:$0xf] %vm1258, %v1166
    %1266 = vst.msk [vmem:[%s4 + $0x1c] sm:$0xf] %vm1258, %v1167
    %1267 = vst.msk [vmem:[%s4 + $0x20] sm:$0xf] %vm1258, %v1168
    %1268 = vst.msk [vmem:[%s4 + $0x24] sm:$0xf] %vm1258, %v1169
    %1269 = vst.msk [vmem:[%s4 + $0x28] sm:$0xf] %vm1258, %v1170
    %1270 = vst.msk [vmem:[%s4 + $0x2c] sm:$0xf] %vm1258, %v1171
    %1271 = vst.msk [vmem:[%s4 + $0x30] sm:$0xf] %vm1258, %v1172
    %1272 = vst.msk [vmem:[%s4 + $0x34] sm:$0xf] %vm1258, %v1173
    %1273 = vst.msk [vmem:[%s4 + $0x38] sm:$0xf] %vm1258, %v1174
    %1274 = vst.msk [vmem:[%s4 + $0x3c] sm:$0xf] %vm1258, %v1175
    %1275 = vst.msk [vmem:[%s4 + $0x40] sm:$0xf] %vm1258, %v1176
    %1276 = vst.msk [vmem:[%s4 + $0x44] sm:$0xf] %vm1258, %v1177
    %1277 = vst.msk [vmem:[%s4 + $0x48] sm:$0xf] %vm1258, %v1178
    %1278 = vst.msk [vmem:[%s4 + $0x4c] sm:$0xf] %vm1258, %v1179
    %1279 = vst.msk [vmem:[%s4 + $0x50] sm:$0xf] %vm1258, %v1180
    %1280 = vst.msk [vmem:[%s4 + $0x54] sm:$0xf] %vm1258, %v1181
    %1281 = vst.msk [vmem:[%s4 + $0x58] sm:$0xf] %vm1258, %v1182
    %1282 = vst.msk [vmem:[%s4 + $0x5c] sm:$0xf] %vm1258, %v1183
    %1283 = vst.msk [vmem:[%s4 + $0x60] sm:$0xf] %vm1258, %v1184
    %1284 = vst.msk [vmem:[%s4 + $0x64] sm:$0xf] %vm1258, %v1185
    %1285 = vst.msk [vmem:[%s4 + $0x68] sm:$0xf] %vm1258, %v1186
    %1286 = vst.msk [vmem:[%s4 + $0x6c] sm:$0xf] %vm1258, %v1187
    %1287 = vst.msk [vmem:[%s4 + $0x70] sm:$0xf] %vm1258, %v1188
    %1288 = vst.msk [vmem:[%s4 + $0x74] sm:$0xf] %vm1258, %v1189
    %1289 = vst.msk [vmem:[%s4 + $0x78] sm:$0xf] %vm1258, %v1190
    %1290 = vst.msk [vmem:[%s4 + $0x7c] sm:$0xf] %vm1258, %v1191
    %1291 = vst.msk [vmem:[%s4 + $0x80] sm:$0xf] %vm1258, %v1192
    %1292 = vst.msk [vmem:[%s4 + $0x84] sm:$0xf] %vm1258, %v1193
    %1293 = vst.msk [vmem:[%s4 + $0x88] sm:$0xf] %vm1258, %v1194
    %1294 = vst.msk [vmem:[%s4 + $0x8c] sm:$0xf] %vm1258, %v1195
    %1295 = vst.msk [vmem:[%s4 + $0x90] sm:$0xf] %vm1258, %v1196
    %1296 = vst.msk [vmem:[%s4 + $0x94] sm:$0xf] %vm1258, %v1197
    %1297 = vst.msk [vmem:[%s4 + $0x98] sm:$0xf] %vm1258, %v1198
    %1298 = vst.msk [vmem:[%s4 + $0x9c] sm:$0xf] %vm1258, %v1199
    %1299 = vst.msk [vmem:[%s4 + $0xa0] sm:$0xf] %vm1258, %v1200
    %1300 = vst.msk [vmem:[%s4 + $0xa4] sm:$0xf] %vm1258, %v1201
    %1301 = vst.msk [vmem:[%s4 + $0xa8] sm:$0xf] %vm1258, %v1202
    %1302 = vst.msk [vmem:[%s4 + $0xac] sm:$0xf] %vm1258, %v1203
    %1303 = vst.msk [vmem:[%s4 + $0xb0] sm:$0xf] %vm1258, %v1204
    %1304 = vst.msk [vmem:[%s4 + $0xb4] sm:$0xf] %vm1258, %v1205
    %1305 = vst.msk [vmem:[%s4 + $0xb8] sm:$0xf] %vm1258, %v1206
    %1306 = vst.msk [vmem:[%s4 + $0xbc] sm:$0xf] %vm1258, %v1207
    %1307 = vst.msk [vmem:[%s4 + $0xc0] sm:$0xf] %vm1258, %v1208
    // Predicated region
    $region26: #{vae_forward.6} parent=1 // pred_check
      _
    $region27: #{vae_forward.6} parent=1 // pred_check_branch
      %1309 = sbr.rel (0) target = $region29
    $region28: #{vae_forward.6} parent=1 // pred_region
      _
    $region29: #{vae_forward.6} parent=1 // pred_fallthru
      _
    // Predicated region
    $region30: #{vae_forward.6} parent=1 // pred_check
      _
    $region31: #{vae_forward.6} parent=1 // pred_check_branch
      %1311 = sbr.rel (0) target = $region33
    $region32: #{vae_forward.6} parent=1 // pred_region
      _
    $region33: #{vae_forward.6} parent=1 // pred_fallthru
      _
    %1312 = vsyncpa [#allocation3], 1
    %1313 = vsyncpa [#allocation5], 1

// kernel: vae_forward.7
$region0: #{vae_forward.7}
  #allocation0 [shape = 'u32[]', space=smem, size = 0x4, offset = 0x4, fixed_abs, tag = 'smem constant byte address 0x4 - core index']
  #allocation1 [shape = 'u32[144,128]{1,0:T(1,128)}', space=vmem, size = 0x12000, scoped, tag = 'internal scratch']
  %s0 = inlined_call_operand.vmem [shape: bf16[98,288], index: 0, kind: input, shape index: {}]
  %s1 = inlined_call_operand.vmem [shape: bf16[288,64], index: 1, kind: input, shape index: {}]
  %s2 = inlined_call_operand.vmem [shape: f32[1,64], index: 2, kind: input, shape index: {}]
  %s3 = inlined_call_operand.vmem [shape: f32[1,64], index: 3, kind: input, shape index: {}]
  %s4 = inlined_call_operand.vmem [shape: bf16[98,64], index: 4, kind: output, shape index: {}]
  %s5 = sld [smem:[#allocation0]]
  $region26: #{vae_forward.7} parent=0
    _
  %s7 = ssub.s32 1, %s5
  %s8 = scalar_select 0, %s7, %s5
  // Predicated region
  $region2: #{vae_forward.7} parent=0 // pred_check
    _
  $region3: #{vae_forward.7} parent=0 // pred_check_branch
    %10 = sbr.rel (0) target = $region5
  $region4: #{vae_forward.7} parent=0 // pred_region
    _
  $region5: #{vae_forward.7} parent=0 // pred_fallthru
    _
  // Predicated region
  $region6: #{vae_forward.7} parent=0 // pred_check
    _
  $region7: #{vae_forward.7} parent=0 // pred_check_branch
    %12 = sbr.rel (0) target = $region9
  $region8: #{vae_forward.7} parent=0 // pred_region
    _
  $region9: #{vae_forward.7} parent=0 // pred_fallthru
    _
  // Predicated region
  $region10: #{vae_forward.7} parent=0 // pred_check
    _
  $region11: #{vae_forward.7} parent=0 // pred_check_branch
    %14 = sbr.rel (0) target = $region13
  $region12: #{vae_forward.7} parent=0 // pred_region
    _
  $region13: #{vae_forward.7} parent=0 // pred_fallthru
    _
  // Predicated region
  $region14: #{vae_forward.7} parent=0 // pred_check
    _
  $region15: #{vae_forward.7} parent=0 // pred_check_branch
    %16 = sbr.rel (0) target = $region17
  $region16: #{vae_forward.7} parent=0 // pred_region
    _
  $region17: #{vae_forward.7} parent=0 // pred_fallthru
    _
  %v18 = vld [vmem:[%s0] sm:$0xff]
  %v19 = vld [vmem:[%s0 + $0x8] sm:$0xf]
  %v20 = vld [vmem:[%s0 + $0xc] sm:$0xff]
  %v21 = vld [vmem:[%s0 + $0x14] sm:$0xf]
  %v22 = vld [vmem:[%s0 + $0x18] sm:$0xff]
  %v23 = vld [vmem:[%s0 + $0x20] sm:$0xf]
  %v24 = vld [vmem:[%s0 + $0x24] sm:$0xff]
  %v25 = vld [vmem:[%s0 + $0x2c] sm:$0xf]
  %v26 = vld [vmem:[%s0 + $0x30] sm:$0xff]
  %v27 = vld [vmem:[%s0 + $0x38] sm:$0xf]
  %v28 = vld [vmem:[%s0 + $0x3c] sm:$0xff]
  %v29 = vld [vmem:[%s0 + $0x44] sm:$0xf]
  %v30 = vld [vmem:[%s0 + $0x48] sm:$0xff]
  %v31 = vld [vmem:[%s0 + $0x50] sm:$0xf]
  %v32 = vld [vmem:[%s0 + $0x54] sm:$0xff]
  %v33 = vld [vmem:[%s0 + $0x5c] sm:$0xf]
  %v34 = vld [vmem:[%s0 + $0x60] sm:$0xff]
  %v35 = vld [vmem:[%s0 + $0x68] sm:$0xf]
  %v36 = vld [vmem:[%s0 + $0x6c] sm:$0xff]
  %v37 = vld [vmem:[%s0 + $0x74] sm:$0xf]
  %v38 = vld [vmem:[%s0 + $0x78] sm:$0xff]
  %v39 = vld [vmem:[%s0 + $0x80] sm:$0xf]
  %v40 = vld [vmem:[%s0 + $0x84] sm:$0xff]
  %v41 = vld [vmem:[%s0 + $0x8c] sm:$0xf]
  %v42 = vld [vmem:[%s0 + $0x90] sm:$0x11]
  %v43 = vld [vmem:[%s0 + $0x98] sm:$0x1]
  %v44 = vld [vmem:[%s1] sm:$0xf]
  %v45 = vld [vmem:[%s1 + $0x4] sm:$0xf]
  %v46 = vld [vmem:[%s1 + $0x8] sm:$0xf]
  %v47 = vld [vmem:[%s1 + $0xc] sm:$0xf]
  %v48 = vld [vmem:[%s1 + $0x10] sm:$0xf]
  %v49 = vld [vmem:[%s1 + $0x14] sm:$0xf]
  %v50 = vld [vmem:[%s1 + $0x18] sm:$0xf]
  %v51 = vld [vmem:[%s1 + $0x1c] sm:$0xf]
  %v52 = vld [vmem:[%s1 + $0x20] sm:$0xf]
  %v53 = vld [vmem:[%s1 + $0x24] sm:$0xf]
  %v54 = vld [vmem:[%s1 + $0x28] sm:$0xf]
  %v55 = vld [vmem:[%s1 + $0x2c] sm:$0xf]
  %v56 = vld [vmem:[%s1 + $0x30] sm:$0xf]
  %v57 = vld [vmem:[%s1 + $0x34] sm:$0xf]
  %v58 = vld [vmem:[%s1 + $0x38] sm:$0xf]
  %v59 = vld [vmem:[%s1 + $0x3c] sm:$0xf]
  %v60 = vld [vmem:[%s1 + $0x40] sm:$0xf]
  %v61 = vld [vmem:[%s1 + $0x44] sm:$0xf]
  %v62 = vld [vmem:[%s1 + $0x48] sm:$0xf]
  %v63 = vld [vmem:[%s1 + $0x4c] sm:$0xf]
  %v64 = vld [vmem:[%s1 + $0x50] sm:$0xf]
  %v65 = vld [vmem:[%s1 + $0x54] sm:$0xf]
  %v66 = vld [vmem:[%s1 + $0x58] sm:$0xf]
  %v67 = vld [vmem:[%s1 + $0x5c] sm:$0xf]
  %v68 = vld [vmem:[%s1 + $0x60] sm:$0xf]
  %v69 = vld [vmem:[%s1 + $0x64] sm:$0xf]
  %v70 = vld [vmem:[%s1 + $0x68] sm:$0xf]
  %v71 = vld [vmem:[%s1 + $0x6c] sm:$0xf]
  %v72 = vld [vmem:[%s1 + $0x70] sm:$0xf]
  %v73 = vld [vmem:[%s1 + $0x74] sm:$0xf]
  %v74 = vld [vmem:[%s1 + $0x78] sm:$0xf]
  %v75 = vld [vmem:[%s1 + $0x7c] sm:$0xf]
  %v76 = vld [vmem:[%s1 + $0x80] sm:$0xf]
  %v77 = vld [vmem:[%s1 + $0x84] sm:$0xf]
  %v78 = vld [vmem:[%s1 + $0x88] sm:$0xf]
  %v79 = vld [vmem:[%s1 + $0x8c] sm:$0xf]
  %v106 = vunpack.c.l.b16 %v18
  %v107 = vunpack.c.h.b16 %v18
  %v108 = vunpack.c.l.b16 %v19
  %v109 = vunpack.c.l.b16 %v20
  %v110 = vunpack.c.h.b16 %v20
  %v111 = vunpack.c.l.b16 %v21
  %v112 = vunpack.c.l.b16 %v22
  %v113 = vunpack.c.h.b16 %v22
  %v114 = vunpack.c.l.b16 %v23
  %v115 = vunpack.c.l.b16 %v24
  %v116 = vunpack.c.h.b16 %v24
  %v117 = vunpack.c.l.b16 %v25
  %v118 = vunpack.c.l.b16 %v26
  %v119 = vunpack.c.h.b16 %v26
  %v120 = vunpack.c.l.b16 %v27
  %v121 = vunpack.c.l.b16 %v28
  %v122 = vunpack.c.h.b16 %v28
  %v123 = vunpack.c.l.b16 %v29
  %v124 = vunpack.c.l.b16 %v30
  %v125 = vunpack.c.h.b16 %v30
  %v126 = vunpack.c.l.b16 %v31
  %v127 = vunpack.c.l.b16 %v32
  %v128 = vunpack.c.h.b16 %v32
  %v129 = vunpack.c.l.b16 %v33
  %v130 = vunpack.c.l.b16 %v34
  %v131 = vunpack.c.h.b16 %v34
  %v132 = vunpack.c.l.b16 %v35
  %v133 = vunpack.c.l.b16 %v36
  %v134 = vunpack.c.h.b16 %v36
  %v135 = vunpack.c.l.b16 %v37
  %v136 = vunpack.c.l.b16 %v38
  %v137 = vunpack.c.h.b16 %v38
  %v138 = vunpack.c.l.b16 %v39
  %v139 = vunpack.c.l.b16 %v40
  %v140 = vunpack.c.h.b16 %v40
  %v141 = vunpack.c.l.b16 %v41
  %v142 = vunpack.c.l.b16 %v42
  %v143 = vunpack.c.h.b16 %v42
  %v144 = vunpack.c.l.b16 %v43
  %v145 = vpack.c.b16 %v109, %v106
  %v146 = vpack.c.b16 %v110, %v107
  %v147 = vpack.c.b16 %v111, %v108
  %v148 = vpack.c.b16 %v115, %v112
  %v149 = vpack.c.b16 %v116, %v113
  %v150 = vpack.c.b16 %v117, %v114
  %v151 = vpack.c.b16 %v121, %v118
  %v152 = vpack.c.b16 %v122, %v119
  %v153 = vpack.c.b16 %v123, %v120
  %v154 = vpack.c.b16 %v127, %v124
  %v155 = vpack.c.b16 %v128, %v125
  %v156 = vpack.c.b16 %v129, %v126
  %v157 = vpack.c.b16 %v133, %v130
  %v158 = vpack.c.b16 %v134, %v131
  %v159 = vpack.c.b16 %v135, %v132
  %v160 = vpack.c.b16 %v139, %v136
  %v161 = vpack.c.b16 %v140, %v137
  %v162 = vpack.c.b16 %v141, %v138
  %v163 = vpack.c.b16 %v142, %v142
  %v164 = vpack.c.b16 %v143, %v143
  %v165 = vpack.c.b16 %v144, %v144
  %v216 = vunpack.c.l.b16 %v44
  %v217 = vunpack.c.l.b16 %v45
  %v218 = vunpack.c.l.b16 %v46
  %v219 = vunpack.c.l.b16 %v47
  %v220 = vunpack.c.l.b16 %v48
  %v221 = vunpack.c.l.b16 %v49
  %v222 = vunpack.c.l.b16 %v50
  %v223 = vunpack.c.l.b16 %v51
  %v224 = vunpack.c.l.b16 %v52
  %v225 = vunpack.c.l.b16 %v53
  %v226 = vunpack.c.l.b16 %v54
  %v227 = vunpack.c.l.b16 %v55
  %v228 = vunpack.c.l.b16 %v56
  %v229 = vunpack.c.l.b16 %v57
  %v230 = vunpack.c.l.b16 %v58
  %v231 = vunpack.c.l.b16 %v59
  %v232 = vunpack.c.l.b16 %v60
  %v233 = vunpack.c.l.b16 %v61
  %v234 = vunpack.c.l.b16 %v62
  %v235 = vunpack.c.l.b16 %v63
  %v236 = vunpack.c.l.b16 %v64
  %v237 = vunpack.c.l.b16 %v65
  %v238 = vunpack.c.l.b16 %v66
  %v239 = vunpack.c.l.b16 %v67
  %v240 = vunpack.c.l.b16 %v68
  %v241 = vunpack.c.l.b16 %v69
  %v242 = vunpack.c.l.b16 %v70
  %v243 = vunpack.c.l.b16 %v71
  %v244 = vunpack.c.l.b16 %v72
  %v245 = vunpack.c.l.b16 %v73
  %v246 = vunpack.c.l.b16 %v74
  %v247 = vunpack.c.l.b16 %v75
  %v248 = vunpack.c.l.b16 %v76
  %v249 = vunpack.c.l.b16 %v77
  %v250 = vunpack.c.l.b16 %v78
  %v251 = vunpack.c.l.b16 %v79
  %v252 = vpack.c.b16 %v217, %v216
  %v253 = vpack.c.b16 %v219, %v218
  %v254 = vpack.c.b16 %v221, %v220
  %v255 = vpack.c.b16 %v223, %v222
  %v256 = vpack.c.b16 %v225, %v224
  %v257 = vpack.c.b16 %v227, %v226
  %v258 = vpack.c.b16 %v229, %v228
  %v259 = vpack.c.b16 %v231, %v230
  %v260 = vpack.c.b16 %v233, %v232
  %v261 = vpack.c.b16 %v235, %v234
  %v262 = vpack.c.b16 %v237, %v236
  %v263 = vpack.c.b16 %v239, %v238
  %v264 = vpack.c.b16 %v241, %v240
  %v265 = vpack.c.b16 %v243, %v242
  %v266 = vpack.c.b16 %v245, %v244
  %v267 = vpack.c.b16 %v247, %v246
  %v268 = vpack.c.b16 %v249, %v248
  %v269 = vpack.c.b16 %v251, %v250
  %vm288 = vcmask 261120
  %v290 = vsel %vm288, %v147, 0
  %v293 = vsel %vm288, %v150, 0
  %v296 = vsel %vm288, %v153, 0
  %v299 = vsel %vm288, %v156, 0
  %v302 = vsel %vm288, %v159, 0
  %v305 = vsel %vm288, %v162, 0
  %v308 = vsel %vm288, %v165, 0
  %310 = vmatprep.subr.bf16.mxu0 0
  %311 = vmatpush1.bf16.msra.mxu0 %v252
  %312 = vmatprep.subr.bf16.mxu0 0
  %313 = vmatpush1.bf16.msra.mxu0 %v253
  %314 = vmatprep.subr.bf16.mxu0 0
  %315 = vmatpush1.bf16.msra.mxu0 %v254
  %316 = vmatprep.subr.bf16.mxu0 0
  %317 = vmatpush1.bf16.msra.mxu0 %v255
  %318 = vmatprep.subr.bf16.mxu0 0
  %319 = vmatpush1.bf16.msra.mxu0 %v256
  %320 = vmatprep.subr.bf16.mxu0 0
  %321 = vmatpush1.bf16.msra.mxu0 %v257
  %322 = vmatprep.subr.bf16.mxu0 0
  %323 = vmatpush1.bf16.msra.mxu0 %v258
  %324 = vmatprep.subr.bf16.mxu0 0
  %325 = vmatpush1.bf16.msra.mxu0 %v259
  %326 = vmatprep.subr.bf16.mxu0 0
  %327 = vmatpush1.bf16.msra.mxu0 %v260
  %328 = vmatprep.subr.bf16.mxu0 0
  %329 = vmatpush1.bf16.msra.mxu0 %v261
  %330 = vmatprep.subr.bf16.mxu0 0
  %331 = vmatpush1.bf16.msra.mxu0 %v262
  %332 = vmatprep.subr.bf16.mxu0 0
  %333 = vmatpush1.bf16.msra.mxu0 %v263
  %334 = vmatprep.subr.bf16.mxu0 0
  %335 = vmatpush1.bf16.msra.mxu0 %v264
  %336 = vmatprep.subr.bf16.mxu0 0
  %337 = vmatpush1.bf16.msra.mxu0 %v265
  %338 = vmatprep.subr.bf16.mxu0 0
  %339 = vmatpush1.bf16.msra.mxu0 %v266
  %340 = vmatprep.subr.bf16.mxu0 0
  %341 = vmatpush1.bf16.msra.mxu0 %v267
  %342 = vmatprep.mubr.bf16.mxu0 %v146
  %343 = vmatmul.mubr.bf16.gmra.mrb[0].mxu0 %v145
  %v344 = vpop.f32.mrb[0].mxu0
  %v345 = vadd.f32 0.0, %v344
  %v346 = vpop.f32.mrb[0].mxu0
  %v347 = vpop.f32.mrb[0].mxu0
  %v348 = vadd.f32 0.0, %v347
  %v349 = vpop.f32.mrb[0].mxu0
  %350 = vmatprep.mubr.bf16.mxu0 %v149
  %351 = vmatmul.mubr.bf16.gmra.mrb[0].mxu0 %v148
  %v352 = vpop.f32.mrb[0].mxu0
  %v353 = vadd.f32 0.0, %v352
  %v354 = vpop.f32.mrb[0].mxu0
  %v355 = vpop.f32.mrb[0].mxu0
  %v356 = vadd.f32 0.0, %v355
  %v357 = vpop.f32.mrb[0].mxu0
  %358 = vmatprep.mubr.bf16.mxu0 %v152
  %359 = vmatmul.mubr.bf16.gmra.mrb[0].mxu0 %v151
  %v360 = vpop.f32.mrb[0].mxu0
  %v361 = vadd.f32 0.0, %v360
  %v362 = vpop.f32.mrb[0].mxu0
  %v363 = vpop.f32.mrb[0].mxu0
  %v364 = vadd.f32 0.0, %v363
  %v365 = vpop.f32.mrb[0].mxu0
  %366 = vmatprep.mubr.bf16.mxu0 %v155
  %367 = vmatmul.mubr.bf16.gmra.mrb[0].mxu0 %v154
  %v368 = vpop.f32.mrb[0].mxu0
  %v369 = vadd.f32 0.0, %v368
  %v370 = vpop.f32.mrb[0].mxu0
  %v371 = vpop.f32.mrb[0].mxu0
  %v372 = vadd.f32 0.0, %v371
  %v373 = vpop.f32.mrb[0].mxu0
  %374 = vmatprep.mubr.bf16.mxu0 %v158
  %375 = vmatmul.mubr.bf16.gmra.mrb[0].mxu0 %v157
  %v376 = vpop.f32.mrb[0].mxu0
  %v377 = vadd.f32 0.0, %v376
  %v378 = vpop.f32.mrb[0].mxu0
  %v379 = vpop.f32.mrb[0].mxu0
  %v380 = vadd.f32 0.0, %v379
  %v381 = vpop.f32.mrb[0].mxu0
  %382 = vmatprep.mubr.bf16.mxu0 %v161
  %383 = vmatmul.mubr.bf16.gmra.mrb[0].mxu0 %v160
  %v384 = vpop.f32.mrb[0].mxu0
  %v385 = vadd.f32 0.0, %v384
  %v386 = vpop.f32.mrb[0].mxu0
  %v387 = vpop.f32.mrb[0].mxu0
  %v388 = vadd.f32 0.0, %v387
  %v389 = vpop.f32.mrb[0].mxu0
  %390 = vmatprep.mubr.bf16.mxu0 %v164
  %391 = vmatmul.mubr.bf16.gmra.mrb[0].mxu0 %v163
  %v392 = vpop.f32.mrb[0].mxu0
  %v393 = vadd.f32 0.0, %v392
  %v394 = vpop.f32.mrb[0].mxu0
  %v395 = vpop.f32.mrb[0].mxu0
  %v396 = vpop.f32.mrb[0].mxu0
  %397 = vdwg.mxu0
  %398 = vmatprep.subr.bf16.mxu0 0
  %399 = vmatpush1.bf16.msra.mxu0 %v268
  %400 = vmatprep.subr.bf16.mxu0 0
  %401 = vmatpush1.bf16.msra.mxu0 %v269
  %402 = vmatprep.subr.bf16.mxu0 0
  %403 = vmatpush1.bf16.msra.mxu0 0
  %404 = vmatprep.subr.bf16.mxu0 0
  %405 = vmatpush1.bf16.msra.mxu0 0
  %406 = vmatprep.subr.bf16.mxu0 0
  %407 = vmatpush1.bf16.msra.mxu0 0
  %408 = vmatprep.subr.bf16.mxu0 0
  %409 = vmatpush1.bf16.msra.mxu0 0
  %410 = vmatprep.subr.bf16.mxu0 0
  %411 = vmatpush1.bf16.msra.mxu0 0
  %412 = vmatprep.subr.bf16.mxu0 0
  %413 = vmatpush1.bf16.msra.mxu0 0
  %414 = vmatprep.subr.bf16.mxu0 0
  %415 = vmatpush1.bf16.msra.mxu0 0
  %416 = vmatprep.subr.bf16.mxu0 0
  %417 = vmatpush1.bf16.msra.mxu0 0
  %418 = vmatprep.subr.bf16.mxu0 0
  %419 = vmatpush1.bf16.msra.mxu0 0
  %420 = vmatprep.subr.bf16.mxu0 0
  %421 = vmatpush1.bf16.msra.mxu0 0
  %422 = vmatprep.subr.bf16.mxu0 0
  %423 = vmatpush1.bf16.msra.mxu0 0
  %424 = vmatprep.subr.bf16.mxu0 0
  %425 = vmatpush1.bf16.msra.mxu0 0
  %426 = vmatprep.subr.bf16.mxu0 0
  %427 = vmatpush1.bf16.msra.mxu0 0
  %428 = vmatprep.subr.bf16.mxu0 0
  %429 = vmatpush1.bf16.msra.mxu0 0
  %430 = vmatprep.mubr.bf16.mxu0 0
  %431 = vmatmul.mubr.bf16.gmra.mrb[0].mxu0 %v290
  %v432 = vpop.f32.mrb[0].mxu0
  %v433 = vadd.f32 %v345, %v432
  %v434 = vpop.f32.mrb[0].mxu0
  %v435 = vpop.f32.mrb[0].mxu0
  %v436 = vadd.f32 %v348, %v435
  %v437 = vpop.f32.mrb[0].mxu0
  %438 = vmatprep.mubr.bf16.mxu0 0
  %439 = vmatmul.mubr.bf16.gmra.mrb[0].mxu0 %v293
  %v440 = vpop.f32.mrb[0].mxu0
  %v441 = vadd.f32 %v353, %v440
  %v442 = vpop.f32.mrb[0].mxu0
  %v443 = vpop.f32.mrb[0].mxu0
  %v444 = vadd.f32 %v356, %v443
  %v445 = vpop.f32.mrb[0].mxu0
  %446 = vmatprep.mubr.bf16.mxu0 0
  %447 = vmatmul.mubr.bf16.gmra.mrb[0].mxu0 %v296
  %v448 = vpop.f32.mrb[0].mxu0
  %v449 = vadd.f32 %v361, %v448
  %v450 = vpop.f32.mrb[0].mxu0
  %v451 = vpop.f32.mrb[0].mxu0
  %v452 = vadd.f32 %v364, %v451
  %v453 = vpop.f32.mrb[0].mxu0
  %454 = vmatprep.mubr.bf16.mxu0 0
  %455 = vmatmul.mubr.bf16.gmra.mrb[0].mxu0 %v299
  %v456 = vpop.f32.mrb[0].mxu0
  %v457 = vadd.f32 %v369, %v456
  %v458 = vpop.f32.mrb[0].mxu0
  %v459 = vpop.f32.mrb[0].mxu0
  %v460 = vadd.f32 %v372, %v459
  %v461 = vpop.f32.mrb[0].mxu0
  %462 = vmatprep.mubr.bf16.mxu0 0
  %463 = vmatmul.mubr.bf16.gmra.mrb[0].mxu0 %v302
  %v464 = vpop.f32.mrb[0].mxu0
  %v465 = vadd.f32 %v377, %v464
  %v466 = vpop.f32.mrb[0].mxu0
  %v467 = vpop.f32.mrb[0].mxu0
  %v468 = vadd.f32 %v380, %v467
  %v469 = vpop.f32.mrb[0].mxu0
  %470 = vmatprep.mubr.bf16.mxu0 0
  %471 = vmatmul.mubr.bf16.gmra.mrb[0].mxu0 %v305
  %v472 = vpop.f32.mrb[0].mxu0
  %v473 = vadd.f32 %v385, %v472
  %v474 = vpop.f32.mrb[0].mxu0
  %v475 = vpop.f32.mrb[0].mxu0
  %v476 = vadd.f32 %v388, %v475
  %v477 = vpop.f32.mrb[0].mxu0
  %478 = vmatprep.mubr.bf16.mxu0 0
  %479 = vmatmul.mubr.bf16.gmra.mrb[0].mxu0 %v308
  %v480 = vpop.f32.mrb[0].mxu0
  %v481 = vadd.f32 %v393, %v480
  %v482 = vpop.f32.mrb[0].mxu0
  %v483 = vpop.f32.mrb[0].mxu0
  %v484 = vpop.f32.mrb[0].mxu0
  %485 = vdwg.mxu0
  %vm486 = vcmask 523264
  %v487 = vsel %vm486, %v433, 0.0
  %v488 = vsel %vm486, %v436, 0.0
  %v489 = vadd.f32 %v487, %v488
  %v490 = vsel %vm486, %v441, 0.0
  %v491 = vadd.f32 %v489, %v490
  %v492 = vsel %vm486, %v444, 0.0
  %v493 = vadd.f32 %v491, %v492
  %v494 = vsel %vm486, %v449, 0.0
  %v495 = vadd.f32 %v493, %v494
  %v496 = vsel %vm486, %v452, 0.0
  %v497 = vadd.f32 %v495, %v496
  %v498 = vsel %vm486, %v457, 0.0
  %v499 = vadd.f32 %v497, %v498
  %v500 = vsel %vm486, %v460, 0.0
  %v501 = vadd.f32 %v499, %v500
  %v502 = vsel %vm486, %v465, 0.0
  %v503 = vadd.f32 %v501, %v502
  %v504 = vsel %vm486, %v468, 0.0
  %v505 = vadd.f32 %v503, %v504
  %v506 = vsel %vm486, %v473, 0.0
  %v507 = vadd.f32 %v505, %v506
  %v508 = vsel %vm486, %v476, 0.0
  %v509 = vadd.f32 %v507, %v508
  %vm510 = vcmask 517120
  %v511 = vsel %vm510, %v481, 0.0
  %v512 = vadd.f32 %v509, %v511
  %v513 = vrot.slane %v512, 4
  %v514 = vadd.f32 %v512, %v513
  %v515 = vrot.slane %v514, 2
  %v516 = vadd.f32 %v514, %v515
  %v517 = vrot.slane %v516, 1
  %v518 = vadd.f32 %v516, %v517
  %v519 = vmul.f32 %v433, %v433
  %v520 = vmul.f32 %v436, %v436
  %v521 = vmul.f32 %v441, %v441
  %v522 = vmul.f32 %v444, %v444
  %v523 = vmul.f32 %v449, %v449
  %v524 = vmul.f32 %v452, %v452
  %v525 = vmul.f32 %v457, %v457
  %v526 = vmul.f32 %v460, %v460
  %v527 = vmul.f32 %v465, %v465
  %v528 = vmul.f32 %v468, %v468
  %v529 = vmul.f32 %v473, %v473
  %v530 = vmul.f32 %v476, %v476
  %v531 = vmul.f32 %v481, %v481
  %v532 = vsel %vm486, %v519, 0.0
  %v533 = vsel %vm486, %v520, 0.0
  %v534 = vadd.f32 %v532, %v533
  %v535 = vsel %vm486, %v521, 0.0
  %v536 = vadd.f32 %v534, %v535
  %v537 = vsel %vm486, %v522, 0.0
  %v538 = vadd.f32 %v536, %v537
  %v539 = vsel %vm486, %v523, 0.0
  %v540 = vadd.f32 %v538, %v539
  %v541 = vsel %vm486, %v524, 0.0
  %v542 = vadd.f32 %v540, %v541
  %v543 = vsel %vm486, %v525, 0.0
  %v544 = vadd.f32 %v542, %v543
  %v545 = vsel %vm486, %v526, 0.0
  %v546 = vadd.f32 %v544, %v545
  %v547 = vsel %vm486, %v527, 0.0
  %v548 = vadd.f32 %v546, %v547
  %v549 = vsel %vm486, %v528, 0.0
  %v550 = vadd.f32 %v548, %v549
  %v551 = vsel %vm486, %v529, 0.0
  %v552 = vadd.f32 %v550, %v551
  %v553 = vsel %vm486, %v530, 0.0
  %v554 = vadd.f32 %v552, %v553
  %v555 = vsel %vm510, %v531, 0.0
  %v556 = vadd.f32 %v554, %v555
  %v557 = vrot.slane %v556, 4
  %v558 = vadd.f32 %v556, %v557
  %v559 = vrot.slane %v558, 2
  %v560 = vadd.f32 %v558, %v559
  %v561 = vrot.slane %v560, 1
  %v562 = vadd.f32 %v560, %v561
  %v563 = vrcp.pop 98.0
  %v564 = vmul.f32 %v518, %v563
  %v565 = vmul.f32 %v562, %v563
  %v566 = vmul.f32 %v564, %v564
  %v567 = vsub.f32 %v565, %v566
  %v568 = vadd.f32 %v567, 1e-05
  %v569 = vrsqrt.pop %v568
  %v570 = vld [vmem:[%s2] sm:$0x1]
  %v571 = vmul.f32 %v570, %v569
  %v572 = vld [vmem:[%s3] sm:$0x1]
  %v573 = vmul.f32 %v564, %v571
  %v574 = vsub.f32 %v572, %v573
  %v576 = vlaneseq
  %v577 = vshrl.u32 %v576, 7
  %v578 = vsub.s32 0, %v577
  %v579 = vrot.slane %v571, %v578
  %v581 = vmul.f32 %v433, %v579
  %v582 = vmul.f32 %v436, %v579
  %v583 = vmul.f32 %v441, %v579
  %v584 = vmul.f32 %v444, %v579
  %v585 = vmul.f32 %v449, %v579
  %v586 = vmul.f32 %v452, %v579
  %v587 = vmul.f32 %v457, %v579
  %v588 = vmul.f32 %v460, %v579
  %v589 = vmul.f32 %v465, %v579
  %v590 = vmul.f32 %v468, %v579
  %v591 = vmul.f32 %v473, %v579
  %v592 = vmul.f32 %v476, %v579
  %v593 = vmul.f32 %v481, %v579
  %v595 = vlaneseq
  %v596 = vshrl.u32 %v595, 7
  %v597 = vsub.s32 0, %v596
  %v598 = vrot.slane %v574, %v597
  %v600 = vadd.f32 %v581, %v598
  %v601 = vadd.f32 %v582, %v598
  %v602 = vadd.f32 %v583, %v598
  %v603 = vadd.f32 %v584, %v598
  %v604 = vadd.f32 %v585, %v598
  %v605 = vadd.f32 %v586, %v598
  %v606 = vadd.f32 %v587, %v598
  %v607 = vadd.f32 %v588, %v598
  %v608 = vadd.f32 %v589, %v598
  %v609 = vadd.f32 %v590, %v598
  %v610 = vadd.f32 %v591, %v598
  %v611 = vadd.f32 %v592, %v598
  %v612 = vadd.f32 %v593, %v598
  %vm613 = vcmp.ge.f32.partialorder %v600, 0.0
  %vm614 = vcmp.ge.f32.partialorder %v601, 0.0
  %vm615 = vcmp.ge.f32.partialorder %v602, 0.0
  %vm616 = vcmp.ge.f32.partialorder %v603, 0.0
  %vm617 = vcmp.ge.f32.partialorder %v604, 0.0
  %vm618 = vcmp.ge.f32.partialorder %v605, 0.0
  %vm619 = vcmp.ge.f32.partialorder %v606, 0.0
  %vm620 = vcmp.ge.f32.partialorder %v607, 0.0
  %vm621 = vcmp.ge.f32.partialorder %v608, 0.0
  %vm622 = vcmp.ge.f32.partialorder %v609, 0.0
  %vm623 = vcmp.ge.f32.partialorder %v610, 0.0
  %vm624 = vcmp.ge.f32.partialorder %v611, 0.0
  %vm625 = vcmp.ge.f32.partialorder %v612, 0.0
  %v626 = vmul.f32 %v600, 0.01
  %v627 = vmul.f32 %v601, 0.01
  %v628 = vmul.f32 %v602, 0.01
  %v629 = vmul.f32 %v603, 0.01
  %v630 = vmul.f32 %v604, 0.01
  %v631 = vmul.f32 %v605, 0.01
  %v632 = vmul.f32 %v606, 0.01
  %v633 = vmul.f32 %v607, 0.01
  %v634 = vmul.f32 %v608, 0.01
  %v635 = vmul.f32 %v609, 0.01
  %v636 = vmul.f32 %v610, 0.01
  %v637 = vmul.f32 %v611, 0.01
  %v638 = vmul.f32 %v612, 0.01
  %v639 = vsel %vm613, %v600, %v626
  %v640 = vsel %vm614, %v601, %v627
  %v641 = vsel %vm615, %v602, %v628
  %v642 = vsel %vm616, %v603, %v629
  %v643 = vsel %vm617, %v604, %v630
  %v644 = vsel %vm618, %v605, %v631
  %v645 = vsel %vm619, %v606, %v632
  %v646 = vsel %vm620, %v607, %v633
  %v647 = vsel %vm621, %v608, %v634
  %v648 = vsel %vm622, %v609, %v635
  %v649 = vsel %vm623, %v610, %v636
  %v650 = vsel %vm624, %v611, %v637
  %v651 = vsel %vm625, %v612, %v638
  %v652 = vpack.c.bf16 %v640, %v639
  %v653 = vpack.c.bf16 %v642, %v641
  %v654 = vpack.c.bf16 %v644, %v643
  %v655 = vpack.c.bf16 %v646, %v645
  %v656 = vpack.c.bf16 %v648, %v647
  %v657 = vpack.c.bf16 %v650, %v649
  %v658 = vpack.c.bf16 %v651, %v651
  %v666 = vunpack.c.l.b16 %v652
  %v667 = vunpack.c.h.b16 %v652
  %v668 = vunpack.c.l.b16 %v653
  %v669 = vunpack.c.h.b16 %v653
  %v670 = vunpack.c.l.b16 %v654
  %v671 = vunpack.c.h.b16 %v654
  %v672 = vunpack.c.l.b16 %v655
  %v673 = vunpack.c.h.b16 %v655
  %v674 = vunpack.c.l.b16 %v656
  %v675 = vunpack.c.h.b16 %v656
  %v676 = vunpack.c.l.b16 %v657
  %v677 = vunpack.c.h.b16 %v657
  %v678 = vunpack.c.l.b16 %v658
  %v679 = vpack.c.b16 %v666, %v666
  %v680 = vpack.c.b16 %v667, %v667
  %v681 = vpack.c.b16 %v668, %v668
  %v682 = vpack.c.b16 %v669, %v669
  %v683 = vpack.c.b16 %v670, %v670
  %v684 = vpack.c.b16 %v671, %v671
  %v685 = vpack.c.b16 %v672, %v672
  %v686 = vpack.c.b16 %v673, %v673
  %v687 = vpack.c.b16 %v674, %v674
  %v688 = vpack.c.b16 %v675, %v675
  %v689 = vpack.c.b16 %v676, %v676
  %v690 = vpack.c.b16 %v677, %v677
  %v691 = vpack.c.b16 %v678, %v678
  %vm705 = vcmask 519168
  %706 = vst.msk [vmem:[%s4] sm:$0xf] %vm705, %v679
  %707 = vst.msk [vmem:[%s4 + $0x4] sm:$0xf] %vm705, %v680
  %708 = vst.msk [vmem:[%s4 + $0x8] sm:$0xf] %vm705, %v681
  %709 = vst.msk [vmem:[%s4 + $0xc] sm:$0xf] %vm705, %v682
  %710 = vst.msk [vmem:[%s4 + $0x10] sm:$0xf] %vm705, %v683
  %711 = vst.msk [vmem:[%s4 + $0x14] sm:$0xf] %vm705, %v684
  %712 = vst.msk [vmem:[%s4 + $0x18] sm:$0xf] %vm705, %v685
  %713 = vst.msk [vmem:[%s4 + $0x1c] sm:$0xf] %vm705, %v686
  %714 = vst.msk [vmem:[%s4 + $0x20] sm:$0xf] %vm705, %v687
  %715 = vst.msk [vmem:[%s4 + $0x24] sm:$0xf] %vm705, %v688
  %716 = vst.msk [vmem:[%s4 + $0x28] sm:$0xf] %vm705, %v689
  %717 = vst.msk [vmem:[%s4 + $0x2c] sm:$0xf] %vm705, %v690
  %vm718 = vcmask 516096
  %719 = vst.msk [vmem:[%s4 + $0x30] sm:$0x1] %vm718, %v691
  // Predicated region
  $region18: #{vae_forward.7} parent=0 // pred_check
    _
  $region19: #{vae_forward.7} parent=0 // pred_check_branch
    %721 = sbr.rel (0) target = $region21
  $region20: #{vae_forward.7} parent=0 // pred_region
    _
  $region21: #{vae_forward.7} parent=0 // pred_fallthru
    _
  // Predicated region
  $region22: #{vae_forward.7} parent=0 // pred_check
    _
  $region23: #{vae_forward.7} parent=0 // pred_check_branch
    %723 = sbr.rel (0) target = $region25
  $region24: #{vae_forward.7} parent=0 // pred_region
    _
  $region25: #{vae_forward.7} parent=0 // pred_fallthru
    _

// kernel: vae_forward.9
$region0: #{vae_forward.9}
  #allocation0 [shape = 'u32[]', space=smem, size = 0x4, offset = 0x4, fixed_abs, tag = 'smem constant byte address 0x4 - core index']
  #allocation1 [shape = 'u32[144,128]{1,0:T(1,128)}', space=vmem, size = 0x12000, scoped, tag = 'internal scratch']
  %s0 = inlined_call_operand.vmem [shape: bf16[98,256], index: 0, kind: input, shape index: {}]
  %s1 = inlined_call_operand.vmem [shape: bf16[256,128], index: 1, kind: input, shape index: {}]
  %s2 = inlined_call_operand.vmem [shape: f32[1,32], index: 2, kind: input, shape index: {}]
  %s3 = inlined_call_operand.vmem [shape: f32[1,32], index: 3, kind: input, shape index: {}]
  %s4 = inlined_call_operand.vmem [shape: bf16[98,128], index: 4, kind: output, shape index: {}]
  %s5 = sld [smem:[#allocation0]]
  $region26: #{vae_forward.9} parent=0
    _
  %s7 = ssub.s32 1, %s5
  %s8 = scalar_select 0, %s7, %s5
  // Predicated region
  $region2: #{vae_forward.9} parent=0 // pred_check
    _
  $region3: #{vae_forward.9} parent=0 // pred_check_branch
    %10 = sbr.rel (0) target = $region5
  $region4: #{vae_forward.9} parent=0 // pred_region
    _
  $region5: #{vae_forward.9} parent=0 // pred_fallthru
    _
  // Predicated region
  $region6: #{vae_forward.9} parent=0 // pred_check
    _
  $region7: #{vae_forward.9} parent=0 // pred_check_branch
    %12 = sbr.rel (0) target = $region9
  $region8: #{vae_forward.9} parent=0 // pred_region
    _
  $region9: #{vae_forward.9} parent=0 // pred_fallthru
    _
  // Predicated region
  $region10: #{vae_forward.9} parent=0 // pred_check
    _
  $region11: #{vae_forward.9} parent=0 // pred_check_branch
    %14 = sbr.rel (0) target = $region13
  $region12: #{vae_forward.9} parent=0 // pred_region
    _
  $region13: #{vae_forward.9} parent=0 // pred_fallthru
    _
  // Predicated region
  $region14: #{vae_forward.9} parent=0 // pred_check
    _
  $region15: #{vae_forward.9} parent=0 // pred_check_branch
    %16 = sbr.rel (0) target = $region17
  $region16: #{vae_forward.9} parent=0 // pred_region
    _
  $region17: #{vae_forward.9} parent=0 // pred_fallthru
    _
  %v18 = vld [vmem:[%s0] sm:$0xff]
  %v19 = vld [vmem:[%s0 + $0x8] sm:$0xff]
  %v20 = vld [vmem:[%s0 + $0x10] sm:$0xff]
  %v21 = vld [vmem:[%s0 + $0x18] sm:$0xff]
  %v22 = vld [vmem:[%s0 + $0x20] sm:$0xff]
  %v23 = vld [vmem:[%s0 + $0x28] sm:$0xff]
  %v24 = vld [vmem:[%s0 + $0x30] sm:$0xff]
  %v25 = vld [vmem:[%s0 + $0x38] sm:$0xff]
  %v26 = vld [vmem:[%s0 + $0x40] sm:$0xff]
  %v27 = vld [vmem:[%s0 + $0x48] sm:$0xff]
  %v28 = vld [vmem:[%s0 + $0x50] sm:$0xff]
  %v29 = vld [vmem:[%s0 + $0x58] sm:$0xff]
  %v30 = vld [vmem:[%s0 + $0x60] sm:$0x11]
  %v31 = vld [vmem:[%s1] sm:$0xf]
  %v32 = vld [vmem:[%s1 + $0x4] sm:$0xf]
  %v33 = vld [vmem:[%s1 + $0x8] sm:$0xf]
  %v34 = vld [vmem:[%s1 + $0xc] sm:$0xf]
  %v35 = vld [vmem:[%s1 + $0x10] sm:$0xf]
  %v36 = vld [vmem:[%s1 + $0x14] sm:$0xf]
  %v37 = vld [vmem:[%s1 + $0x18] sm:$0xf]
  %v38 = vld [vmem:[%s1 + $0x1c] sm:$0xf]
  %v39 = vld [vmem:[%s1 + $0x20] sm:$0xf]
  %v40 = vld [vmem:[%s1 + $0x24] sm:$0xf]
  %v41 = vld [vmem:[%s1 + $0x28] sm:$0xf]
  %v42 = vld [vmem:[%s1 + $0x2c] sm:$0xf]
  %v43 = vld [vmem:[%s1 + $0x30] sm:$0xf]
  %v44 = vld [vmem:[%s1 + $0x34] sm:$0xf]
  %v45 = vld [vmem:[%s1 + $0x38] sm:$0xf]
  %v46 = vld [vmem:[%s1 + $0x3c] sm:$0xf]
  %v47 = vld [vmem:[%s1 + $0x40] sm:$0xf]
  %v48 = vld [vmem:[%s1 + $0x44] sm:$0xf]
  %v49 = vld [vmem:[%s1 + $0x48] sm:$0xf]
  %v50 = vld [vmem:[%s1 + $0x4c] sm:$0xf]
  %v51 = vld [vmem:[%s1 + $0x50] sm:$0xf]
  %v52 = vld [vmem:[%s1 + $0x54] sm:$0xf]
  %v53 = vld [vmem:[%s1 + $0x58] sm:$0xf]
  %v54 = vld [vmem:[%s1 + $0x5c] sm:$0xf]
  %v55 = vld [vmem:[%s1 + $0x60] sm:$0xf]
  %v56 = vld [vmem:[%s1 + $0x64] sm:$0xf]
  %v57 = vld [vmem:[%s1 + $0x68] sm:$0xf]
  %v58 = vld [vmem:[%s1 + $0x6c] sm:$0xf]
  %v59 = vld [vmem:[%s1 + $0x70] sm:$0xf]
  %v60 = vld [vmem:[%s1 + $0x74] sm:$0xf]
  %v61 = vld [vmem:[%s1 + $0x78] sm:$0xf]
  %v62 = vld [vmem:[%s1 + $0x7c] sm:$0xf]
  %v76 = vunpack.c.l.b16 %v18
  %v77 = vunpack.c.h.b16 %v18
  %v78 = vunpack.c.l.b16 %v19
  %v79 = vunpack.c.h.b16 %v19
  %v80 = vunpack.c.l.b16 %v20
  %v81 = vunpack.c.h.b16 %v20
  %v82 = vunpack.c.l.b16 %v21
  %v83 = vunpack.c.h.b16 %v21
  %v84 = vunpack.c.l.b16 %v22
  %v85 = vunpack.c.h.b16 %v22
  %v86 = vunpack.c.l.b16 %v23
  %v87 = vunpack.c.h.b16 %v23
  %v88 = vunpack.c.l.b16 %v24
  %v89 = vunpack.c.h.b16 %v24
  %v90 = vunpack.c.l.b16 %v25
  %v91 = vunpack.c.h.b16 %v25
  %v92 = vunpack.c.l.b16 %v26
  %v93 = vunpack.c.h.b16 %v26
  %v94 = vunpack.c.l.b16 %v27
  %v95 = vunpack.c.h.b16 %v27
  %v96 = vunpack.c.l.b16 %v28
  %v97 = vunpack.c.h.b16 %v28
  %v98 = vunpack.c.l.b16 %v29
  %v99 = vunpack.c.h.b16 %v29
  %v100 = vunpack.c.l.b16 %v30
  %v101 = vunpack.c.h.b16 %v30
  %v102 = vpack.c.b16 %v78, %v76
  %v103 = vpack.c.b16 %v79, %v77
  %v104 = vpack.c.b16 %v82, %v80
  %v105 = vpack.c.b16 %v83, %v81
  %v106 = vpack.c.b16 %v86, %v84
  %v107 = vpack.c.b16 %v87, %v85
  %v108 = vpack.c.b16 %v90, %v88
  %v109 = vpack.c.b16 %v91, %v89
  %v110 = vpack.c.b16 %v94, %v92
  %v111 = vpack.c.b16 %v95, %v93
  %v112 = vpack.c.b16 %v98, %v96
  %v113 = vpack.c.b16 %v99, %v97
  %v114 = vpack.c.b16 %v100, %v100
  %v115 = vpack.c.b16 %v101, %v101
  %v162 = vunpack.c.l.b16 %v31
  %v163 = vunpack.c.l.b16 %v32
  %v164 = vunpack.c.l.b16 %v33
  %v165 = vunpack.c.l.b16 %v34
  %v166 = vunpack.c.l.b16 %v35
  %v167 = vunpack.c.l.b16 %v36
  %v168 = vunpack.c.l.b16 %v37
  %v169 = vunpack.c.l.b16 %v38
  %v170 = vunpack.c.l.b16 %v39
  %v171 = vunpack.c.l.b16 %v40
  %v172 = vunpack.c.l.b16 %v41
  %v173 = vunpack.c.l.b16 %v42
  %v174 = vunpack.c.l.b16 %v43
  %v175 = vunpack.c.l.b16 %v44
  %v176 = vunpack.c.l.b16 %v45
  %v177 = vunpack.c.l.b16 %v46
  %v178 = vunpack.c.l.b16 %v47
  %v179 = vunpack.c.l.b16 %v48
  %v180 = vunpack.c.l.b16 %v49
  %v181 = vunpack.c.l.b16 %v50
  %v182 = vunpack.c.l.b16 %v51
  %v183 = vunpack.c.l.b16 %v52
  %v184 = vunpack.c.l.b16 %v53
  %v185 = vunpack.c.l.b16 %v54
  %v186 = vunpack.c.l.b16 %v55
  %v187 = vunpack.c.l.b16 %v56
  %v188 = vunpack.c.l.b16 %v57
  %v189 = vunpack.c.l.b16 %v58
  %v190 = vunpack.c.l.b16 %v59
  %v191 = vunpack.c.l.b16 %v60
  %v192 = vunpack.c.l.b16 %v61
  %v193 = vunpack.c.l.b16 %v62
  %v194 = vpack.c.b16 %v163, %v162
  %v195 = vpack.c.b16 %v165, %v164
  %v196 = vpack.c.b16 %v167, %v166
  %v197 = vpack.c.b16 %v169, %v168
  %v198 = vpack.c.b16 %v171, %v170
  %v199 = vpack.c.b16 %v173, %v172
  %v200 = vpack.c.b16 %v175, %v174
  %v201 = vpack.c.b16 %v177, %v176
  %v202 = vpack.c.b16 %v179, %v178
  %v203 = vpack.c.b16 %v181, %v180
  %v204 = vpack.c.b16 %v183, %v182
  %v205 = vpack.c.b16 %v185, %v184
  %v206 = vpack.c.b16 %v187, %v186
  %v207 = vpack.c.b16 %v189, %v188
  %v208 = vpack.c.b16 %v191, %v190
  %v209 = vpack.c.b16 %v193, %v192
  %226 = vmatprep.subr.bf16.mxu0 0
  %227 = vmatpush1.bf16.msra.mxu0 %v194
  %228 = vmatprep.subr.bf16.mxu0 0
  %229 = vmatpush1.bf16.msra.mxu0 %v195
  %230 = vmatprep.subr.bf16.mxu0 0
  %231 = vmatpush1.bf16.msra.mxu0 %v196
  %232 = vmatprep.subr.bf16.mxu0 0
  %233 = vmatpush1.bf16.msra.mxu0 %v197
  %234 = vmatprep.subr.bf16.mxu0 0
  %235 = vmatpush1.bf16.msra.mxu0 %v198
  %236 = vmatprep.subr.bf16.mxu0 0
  %237 = vmatpush1.bf16.msra.mxu0 %v199
  %238 = vmatprep.subr.bf16.mxu0 0
  %239 = vmatpush1.bf16.msra.mxu0 %v200
  %240 = vmatprep.subr.bf16.mxu0 0
  %241 = vmatpush1.bf16.msra.mxu0 %v201
  %242 = vmatprep.subr.bf16.mxu0 0
  %243 = vmatpush1.bf16.msra.mxu0 %v202
  %244 = vmatprep.subr.bf16.mxu0 0
  %245 = vmatpush1.bf16.msra.mxu0 %v203
  %246 = vmatprep.subr.bf16.mxu0 0
  %247 = vmatpush1.bf16.msra.mxu0 %v204
  %248 = vmatprep.subr.bf16.mxu0 0
  %249 = vmatpush1.bf16.msra.mxu0 %v205
  %250 = vmatprep.subr.bf16.mxu0 0
  %251 = vmatpush1.bf16.msra.mxu0 %v206
  %252 = vmatprep.subr.bf16.mxu0 0
  %253 = vmatpush1.bf16.msra.mxu0 %v207
  %254 = vmatprep.subr.bf16.mxu0 0
  %255 = vmatpush1.bf16.msra.mxu0 %v208
  %256 = vmatprep.subr.bf16.mxu0 0
  %257 = vmatpush1.bf16.msra.mxu0 %v209
  %258 = vmatprep.mubr.bf16.mxu0 %v103
  %259 = vmatmul.mubr.bf16.gmra.mrb[0].mxu0 %v102
  %v260 = vpop.f32.mrb[0].mxu0
  %v261 = vadd.f32 0.0, %v260
  %v262 = vpop.f32.mrb[0].mxu0
  %v263 = vpop.f32.mrb[0].mxu0
  %v264 = vadd.f32 0.0, %v263
  %v265 = vpop.f32.mrb[0].mxu0
  %266 = vmatprep.mubr.bf16.mxu0 %v105
  %267 = vmatmul.mubr.bf16.gmra.mrb[0].mxu0 %v104
  %v268 = vpop.f32.mrb[0].mxu0
  %v269 = vadd.f32 0.0, %v268
  %v270 = vpop.f32.mrb[0].mxu0
  %v271 = vpop.f32.mrb[0].mxu0
  %v272 = vadd.f32 0.0, %v271
  %v273 = vpop.f32.mrb[0].mxu0
  %274 = vmatprep.mubr.bf16.mxu0 %v107
  %275 = vmatmul.mubr.bf16.gmra.mrb[0].mxu0 %v106
  %v276 = vpop.f32.mrb[0].mxu0
  %v277 = vadd.f32 0.0, %v276
  %v278 = vpop.f32.mrb[0].mxu0
  %v279 = vpop.f32.mrb[0].mxu0
  %v280 = vadd.f32 0.0, %v279
  %v281 = vpop.f32.mrb[0].mxu0
  %282 = vmatprep.mubr.bf16.mxu0 %v109
  %283 = vmatmul.mubr.bf16.gmra.mrb[0].mxu0 %v108
  %v284 = vpop.f32.mrb[0].mxu0
  %v285 = vadd.f32 0.0, %v284
  %v286 = vpop.f32.mrb[0].mxu0
  %v287 = vpop.f32.mrb[0].mxu0
  %v288 = vadd.f32 0.0, %v287
  %v289 = vpop.f32.mrb[0].mxu0
  %290 = vmatprep.mubr.bf16.mxu0 %v111
  %291 = vmatmul.mubr.bf16.gmra.mrb[0].mxu0 %v110
  %v292 = vpop.f32.mrb[0].mxu0
  %v293 = vadd.f32 0.0, %v292
  %v294 = vpop.f32.mrb[0].mxu0
  %v295 = vpop.f32.mrb[0].mxu0
  %v296 = vadd.f32 0.0, %v295
  %v297 = vpop.f32.mrb[0].mxu0
  %298 = vmatprep.mubr.bf16.mxu0 %v113
  %299 = vmatmul.mubr.bf16.gmra.mrb[0].mxu0 %v112
  %v300 = vpop.f32.mrb[0].mxu0
  %v301 = vadd.f32 0.0, %v300
  %v302 = vpop.f32.mrb[0].mxu0
  %v303 = vpop.f32.mrb[0].mxu0
  %v304 = vadd.f32 0.0, %v303
  %v305 = vpop.f32.mrb[0].mxu0
  %306 = vmatprep.mubr.bf16.mxu0 %v115
  %307 = vmatmul.mubr.bf16.gmra.mrb[0].mxu0 %v114
  %v308 = vpop.f32.mrb[0].mxu0
  %v309 = vadd.f32 0.0, %v308
  %v310 = vpop.f32.mrb[0].mxu0
  %v311 = vpop.f32.mrb[0].mxu0
  %v312 = vpop.f32.mrb[0].mxu0
  %313 = vdwg.mxu0
  %v314 = vadd.f32 %v261, %v264
  %v315 = vadd.f32 %v314, %v269
  %v316 = vadd.f32 %v315, %v272
  %v317 = vadd.f32 %v316, %v277
  %v318 = vadd.f32 %v317, %v280
  %v319 = vadd.f32 %v318, %v285
  %v320 = vadd.f32 %v319, %v288
  %v321 = vadd.f32 %v320, %v293
  %v322 = vadd.f32 %v321, %v296
  %v323 = vadd.f32 %v322, %v301
  %v324 = vadd.f32 %v323, %v304
  %vm325 = vcmask 1041408
  %v326 = vsel %vm325, %v309, 0.0
  %v327 = vadd.f32 %v324, %v326
  %v328 = vrot.slane %v327, 4
  %v329 = vadd.f32 %v327, %v328
  %v330 = vrot.slane %v329, 2
  %v331 = vadd.f32 %v329, %v330
  %v332 = vrot.slane %v331, 1
  %v333 = vadd.f32 %v331, %v332
  %v334 = vmul.f32 %v261, %v261
  %v335 = vmul.f32 %v264, %v264
  %v336 = vmul.f32 %v269, %v269
  %v337 = vmul.f32 %v272, %v272
  %v338 = vmul.f32 %v277, %v277
  %v339 = vmul.f32 %v280, %v280
  %v340 = vmul.f32 %v285, %v285
  %v341 = vmul.f32 %v288, %v288
  %v342 = vmul.f32 %v293, %v293
  %v343 = vmul.f32 %v296, %v296
  %v344 = vmul.f32 %v301, %v301
  %v345 = vmul.f32 %v304, %v304
  %v346 = vmul.f32 %v309, %v309
  %v347 = vadd.f32 %v334, %v335
  %v348 = vadd.f32 %v347, %v336
  %v349 = vadd.f32 %v348, %v337
  %v350 = vadd.f32 %v349, %v338
  %v351 = vadd.f32 %v350, %v339
  %v352 = vadd.f32 %v351, %v340
  %v353 = vadd.f32 %v352, %v341
  %v354 = vadd.f32 %v353, %v342
  %v355 = vadd.f32 %v354, %v343
  %v356 = vadd.f32 %v355, %v344
  %v357 = vadd.f32 %v356, %v345
  %v358 = vsel %vm325, %v346, 0.0
  %v359 = vadd.f32 %v357, %v358
  %v360 = vrot.slane %v359, 4
  %v361 = vadd.f32 %v359, %v360
  %v362 = vrot.slane %v361, 2
  %v363 = vadd.f32 %v361, %v362
  %v364 = vrot.slane %v363, 1
  %v365 = vadd.f32 %v363, %v364
  %v366 = vadd.f32 %v333, 0.0
  %368 = vrot.lane.b32.xlu0 %v333, 96
  %v369 = vpop.permute.xlu0 %368
  %v371 = vadd.f32 %v366, %v369
  %372 = vrot.lane.b32.xlu0 %v333, 64
  %v373 = vpop.permute.xlu0 %372
  %v375 = vadd.f32 %v371, %v373
  %376 = vrot.lane.b32.xlu0 %v333, 32
  %v377 = vpop.permute.xlu0 %376
  %v379 = vadd.f32 %v375, %v377
  %v380 = vadd.f32 %v365, 0.0
  %382 = vrot.lane.b32.xlu0 %v365, 96
  %v383 = vpop.permute.xlu0 %382
  %v385 = vadd.f32 %v380, %v383
  %386 = vrot.lane.b32.xlu0 %v365, 64
  %v387 = vpop.permute.xlu0 %386
  %v389 = vadd.f32 %v385, %v387
  %390 = vrot.lane.b32.xlu0 %v365, 32
  %v391 = vpop.permute.xlu0 %390
  %v393 = vadd.f32 %v389, %v391
  %v394 = vrcp.pop 392.0
  %v395 = vmul.f32 %v379, %v394
  %v396 = vmul.f32 %v393, %v394
  %v397 = vmul.f32 %v395, %v395
  %v398 = vsub.f32 %v396, %v397
  %v399 = vadd.f32 %v398, 1e-05
  %v400 = vrsqrt.pop %v399
  %v401 = vld [vmem:[%s2] sm:$0x1]
  %v402 = vmul.f32 %v401, %v400
  %v403 = vld [vmem:[%s3] sm:$0x1]
  %v404 = vmul.f32 %v395, %v402
  %v405 = vsub.f32 %v403, %v404
  %v407 = vlaneseq
  %v408 = vshrl.u32 %v407, 7
  %v409 = vsub.s32 0, %v408
  %v410 = vrot.slane %v402, %v409
  %411 = vrot.lane.b32.xlu0 %v410, 32
  %v412 = vpop.permute.xlu0 %411
  %414 = vrot.lane.b32.xlu0 %v410, 64
  %v415 = vpop.permute.xlu0 %414
  %417 = vrot.lane.b32.xlu0 %v410, 96
  %v418 = vpop.permute.xlu0 %417
  %vm420 = vcmask 261120
  %v421 = vsel %vm420, %v402, %v412
  %vm422 = vcmask 523264
  %v423 = vsel %vm422, %v421, %v415
  %vm424 = vcmask 785408
  %v425 = vsel %vm424, %v423, %v418
  %v427 = vlaneseq
  %v428 = vshrl.u32 %v427, 7
  %v429 = vsub.s32 0, %v428
  %v430 = vrot.slane %v405, %v429
  %431 = vrot.lane.b32.xlu0 %v430, 32
  %v432 = vpop.permute.xlu0 %431
  %434 = vrot.lane.b32.xlu0 %v430, 64
  %v435 = vpop.permute.xlu0 %434
  %437 = vrot.lane.b32.xlu0 %v430, 96
  %v438 = vpop.permute.xlu0 %437
  %v440 = vsel %vm420, %v405, %v432
  %v441 = vsel %vm422, %v440, %v435
  %v442 = vsel %vm424, %v441, %v438
  %v443 = vlaneseq
  %v444 = vshrl.u32 %v443, 7
  %v445 = vsub.s32 0, %v444
  %v446 = vrot.slane %v425, %v445
  %v447 = vmul.f32 %v261, %v446
  %v448 = vmul.f32 %v264, %v446
  %v449 = vmul.f32 %v269, %v446
  %v450 = vmul.f32 %v272, %v446
  %v451 = vmul.f32 %v277, %v446
  %v452 = vmul.f32 %v280, %v446
  %v453 = vmul.f32 %v285, %v446
  %v454 = vmul.f32 %v288, %v446
  %v455 = vmul.f32 %v293, %v446
  %v456 = vmul.f32 %v296, %v446
  %v457 = vmul.f32 %v301, %v446
  %v458 = vmul.f32 %v304, %v446
  %v459 = vmul.f32 %v309, %v446
  %v460 = vlaneseq
  %v461 = vshrl.u32 %v460, 7
  %v462 = vsub.s32 0, %v461
  %v463 = vrot.slane %v442, %v462
  %v464 = vadd.f32 %v447, %v463
  %v465 = vadd.f32 %v448, %v463
  %v466 = vadd.f32 %v449, %v463
  %v467 = vadd.f32 %v450, %v463
  %v468 = vadd.f32 %v451, %v463
  %v469 = vadd.f32 %v452, %v463
  %v470 = vadd.f32 %v453, %v463
  %v471 = vadd.f32 %v454, %v463
  %v472 = vadd.f32 %v455, %v463
  %v473 = vadd.f32 %v456, %v463
  %v474 = vadd.f32 %v457, %v463
  %v475 = vadd.f32 %v458, %v463
  %v476 = vadd.f32 %v459, %v463
  %vm477 = vcmp.ge.f32.partialorder %v464, 0.0
  %vm478 = vcmp.ge.f32.partialorder %v465, 0.0
  %vm479 = vcmp.ge.f32.partialorder %v466, 0.0
  %vm480 = vcmp.ge.f32.partialorder %v467, 0.0
  %vm481 = vcmp.ge.f32.partialorder %v468, 0.0
  %vm482 = vcmp.ge.f32.partialorder %v469, 0.0
  %vm483 = vcmp.ge.f32.partialorder %v470, 0.0
  %vm484 = vcmp.ge.f32.partialorder %v471, 0.0
  %vm485 = vcmp.ge.f32.partialorder %v472, 0.0
  %vm486 = vcmp.ge.f32.partialorder %v473, 0.0
  %vm487 = vcmp.ge.f32.partialorder %v474, 0.0
  %vm488 = vcmp.ge.f32.partialorder %v475, 0.0
  %vm489 = vcmp.ge.f32.partialorder %v476, 0.0
  %v490 = vmul.f32 %v464, 0.01
  %v491 = vmul.f32 %v465, 0.01
  %v492 = vmul.f32 %v466, 0.01
  %v493 = vmul.f32 %v467, 0.01
  %v494 = vmul.f32 %v468, 0.01
  %v495 = vmul.f32 %v469, 0.01
  %v496 = vmul.f32 %v470, 0.01
  %v497 = vmul.f32 %v471, 0.01
  %v498 = vmul.f32 %v472, 0.01
  %v499 = vmul.f32 %v473, 0.01
  %v500 = vmul.f32 %v474, 0.01
  %v501 = vmul.f32 %v475, 0.01
  %v502 = vmul.f32 %v476, 0.01
  %v503 = vsel %vm477, %v464, %v490
  %v504 = vsel %vm478, %v465, %v491
  %v505 = vsel %vm479, %v466, %v492
  %v506 = vsel %vm480, %v467, %v493
  %v507 = vsel %vm481, %v468, %v494
  %v508 = vsel %vm482, %v469, %v495
  %v509 = vsel %vm483, %v470, %v496
  %v510 = vsel %vm484, %v471, %v497
  %v511 = vsel %vm485, %v472, %v498
  %v512 = vsel %vm486, %v473, %v499
  %v513 = vsel %vm487, %v474, %v500
  %v514 = vsel %vm488, %v475, %v501
  %v515 = vsel %vm489, %v476, %v502
  %v516 = vpack.c.bf16 %v504, %v503
  %v517 = vpack.c.bf16 %v506, %v505
  %v518 = vpack.c.bf16 %v508, %v507
  %v519 = vpack.c.bf16 %v510, %v509
  %v520 = vpack.c.bf16 %v512, %v511
  %v521 = vpack.c.bf16 %v514, %v513
  %v522 = vpack.c.bf16 %v515, %v515
  %v530 = vunpack.c.l.b16 %v516
  %v531 = vunpack.c.h.b16 %v516
  %v532 = vunpack.c.l.b16 %v517
  %v533 = vunpack.c.h.b16 %v517
  %v534 = vunpack.c.l.b16 %v518
  %v535 = vunpack.c.h.b16 %v518
  %v536 = vunpack.c.l.b16 %v519
  %v537 = vunpack.c.h.b16 %v519
  %v538 = vunpack.c.l.b16 %v520
  %v539 = vunpack.c.h.b16 %v520
  %v540 = vunpack.c.l.b16 %v521
  %v541 = vunpack.c.h.b16 %v521
  %v542 = vunpack.c.l.b16 %v522
  %v543 = vpack.c.b16 %v530, %v530
  %v544 = vpack.c.b16 %v531, %v531
  %v545 = vpack.c.b16 %v532, %v532
  %v546 = vpack.c.b16 %v533, %v533
  %v547 = vpack.c.b16 %v534, %v534
  %v548 = vpack.c.b16 %v535, %v535
  %v549 = vpack.c.b16 %v536, %v536
  %v550 = vpack.c.b16 %v537, %v537
  %v551 = vpack.c.b16 %v538, %v538
  %v552 = vpack.c.b16 %v539, %v539
  %v553 = vpack.c.b16 %v540, %v540
  %v554 = vpack.c.b16 %v541, %v541
  %v555 = vpack.c.b16 %v542, %v542
  %569 = vst [vmem:[%s4] sm:$0xf] %v543
  %570 = vst [vmem:[%s4 + $0x4] sm:$0xf] %v544
  %571 = vst [vmem:[%s4 + $0x8] sm:$0xf] %v545
  %572 = vst [vmem:[%s4 + $0xc] sm:$0xf] %v546
  %573 = vst [vmem:[%s4 + $0x10] sm:$0xf] %v547
  %574 = vst [vmem:[%s4 + $0x14] sm:$0xf] %v548
  %575 = vst [vmem:[%s4 + $0x18] sm:$0xf] %v549
  %576 = vst [vmem:[%s4 + $0x1c] sm:$0xf] %v550
  %577 = vst [vmem:[%s4 + $0x20] sm:$0xf] %v551
  %578 = vst [vmem:[%s4 + $0x24] sm:$0xf] %v552
  %579 = vst [vmem:[%s4 + $0x28] sm:$0xf] %v553
  %580 = vst [vmem:[%s4 + $0x2c] sm:$0xf] %v554
  %581 = vst [vmem:[%s4 + $0x30] sm:$0x1] %v555
  // Predicated region
  $region18: #{vae_forward.9} parent=0 // pred_check
    _
  $region19: #{vae_forward.9} parent=0 // pred_check_branch
    %583 = sbr.rel (0) target = $region21
  $region20: #{vae_forward.9} parent=0 // pred_region
    _
  $region21: #{vae_forward.9} parent=0 // pred_fallthru
    _
  // Predicated region
  $region22: #{vae_forward.9} parent=0 // pred_check
    _
  $region23: #{vae_forward.9} parent=0 // pred_check_branch
    %585 = sbr.rel (0) target = $region25
  $region24: #{vae_forward.9} parent=0 // pred_region
    _
  $region25: #{vae_forward.9} parent=0 // pred_fallthru
    _

// kernel: vae_forward.8
$region0: #{vae_forward.8}
  #allocation0 [shape = 'u32[]', space=smem, size = 0x4, offset = 0x4, fixed_abs, tag = 'smem constant byte address 0x4 - core index']
  #allocation1 [shape = 'u32[144,128]{1,0:T(1,128)}', space=vmem, size = 0x12000, scoped, tag = 'internal scratch']
  %s0 = inlined_call_operand.vmem [shape: bf16[2,3136], index: 0, kind: input, shape index: {}]
  %s1 = inlined_call_operand.vmem [shape: bf16[3136,20], index: 1, kind: input, shape index: {}]
  %s2 = inlined_call_operand.vmem [shape: f32[1,20], index: 2, kind: input, shape index: {}]
  %s3 = inlined_call_operand.vmem [shape: f32[2,10], index: 3, kind: input, shape index: {}]
  %s4 = inlined_call_operand.vmem [shape: bf16[10,3136], index: 4, kind: input, shape index: {}]
  %s5 = inlined_call_operand.vmem [shape: f32[1,3136], index: 5, kind: input, shape index: {}]
  %s6 = inlined_call_operand.hbm [shape: f32[2,10], index: 6, kind: output, shape index: {0}]
  %s7 = inlined_call_operand.hbm [shape: f32[2,10], index: 7, kind: output, shape index: {1}]
  %s8 = inlined_call_operand.vmem [shape: bf16[2,3136], index: 8, kind: output, shape index: {2}]
  %9 = xla_tuple %s6, %s7, %s8
  %s10 = sld [smem:[#allocation0]]
  $region50: #{vae_forward.8} parent=0
    _
  %s12 = ssub.s32 1, %s10
  %s13 = scalar_select 0, %s12, %s10
  $region1: #{vae_forward.8} parent=0
    #allocation2 [shape = 'u8[1024]{0}', space=vmem, size = 0x400, scoped, tag = 'output window, operand 0, single buffered']
    #allocation3 [shape = 's32[1]{0}', space=sflag, size = 0x4, scoped, tag = 'scoped memory for vae_forward.8']
    #allocation4 [shape = 'u8[1024]{0}', space=vmem, size = 0x400, scoped, tag = 'output window, operand 1, single buffered']
    #allocation5 [shape = 's32[1]{0}', space=sflag, size = 0x4, scoped, tag = 'scoped memory for vae_forward.8']
    %14 = vsyncpa [#allocation3], 0
    %15 = vsyncpa [#allocation5], 0
    // Predicated region
    $region2: #{vae_forward.8} parent=1 // pred_check
      _
    $region3: #{vae_forward.8} parent=1 // pred_check_branch
      %17 = sbr.rel (0) target = $region5
    $region4: #{vae_forward.8} parent=1 // pred_region
      _
    $region5: #{vae_forward.8} parent=1 // pred_fallthru
      _
    // Predicated region
    $region6: #{vae_forward.8} parent=1 // pred_check
      _
    $region7: #{vae_forward.8} parent=1 // pred_check_branch
      %19 = sbr.rel (0) target = $region9
    $region8: #{vae_forward.8} parent=1 // pred_region
      _
    $region9: #{vae_forward.8} parent=1 // pred_fallthru
      _
    // Predicated region
    $region10: #{vae_forward.8} parent=1 // pred_check
      _
    $region11: #{vae_forward.8} parent=1 // pred_check_branch
      %21 = sbr.rel (0) target = $region13
    $region12: #{vae_forward.8} parent=1 // pred_region
      _
    $region13: #{vae_forward.8} parent=1 // pred_fallthru
      _
    // Predicated region
    $region14: #{vae_forward.8} parent=1 // pred_check
      _
    $region15: #{vae_forward.8} parent=1 // pred_check_branch
      %23 = sbr.rel (0) target = $region17
    $region16: #{vae_forward.8} parent=1 // pred_region
      _
    $region17: #{vae_forward.8} parent=1 // pred_fallthru
      _
    // Predicated region
    $region18: #{vae_forward.8} parent=1 // pred_check
      _
    $region19: #{vae_forward.8} parent=1 // pred_check_branch
      %25 = sbr.rel (0) target = $region21
    $region20: #{vae_forward.8} parent=1 // pred_region
      _
    $region21: #{vae_forward.8} parent=1 // pred_fallthru
      _
    // Predicated region
    $region22: #{vae_forward.8} parent=1 // pred_check
      _
    $region23: #{vae_forward.8} parent=1 // pred_check_branch
      %27 = sbr.rel (0) target = $region25
    $region24: #{vae_forward.8} parent=1 // pred_region
      _
    $region25: #{vae_forward.8} parent=1 // pred_fallthru
      _
    %v29 = vld [vmem:[%s0] sm:$0xff]
    %v30 = vld [vmem:[%s0 + $0x8] sm:$0xff]
    %v31 = vld [vmem:[%s0 + $0x10] sm:$0xff]
    %v32 = vld [vmem:[%s0 + $0x18] sm:$0x1]
    %v33 = vld [vmem:[%s1] sm:$0xf]
    %v34 = vld [vmem:[%s1 + $0x4] sm:$0xf]
    %v35 = vld [vmem:[%s1 + $0x8] sm:$0xf]
    %v36 = vld [vmem:[%s1 + $0xc] sm:$0xf]
    %v37 = vld [vmem:[%s1 + $0x10] sm:$0xf]
    %v38 = vld [vmem:[%s1 + $0x14] sm:$0xf]
    %v39 = vld [vmem:[%s1 + $0x18] sm:$0xf]
    %v40 = vld [vmem:[%s1 + $0x1c] sm:$0xf]
    %v41 = vld [vmem:[%s1 + $0x20] sm:$0xf]
    %v42 = vld [vmem:[%s1 + $0x24] sm:$0xf]
    %v43 = vld [vmem:[%s1 + $0x28] sm:$0xf]
    %v44 = vld [vmem:[%s1 + $0x2c] sm:$0xf]
    %v45 = vld [vmem:[%s1 + $0x30] sm:$0xf]
    %v46 = vld [vmem:[%s1 + $0x34] sm:$0xf]
    %v47 = vld [vmem:[%s1 + $0x38] sm:$0xf]
    %v48 = vld [vmem:[%s1 + $0x3c] sm:$0xf]
    %v49 = vld [vmem:[%s1 + $0x40] sm:$0xf]
    %v50 = vld [vmem:[%s1 + $0x44] sm:$0xf]
    %v51 = vld [vmem:[%s1 + $0x48] sm:$0xf]
    %v52 = vld [vmem:[%s1 + $0x4c] sm:$0xf]
    %v53 = vld [vmem:[%s1 + $0x50] sm:$0xf]
    %v54 = vld [vmem:[%s1 + $0x54] sm:$0xf]
    %v55 = vld [vmem:[%s1 + $0x58] sm:$0xf]
    %v56 = vld [vmem:[%s1 + $0x5c] sm:$0xf]
    %v57 = vld [vmem:[%s1 + $0x60] sm:$0xf]
    %v58 = vld [vmem:[%s1 + $0x64] sm:$0xf]
    %v59 = vld [vmem:[%s1 + $0x68] sm:$0xf]
    %v60 = vld [vmem:[%s1 + $0x6c] sm:$0xf]
    %v61 = vld [vmem:[%s1 + $0x70] sm:$0xf]
    %v62 = vld [vmem:[%s1 + $0x74] sm:$0xf]
    %v63 = vld [vmem:[%s1 + $0x78] sm:$0xf]
    %v64 = vld [vmem:[%s1 + $0x7c] sm:$0xf]
    %v65 = vld [vmem:[%s1 + $0x80] sm:$0xf]
    %v66 = vld [vmem:[%s1 + $0x84] sm:$0xf]
    %v67 = vld [vmem:[%s1 + $0x88] sm:$0xf]
    %v68 = vld [vmem:[%s1 + $0x8c] sm:$0xf]
    %v69 = vld [vmem:[%s1 + $0x90] sm:$0xf]
    %v70 = vld [vmem:[%s1 + $0x94] sm:$0xf]
    %v71 = vld [vmem:[%s1 + $0x98] sm:$0xf]
    %v72 = vld [vmem:[%s1 + $0x9c] sm:$0xf]
    %v73 = vld [vmem:[%s1 + $0xa0] sm:$0xf]
    %v74 = vld [vmem:[%s1 + $0xa4] sm:$0xf]
    %v75 = vld [vmem:[%s1 + $0xa8] sm:$0xf]
    %v76 = vld [vmem:[%s1 + $0xac] sm:$0xf]
    %v77 = vld [vmem:[%s1 + $0xb0] sm:$0xf]
    %v78 = vld [vmem:[%s1 + $0xb4] sm:$0xf]
    %v79 = vld [vmem:[%s1 + $0xb8] sm:$0xf]
    %v80 = vld [vmem:[%s1 + $0xbc] sm:$0xf]
    %v81 = vld [vmem:[%s1 + $0xc0] sm:$0xf]
    %v82 = vld [vmem:[%s1 + $0xc4] sm:$0xf]
    %v83 = vld [vmem:[%s1 + $0xc8] sm:$0xf]
    %v84 = vld [vmem:[%s1 + $0xcc] sm:$0xf]
    %v85 = vld [vmem:[%s1 + $0xd0] sm:$0xf]
    %v86 = vld [vmem:[%s1 + $0xd4] sm:$0xf]
    %v87 = vld [vmem:[%s1 + $0xd8] sm:$0xf]
    %v88 = vld [vmem:[%s1 + $0xdc] sm:$0xf]
    %v89 = vld [vmem:[%s1 + $0xe0] sm:$0xf]
    %v90 = vld [vmem:[%s1 + $0xe4] sm:$0xf]
    %v91 = vld [vmem:[%s1 + $0xe8] sm:$0xf]
    %v92 = vld [vmem:[%s1 + $0xec] sm:$0xf]
    %v93 = vld [vmem:[%s1 + $0xf0] sm:$0xf]
    %v94 = vld [vmem:[%s1 + $0xf4] sm:$0xf]
    %v95 = vld [vmem:[%s1 + $0xf8] sm:$0xf]
    %v96 = vld [vmem:[%s1 + $0xfc] sm:$0xf]
    %v97 = vld [vmem:[%s1 + $0x100] sm:$0xf]
    %v98 = vld [vmem:[%s1 + $0x104] sm:$0xf]
    %v99 = vld [vmem:[%s1 + $0x108] sm:$0xf]
    %v100 = vld [vmem:[%s1 + $0x10c] sm:$0xf]
    %v101 = vld [vmem:[%s1 + $0x110] sm:$0xf]
    %v102 = vld [vmem:[%s1 + $0x114] sm:$0xf]
    %v103 = vld [vmem:[%s1 + $0x118] sm:$0xf]
    %v104 = vld [vmem:[%s1 + $0x11c] sm:$0xf]
    %v105 = vld [vmem:[%s1 + $0x120] sm:$0xf]
    %v106 = vld [vmem:[%s1 + $0x124] sm:$0xf]
    %v107 = vld [vmem:[%s1 + $0x128] sm:$0xf]
    %v108 = vld [vmem:[%s1 + $0x12c] sm:$0xf]
    %v109 = vld [vmem:[%s1 + $0x130] sm:$0xf]
    %v110 = vld [vmem:[%s1 + $0x134] sm:$0xf]
    %v111 = vld [vmem:[%s1 + $0x138] sm:$0xf]
    %v112 = vld [vmem:[%s1 + $0x13c] sm:$0xf]
    %v113 = vld [vmem:[%s1 + $0x140] sm:$0xf]
    %v114 = vld [vmem:[%s1 + $0x144] sm:$0xf]
    %v115 = vld [vmem:[%s1 + $0x148] sm:$0xf]
    %v116 = vld [vmem:[%s1 + $0x14c] sm:$0xf]
    %v117 = vld [vmem:[%s1 + $0x150] sm:$0xf]
    %v118 = vld [vmem:[%s1 + $0x154] sm:$0xf]
    %v119 = vld [vmem:[%s1 + $0x158] sm:$0xf]
    %v120 = vld [vmem:[%s1 + $0x15c] sm:$0xf]
    %v121 = vld [vmem:[%s1 + $0x160] sm:$0xf]
    %v122 = vld [vmem:[%s1 + $0x164] sm:$0xf]
    %v123 = vld [vmem:[%s1 + $0x168] sm:$0xf]
    %v124 = vld [vmem:[%s1 + $0x16c] sm:$0xf]
    %v125 = vld [vmem:[%s1 + $0x170] sm:$0xf]
    %v126 = vld [vmem:[%s1 + $0x174] sm:$0xf]
    %v127 = vld [vmem:[%s1 + $0x178] sm:$0xf]
    %v128 = vld [vmem:[%s1 + $0x17c] sm:$0xf]
    %v129 = vld [vmem:[%s1 + $0x180] sm:$0xf]
    %v130 = vld [vmem:[%s1 + $0x184] sm:$0xf]
    %v131 = vld [vmem:[%s1 + $0x188] sm:$0xf]
    %v132 = vld [vmem:[%s1 + $0x18c] sm:$0xf]
    %v133 = vld [vmem:[%s1 + $0x190] sm:$0xf]
    %v134 = vld [vmem:[%s1 + $0x194] sm:$0xf]
    %v135 = vld [vmem:[%s1 + $0x198] sm:$0xf]
    %v136 = vld [vmem:[%s1 + $0x19c] sm:$0xf]
    %v137 = vld [vmem:[%s1 + $0x1a0] sm:$0xf]
    %v138 = vld [vmem:[%s1 + $0x1a4] sm:$0xf]
    %v139 = vld [vmem:[%s1 + $0x1a8] sm:$0xf]
    %v140 = vld [vmem:[%s1 + $0x1ac] sm:$0xf]
    %v141 = vld [vmem:[%s1 + $0x1b0] sm:$0xf]
    %v142 = vld [vmem:[%s1 + $0x1b4] sm:$0xf]
    %v143 = vld [vmem:[%s1 + $0x1b8] sm:$0xf]
    %v144 = vld [vmem:[%s1 + $0x1bc] sm:$0xf]
    %v145 = vld [vmem:[%s1 + $0x1c0] sm:$0xf]
    %v146 = vld [vmem:[%s1 + $0x1c4] sm:$0xf]
    %v147 = vld [vmem:[%s1 + $0x1c8] sm:$0xf]
    %v148 = vld [vmem:[%s1 + $0x1cc] sm:$0xf]
    %v149 = vld [vmem:[%s1 + $0x1d0] sm:$0xf]
    %v150 = vld [vmem:[%s1 + $0x1d4] sm:$0xf]
    %v151 = vld [vmem:[%s1 + $0x1d8] sm:$0xf]
    %v152 = vld [vmem:[%s1 + $0x1dc] sm:$0xf]
    %v153 = vld [vmem:[%s1 + $0x1e0] sm:$0xf]
    %v154 = vld [vmem:[%s1 + $0x1e4] sm:$0xf]
    %v155 = vld [vmem:[%s1 + $0x1e8] sm:$0xf]
    %v156 = vld [vmem:[%s1 + $0x1ec] sm:$0xf]
    %v157 = vld [vmem:[%s1 + $0x1f0] sm:$0xf]
    %v158 = vld [vmem:[%s1 + $0x1f4] sm:$0xf]
    %v159 = vld [vmem:[%s1 + $0x1f8] sm:$0xf]
    %v160 = vld [vmem:[%s1 + $0x1fc] sm:$0xf]
    %v161 = vld [vmem:[%s1 + $0x200] sm:$0xf]
    %v162 = vld [vmem:[%s1 + $0x204] sm:$0xf]
    %v163 = vld [vmem:[%s1 + $0x208] sm:$0xf]
    %v164 = vld [vmem:[%s1 + $0x20c] sm:$0xf]
    %v165 = vld [vmem:[%s1 + $0x210] sm:$0xf]
    %v166 = vld [vmem:[%s1 + $0x214] sm:$0xf]
    %v167 = vld [vmem:[%s1 + $0x218] sm:$0xf]
    %v168 = vld [vmem:[%s1 + $0x21c] sm:$0xf]
    %v169 = vld [vmem:[%s1 + $0x220] sm:$0xf]
    %v170 = vld [vmem:[%s1 + $0x224] sm:$0xf]
    %v171 = vld [vmem:[%s1 + $0x228] sm:$0xf]
    %v172 = vld [vmem:[%s1 + $0x22c] sm:$0xf]
    %v173 = vld [vmem:[%s1 + $0x230] sm:$0xf]
    %v174 = vld [vmem:[%s1 + $0x234] sm:$0xf]
    %v175 = vld [vmem:[%s1 + $0x238] sm:$0xf]
    %v176 = vld [vmem:[%s1 + $0x23c] sm:$0xf]
    %v177 = vld [vmem:[%s1 + $0x240] sm:$0xf]
    %v178 = vld [vmem:[%s1 + $0x244] sm:$0xf]
    %v179 = vld [vmem:[%s1 + $0x248] sm:$0xf]
    %v180 = vld [vmem:[%s1 + $0x24c] sm:$0xf]
    %v181 = vld [vmem:[%s1 + $0x250] sm:$0xf]
    %v182 = vld [vmem:[%s1 + $0x254] sm:$0xf]
    %v183 = vld [vmem:[%s1 + $0x258] sm:$0xf]
    %v184 = vld [vmem:[%s1 + $0x25c] sm:$0xf]
    %v185 = vld [vmem:[%s1 + $0x260] sm:$0xf]
    %v186 = vld [vmem:[%s1 + $0x264] sm:$0xf]
    %v187 = vld [vmem:[%s1 + $0x268] sm:$0xf]
    %v188 = vld [vmem:[%s1 + $0x26c] sm:$0xf]
    %v189 = vld [vmem:[%s1 + $0x270] sm:$0xf]
    %v190 = vld [vmem:[%s1 + $0x274] sm:$0xf]
    %v191 = vld [vmem:[%s1 + $0x278] sm:$0xf]
    %v192 = vld [vmem:[%s1 + $0x27c] sm:$0xf]
    %v193 = vld [vmem:[%s1 + $0x280] sm:$0xf]
    %v194 = vld [vmem:[%s1 + $0x284] sm:$0xf]
    %v195 = vld [vmem:[%s1 + $0x288] sm:$0xf]
    %v196 = vld [vmem:[%s1 + $0x28c] sm:$0xf]
    %v197 = vld [vmem:[%s1 + $0x290] sm:$0xf]
    %v198 = vld [vmem:[%s1 + $0x294] sm:$0xf]
    %v199 = vld [vmem:[%s1 + $0x298] sm:$0xf]
    %v200 = vld [vmem:[%s1 + $0x29c] sm:$0xf]
    %v201 = vld [vmem:[%s1 + $0x2a0] sm:$0xf]
    %v202 = vld [vmem:[%s1 + $0x2a4] sm:$0xf]
    %v203 = vld [vmem:[%s1 + $0x2a8] sm:$0xf]
    %v204 = vld [vmem:[%s1 + $0x2ac] sm:$0xf]
    %v205 = vld [vmem:[%s1 + $0x2b0] sm:$0xf]
    %v206 = vld [vmem:[%s1 + $0x2b4] sm:$0xf]
    %v207 = vld [vmem:[%s1 + $0x2b8] sm:$0xf]
    %v208 = vld [vmem:[%s1 + $0x2bc] sm:$0xf]
    %v209 = vld [vmem:[%s1 + $0x2c0] sm:$0xf]
    %v210 = vld [vmem:[%s1 + $0x2c4] sm:$0xf]
    %v211 = vld [vmem:[%s1 + $0x2c8] sm:$0xf]
    %v212 = vld [vmem:[%s1 + $0x2cc] sm:$0xf]
    %v213 = vld [vmem:[%s1 + $0x2d0] sm:$0xf]
    %v214 = vld [vmem:[%s1 + $0x2d4] sm:$0xf]
    %v215 = vld [vmem:[%s1 + $0x2d8] sm:$0xf]
    %v216 = vld [vmem:[%s1 + $0x2dc] sm:$0xf]
    %v217 = vld [vmem:[%s1 + $0x2e0] sm:$0xf]
    %v218 = vld [vmem:[%s1 + $0x2e4] sm:$0xf]
    %v219 = vld [vmem:[%s1 + $0x2e8] sm:$0xf]
    %v220 = vld [vmem:[%s1 + $0x2ec] sm:$0xf]
    %v221 = vld [vmem:[%s1 + $0x2f0] sm:$0xf]
    %v222 = vld [vmem:[%s1 + $0x2f4] sm:$0xf]
    %v223 = vld [vmem:[%s1 + $0x2f8] sm:$0xf]
    %v224 = vld [vmem:[%s1 + $0x2fc] sm:$0xf]
    %v225 = vld [vmem:[%s1 + $0x300] sm:$0xf]
    %v226 = vld [vmem:[%s1 + $0x304] sm:$0xf]
    %v227 = vld [vmem:[%s1 + $0x308] sm:$0xf]
    %v228 = vld [vmem:[%s1 + $0x30c] sm:$0xf]
    %v229 = vld [vmem:[%s1 + $0x310] sm:$0xf]
    %v230 = vld [vmem:[%s1 + $0x314] sm:$0xf]
    %v231 = vld [vmem:[%s1 + $0x318] sm:$0xf]
    %v232 = vld [vmem:[%s1 + $0x31c] sm:$0xf]
    %v233 = vld [vmem:[%s1 + $0x320] sm:$0xf]
    %v234 = vld [vmem:[%s1 + $0x324] sm:$0xf]
    %v235 = vld [vmem:[%s1 + $0x328] sm:$0xf]
    %v236 = vld [vmem:[%s1 + $0x32c] sm:$0xf]
    %v237 = vld [vmem:[%s1 + $0x330] sm:$0xf]
    %v238 = vld [vmem:[%s1 + $0x334] sm:$0xf]
    %v239 = vld [vmem:[%s1 + $0x338] sm:$0xf]
    %v240 = vld [vmem:[%s1 + $0x33c] sm:$0xf]
    %v241 = vld [vmem:[%s1 + $0x340] sm:$0xf]
    %v242 = vld [vmem:[%s1 + $0x344] sm:$0xf]
    %v243 = vld [vmem:[%s1 + $0x348] sm:$0xf]
    %v244 = vld [vmem:[%s1 + $0x34c] sm:$0xf]
    %v245 = vld [vmem:[%s1 + $0x350] sm:$0xf]
    %v246 = vld [vmem:[%s1 + $0x354] sm:$0xf]
    %v247 = vld [vmem:[%s1 + $0x358] sm:$0xf]
    %v248 = vld [vmem:[%s1 + $0x35c] sm:$0xf]
    %v249 = vld [vmem:[%s1 + $0x360] sm:$0xf]
    %v250 = vld [vmem:[%s1 + $0x364] sm:$0xf]
    %v251 = vld [vmem:[%s1 + $0x368] sm:$0xf]
    %v252 = vld [vmem:[%s1 + $0x36c] sm:$0xf]
    %v253 = vld [vmem:[%s1 + $0x370] sm:$0xf]
    %v254 = vld [vmem:[%s1 + $0x374] sm:$0xf]
    %v255 = vld [vmem:[%s1 + $0x378] sm:$0xf]
    %v256 = vld [vmem:[%s1 + $0x37c] sm:$0xf]
    %v257 = vld [vmem:[%s1 + $0x380] sm:$0xf]
    %v258 = vld [vmem:[%s1 + $0x384] sm:$0xf]
    %v259 = vld [vmem:[%s1 + $0x388] sm:$0xf]
    %v260 = vld [vmem:[%s1 + $0x38c] sm:$0xf]
    %v261 = vld [vmem:[%s1 + $0x390] sm:$0xf]
    %v262 = vld [vmem:[%s1 + $0x394] sm:$0xf]
    %v263 = vld [vmem:[%s1 + $0x398] sm:$0xf]
    %v264 = vld [vmem:[%s1 + $0x39c] sm:$0xf]
    %v265 = vld [vmem:[%s1 + $0x3a0] sm:$0xf]
    %v266 = vld [vmem:[%s1 + $0x3a4] sm:$0xf]
    %v267 = vld [vmem:[%s1 + $0x3a8] sm:$0xf]
    %v268 = vld [vmem:[%s1 + $0x3ac] sm:$0xf]
    %v269 = vld [vmem:[%s1 + $0x3b0] sm:$0xf]
    %v270 = vld [vmem:[%s1 + $0x3b4] sm:$0xf]
    %v271 = vld [vmem:[%s1 + $0x3b8] sm:$0xf]
    %v272 = vld [vmem:[%s1 + $0x3bc] sm:$0xf]
    %v273 = vld [vmem:[%s1 + $0x3c0] sm:$0xf]
    %v274 = vld [vmem:[%s1 + $0x3c4] sm:$0xf]
    %v275 = vld [vmem:[%s1 + $0x3c8] sm:$0xf]
    %v276 = vld [vmem:[%s1 + $0x3cc] sm:$0xf]
    %v277 = vld [vmem:[%s1 + $0x3d0] sm:$0xf]
    %v278 = vld [vmem:[%s1 + $0x3d4] sm:$0xf]
    %v279 = vld [vmem:[%s1 + $0x3d8] sm:$0xf]
    %v280 = vld [vmem:[%s1 + $0x3dc] sm:$0xf]
    %v281 = vld [vmem:[%s1 + $0x3e0] sm:$0xf]
    %v282 = vld [vmem:[%s1 + $0x3e4] sm:$0xf]
    %v283 = vld [vmem:[%s1 + $0x3e8] sm:$0xf]
    %v284 = vld [vmem:[%s1 + $0x3ec] sm:$0xf]
    %v285 = vld [vmem:[%s1 + $0x3f0] sm:$0xf]
    %v286 = vld [vmem:[%s1 + $0x3f4] sm:$0xf]
    %v287 = vld [vmem:[%s1 + $0x3f8] sm:$0xf]
    %v288 = vld [vmem:[%s1 + $0x3fc] sm:$0xf]
    %v289 = vld [vmem:[%s1 + $0x400] sm:$0xf]
    %v290 = vld [vmem:[%s1 + $0x404] sm:$0xf]
    %v291 = vld [vmem:[%s1 + $0x408] sm:$0xf]
    %v292 = vld [vmem:[%s1 + $0x40c] sm:$0xf]
    %v293 = vld [vmem:[%s1 + $0x410] sm:$0xf]
    %v294 = vld [vmem:[%s1 + $0x414] sm:$0xf]
    %v295 = vld [vmem:[%s1 + $0x418] sm:$0xf]
    %v296 = vld [vmem:[%s1 + $0x41c] sm:$0xf]
    %v297 = vld [vmem:[%s1 + $0x420] sm:$0xf]
    %v298 = vld [vmem:[%s1 + $0x424] sm:$0xf]
    %v299 = vld [vmem:[%s1 + $0x428] sm:$0xf]
    %v300 = vld [vmem:[%s1 + $0x42c] sm:$0xf]
    %v301 = vld [vmem:[%s1 + $0x430] sm:$0xf]
    %v302 = vld [vmem:[%s1 + $0x434] sm:$0xf]
    %v303 = vld [vmem:[%s1 + $0x438] sm:$0xf]
    %v304 = vld [vmem:[%s1 + $0x43c] sm:$0xf]
    %v305 = vld [vmem:[%s1 + $0x440] sm:$0xf]
    %v306 = vld [vmem:[%s1 + $0x444] sm:$0xf]
    %v307 = vld [vmem:[%s1 + $0x448] sm:$0xf]
    %v308 = vld [vmem:[%s1 + $0x44c] sm:$0xf]
    %v309 = vld [vmem:[%s1 + $0x450] sm:$0xf]
    %v310 = vld [vmem:[%s1 + $0x454] sm:$0xf]
    %v311 = vld [vmem:[%s1 + $0x458] sm:$0xf]
    %v312 = vld [vmem:[%s1 + $0x45c] sm:$0xf]
    %v313 = vld [vmem:[%s1 + $0x460] sm:$0xf]
    %v314 = vld [vmem:[%s1 + $0x464] sm:$0xf]
    %v315 = vld [vmem:[%s1 + $0x468] sm:$0xf]
    %v316 = vld [vmem:[%s1 + $0x46c] sm:$0xf]
    %v317 = vld [vmem:[%s1 + $0x470] sm:$0xf]
    %v318 = vld [vmem:[%s1 + $0x474] sm:$0xf]
    %v319 = vld [vmem:[%s1 + $0x478] sm:$0xf]
    %v320 = vld [vmem:[%s1 + $0x47c] sm:$0xf]
    %v321 = vld [vmem:[%s1 + $0x480] sm:$0xf]
    %v322 = vld [vmem:[%s1 + $0x484] sm:$0xf]
    %v323 = vld [vmem:[%s1 + $0x488] sm:$0xf]
    %v324 = vld [vmem:[%s1 + $0x48c] sm:$0xf]
    %v325 = vld [vmem:[%s1 + $0x490] sm:$0xf]
    %v326 = vld [vmem:[%s1 + $0x494] sm:$0xf]
    %v327 = vld [vmem:[%s1 + $0x498] sm:$0xf]
    %v328 = vld [vmem:[%s1 + $0x49c] sm:$0xf]
    %v329 = vld [vmem:[%s1 + $0x4a0] sm:$0xf]
    %v330 = vld [vmem:[%s1 + $0x4a4] sm:$0xf]
    %v331 = vld [vmem:[%s1 + $0x4a8] sm:$0xf]
    %v332 = vld [vmem:[%s1 + $0x4ac] sm:$0xf]
    %v333 = vld [vmem:[%s1 + $0x4b0] sm:$0xf]
    %v334 = vld [vmem:[%s1 + $0x4b4] sm:$0xf]
    %v335 = vld [vmem:[%s1 + $0x4b8] sm:$0xf]
    %v336 = vld [vmem:[%s1 + $0x4bc] sm:$0xf]
    %v337 = vld [vmem:[%s1 + $0x4c0] sm:$0xf]
    %v338 = vld [vmem:[%s1 + $0x4c4] sm:$0xf]
    %v339 = vld [vmem:[%s1 + $0x4c8] sm:$0xf]
    %v340 = vld [vmem:[%s1 + $0x4cc] sm:$0xf]
    %v341 = vld [vmem:[%s1 + $0x4d0] sm:$0xf]
    %v342 = vld [vmem:[%s1 + $0x4d4] sm:$0xf]
    %v343 = vld [vmem:[%s1 + $0x4d8] sm:$0xf]
    %v344 = vld [vmem:[%s1 + $0x4dc] sm:$0xf]
    %v345 = vld [vmem:[%s1 + $0x4e0] sm:$0xf]
    %v346 = vld [vmem:[%s1 + $0x4e4] sm:$0xf]
    %v347 = vld [vmem:[%s1 + $0x4e8] sm:$0xf]
    %v348 = vld [vmem:[%s1 + $0x4ec] sm:$0xf]
    %v349 = vld [vmem:[%s1 + $0x4f0] sm:$0xf]
    %v350 = vld [vmem:[%s1 + $0x4f4] sm:$0xf]
    %v351 = vld [vmem:[%s1 + $0x4f8] sm:$0xf]
    %v352 = vld [vmem:[%s1 + $0x4fc] sm:$0xf]
    %v353 = vld [vmem:[%s1 + $0x500] sm:$0xf]
    %v354 = vld [vmem:[%s1 + $0x504] sm:$0xf]
    %v355 = vld [vmem:[%s1 + $0x508] sm:$0xf]
    %v356 = vld [vmem:[%s1 + $0x50c] sm:$0xf]
    %v357 = vld [vmem:[%s1 + $0x510] sm:$0xf]
    %v358 = vld [vmem:[%s1 + $0x514] sm:$0xf]
    %v359 = vld [vmem:[%s1 + $0x518] sm:$0xf]
    %v360 = vld [vmem:[%s1 + $0x51c] sm:$0xf]
    %v361 = vld [vmem:[%s1 + $0x520] sm:$0xf]
    %v362 = vld [vmem:[%s1 + $0x524] sm:$0xf]
    %v363 = vld [vmem:[%s1 + $0x528] sm:$0xf]
    %v364 = vld [vmem:[%s1 + $0x52c] sm:$0xf]
    %v365 = vld [vmem:[%s1 + $0x530] sm:$0xf]
    %v366 = vld [vmem:[%s1 + $0x534] sm:$0xf]
    %v367 = vld [vmem:[%s1 + $0x538] sm:$0xf]
    %v368 = vld [vmem:[%s1 + $0x53c] sm:$0xf]
    %v369 = vld [vmem:[%s1 + $0x540] sm:$0xf]
    %v370 = vld [vmem:[%s1 + $0x544] sm:$0xf]
    %v371 = vld [vmem:[%s1 + $0x548] sm:$0xf]
    %v372 = vld [vmem:[%s1 + $0x54c] sm:$0xf]
    %v373 = vld [vmem:[%s1 + $0x550] sm:$0xf]
    %v374 = vld [vmem:[%s1 + $0x554] sm:$0xf]
    %v375 = vld [vmem:[%s1 + $0x558] sm:$0xf]
    %v376 = vld [vmem:[%s1 + $0x55c] sm:$0xf]
    %v377 = vld [vmem:[%s1 + $0x560] sm:$0xf]
    %v378 = vld [vmem:[%s1 + $0x564] sm:$0xf]
    %v379 = vld [vmem:[%s1 + $0x568] sm:$0xf]
    %v380 = vld [vmem:[%s1 + $0x56c] sm:$0xf]
    %v381 = vld [vmem:[%s1 + $0x570] sm:$0xf]
    %v382 = vld [vmem:[%s1 + $0x574] sm:$0xf]
    %v383 = vld [vmem:[%s1 + $0x578] sm:$0xf]
    %v384 = vld [vmem:[%s1 + $0x57c] sm:$0xf]
    %v385 = vld [vmem:[%s1 + $0x580] sm:$0xf]
    %v386 = vld [vmem:[%s1 + $0x584] sm:$0xf]
    %v387 = vld [vmem:[%s1 + $0x588] sm:$0xf]
    %v388 = vld [vmem:[%s1 + $0x58c] sm:$0xf]
    %v389 = vld [vmem:[%s1 + $0x590] sm:$0xf]
    %v390 = vld [vmem:[%s1 + $0x594] sm:$0xf]
    %v391 = vld [vmem:[%s1 + $0x598] sm:$0xf]
    %v392 = vld [vmem:[%s1 + $0x59c] sm:$0xf]
    %v393 = vld [vmem:[%s1 + $0x5a0] sm:$0xf]
    %v394 = vld [vmem:[%s1 + $0x5a4] sm:$0xf]
    %v395 = vld [vmem:[%s1 + $0x5a8] sm:$0xf]
    %v396 = vld [vmem:[%s1 + $0x5ac] sm:$0xf]
    %v397 = vld [vmem:[%s1 + $0x5b0] sm:$0xf]
    %v398 = vld [vmem:[%s1 + $0x5b4] sm:$0xf]
    %v399 = vld [vmem:[%s1 + $0x5b8] sm:$0xf]
    %v400 = vld [vmem:[%s1 + $0x5bc] sm:$0xf]
    %v401 = vld [vmem:[%s1 + $0x5c0] sm:$0xf]
    %v402 = vld [vmem:[%s1 + $0x5c4] sm:$0xf]
    %v403 = vld [vmem:[%s1 + $0x5c8] sm:$0xf]
    %v404 = vld [vmem:[%s1 + $0x5cc] sm:$0xf]
    %v405 = vld [vmem:[%s1 + $0x5d0] sm:$0xf]
    %v406 = vld [vmem:[%s1 + $0x5d4] sm:$0xf]
    %v407 = vld [vmem:[%s1 + $0x5d8] sm:$0xf]
    %v408 = vld [vmem:[%s1 + $0x5dc] sm:$0xf]
    %v409 = vld [vmem:[%s1 + $0x5e0] sm:$0xf]
    %v410 = vld [vmem:[%s1 + $0x5e4] sm:$0xf]
    %v411 = vld [vmem:[%s1 + $0x5e8] sm:$0xf]
    %v412 = vld [vmem:[%s1 + $0x5ec] sm:$0xf]
    %v413 = vld [vmem:[%s1 + $0x5f0] sm:$0xf]
    %v414 = vld [vmem:[%s1 + $0x5f4] sm:$0xf]
    %v415 = vld [vmem:[%s1 + $0x5f8] sm:$0xf]
    %v416 = vld [vmem:[%s1 + $0x5fc] sm:$0xf]
    %v417 = vld [vmem:[%s1 + $0x600] sm:$0xf]
    %v418 = vld [vmem:[%s1 + $0x604] sm:$0xf]
    %v419 = vld [vmem:[%s1 + $0x608] sm:$0xf]
    %v420 = vld [vmem:[%s1 + $0x60c] sm:$0xf]
    %v421 = vld [vmem:[%s1 + $0x610] sm:$0xf]
    %v422 = vld [vmem:[%s1 + $0x614] sm:$0xf]
    %v423 = vld [vmem:[%s1 + $0x618] sm:$0xf]
    %v424 = vld [vmem:[%s1 + $0x61c] sm:$0xf]
    %v425 = vld [vmem:[%s2] sm:$0x1]
    %v427 = vlaneseq
    %v428 = vshrl.u32 %v427, 7
    %v429 = vsub.s32 0, %v428
    %v430 = vrot.slane %v425, %v429
    %v436 = vcombine.high %v29, %v29
    %v438 = vunpack.c.l.s4 1966171168
    %v439 = vunpack.c.0.s8 %v438
    %v440 = vlaneseq
    %v441 = vshrl.u32 %v440, 7
    %v442 = vsub.s32 %v439, %v441
    %v443 = vrot.slane %v29, %v442
    %v445 = vunpack.c.l.s4 1966171168
    %v446 = vunpack.c.0.s8 %v445
    %v447 = vlaneseq
    %v448 = vshrl.u32 %v447, 7
    %v449 = vsub.s32 %v446, %v448
    %v450 = vrot.slane %v436, %v449
    %v451 = vcombine.high %v443, %v443
    %v452 = vcombine.high %v450, %v450
    %v454 = vunpack.c.l.s4 1966171168
    %v455 = vunpack.c.0.s8 %v454
    %v456 = vlaneseq
    %v457 = vshrl.u32 %v456, 7
    %v458 = vsub.s32 %v455, %v457
    %v459 = vrot.slane %v443, %v458
    %v461 = vunpack.c.l.s4 1966171168
    %v462 = vunpack.c.0.s8 %v461
    %v463 = vlaneseq
    %v464 = vshrl.u32 %v463, 7
    %v465 = vsub.s32 %v462, %v464
    %v466 = vrot.slane %v450, %v465
    %v468 = vunpack.c.l.s4 1966171168
    %v469 = vunpack.c.0.s8 %v468
    %v470 = vlaneseq
    %v471 = vshrl.u32 %v470, 7
    %v472 = vsub.s32 %v469, %v471
    %v473 = vrot.slane %v451, %v472
    %v475 = vunpack.c.l.s4 1966171168
    %v476 = vunpack.c.0.s8 %v475
    %v477 = vlaneseq
    %v478 = vshrl.u32 %v477, 7
    %v479 = vsub.s32 %v476, %v478
    %v480 = vrot.slane %v452, %v479
    %v481 = vcombine.high %v459, %v459
    %v482 = vcombine.high %v466, %v466
    %v483 = vcombine.high %v473, %v473
    %v484 = vcombine.high %v480, %v480
    %v485 = vcombine.high %v30, %v30
    %v487 = vunpack.c.l.s4 1966171168
    %v488 = vunpack.c.0.s8 %v487
    %v489 = vlaneseq
    %v490 = vshrl.u32 %v489, 7
    %v491 = vsub.s32 %v488, %v490
    %v492 = vrot.slane %v30, %v491
    %v494 = vunpack.c.l.s4 1966171168
    %v495 = vunpack.c.0.s8 %v494
    %v496 = vlaneseq
    %v497 = vshrl.u32 %v496, 7
    %v498 = vsub.s32 %v495, %v497
    %v499 = vrot.slane %v485, %v498
    %v500 = vcombine.high %v492, %v492
    %v501 = vcombine.high %v499, %v499
    %v503 = vunpack.c.l.s4 1966171168
    %v504 = vunpack.c.0.s8 %v503
    %v505 = vlaneseq
    %v506 = vshrl.u32 %v505, 7
    %v507 = vsub.s32 %v504, %v506
    %v508 = vrot.slane %v492, %v507
    %v510 = vunpack.c.l.s4 1966171168
    %v511 = vunpack.c.0.s8 %v510
    %v512 = vlaneseq
    %v513 = vshrl.u32 %v512, 7
    %v514 = vsub.s32 %v511, %v513
    %v515 = vrot.slane %v499, %v514
    %v517 = vunpack.c.l.s4 1966171168
    %v518 = vunpack.c.0.s8 %v517
    %v519 = vlaneseq
    %v520 = vshrl.u32 %v519, 7
    %v521 = vsub.s32 %v518, %v520
    %v522 = vrot.slane %v500, %v521
    %v524 = vunpack.c.l.s4 1966171168
    %v525 = vunpack.c.0.s8 %v524
    %v526 = vlaneseq
    %v527 = vshrl.u32 %v526, 7
    %v528 = vsub.s32 %v525, %v527
    %v529 = vrot.slane %v501, %v528
    %v530 = vcombine.high %v508, %v508
    %v531 = vcombine.high %v515, %v515
    %v532 = vcombine.high %v522, %v522
    %v533 = vcombine.high %v529, %v529
    %v534 = vcombine.high %v31, %v31
    %v536 = vunpack.c.l.s4 1966171168
    %v537 = vunpack.c.0.s8 %v536
    %v538 = vlaneseq
    %v539 = vshrl.u32 %v538, 7
    %v540 = vsub.s32 %v537, %v539
    %v541 = vrot.slane %v31, %v540
    %v543 = vunpack.c.l.s4 1966171168
    %v544 = vunpack.c.0.s8 %v543
    %v545 = vlaneseq
    %v546 = vshrl.u32 %v545, 7
    %v547 = vsub.s32 %v544, %v546
    %v548 = vrot.slane %v534, %v547
    %v549 = vcombine.high %v541, %v541
    %v550 = vcombine.high %v548, %v548
    %v552 = vunpack.c.l.s4 1966171168
    %v553 = vunpack.c.0.s8 %v552
    %v554 = vlaneseq
    %v555 = vshrl.u32 %v554, 7
    %v556 = vsub.s32 %v553, %v555
    %v557 = vrot.slane %v541, %v556
    %v559 = vunpack.c.l.s4 1966171168
    %v560 = vunpack.c.0.s8 %v559
    %v561 = vlaneseq
    %v562 = vshrl.u32 %v561, 7
    %v563 = vsub.s32 %v560, %v562
    %v564 = vrot.slane %v548, %v563
    %v566 = vunpack.c.l.s4 1966171168
    %v567 = vunpack.c.0.s8 %v566
    %v568 = vlaneseq
    %v569 = vshrl.u32 %v568, 7
    %v570 = vsub.s32 %v567, %v569
    %v571 = vrot.slane %v549, %v570
    %v573 = vunpack.c.l.s4 1966171168
    %v574 = vunpack.c.0.s8 %v573
    %v575 = vlaneseq
    %v576 = vshrl.u32 %v575, 7
    %v577 = vsub.s32 %v574, %v576
    %v578 = vrot.slane %v550, %v577
    %v579 = vcombine.high %v557, %v557
    %v580 = vcombine.high %v564, %v564
    %v581 = vcombine.high %v571, %v571
    %v582 = vcombine.high %v578, %v578
    %v584 = vunpack.c.l.s4 1966171168
    %v585 = vunpack.c.0.s8 %v584
    %v586 = vlaneseq
    %v587 = vshrl.u32 %v586, 7
    %v588 = vsub.s32 %v585, %v587
    %v589 = vrot.slane %v32, %v588
    %v591 = vunpack.c.l.s4 1966171168
    %v592 = vunpack.c.0.s8 %v591
    %v593 = vlaneseq
    %v594 = vshrl.u32 %v593, 7
    %v595 = vsub.s32 %v592, %v594
    %v596 = vrot.slane %v589, %v595
    %v1013 = vunpack.c.l.b16 %v33
    %v1014 = vunpack.c.l.b16 %v34
    %v1015 = vunpack.c.l.b16 %v35
    %v1016 = vunpack.c.l.b16 %v36
    %v1017 = vunpack.c.l.b16 %v37
    %v1018 = vunpack.c.l.b16 %v38
    %v1019 = vunpack.c.l.b16 %v39
    %v1020 = vunpack.c.l.b16 %v40
    %v1021 = vunpack.c.l.b16 %v41
    %v1022 = vunpack.c.l.b16 %v42
    %v1023 = vunpack.c.l.b16 %v43
    %v1024 = vunpack.c.l.b16 %v44
    %v1025 = vunpack.c.l.b16 %v45
    %v1026 = vunpack.c.l.b16 %v46
    %v1027 = vunpack.c.l.b16 %v47
    %v1028 = vunpack.c.l.b16 %v48
    %v1029 = vunpack.c.l.b16 %v49
    %v1030 = vunpack.c.l.b16 %v50
    %v1031 = vunpack.c.l.b16 %v51
    %v1032 = vunpack.c.l.b16 %v52
    %v1033 = vunpack.c.l.b16 %v53
    %v1034 = vunpack.c.l.b16 %v54
    %v1035 = vunpack.c.l.b16 %v55
    %v1036 = vunpack.c.l.b16 %v56
    %v1037 = vunpack.c.l.b16 %v57
    %v1038 = vunpack.c.l.b16 %v58
    %v1039 = vunpack.c.l.b16 %v59
    %v1040 = vunpack.c.l.b16 %v60
    %v1041 = vunpack.c.l.b16 %v61
    %v1042 = vunpack.c.l.b16 %v62
    %v1043 = vunpack.c.l.b16 %v63
    %v1044 = vunpack.c.l.b16 %v64
    %v1045 = vunpack.c.l.b16 %v65
    %v1046 = vunpack.c.l.b16 %v66
    %v1047 = vunpack.c.l.b16 %v67
    %v1048 = vunpack.c.l.b16 %v68
    %v1049 = vunpack.c.l.b16 %v69
    %v1050 = vunpack.c.l.b16 %v70
    %v1051 = vunpack.c.l.b16 %v71
    %v1052 = vunpack.c.l.b16 %v72
    %v1053 = vunpack.c.l.b16 %v73
    %v1054 = vunpack.c.l.b16 %v74
    %v1055 = vunpack.c.l.b16 %v75
    %v1056 = vunpack.c.l.b16 %v76
    %v1057 = vunpack.c.l.b16 %v77
    %v1058 = vunpack.c.l.b16 %v78
    %v1059 = vunpack.c.l.b16 %v79
    %v1060 = vunpack.c.l.b16 %v80
    %v1061 = vunpack.c.l.b16 %v81
    %v1062 = vunpack.c.l.b16 %v82
    %v1063 = vunpack.c.l.b16 %v83
    %v1064 = vunpack.c.l.b16 %v84
    %v1065 = vunpack.c.l.b16 %v85
    %v1066 = vunpack.c.l.b16 %v86
    %v1067 = vunpack.c.l.b16 %v87
    %v1068 = vunpack.c.l.b16 %v88
    %v1069 = vunpack.c.l.b16 %v89
    %v1070 = vunpack.c.l.b16 %v90
    %v1071 = vunpack.c.l.b16 %v91
    %v1072 = vunpack.c.l.b16 %v92
    %v1073 = vunpack.c.l.b16 %v93
    %v1074 = vunpack.c.l.b16 %v94
    %v1075 = vunpack.c.l.b16 %v95
    %v1076 = vunpack.c.l.b16 %v96
    %v1077 = vunpack.c.l.b16 %v97
    %v1078 = vunpack.c.l.b16 %v98
    %v1079 = vunpack.c.l.b16 %v99
    %v1080 = vunpack.c.l.b16 %v100
    %v1081 = vunpack.c.l.b16 %v101
    %v1082 = vunpack.c.l.b16 %v102
    %v1083 = vunpack.c.l.b16 %v103
    %v1084 = vunpack.c.l.b16 %v104
    %v1085 = vunpack.c.l.b16 %v105
    %v1086 = vunpack.c.l.b16 %v106
    %v1087 = vunpack.c.l.b16 %v107
    %v1088 = vunpack.c.l.b16 %v108
    %v1089 = vunpack.c.l.b16 %v109
    %v1090 = vunpack.c.l.b16 %v110
    %v1091 = vunpack.c.l.b16 %v111
    %v1092 = vunpack.c.l.b16 %v112
    %v1093 = vunpack.c.l.b16 %v113
    %v1094 = vunpack.c.l.b16 %v114
    %v1095 = vunpack.c.l.b16 %v115
    %v1096 = vunpack.c.l.b16 %v116
    %v1097 = vunpack.c.l.b16 %v117
    %v1098 = vunpack.c.l.b16 %v118
    %v1099 = vunpack.c.l.b16 %v119
    %v1100 = vunpack.c.l.b16 %v120
    %v1101 = vunpack.c.l.b16 %v121
    %v1102 = vunpack.c.l.b16 %v122
    %v1103 = vunpack.c.l.b16 %v123
    %v1104 = vunpack.c.l.b16 %v124
    %v1105 = vunpack.c.l.b16 %v125
    %v1106 = vunpack.c.l.b16 %v126
    %v1107 = vunpack.c.l.b16 %v127
    %v1108 = vunpack.c.l.b16 %v128
    %v1109 = vunpack.c.l.b16 %v129
    %v1110 = vunpack.c.l.b16 %v130
    %v1111 = vunpack.c.l.b16 %v131
    %v1112 = vunpack.c.l.b16 %v132
    %v1113 = vunpack.c.l.b16 %v133
    %v1114 = vunpack.c.l.b16 %v134
    %v1115 = vunpack.c.l.b16 %v135
    %v1116 = vunpack.c.l.b16 %v136
    %v1117 = vunpack.c.l.b16 %v137
    %v1118 = vunpack.c.l.b16 %v138
    %v1119 = vunpack.c.l.b16 %v139
    %v1120 = vunpack.c.l.b16 %v140
    %v1121 = vunpack.c.l.b16 %v141
    %v1122 = vunpack.c.l.b16 %v142
    %v1123 = vunpack.c.l.b16 %v143
    %v1124 = vunpack.c.l.b16 %v144
    %v1125 = vunpack.c.l.b16 %v145
    %v1126 = vunpack.c.l.b16 %v146
    %v1127 = vunpack.c.l.b16 %v147
    %v1128 = vunpack.c.l.b16 %v148
    %v1129 = vunpack.c.l.b16 %v149
    %v1130 = vunpack.c.l.b16 %v150
    %v1131 = vunpack.c.l.b16 %v151
    %v1132 = vunpack.c.l.b16 %v152
    %v1133 = vunpack.c.l.b16 %v153
    %v1134 = vunpack.c.l.b16 %v154
    %v1135 = vunpack.c.l.b16 %v155
    %v1136 = vunpack.c.l.b16 %v156
    %v1137 = vunpack.c.l.b16 %v157
    %v1138 = vunpack.c.l.b16 %v158
    %v1139 = vunpack.c.l.b16 %v159
    %v1140 = vunpack.c.l.b16 %v160
    %v1141 = vunpack.c.l.b16 %v161
    %v1142 = vunpack.c.l.b16 %v162
    %v1143 = vunpack.c.l.b16 %v163
    %v1144 = vunpack.c.l.b16 %v164
    %v1145 = vunpack.c.l.b16 %v165
    %v1146 = vunpack.c.l.b16 %v166
    %v1147 = vunpack.c.l.b16 %v167
    %v1148 = vunpack.c.l.b16 %v168
    %v1149 = vunpack.c.l.b16 %v169
    %v1150 = vunpack.c.l.b16 %v170
    %v1151 = vunpack.c.l.b16 %v171
    %v1152 = vunpack.c.l.b16 %v172
    %v1153 = vunpack.c.l.b16 %v173
    %v1154 = vunpack.c.l.b16 %v174
    %v1155 = vunpack.c.l.b16 %v175
    %v1156 = vunpack.c.l.b16 %v176
    %v1157 = vunpack.c.l.b16 %v177
    %v1158 = vunpack.c.l.b16 %v178
    %v1159 = vunpack.c.l.b16 %v179
    %v1160 = vunpack.c.l.b16 %v180
    %v1161 = vunpack.c.l.b16 %v181
    %v1162 = vunpack.c.l.b16 %v182
    %v1163 = vunpack.c.l.b16 %v183
    %v1164 = vunpack.c.l.b16 %v184
    %v1165 = vunpack.c.l.b16 %v185
    %v1166 = vunpack.c.l.b16 %v186
    %v1167 = vunpack.c.l.b16 %v187
    %v1168 = vunpack.c.l.b16 %v188
    %v1169 = vunpack.c.l.b16 %v189
    %v1170 = vunpack.c.l.b16 %v190
    %v1171 = vunpack.c.l.b16 %v191
    %v1172 = vunpack.c.l.b16 %v192
    %v1173 = vunpack.c.l.b16 %v193
    %v1174 = vunpack.c.l.b16 %v194
    %v1175 = vunpack.c.l.b16 %v195
    %v1176 = vunpack.c.l.b16 %v196
    %v1177 = vunpack.c.l.b16 %v197
    %v1178 = vunpack.c.l.b16 %v198
    %v1179 = vunpack.c.l.b16 %v199
    %v1180 = vunpack.c.l.b16 %v200
    %v1181 = vunpack.c.l.b16 %v201
    %v1182 = vunpack.c.l.b16 %v202
    %v1183 = vunpack.c.l.b16 %v203
    %v1184 = vunpack.c.l.b16 %v204
    %v1185 = vunpack.c.l.b16 %v205
    %v1186 = vunpack.c.l.b16 %v206
    %v1187 = vunpack.c.l.b16 %v207
    %v1188 = vunpack.c.l.b16 %v208
    %v1189 = vunpack.c.l.b16 %v209
    %v1190 = vunpack.c.l.b16 %v210
    %v1191 = vunpack.c.l.b16 %v211
    %v1192 = vunpack.c.l.b16 %v212
    %v1193 = vunpack.c.l.b16 %v213
    %v1194 = vunpack.c.l.b16 %v214
    %v1195 = vunpack.c.l.b16 %v215
    %v1196 = vunpack.c.l.b16 %v216
    %v1197 = vunpack.c.l.b16 %v217
    %v1198 = vunpack.c.l.b16 %v218
    %v1199 = vunpack.c.l.b16 %v219
    %v1200 = vunpack.c.l.b16 %v220
    %v1201 = vunpack.c.l.b16 %v221
    %v1202 = vunpack.c.l.b16 %v222
    %v1203 = vunpack.c.l.b16 %v223
    %v1204 = vunpack.c.l.b16 %v224
    %v1205 = vunpack.c.l.b16 %v225
    %v1206 = vunpack.c.l.b16 %v226
    %v1207 = vunpack.c.l.b16 %v227
    %v1208 = vunpack.c.l.b16 %v228
    %v1209 = vunpack.c.l.b16 %v229
    %v1210 = vunpack.c.l.b16 %v230
    %v1211 = vunpack.c.l.b16 %v231
    %v1212 = vunpack.c.l.b16 %v232
    %v1213 = vunpack.c.l.b16 %v233
    %v1214 = vunpack.c.l.b16 %v234
    %v1215 = vunpack.c.l.b16 %v235
    %v1216 = vunpack.c.l.b16 %v236
    %v1217 = vunpack.c.l.b16 %v237
    %v1218 = vunpack.c.l.b16 %v238
    %v1219 = vunpack.c.l.b16 %v239
    %v1220 = vunpack.c.l.b16 %v240
    %v1221 = vunpack.c.l.b16 %v241
    %v1222 = vunpack.c.l.b16 %v242
    %v1223 = vunpack.c.l.b16 %v243
    %v1224 = vunpack.c.l.b16 %v244
    %v1225 = vunpack.c.l.b16 %v245
    %v1226 = vunpack.c.l.b16 %v246
    %v1227 = vunpack.c.l.b16 %v247
    %v1228 = vunpack.c.l.b16 %v248
    %v1229 = vunpack.c.l.b16 %v249
    %v1230 = vunpack.c.l.b16 %v250
    %v1231 = vunpack.c.l.b16 %v251
    %v1232 = vunpack.c.l.b16 %v252
    %v1233 = vunpack.c.l.b16 %v253
    %v1234 = vunpack.c.l.b16 %v254
    %v1235 = vunpack.c.l.b16 %v255
    %v1236 = vunpack.c.l.b16 %v256
    %v1237 = vunpack.c.l.b16 %v257
    %v1238 = vunpack.c.l.b16 %v258
    %v1239 = vunpack.c.l.b16 %v259
    %v1240 = vunpack.c.l.b16 %v260
    %v1241 = vunpack.c.l.b16 %v261
    %v1242 = vunpack.c.l.b16 %v262
    %v1243 = vunpack.c.l.b16 %v263
    %v1244 = vunpack.c.l.b16 %v264
    %v1245 = vunpack.c.l.b16 %v265
    %v1246 = vunpack.c.l.b16 %v266
    %v1247 = vunpack.c.l.b16 %v267
    %v1248 = vunpack.c.l.b16 %v268
    %v1249 = vunpack.c.l.b16 %v269
    %v1250 = vunpack.c.l.b16 %v270
    %v1251 = vunpack.c.l.b16 %v271
    %v1252 = vunpack.c.l.b16 %v272
    %v1253 = vunpack.c.l.b16 %v273
    %v1254 = vunpack.c.l.b16 %v274
    %v1255 = vunpack.c.l.b16 %v275
    %v1256 = vunpack.c.l.b16 %v276
    %v1257 = vunpack.c.l.b16 %v277
    %v1258 = vunpack.c.l.b16 %v278
    %v1259 = vunpack.c.l.b16 %v279
    %v1260 = vunpack.c.l.b16 %v280
    %v1261 = vunpack.c.l.b16 %v281
    %v1262 = vunpack.c.l.b16 %v282
    %v1263 = vunpack.c.l.b16 %v283
    %v1264 = vunpack.c.l.b16 %v284
    %v1265 = vunpack.c.l.b16 %v285
    %v1266 = vunpack.c.l.b16 %v286
    %v1267 = vunpack.c.l.b16 %v287
    %v1268 = vunpack.c.l.b16 %v288
    %v1269 = vunpack.c.l.b16 %v289
    %v1270 = vunpack.c.l.b16 %v290
    %v1271 = vunpack.c.l.b16 %v291
    %v1272 = vunpack.c.l.b16 %v292
    %v1273 = vunpack.c.l.b16 %v293
    %v1274 = vunpack.c.l.b16 %v294
    %v1275 = vunpack.c.l.b16 %v295
    %v1276 = vunpack.c.l.b16 %v296
    %v1277 = vunpack.c.l.b16 %v297
    %v1278 = vunpack.c.l.b16 %v298
    %v1279 = vunpack.c.l.b16 %v299
    %v1280 = vunpack.c.l.b16 %v300
    %v1281 = vunpack.c.l.b16 %v301
    %v1282 = vunpack.c.l.b16 %v302
    %v1283 = vunpack.c.l.b16 %v303
    %v1284 = vunpack.c.l.b16 %v304
    %v1285 = vunpack.c.l.b16 %v305
    %v1286 = vunpack.c.l.b16 %v306
    %v1287 = vunpack.c.l.b16 %v307
    %v1288 = vunpack.c.l.b16 %v308
    %v1289 = vunpack.c.l.b16 %v309
    %v1290 = vunpack.c.l.b16 %v310
    %v1291 = vunpack.c.l.b16 %v311
    %v1292 = vunpack.c.l.b16 %v312
    %v1293 = vunpack.c.l.b16 %v313
    %v1294 = vunpack.c.l.b16 %v314
    %v1295 = vunpack.c.l.b16 %v315
    %v1296 = vunpack.c.l.b16 %v316
    %v1297 = vunpack.c.l.b16 %v317
    %v1298 = vunpack.c.l.b16 %v318
    %v1299 = vunpack.c.l.b16 %v319
    %v1300 = vunpack.c.l.b16 %v320
    %v1301 = vunpack.c.l.b16 %v321
    %v1302 = vunpack.c.l.b16 %v322
    %v1303 = vunpack.c.l.b16 %v323
    %v1304 = vunpack.c.l.b16 %v324
    %v1305 = vunpack.c.l.b16 %v325
    %v1306 = vunpack.c.l.b16 %v326
    %v1307 = vunpack.c.l.b16 %v327
    %v1308 = vunpack.c.l.b16 %v328
    %v1309 = vunpack.c.l.b16 %v329
    %v1310 = vunpack.c.l.b16 %v330
    %v1311 = vunpack.c.l.b16 %v331
    %v1312 = vunpack.c.l.b16 %v332
    %v1313 = vunpack.c.l.b16 %v333
    %v1314 = vunpack.c.l.b16 %v334
    %v1315 = vunpack.c.l.b16 %v335
    %v1316 = vunpack.c.l.b16 %v336
    %v1317 = vunpack.c.l.b16 %v337
    %v1318 = vunpack.c.l.b16 %v338
    %v1319 = vunpack.c.l.b16 %v339
    %v1320 = vunpack.c.l.b16 %v340
    %v1321 = vunpack.c.l.b16 %v341
    %v1322 = vunpack.c.l.b16 %v342
    %v1323 = vunpack.c.l.b16 %v343
    %v1324 = vunpack.c.l.b16 %v344
    %v1325 = vunpack.c.l.b16 %v345
    %v1326 = vunpack.c.l.b16 %v346
    %v1327 = vunpack.c.l.b16 %v347
    %v1328 = vunpack.c.l.b16 %v348
    %v1329 = vunpack.c.l.b16 %v349
    %v1330 = vunpack.c.l.b16 %v350
    %v1331 = vunpack.c.l.b16 %v351
    %v1332 = vunpack.c.l.b16 %v352
    %v1333 = vunpack.c.l.b16 %v353
    %v1334 = vunpack.c.l.b16 %v354
    %v1335 = vunpack.c.l.b16 %v355
    %v1336 = vunpack.c.l.b16 %v356
    %v1337 = vunpack.c.l.b16 %v357
    %v1338 = vunpack.c.l.b16 %v358
    %v1339 = vunpack.c.l.b16 %v359
    %v1340 = vunpack.c.l.b16 %v360
    %v1341 = vunpack.c.l.b16 %v361
    %v1342 = vunpack.c.l.b16 %v362
    %v1343 = vunpack.c.l.b16 %v363
    %v1344 = vunpack.c.l.b16 %v364
    %v1345 = vunpack.c.l.b16 %v365
    %v1346 = vunpack.c.l.b16 %v366
    %v1347 = vunpack.c.l.b16 %v367
    %v1348 = vunpack.c.l.b16 %v368
    %v1349 = vunpack.c.l.b16 %v369
    %v1350 = vunpack.c.l.b16 %v370
    %v1351 = vunpack.c.l.b16 %v371
    %v1352 = vunpack.c.l.b16 %v372
    %v1353 = vunpack.c.l.b16 %v373
    %v1354 = vunpack.c.l.b16 %v374
    %v1355 = vunpack.c.l.b16 %v375
    %v1356 = vunpack.c.l.b16 %v376
    %v1357 = vunpack.c.l.b16 %v377
    %v1358 = vunpack.c.l.b16 %v378
    %v1359 = vunpack.c.l.b16 %v379
    %v1360 = vunpack.c.l.b16 %v380
    %v1361 = vunpack.c.l.b16 %v381
    %v1362 = vunpack.c.l.b16 %v382
    %v1363 = vunpack.c.l.b16 %v383
    %v1364 = vunpack.c.l.b16 %v384
    %v1365 = vunpack.c.l.b16 %v385
    %v1366 = vunpack.c.l.b16 %v386
    %v1367 = vunpack.c.l.b16 %v387
    %v1368 = vunpack.c.l.b16 %v388
    %v1369 = vunpack.c.l.b16 %v389
    %v1370 = vunpack.c.l.b16 %v390
    %v1371 = vunpack.c.l.b16 %v391
    %v1372 = vunpack.c.l.b16 %v392
    %v1373 = vunpack.c.l.b16 %v393
    %v1374 = vunpack.c.l.b16 %v394
    %v1375 = vunpack.c.l.b16 %v395
    %v1376 = vunpack.c.l.b16 %v396
    %v1377 = vunpack.c.l.b16 %v397
    %v1378 = vunpack.c.l.b16 %v398
    %v1379 = vunpack.c.l.b16 %v399
    %v1380 = vunpack.c.l.b16 %v400
    %v1381 = vunpack.c.l.b16 %v401
    %v1382 = vunpack.c.l.b16 %v402
    %v1383 = vunpack.c.l.b16 %v403
    %v1384 = vunpack.c.l.b16 %v404
    %v1385 = vunpack.c.l.b16 %v405
    %v1386 = vunpack.c.l.b16 %v406
    %v1387 = vunpack.c.l.b16 %v407
    %v1388 = vunpack.c.l.b16 %v408
    %v1389 = vunpack.c.l.b16 %v409
    %v1390 = vunpack.c.l.b16 %v410
    %v1391 = vunpack.c.l.b16 %v411
    %v1392 = vunpack.c.l.b16 %v412
    %v1393 = vunpack.c.l.b16 %v413
    %v1394 = vunpack.c.l.b16 %v414
    %v1395 = vunpack.c.l.b16 %v415
    %v1396 = vunpack.c.l.b16 %v416
    %v1397 = vunpack.c.l.b16 %v417
    %v1398 = vunpack.c.l.b16 %v418
    %v1399 = vunpack.c.l.b16 %v419
    %v1400 = vunpack.c.l.b16 %v420
    %v1401 = vunpack.c.l.b16 %v421
    %v1402 = vunpack.c.l.b16 %v422
    %v1403 = vunpack.c.l.b16 %v423
    %v1404 = vunpack.c.l.b16 %v424
    %v1405 = vpack.c.b16 %v1014, %v1013
    %v1406 = vpack.c.b16 %v1016, %v1015
    %v1407 = vpack.c.b16 %v1018, %v1017
    %v1408 = vpack.c.b16 %v1020, %v1019
    %v1409 = vpack.c.b16 %v1022, %v1021
    %v1410 = vpack.c.b16 %v1024, %v1023
    %v1411 = vpack.c.b16 %v1026, %v1025
    %v1412 = vpack.c.b16 %v1028, %v1027
    %v1413 = vpack.c.b16 %v1030, %v1029
    %v1414 = vpack.c.b16 %v1032, %v1031
    %v1415 = vpack.c.b16 %v1034, %v1033
    %v1416 = vpack.c.b16 %v1036, %v1035
    %v1417 = vpack.c.b16 %v1038, %v1037
    %v1418 = vpack.c.b16 %v1040, %v1039
    %v1419 = vpack.c.b16 %v1042, %v1041
    %v1420 = vpack.c.b16 %v1044, %v1043
    %v1421 = vpack.c.b16 %v1046, %v1045
    %v1422 = vpack.c.b16 %v1048, %v1047
    %v1423 = vpack.c.b16 %v1050, %v1049
    %v1424 = vpack.c.b16 %v1052, %v1051
    %v1425 = vpack.c.b16 %v1054, %v1053
    %v1426 = vpack.c.b16 %v1056, %v1055
    %v1427 = vpack.c.b16 %v1058, %v1057
    %v1428 = vpack.c.b16 %v1060, %v1059
    %v1429 = vpack.c.b16 %v1062, %v1061
    %v1430 = vpack.c.b16 %v1064, %v1063
    %v1431 = vpack.c.b16 %v1066, %v1065
    %v1432 = vpack.c.b16 %v1068, %v1067
    %v1433 = vpack.c.b16 %v1070, %v1069
    %v1434 = vpack.c.b16 %v1072, %v1071
    %v1435 = vpack.c.b16 %v1074, %v1073
    %v1436 = vpack.c.b16 %v1076, %v1075
    %v1437 = vpack.c.b16 %v1078, %v1077
    %v1438 = vpack.c.b16 %v1080, %v1079
    %v1439 = vpack.c.b16 %v1082, %v1081
    %v1440 = vpack.c.b16 %v1084, %v1083
    %v1441 = vpack.c.b16 %v1086, %v1085
    %v1442 = vpack.c.b16 %v1088, %v1087
    %v1443 = vpack.c.b16 %v1090, %v1089
    %v1444 = vpack.c.b16 %v1092, %v1091
    %v1445 = vpack.c.b16 %v1094, %v1093
    %v1446 = vpack.c.b16 %v1096, %v1095
    %v1447 = vpack.c.b16 %v1098, %v1097
    %v1448 = vpack.c.b16 %v1100, %v1099
    %v1449 = vpack.c.b16 %v1102, %v1101
    %v1450 = vpack.c.b16 %v1104, %v1103
    %v1451 = vpack.c.b16 %v1106, %v1105
    %v1452 = vpack.c.b16 %v1108, %v1107
    %v1453 = vpack.c.b16 %v1110, %v1109
    %v1454 = vpack.c.b16 %v1112, %v1111
    %v1455 = vpack.c.b16 %v1114, %v1113
    %v1456 = vpack.c.b16 %v1116, %v1115
    %v1457 = vpack.c.b16 %v1118, %v1117
    %v1458 = vpack.c.b16 %v1120, %v1119
    %v1459 = vpack.c.b16 %v1122, %v1121
    %v1460 = vpack.c.b16 %v1124, %v1123
    %v1461 = vpack.c.b16 %v1126, %v1125
    %v1462 = vpack.c.b16 %v1128, %v1127
    %v1463 = vpack.c.b16 %v1130, %v1129
    %v1464 = vpack.c.b16 %v1132, %v1131
    %v1465 = vpack.c.b16 %v1134, %v1133
    %v1466 = vpack.c.b16 %v1136, %v1135
    %v1467 = vpack.c.b16 %v1138, %v1137
    %v1468 = vpack.c.b16 %v1140, %v1139
    %v1469 = vpack.c.b16 %v1142, %v1141
    %v1470 = vpack.c.b16 %v1144, %v1143
    %v1471 = vpack.c.b16 %v1146, %v1145
    %v1472 = vpack.c.b16 %v1148, %v1147
    %v1473 = vpack.c.b16 %v1150, %v1149
    %v1474 = vpack.c.b16 %v1152, %v1151
    %v1475 = vpack.c.b16 %v1154, %v1153
    %v1476 = vpack.c.b16 %v1156, %v1155
    %v1477 = vpack.c.b16 %v1158, %v1157
    %v1478 = vpack.c.b16 %v1160, %v1159
    %v1479 = vpack.c.b16 %v1162, %v1161
    %v1480 = vpack.c.b16 %v1164, %v1163
    %v1481 = vpack.c.b16 %v1166, %v1165
    %v1482 = vpack.c.b16 %v1168, %v1167
    %v1483 = vpack.c.b16 %v1170, %v1169
    %v1484 = vpack.c.b16 %v1172, %v1171
    %v1485 = vpack.c.b16 %v1174, %v1173
    %v1486 = vpack.c.b16 %v1176, %v1175
    %v1487 = vpack.c.b16 %v1178, %v1177
    %v1488 = vpack.c.b16 %v1180, %v1179
    %v1489 = vpack.c.b16 %v1182, %v1181
    %v1490 = vpack.c.b16 %v1184, %v1183
    %v1491 = vpack.c.b16 %v1186, %v1185
    %v1492 = vpack.c.b16 %v1188, %v1187
    %v1493 = vpack.c.b16 %v1190, %v1189
    %v1494 = vpack.c.b16 %v1192, %v1191
    %v1495 = vpack.c.b16 %v1194, %v1193
    %v1496 = vpack.c.b16 %v1196, %v1195
    %v1497 = vpack.c.b16 %v1198, %v1197
    %v1498 = vpack.c.b16 %v1200, %v1199
    %v1499 = vpack.c.b16 %v1202, %v1201
    %v1500 = vpack.c.b16 %v1204, %v1203
    %v1501 = vpack.c.b16 %v1206, %v1205
    %v1502 = vpack.c.b16 %v1208, %v1207
    %v1503 = vpack.c.b16 %v1210, %v1209
    %v1504 = vpack.c.b16 %v1212, %v1211
    %v1505 = vpack.c.b16 %v1214, %v1213
    %v1506 = vpack.c.b16 %v1216, %v1215
    %v1507 = vpack.c.b16 %v1218, %v1217
    %v1508 = vpack.c.b16 %v1220, %v1219
    %v1509 = vpack.c.b16 %v1222, %v1221
    %v1510 = vpack.c.b16 %v1224, %v1223
    %v1511 = vpack.c.b16 %v1226, %v1225
    %v1512 = vpack.c.b16 %v1228, %v1227
    %v1513 = vpack.c.b16 %v1230, %v1229
    %v1514 = vpack.c.b16 %v1232, %v1231
    %v1515 = vpack.c.b16 %v1234, %v1233
    %v1516 = vpack.c.b16 %v1236, %v1235
    %v1517 = vpack.c.b16 %v1238, %v1237
    %v1518 = vpack.c.b16 %v1240, %v1239
    %v1519 = vpack.c.b16 %v1242, %v1241
    %v1520 = vpack.c.b16 %v1244, %v1243
    %v1521 = vpack.c.b16 %v1246, %v1245
    %v1522 = vpack.c.b16 %v1248, %v1247
    %v1523 = vpack.c.b16 %v1250, %v1249
    %v1524 = vpack.c.b16 %v1252, %v1251
    %v1525 = vpack.c.b16 %v1254, %v1253
    %v1526 = vpack.c.b16 %v1256, %v1255
    %v1527 = vpack.c.b16 %v1258, %v1257
    %v1528 = vpack.c.b16 %v1260, %v1259
    %v1529 = vpack.c.b16 %v1262, %v1261
    %v1530 = vpack.c.b16 %v1264, %v1263
    %v1531 = vpack.c.b16 %v1266, %v1265
    %v1532 = vpack.c.b16 %v1268, %v1267
    %v1533 = vpack.c.b16 %v1270, %v1269
    %v1534 = vpack.c.b16 %v1272, %v1271
    %v1535 = vpack.c.b16 %v1274, %v1273
    %v1536 = vpack.c.b16 %v1276, %v1275
    %v1537 = vpack.c.b16 %v1278, %v1277
    %v1538 = vpack.c.b16 %v1280, %v1279
    %v1539 = vpack.c.b16 %v1282, %v1281
    %v1540 = vpack.c.b16 %v1284, %v1283
    %v1541 = vpack.c.b16 %v1286, %v1285
    %v1542 = vpack.c.b16 %v1288, %v1287
    %v1543 = vpack.c.b16 %v1290, %v1289
    %v1544 = vpack.c.b16 %v1292, %v1291
    %v1545 = vpack.c.b16 %v1294, %v1293
    %v1546 = vpack.c.b16 %v1296, %v1295
    %v1547 = vpack.c.b16 %v1298, %v1297
    %v1548 = vpack.c.b16 %v1300, %v1299
    %v1549 = vpack.c.b16 %v1302, %v1301
    %v1550 = vpack.c.b16 %v1304, %v1303
    %v1551 = vpack.c.b16 %v1306, %v1305
    %v1552 = vpack.c.b16 %v1308, %v1307
    %v1553 = vpack.c.b16 %v1310, %v1309
    %v1554 = vpack.c.b16 %v1312, %v1311
    %v1555 = vpack.c.b16 %v1314, %v1313
    %v1556 = vpack.c.b16 %v1316, %v1315
    %v1557 = vpack.c.b16 %v1318, %v1317
    %v1558 = vpack.c.b16 %v1320, %v1319
    %v1559 = vpack.c.b16 %v1322, %v1321
    %v1560 = vpack.c.b16 %v1324, %v1323
    %v1561 = vpack.c.b16 %v1326, %v1325
    %v1562 = vpack.c.b16 %v1328, %v1327
    %v1563 = vpack.c.b16 %v1330, %v1329
    %v1564 = vpack.c.b16 %v1332, %v1331
    %v1565 = vpack.c.b16 %v1334, %v1333
    %v1566 = vpack.c.b16 %v1336, %v1335
    %v1567 = vpack.c.b16 %v1338, %v1337
    %v1568 = vpack.c.b16 %v1340, %v1339
    %v1569 = vpack.c.b16 %v1342, %v1341
    %v1570 = vpack.c.b16 %v1344, %v1343
    %v1571 = vpack.c.b16 %v1346, %v1345
    %v1572 = vpack.c.b16 %v1348, %v1347
    %v1573 = vpack.c.b16 %v1350, %v1349
    %v1574 = vpack.c.b16 %v1352, %v1351
    %v1575 = vpack.c.b16 %v1354, %v1353
    %v1576 = vpack.c.b16 %v1356, %v1355
    %v1577 = vpack.c.b16 %v1358, %v1357
    %v1578 = vpack.c.b16 %v1360, %v1359
    %v1579 = vpack.c.b16 %v1362, %v1361
    %v1580 = vpack.c.b16 %v1364, %v1363
    %v1581 = vpack.c.b16 %v1366, %v1365
    %v1582 = vpack.c.b16 %v1368, %v1367
    %v1583 = vpack.c.b16 %v1370, %v1369
    %v1584 = vpack.c.b16 %v1372, %v1371
    %v1585 = vpack.c.b16 %v1374, %v1373
    %v1586 = vpack.c.b16 %v1376, %v1375
    %v1587 = vpack.c.b16 %v1378, %v1377
    %v1588 = vpack.c.b16 %v1380, %v1379
    %v1589 = vpack.c.b16 %v1382, %v1381
    %v1590 = vpack.c.b16 %v1384, %v1383
    %v1591 = vpack.c.b16 %v1386, %v1385
    %v1592 = vpack.c.b16 %v1388, %v1387
    %v1593 = vpack.c.b16 %v1390, %v1389
    %v1594 = vpack.c.b16 %v1392, %v1391
    %v1595 = vpack.c.b16 %v1394, %v1393
    %v1596 = vpack.c.b16 %v1396, %v1395
    %v1597 = vpack.c.b16 %v1398, %v1397
    %v1598 = vpack.c.b16 %v1400, %v1399
    %v1599 = vpack.c.b16 %v1402, %v1401
    %v1600 = vpack.c.b16 %v1404, %v1403
    %vm1797 = vcmask 523264
    %v1799 = vsel %vm1797, %v596, 0
    %1801 = vmatprep.subr.bf16.mxu0 0
    %1802 = vmatpush1.bf16.msra.mxu0 %v1405
    %1803 = vmatprep.subr.bf16.mxu0 0
    %1804 = vmatpush1.bf16.msra.mxu0 %v1406
    %1805 = vmatprep.subr.bf16.mxu0 0
    %1806 = vmatpush1.bf16.msra.mxu0 %v1407
    %1807 = vmatprep.subr.bf16.mxu0 0
    %1808 = vmatpush1.bf16.msra.mxu0 %v1408
    %1809 = vmatprep.subr.bf16.mxu0 0
    %1810 = vmatpush1.bf16.msra.mxu0 %v1409
    %1811 = vmatprep.subr.bf16.mxu0 0
    %1812 = vmatpush1.bf16.msra.mxu0 %v1410
    %1813 = vmatprep.subr.bf16.mxu0 0
    %1814 = vmatpush1.bf16.msra.mxu0 %v1411
    %1815 = vmatprep.subr.bf16.mxu0 0
    %1816 = vmatpush1.bf16.msra.mxu0 %v1412
    %1817 = vmatprep.subr.bf16.mxu0 0
    %1818 = vmatpush1.bf16.msra.mxu0 %v1413
    %1819 = vmatprep.subr.bf16.mxu0 0
    %1820 = vmatpush1.bf16.msra.mxu0 %v1414
    %1821 = vmatprep.subr.bf16.mxu0 0
    %1822 = vmatpush1.bf16.msra.mxu0 %v1415
    %1823 = vmatprep.subr.bf16.mxu0 0
    %1824 = vmatpush1.bf16.msra.mxu0 %v1416
    %1825 = vmatprep.subr.bf16.mxu0 0
    %1826 = vmatpush1.bf16.msra.mxu0 %v1417
    %1827 = vmatprep.subr.bf16.mxu0 0
    %1828 = vmatpush1.bf16.msra.mxu0 %v1418
    %1829 = vmatprep.subr.bf16.mxu0 0
    %1830 = vmatpush1.bf16.msra.mxu0 %v1419
    %1831 = vmatprep.subr.bf16.mxu0 0
    %1832 = vmatpush1.bf16.msra.mxu0 %v1420
    %1833 = vmatprep.mubr.bf16.mxu0 %v473
    %1834 = vmatmul.mubr.bf16.gmra.mrb[0].mxu0 %v459
    %v1835 = vpop.f32.mrb[0].mxu0
    %v1836 = vadd.f32 %v430, %v1835
    %v1837 = vpop.f32.mrb[0].mxu0
    %v1838 = vpop.f32.mrb[0].mxu0
    %v1839 = vpop.f32.mrb[0].mxu0
    %1840 = vdwg.mxu0
    %1841 = vmatprep.subr.bf16.mxu0 0
    %1842 = vmatpush1.bf16.msra.mxu0 %v1421
    %1843 = vmatprep.subr.bf16.mxu0 0
    %1844 = vmatpush1.bf16.msra.mxu0 %v1422
    %1845 = vmatprep.subr.bf16.mxu0 0
    %1846 = vmatpush1.bf16.msra.mxu0 %v1423
    %1847 = vmatprep.subr.bf16.mxu0 0
    %1848 = vmatpush1.bf16.msra.mxu0 %v1424
    %1849 = vmatprep.subr.bf16.mxu0 0
    %1850 = vmatpush1.bf16.msra.mxu0 %v1425
    %1851 = vmatprep.subr.bf16.mxu0 0
    %1852 = vmatpush1.bf16.msra.mxu0 %v1426
    %1853 = vmatprep.subr.bf16.mxu0 0
    %1854 = vmatpush1.bf16.msra.mxu0 %v1427
    %1855 = vmatprep.subr.bf16.mxu0 0
    %1856 = vmatpush1.bf16.msra.mxu0 %v1428
    %1857 = vmatprep.subr.bf16.mxu0 0
    %1858 = vmatpush1.bf16.msra.mxu0 %v1429
    %1859 = vmatprep.subr.bf16.mxu0 0
    %1860 = vmatpush1.bf16.msra.mxu0 %v1430
    %1861 = vmatprep.subr.bf16.mxu0 0
    %1862 = vmatpush1.bf16.msra.mxu0 %v1431
    %1863 = vmatprep.subr.bf16.mxu0 0
    %1864 = vmatpush1.bf16.msra.mxu0 %v1432
    %1865 = vmatprep.subr.bf16.mxu0 0
    %1866 = vmatpush1.bf16.msra.mxu0 %v1433
    %1867 = vmatprep.subr.bf16.mxu0 0
    %1868 = vmatpush1.bf16.msra.mxu0 %v1434
    %1869 = vmatprep.subr.bf16.mxu0 0
    %1870 = vmatpush1.bf16.msra.mxu0 %v1435
    %1871 = vmatprep.subr.bf16.mxu0 0
    %1872 = vmatpush1.bf16.msra.mxu0 %v1436
    %1873 = vmatprep.mubr.bf16.mxu0 %v483
    %1874 = vmatmul.mubr.bf16.gmra.mrb[0].mxu0 %v481
    %v1875 = vpop.f32.mrb[0].mxu0
    %v1876 = vadd.f32 %v1836, %v1875
    %v1877 = vpop.f32.mrb[0].mxu0
    %v1878 = vpop.f32.mrb[0].mxu0
    %v1879 = vpop.f32.mrb[0].mxu0
    %1880 = vdwg.mxu0
    %1881 = vmatprep.subr.bf16.mxu0 0
    %1882 = vmatpush1.bf16.msra.mxu0 %v1437
    %1883 = vmatprep.subr.bf16.mxu0 0
    %1884 = vmatpush1.bf16.msra.mxu0 %v1438
    %1885 = vmatprep.subr.bf16.mxu0 0
    %1886 = vmatpush1.bf16.msra.mxu0 %v1439
    %1887 = vmatprep.subr.bf16.mxu0 0
    %1888 = vmatpush1.bf16.msra.mxu0 %v1440
    %1889 = vmatprep.subr.bf16.mxu0 0
    %1890 = vmatpush1.bf16.msra.mxu0 %v1441
    %1891 = vmatprep.subr.bf16.mxu0 0
    %1892 = vmatpush1.bf16.msra.mxu0 %v1442
    %1893 = vmatprep.subr.bf16.mxu0 0
    %1894 = vmatpush1.bf16.msra.mxu0 %v1443
    %1895 = vmatprep.subr.bf16.mxu0 0
    %1896 = vmatpush1.bf16.msra.mxu0 %v1444
    %1897 = vmatprep.subr.bf16.mxu0 0
    %1898 = vmatpush1.bf16.msra.mxu0 %v1445
    %1899 = vmatprep.subr.bf16.mxu0 0
    %1900 = vmatpush1.bf16.msra.mxu0 %v1446
    %1901 = vmatprep.subr.bf16.mxu0 0
    %1902 = vmatpush1.bf16.msra.mxu0 %v1447
    %1903 = vmatprep.subr.bf16.mxu0 0
    %1904 = vmatpush1.bf16.msra.mxu0 %v1448
    %1905 = vmatprep.subr.bf16.mxu0 0
    %1906 = vmatpush1.bf16.msra.mxu0 %v1449
    %1907 = vmatprep.subr.bf16.mxu0 0
    %1908 = vmatpush1.bf16.msra.mxu0 %v1450
    %1909 = vmatprep.subr.bf16.mxu0 0
    %1910 = vmatpush1.bf16.msra.mxu0 %v1451
    %1911 = vmatprep.subr.bf16.mxu0 0
    %1912 = vmatpush1.bf16.msra.mxu0 %v1452
    %1913 = vmatprep.mubr.bf16.mxu0 %v480
    %1914 = vmatmul.mubr.bf16.gmra.mrb[0].mxu0 %v466
    %v1915 = vpop.f32.mrb[0].mxu0
    %v1916 = vadd.f32 %v1876, %v1915
    %v1917 = vpop.f32.mrb[0].mxu0
    %v1918 = vpop.f32.mrb[0].mxu0
    %v1919 = vpop.f32.mrb[0].mxu0
    %1920 = vdwg.mxu0
    %1921 = vmatprep.subr.bf16.mxu0 0
    %1922 = vmatpush1.bf16.msra.mxu0 %v1453
    %1923 = vmatprep.subr.bf16.mxu0 0
    %1924 = vmatpush1.bf16.msra.mxu0 %v1454
    %1925 = vmatprep.subr.bf16.mxu0 0
    %1926 = vmatpush1.bf16.msra.mxu0 %v1455
    %1927 = vmatprep.subr.bf16.mxu0 0
    %1928 = vmatpush1.bf16.msra.mxu0 %v1456
    %1929 = vmatprep.subr.bf16.mxu0 0
    %1930 = vmatpush1.bf16.msra.mxu0 %v1457
    %1931 = vmatprep.subr.bf16.mxu0 0
    %1932 = vmatpush1.bf16.msra.mxu0 %v1458
    %1933 = vmatprep.subr.bf16.mxu0 0
    %1934 = vmatpush1.bf16.msra.mxu0 %v1459
    %1935 = vmatprep.subr.bf16.mxu0 0
    %1936 = vmatpush1.bf16.msra.mxu0 %v1460
    %1937 = vmatprep.subr.bf16.mxu0 0
    %1938 = vmatpush1.bf16.msra.mxu0 %v1461
    %1939 = vmatprep.subr.bf16.mxu0 0
    %1940 = vmatpush1.bf16.msra.mxu0 %v1462
    %1941 = vmatprep.subr.bf16.mxu0 0
    %1942 = vmatpush1.bf16.msra.mxu0 %v1463
    %1943 = vmatprep.subr.bf16.mxu0 0
    %1944 = vmatpush1.bf16.msra.mxu0 %v1464
    %1945 = vmatprep.subr.bf16.mxu0 0
    %1946 = vmatpush1.bf16.msra.mxu0 %v1465
    %1947 = vmatprep.subr.bf16.mxu0 0
    %1948 = vmatpush1.bf16.msra.mxu0 %v1466
    %1949 = vmatprep.subr.bf16.mxu0 0
    %1950 = vmatpush1.bf16.msra.mxu0 %v1467
    %1951 = vmatprep.subr.bf16.mxu0 0
    %1952 = vmatpush1.bf16.msra.mxu0 %v1468
    %1953 = vmatprep.mubr.bf16.mxu0 %v484
    %1954 = vmatmul.mubr.bf16.gmra.mrb[0].mxu0 %v482
    %v1955 = vpop.f32.mrb[0].mxu0
    %v1956 = vadd.f32 %v1916, %v1955
    %v1957 = vpop.f32.mrb[0].mxu0
    %v1958 = vpop.f32.mrb[0].mxu0
    %v1959 = vpop.f32.mrb[0].mxu0
    %1960 = vdwg.mxu0
    %1961 = vmatprep.subr.bf16.mxu0 0
    %1962 = vmatpush1.bf16.msra.mxu0 %v1469
    %1963 = vmatprep.subr.bf16.mxu0 0
    %1964 = vmatpush1.bf16.msra.mxu0 %v1470
    %1965 = vmatprep.subr.bf16.mxu0 0
    %1966 = vmatpush1.bf16.msra.mxu0 %v1471
    %1967 = vmatprep.subr.bf16.mxu0 0
    %1968 = vmatpush1.bf16.msra.mxu0 %v1472
    %1969 = vmatprep.subr.bf16.mxu0 0
    %1970 = vmatpush1.bf16.msra.mxu0 %v1473
    %1971 = vmatprep.subr.bf16.mxu0 0
    %1972 = vmatpush1.bf16.msra.mxu0 %v1474
    %1973 = vmatprep.subr.bf16.mxu0 0
    %1974 = vmatpush1.bf16.msra.mxu0 %v1475
    %1975 = vmatprep.subr.bf16.mxu0 0
    %1976 = vmatpush1.bf16.msra.mxu0 %v1476
    %1977 = vmatprep.subr.bf16.mxu0 0
    %1978 = vmatpush1.bf16.msra.mxu0 %v1477
    %1979 = vmatprep.subr.bf16.mxu0 0
    %1980 = vmatpush1.bf16.msra.mxu0 %v1478
    %1981 = vmatprep.subr.bf16.mxu0 0
    %1982 = vmatpush1.bf16.msra.mxu0 %v1479
    %1983 = vmatprep.subr.bf16.mxu0 0
    %1984 = vmatpush1.bf16.msra.mxu0 %v1480
    %1985 = vmatprep.subr.bf16.mxu0 0
    %1986 = vmatpush1.bf16.msra.mxu0 %v1481
    %1987 = vmatprep.subr.bf16.mxu0 0
    %1988 = vmatpush1.bf16.msra.mxu0 %v1482
    %1989 = vmatprep.subr.bf16.mxu0 0
    %1990 = vmatpush1.bf16.msra.mxu0 %v1483
    %1991 = vmatprep.subr.bf16.mxu0 0
    %1992 = vmatpush1.bf16.msra.mxu0 %v1484
    %1993 = vmatprep.mubr.bf16.mxu0 %v522
    %1994 = vmatmul.mubr.bf16.gmra.mrb[0].mxu0 %v508
    %v1995 = vpop.f32.mrb[0].mxu0
    %v1996 = vadd.f32 %v1956, %v1995
    %v1997 = vpop.f32.mrb[0].mxu0
    %v1998 = vpop.f32.mrb[0].mxu0
    %v1999 = vpop.f32.mrb[0].mxu0
    %2000 = vdwg.mxu0
    %2001 = vmatprep.subr.bf16.mxu0 0
    %2002 = vmatpush1.bf16.msra.mxu0 %v1485
    %2003 = vmatprep.subr.bf16.mxu0 0
    %2004 = vmatpush1.bf16.msra.mxu0 %v1486
    %2005 = vmatprep.subr.bf16.mxu0 0
    %2006 = vmatpush1.bf16.msra.mxu0 %v1487
    %2007 = vmatprep.subr.bf16.mxu0 0
    %2008 = vmatpush1.bf16.msra.mxu0 %v1488
    %2009 = vmatprep.subr.bf16.mxu0 0
    %2010 = vmatpush1.bf16.msra.mxu0 %v1489
    %2011 = vmatprep.subr.bf16.mxu0 0
    %2012 = vmatpush1.bf16.msra.mxu0 %v1490
    %2013 = vmatprep.subr.bf16.mxu0 0
    %2014 = vmatpush1.bf16.msra.mxu0 %v1491
    %2015 = vmatprep.subr.bf16.mxu0 0
    %2016 = vmatpush1.bf16.msra.mxu0 %v1492
    %2017 = vmatprep.subr.bf16.mxu0 0
    %2018 = vmatpush1.bf16.msra.mxu0 %v1493
    %2019 = vmatprep.subr.bf16.mxu0 0
    %2020 = vmatpush1.bf16.msra.mxu0 %v1494
    %2021 = vmatprep.subr.bf16.mxu0 0
    %2022 = vmatpush1.bf16.msra.mxu0 %v1495
    %2023 = vmatprep.subr.bf16.mxu0 0
    %2024 = vmatpush1.bf16.msra.mxu0 %v1496
    %2025 = vmatprep.subr.bf16.mxu0 0
    %2026 = vmatpush1.bf16.msra.mxu0 %v1497
    %2027 = vmatprep.subr.bf16.mxu0 0
    %2028 = vmatpush1.bf16.msra.mxu0 %v1498
    %2029 = vmatprep.subr.bf16.mxu0 0
    %2030 = vmatpush1.bf16.msra.mxu0 %v1499
    %2031 = vmatprep.subr.bf16.mxu0 0
    %2032 = vmatpush1.bf16.msra.mxu0 %v1500
    %2033 = vmatprep.mubr.bf16.mxu0 %v532
    %2034 = vmatmul.mubr.bf16.gmra.mrb[0].mxu0 %v530
    %v2035 = vpop.f32.mrb[0].mxu0
    %v2036 = vadd.f32 %v1996, %v2035
    %v2037 = vpop.f32.mrb[0].mxu0
    %v2038 = vpop.f32.mrb[0].mxu0
    %v2039 = vpop.f32.mrb[0].mxu0
    %2040 = vdwg.mxu0
    %2041 = vmatprep.subr.bf16.mxu0 0
    %2042 = vmatpush1.bf16.msra.mxu0 %v1501
    %2043 = vmatprep.subr.bf16.mxu0 0
    %2044 = vmatpush1.bf16.msra.mxu0 %v1502
    %2045 = vmatprep.subr.bf16.mxu0 0
    %2046 = vmatpush1.bf16.msra.mxu0 %v1503
    %2047 = vmatprep.subr.bf16.mxu0 0
    %2048 = vmatpush1.bf16.msra.mxu0 %v1504
    %2049 = vmatprep.subr.bf16.mxu0 0
    %2050 = vmatpush1.bf16.msra.mxu0 %v1505
    %2051 = vmatprep.subr.bf16.mxu0 0
    %2052 = vmatpush1.bf16.msra.mxu0 %v1506
    %2053 = vmatprep.subr.bf16.mxu0 0
    %2054 = vmatpush1.bf16.msra.mxu0 %v1507
    %2055 = vmatprep.subr.bf16.mxu0 0
    %2056 = vmatpush1.bf16.msra.mxu0 %v1508
    %2057 = vmatprep.subr.bf16.mxu0 0
    %2058 = vmatpush1.bf16.msra.mxu0 %v1509
    %2059 = vmatprep.subr.bf16.mxu0 0
    %2060 = vmatpush1.bf16.msra.mxu0 %v1510
    %2061 = vmatprep.subr.bf16.mxu0 0
    %2062 = vmatpush1.bf16.msra.mxu0 %v1511
    %2063 = vmatprep.subr.bf16.mxu0 0
    %2064 = vmatpush1.bf16.msra.mxu0 %v1512
    %2065 = vmatprep.subr.bf16.mxu0 0
    %2066 = vmatpush1.bf16.msra.mxu0 %v1513
    %2067 = vmatprep.subr.bf16.mxu0 0
    %2068 = vmatpush1.bf16.msra.mxu0 %v1514
    %2069 = vmatprep.subr.bf16.mxu0 0
    %2070 = vmatpush1.bf16.msra.mxu0 %v1515
    %2071 = vmatprep.subr.bf16.mxu0 0
    %2072 = vmatpush1.bf16.msra.mxu0 %v1516
    %2073 = vmatprep.mubr.bf16.mxu0 %v529
    %2074 = vmatmul.mubr.bf16.gmra.mrb[0].mxu0 %v515
    %v2075 = vpop.f32.mrb[0].mxu0
    %v2076 = vadd.f32 %v2036, %v2075
    %v2077 = vpop.f32.mrb[0].mxu0
    %v2078 = vpop.f32.mrb[0].mxu0
    %v2079 = vpop.f32.mrb[0].mxu0
    %2080 = vdwg.mxu0
    %2081 = vmatprep.subr.bf16.mxu0 0
    %2082 = vmatpush1.bf16.msra.mxu0 %v1517
    %2083 = vmatprep.subr.bf16.mxu0 0
    %2084 = vmatpush1.bf16.msra.mxu0 %v1518
    %2085 = vmatprep.subr.bf16.mxu0 0
    %2086 = vmatpush1.bf16.msra.mxu0 %v1519
    %2087 = vmatprep.subr.bf16.mxu0 0
    %2088 = vmatpush1.bf16.msra.mxu0 %v1520
    %2089 = vmatprep.subr.bf16.mxu0 0
    %2090 = vmatpush1.bf16.msra.mxu0 %v1521
    %2091 = vmatprep.subr.bf16.mxu0 0
    %2092 = vmatpush1.bf16.msra.mxu0 %v1522
    %2093 = vmatprep.subr.bf16.mxu0 0
    %2094 = vmatpush1.bf16.msra.mxu0 %v1523
    %2095 = vmatprep.subr.bf16.mxu0 0
    %2096 = vmatpush1.bf16.msra.mxu0 %v1524
    %2097 = vmatprep.subr.bf16.mxu0 0
    %2098 = vmatpush1.bf16.msra.mxu0 %v1525
    %2099 = vmatprep.subr.bf16.mxu0 0
    %2100 = vmatpush1.bf16.msra.mxu0 %v1526
    %2101 = vmatprep.subr.bf16.mxu0 0
    %2102 = vmatpush1.bf16.msra.mxu0 %v1527
    %2103 = vmatprep.subr.bf16.mxu0 0
    %2104 = vmatpush1.bf16.msra.mxu0 %v1528
    %2105 = vmatprep.subr.bf16.mxu0 0
    %2106 = vmatpush1.bf16.msra.mxu0 %v1529
    %2107 = vmatprep.subr.bf16.mxu0 0
    %2108 = vmatpush1.bf16.msra.mxu0 %v1530
    %2109 = vmatprep.subr.bf16.mxu0 0
    %2110 = vmatpush1.bf16.msra.mxu0 %v1531
    %2111 = vmatprep.subr.bf16.mxu0 0
    %2112 = vmatpush1.bf16.msra.mxu0 %v1532
    %2113 = vmatprep.mubr.bf16.mxu0 %v533
    %2114 = vmatmul.mubr.bf16.gmra.mrb[0].mxu0 %v531
    %v2115 = vpop.f32.mrb[0].mxu0
    %v2116 = vadd.f32 %v2076, %v2115
    %v2117 = vpop.f32.mrb[0].mxu0
    %v2118 = vpop.f32.mrb[0].mxu0
    %v2119 = vpop.f32.mrb[0].mxu0
    %2120 = vdwg.mxu0
    %2121 = vmatprep.subr.bf16.mxu0 0
    %2122 = vmatpush1.bf16.msra.mxu0 %v1533
    %2123 = vmatprep.subr.bf16.mxu0 0
    %2124 = vmatpush1.bf16.msra.mxu0 %v1534
    %2125 = vmatprep.subr.bf16.mxu0 0
    %2126 = vmatpush1.bf16.msra.mxu0 %v1535
    %2127 = vmatprep.subr.bf16.mxu0 0
    %2128 = vmatpush1.bf16.msra.mxu0 %v1536
    %2129 = vmatprep.subr.bf16.mxu0 0
    %2130 = vmatpush1.bf16.msra.mxu0 %v1537
    %2131 = vmatprep.subr.bf16.mxu0 0
    %2132 = vmatpush1.bf16.msra.mxu0 %v1538
    %2133 = vmatprep.subr.bf16.mxu0 0
    %2134 = vmatpush1.bf16.msra.mxu0 %v1539
    %2135 = vmatprep.subr.bf16.mxu0 0
    %2136 = vmatpush1.bf16.msra.mxu0 %v1540
    %2137 = vmatprep.subr.bf16.mxu0 0
    %2138 = vmatpush1.bf16.msra.mxu0 %v1541
    %2139 = vmatprep.subr.bf16.mxu0 0
    %2140 = vmatpush1.bf16.msra.mxu0 %v1542
    %2141 = vmatprep.subr.bf16.mxu0 0
    %2142 = vmatpush1.bf16.msra.mxu0 %v1543
    %2143 = vmatprep.subr.bf16.mxu0 0
    %2144 = vmatpush1.bf16.msra.mxu0 %v1544
    %2145 = vmatprep.subr.bf16.mxu0 0
    %2146 = vmatpush1.bf16.msra.mxu0 %v1545
    %2147 = vmatprep.subr.bf16.mxu0 0
    %2148 = vmatpush1.bf16.msra.mxu0 %v1546
    %2149 = vmatprep.subr.bf16.mxu0 0
    %2150 = vmatpush1.bf16.msra.mxu0 %v1547
    %2151 = vmatprep.subr.bf16.mxu0 0
    %2152 = vmatpush1.bf16.msra.mxu0 %v1548
    %2153 = vmatprep.mubr.bf16.mxu0 %v571
    %2154 = vmatmul.mubr.bf16.gmra.mrb[0].mxu0 %v557
    %v2155 = vpop.f32.mrb[0].mxu0
    %v2156 = vadd.f32 %v2116, %v2155
    %v2157 = vpop.f32.mrb[0].mxu0
    %v2158 = vpop.f32.mrb[0].mxu0
    %v2159 = vpop.f32.mrb[0].mxu0
    %2160 = vdwg.mxu0
    %2161 = vmatprep.subr.bf16.mxu0 0
    %2162 = vmatpush1.bf16.msra.mxu0 %v1549
    %2163 = vmatprep.subr.bf16.mxu0 0
    %2164 = vmatpush1.bf16.msra.mxu0 %v1550
    %2165 = vmatprep.subr.bf16.mxu0 0
    %2166 = vmatpush1.bf16.msra.mxu0 %v1551
    %2167 = vmatprep.subr.bf16.mxu0 0
    %2168 = vmatpush1.bf16.msra.mxu0 %v1552
    %2169 = vmatprep.subr.bf16.mxu0 0
    %2170 = vmatpush1.bf16.msra.mxu0 %v1553
    %2171 = vmatprep.subr.bf16.mxu0 0
    %2172 = vmatpush1.bf16.msra.mxu0 %v1554
    %2173 = vmatprep.subr.bf16.mxu0 0
    %2174 = vmatpush1.bf16.msra.mxu0 %v1555
    %2175 = vmatprep.subr.bf16.mxu0 0
    %2176 = vmatpush1.bf16.msra.mxu0 %v1556
    %2177 = vmatprep.subr.bf16.mxu0 0
    %2178 = vmatpush1.bf16.msra.mxu0 %v1557
    %2179 = vmatprep.subr.bf16.mxu0 0
    %2180 = vmatpush1.bf16.msra.mxu0 %v1558
    %2181 = vmatprep.subr.bf16.mxu0 0
    %2182 = vmatpush1.bf16.msra.mxu0 %v1559
    %2183 = vmatprep.subr.bf16.mxu0 0
    %2184 = vmatpush1.bf16.msra.mxu0 %v1560
    %2185 = vmatprep.subr.bf16.mxu0 0
    %2186 = vmatpush1.bf16.msra.mxu0 %v1561
    %2187 = vmatprep.subr.bf16.mxu0 0
    %2188 = vmatpush1.bf16.msra.mxu0 %v1562
    %2189 = vmatprep.subr.bf16.mxu0 0
    %2190 = vmatpush1.bf16.msra.mxu0 %v1563
    %2191 = vmatprep.subr.bf16.mxu0 0
    %2192 = vmatpush1.bf16.msra.mxu0 %v1564
    %2193 = vmatprep.mubr.bf16.mxu0 %v581
    %2194 = vmatmul.mubr.bf16.gmra.mrb[0].mxu0 %v579
    %v2195 = vpop.f32.mrb[0].mxu0
    %v2196 = vadd.f32 %v2156, %v2195
    %v2197 = vpop.f32.mrb[0].mxu0
    %v2198 = vpop.f32.mrb[0].mxu0
    %v2199 = vpop.f32.mrb[0].mxu0
    %2200 = vdwg.mxu0
    %2201 = vmatprep.subr.bf16.mxu0 0
    %2202 = vmatpush1.bf16.msra.mxu0 %v1565
    %2203 = vmatprep.subr.bf16.mxu0 0
    %2204 = vmatpush1.bf16.msra.mxu0 %v1566
    %2205 = vmatprep.subr.bf16.mxu0 0
    %2206 = vmatpush1.bf16.msra.mxu0 %v1567
    %2207 = vmatprep.subr.bf16.mxu0 0
    %2208 = vmatpush1.bf16.msra.mxu0 %v1568
    %2209 = vmatprep.subr.bf16.mxu0 0
    %2210 = vmatpush1.bf16.msra.mxu0 %v1569
    %2211 = vmatprep.subr.bf16.mxu0 0
    %2212 = vmatpush1.bf16.msra.mxu0 %v1570
    %2213 = vmatprep.subr.bf16.mxu0 0
    %2214 = vmatpush1.bf16.msra.mxu0 %v1571
    %2215 = vmatprep.subr.bf16.mxu0 0
    %2216 = vmatpush1.bf16.msra.mxu0 %v1572
    %2217 = vmatprep.subr.bf16.mxu0 0
    %2218 = vmatpush1.bf16.msra.mxu0 %v1573
    %2219 = vmatprep.subr.bf16.mxu0 0
    %2220 = vmatpush1.bf16.msra.mxu0 %v1574
    %2221 = vmatprep.subr.bf16.mxu0 0
    %2222 = vmatpush1.bf16.msra.mxu0 %v1575
    %2223 = vmatprep.subr.bf16.mxu0 0
    %2224 = vmatpush1.bf16.msra.mxu0 %v1576
    %2225 = vmatprep.subr.bf16.mxu0 0
    %2226 = vmatpush1.bf16.msra.mxu0 %v1577
    %2227 = vmatprep.subr.bf16.mxu0 0
    %2228 = vmatpush1.bf16.msra.mxu0 %v1578
    %2229 = vmatprep.subr.bf16.mxu0 0
    %2230 = vmatpush1.bf16.msra.mxu0 %v1579
    %2231 = vmatprep.subr.bf16.mxu0 0
    %2232 = vmatpush1.bf16.msra.mxu0 %v1580
    %2233 = vmatprep.mubr.bf16.mxu0 %v578
    %2234 = vmatmul.mubr.bf16.gmra.mrb[0].mxu0 %v564
    %v2235 = vpop.f32.mrb[0].mxu0
    %v2236 = vadd.f32 %v2196, %v2235
    %v2237 = vpop.f32.mrb[0].mxu0
    %v2238 = vpop.f32.mrb[0].mxu0
    %v2239 = vpop.f32.mrb[0].mxu0
    %2240 = vdwg.mxu0
    %2241 = vmatprep.subr.bf16.mxu0 0
    %2242 = vmatpush1.bf16.msra.mxu0 %v1581
    %2243 = vmatprep.subr.bf16.mxu0 0
    %2244 = vmatpush1.bf16.msra.mxu0 %v1582
    %2245 = vmatprep.subr.bf16.mxu0 0
    %2246 = vmatpush1.bf16.msra.mxu0 %v1583
    %2247 = vmatprep.subr.bf16.mxu0 0
    %2248 = vmatpush1.bf16.msra.mxu0 %v1584
    %2249 = vmatprep.subr.bf16.mxu0 0
    %2250 = vmatpush1.bf16.msra.mxu0 %v1585
    %2251 = vmatprep.subr.bf16.mxu0 0
    %2252 = vmatpush1.bf16.msra.mxu0 %v1586
    %2253 = vmatprep.subr.bf16.mxu0 0
    %2254 = vmatpush1.bf16.msra.mxu0 %v1587
    %2255 = vmatprep.subr.bf16.mxu0 0
    %2256 = vmatpush1.bf16.msra.mxu0 %v1588
    %2257 = vmatprep.subr.bf16.mxu0 0
    %2258 = vmatpush1.bf16.msra.mxu0 %v1589
    %2259 = vmatprep.subr.bf16.mxu0 0
    %2260 = vmatpush1.bf16.msra.mxu0 %v1590
    %2261 = vmatprep.subr.bf16.mxu0 0
    %2262 = vmatpush1.bf16.msra.mxu0 %v1591
    %2263 = vmatprep.subr.bf16.mxu0 0
    %2264 = vmatpush1.bf16.msra.mxu0 %v1592
    %2265 = vmatprep.subr.bf16.mxu0 0
    %2266 = vmatpush1.bf16.msra.mxu0 %v1593
    %2267 = vmatprep.subr.bf16.mxu0 0
    %2268 = vmatpush1.bf16.msra.mxu0 %v1594
    %2269 = vmatprep.subr.bf16.mxu0 0
    %2270 = vmatpush1.bf16.msra.mxu0 %v1595
    %2271 = vmatprep.subr.bf16.mxu0 0
    %2272 = vmatpush1.bf16.msra.mxu0 %v1596
    %2273 = vmatprep.mubr.bf16.mxu0 %v582
    %2274 = vmatmul.mubr.bf16.gmra.mrb[0].mxu0 %v580
    %v2275 = vpop.f32.mrb[0].mxu0
    %v2276 = vadd.f32 %v2236, %v2275
    %v2277 = vpop.f32.mrb[0].mxu0
    %v2278 = vpop.f32.mrb[0].mxu0
    %v2279 = vpop.f32.mrb[0].mxu0
    %2280 = vdwg.mxu0
    %2281 = vmatprep.subr.bf16.mxu0 0
    %2282 = vmatpush1.bf16.msra.mxu0 %v1597
    %2283 = vmatprep.subr.bf16.mxu0 0
    %2284 = vmatpush1.bf16.msra.mxu0 %v1598
    %2285 = vmatprep.subr.bf16.mxu0 0
    %2286 = vmatpush1.bf16.msra.mxu0 %v1599
    %2287 = vmatprep.subr.bf16.mxu0 0
    %2288 = vmatpush1.bf16.msra.mxu0 %v1600
    %2289 = vmatprep.subr.bf16.mxu0 0
    %2290 = vmatpush1.bf16.msra.mxu0 0
    %2291 = vmatprep.subr.bf16.mxu0 0
    %2292 = vmatpush1.bf16.msra.mxu0 0
    %2293 = vmatprep.subr.bf16.mxu0 0
    %2294 = vmatpush1.bf16.msra.mxu0 0
    %2295 = vmatprep.subr.bf16.mxu0 0
    %2296 = vmatpush1.bf16.msra.mxu0 0
    %2297 = vmatprep.subr.bf16.mxu0 0
    %2298 = vmatpush1.bf16.msra.mxu0 0
    %2299 = vmatprep.subr.bf16.mxu0 0
    %2300 = vmatpush1.bf16.msra.mxu0 0
    %2301 = vmatprep.subr.bf16.mxu0 0
    %2302 = vmatpush1.bf16.msra.mxu0 0
    %2303 = vmatprep.subr.bf16.mxu0 0
    %2304 = vmatpush1.bf16.msra.mxu0 0
    %2305 = vmatprep.subr.bf16.mxu0 0
    %2306 = vmatpush1.bf16.msra.mxu0 0
    %2307 = vmatprep.subr.bf16.mxu0 0
    %2308 = vmatpush1.bf16.msra.mxu0 0
    %2309 = vmatprep.subr.bf16.mxu0 0
    %2310 = vmatpush1.bf16.msra.mxu0 0
    %2311 = vmatprep.subr.bf16.mxu0 0
    %2312 = vmatpush1.bf16.msra.mxu0 0
    %2313 = vmatprep.mubr.bf16.mxu0 0
    %2314 = vmatmul.mubr.bf16.gmra.mrb[0].mxu0 %v1799
    %v2315 = vpop.f32.mrb[0].mxu0
    %v2316 = vadd.f32 %v2276, %v2315
    %v2317 = vpop.f32.mrb[0].mxu0
    %v2318 = vpop.f32.mrb[0].mxu0
    %v2319 = vpop.f32.mrb[0].mxu0
    %2320 = vdwg.mxu0
    %vm2321 = vcmask 74752
    %2322 = vst.msk [vmem:[#allocation2] sm:$0x3] %vm2321, %v2316
    %2324 = vrot.lane.b32.xlu0 %v2316, 118
    %v2325 = vpop.permute.xlu0 %2324
    %2327 = vst.msk [vmem:[#allocation4] sm:$0x3] %vm2321, %v2325
    %v2328 = vld [vmem:[%s3] sm:$0x3]
    %v2329 = vmul.f32 %v2316, 0.5
    %v2330 = vmul.f32 %v2329, 1.442695
    %v2331 = vpow.pop %v2330
    %2333 = vrot.lane.b32.xlu0 %v2331, 118
    %v2334 = vpop.permute.xlu0 %2333
    %v2336 = vmul.f32 %v2328, %v2334
    %v2337 = vadd.f32 %v2336, %v2316
    %v2338 = vpack.c.bf16 %v2337, %v2337
    %v2339 = vld [vmem:[%s4] sm:$0xff]
    %v2340 = vld [vmem:[%s4 + $0x8] sm:$0xff]
    %v2341 = vld [vmem:[%s4 + $0x10] sm:$0xff]
    %v2342 = vld [vmem:[%s4 + $0x18] sm:$0xff]
    %v2343 = vld [vmem:[%s4 + $0x20] sm:$0xff]
    %v2344 = vld [vmem:[%s4 + $0x28] sm:$0xff]
    %v2345 = vld [vmem:[%s4 + $0x30] sm:$0xff]
    %v2346 = vld [vmem:[%s4 + $0x38] sm:$0xff]
    %v2347 = vld [vmem:[%s4 + $0x40] sm:$0xff]
    %v2348 = vld [vmem:[%s4 + $0x48] sm:$0xff]
    %v2349 = vld [vmem:[%s4 + $0x50] sm:$0xff]
    %v2350 = vld [vmem:[%s4 + $0x58] sm:$0xff]
    %v2351 = vld [vmem:[%s4 + $0x60] sm:$0xf]
    %v2352 = vld [vmem:[%s4 + $0x64] sm:$0x11]
    %v2353 = vld [vmem:[%s4 + $0x6c] sm:$0x11]
    %v2354 = vld [vmem:[%s4 + $0x74] sm:$0x11]
    %v2355 = vld [vmem:[%s4 + $0x7c] sm:$0x11]
    %v2356 = vld [vmem:[%s4 + $0x84] sm:$0x11]
    %v2357 = vld [vmem:[%s4 + $0x8c] sm:$0x11]
    %v2358 = vld [vmem:[%s4 + $0x94] sm:$0x11]
    %v2359 = vld [vmem:[%s4 + $0x9c] sm:$0x11]
    %v2360 = vld [vmem:[%s4 + $0xa4] sm:$0x11]
    %v2361 = vld [vmem:[%s4 + $0xac] sm:$0x11]
    %v2362 = vld [vmem:[%s4 + $0xb4] sm:$0x11]
    %v2363 = vld [vmem:[%s4 + $0xbc] sm:$0x11]
    %v2364 = vld [vmem:[%s4 + $0xc4] sm:$0x1]
    %v2365 = vld [vmem:[%s5] sm:$0xff]
    %v2366 = vld [vmem:[%s5 + $0x8] sm:$0xff]
    %v2367 = vld [vmem:[%s5 + $0x10] sm:$0xff]
    %v2368 = vld [vmem:[%s5 + $0x18] sm:$0x1]
    %v2373 = vlaneseq
    %v2374 = vshrl.u32 %v2373, 7
    %v2375 = vsub.s32 0, %v2374
    %v2376 = vrot.slane %v2365, %v2375
    %v2377 = vlaneseq
    %v2378 = vshrl.u32 %v2377, 7
    %v2379 = vsub.s32 1, %v2378
    %v2380 = vrot.slane %v2365, %v2379
    %v2381 = vlaneseq
    %v2382 = vshrl.u32 %v2381, 7
    %v2383 = vsub.s32 2, %v2382
    %v2384 = vrot.slane %v2365, %v2383
    %v2385 = vlaneseq
    %v2386 = vshrl.u32 %v2385, 7
    %v2387 = vsub.s32 3, %v2386
    %v2388 = vrot.slane %v2365, %v2387
    %v2389 = vlaneseq
    %v2390 = vshrl.u32 %v2389, 7
    %v2391 = vsub.s32 4, %v2390
    %v2392 = vrot.slane %v2365, %v2391
    %v2393 = vlaneseq
    %v2394 = vshrl.u32 %v2393, 7
    %v2395 = vsub.s32 5, %v2394
    %v2396 = vrot.slane %v2365, %v2395
    %v2397 = vlaneseq
    %v2398 = vshrl.u32 %v2397, 7
    %v2399 = vsub.s32 6, %v2398
    %v2400 = vrot.slane %v2365, %v2399
    %v2401 = vlaneseq
    %v2402 = vshrl.u32 %v2401, 7
    %v2403 = vsub.s32 7, %v2402
    %v2404 = vrot.slane %v2365, %v2403
    %v2405 = vlaneseq
    %v2406 = vshrl.u32 %v2405, 7
    %v2407 = vsub.s32 0, %v2406
    %v2408 = vrot.slane %v2366, %v2407
    %v2409 = vlaneseq
    %v2410 = vshrl.u32 %v2409, 7
    %v2411 = vsub.s32 1, %v2410
    %v2412 = vrot.slane %v2366, %v2411
    %v2413 = vlaneseq
    %v2414 = vshrl.u32 %v2413, 7
    %v2415 = vsub.s32 2, %v2414
    %v2416 = vrot.slane %v2366, %v2415
    %v2417 = vlaneseq
    %v2418 = vshrl.u32 %v2417, 7
    %v2419 = vsub.s32 3, %v2418
    %v2420 = vrot.slane %v2366, %v2419
    %v2421 = vlaneseq
    %v2422 = vshrl.u32 %v2421, 7
    %v2423 = vsub.s32 4, %v2422
    %v2424 = vrot.slane %v2366, %v2423
    %v2425 = vlaneseq
    %v2426 = vshrl.u32 %v2425, 7
    %v2427 = vsub.s32 5, %v2426
    %v2428 = vrot.slane %v2366, %v2427
    %v2429 = vlaneseq
    %v2430 = vshrl.u32 %v2429, 7
    %v2431 = vsub.s32 6, %v2430
    %v2432 = vrot.slane %v2366, %v2431
    %v2433 = vlaneseq
    %v2434 = vshrl.u32 %v2433, 7
    %v2435 = vsub.s32 7, %v2434
    %v2436 = vrot.slane %v2366, %v2435
    %v2437 = vlaneseq
    %v2438 = vshrl.u32 %v2437, 7
    %v2439 = vsub.s32 0, %v2438
    %v2440 = vrot.slane %v2367, %v2439
    %v2441 = vlaneseq
    %v2442 = vshrl.u32 %v2441, 7
    %v2443 = vsub.s32 1, %v2442
    %v2444 = vrot.slane %v2367, %v2443
    %v2445 = vlaneseq
    %v2446 = vshrl.u32 %v2445, 7
    %v2447 = vsub.s32 2, %v2446
    %v2448 = vrot.slane %v2367, %v2447
    %v2449 = vlaneseq
    %v2450 = vshrl.u32 %v2449, 7
    %v2451 = vsub.s32 3, %v2450
    %v2452 = vrot.slane %v2367, %v2451
    %v2453 = vlaneseq
    %v2454 = vshrl.u32 %v2453, 7
    %v2455 = vsub.s32 4, %v2454
    %v2456 = vrot.slane %v2367, %v2455
    %v2457 = vlaneseq
    %v2458 = vshrl.u32 %v2457, 7
    %v2459 = vsub.s32 5, %v2458
    %v2460 = vrot.slane %v2367, %v2459
    %v2461 = vlaneseq
    %v2462 = vshrl.u32 %v2461, 7
    %v2463 = vsub.s32 6, %v2462
    %v2464 = vrot.slane %v2367, %v2463
    %v2465 = vlaneseq
    %v2466 = vshrl.u32 %v2465, 7
    %v2467 = vsub.s32 7, %v2466
    %v2468 = vrot.slane %v2367, %v2467
    %v2469 = vlaneseq
    %v2470 = vshrl.u32 %v2469, 7
    %v2471 = vsub.s32 0, %v2470
    %v2472 = vrot.slane %v2368, %v2471
    %v2524 = vunpack.c.l.b16 %v2339
    %v2525 = vunpack.c.h.b16 %v2339
    %v2526 = vunpack.c.l.b16 %v2340
    %v2527 = vunpack.c.h.b16 %v2340
    %v2528 = vunpack.c.l.b16 %v2341
    %v2529 = vunpack.c.h.b16 %v2341
    %v2530 = vunpack.c.l.b16 %v2342
    %v2531 = vunpack.c.h.b16 %v2342
    %v2532 = vunpack.c.l.b16 %v2343
    %v2533 = vunpack.c.h.b16 %v2343
    %v2534 = vunpack.c.l.b16 %v2344
    %v2535 = vunpack.c.h.b16 %v2344
    %v2536 = vunpack.c.l.b16 %v2345
    %v2537 = vunpack.c.h.b16 %v2345
    %v2538 = vunpack.c.l.b16 %v2346
    %v2539 = vunpack.c.h.b16 %v2346
    %v2540 = vunpack.c.l.b16 %v2347
    %v2541 = vunpack.c.h.b16 %v2347
    %v2542 = vunpack.c.l.b16 %v2348
    %v2543 = vunpack.c.h.b16 %v2348
    %v2544 = vunpack.c.l.b16 %v2349
    %v2545 = vunpack.c.h.b16 %v2349
    %v2546 = vunpack.c.l.b16 %v2350
    %v2547 = vunpack.c.h.b16 %v2350
    %v2548 = vunpack.c.l.b16 %v2351
    %v2549 = vunpack.c.l.b16 %v2352
    %v2550 = vunpack.c.h.b16 %v2352
    %v2551 = vunpack.c.l.b16 %v2353
    %v2552 = vunpack.c.h.b16 %v2353
    %v2553 = vunpack.c.l.b16 %v2354
    %v2554 = vunpack.c.h.b16 %v2354
    %v2555 = vunpack.c.l.b16 %v2355
    %v2556 = vunpack.c.h.b16 %v2355
    %v2557 = vunpack.c.l.b16 %v2356
    %v2558 = vunpack.c.h.b16 %v2356
    %v2559 = vunpack.c.l.b16 %v2357
    %v2560 = vunpack.c.h.b16 %v2357
    %v2561 = vunpack.c.l.b16 %v2358
    %v2562 = vunpack.c.h.b16 %v2358
    %v2563 = vunpack.c.l.b16 %v2359
    %v2564 = vunpack.c.h.b16 %v2359
    %v2565 = vunpack.c.l.b16 %v2360
    %v2566 = vunpack.c.h.b16 %v2360
    %v2567 = vunpack.c.l.b16 %v2361
    %v2568 = vunpack.c.h.b16 %v2361
    %v2569 = vunpack.c.l.b16 %v2362
    %v2570 = vunpack.c.h.b16 %v2362
    %v2571 = vunpack.c.l.b16 %v2363
    %v2572 = vunpack.c.h.b16 %v2363
    %v2573 = vunpack.c.l.b16 %v2364
    %v2574 = vpack.c.b16 %v2549, %v2524
    %v2575 = vpack.c.b16 %v2550, %v2525
    %v2576 = vpack.c.b16 %v2551, %v2526
    %v2577 = vpack.c.b16 %v2552, %v2527
    %v2578 = vpack.c.b16 %v2553, %v2528
    %v2579 = vpack.c.b16 %v2554, %v2529
    %v2580 = vpack.c.b16 %v2555, %v2530
    %v2581 = vpack.c.b16 %v2556, %v2531
    %v2582 = vpack.c.b16 %v2557, %v2532
    %v2583 = vpack.c.b16 %v2558, %v2533
    %v2584 = vpack.c.b16 %v2559, %v2534
    %v2585 = vpack.c.b16 %v2560, %v2535
    %v2586 = vpack.c.b16 %v2561, %v2536
    %v2587 = vpack.c.b16 %v2562, %v2537
    %v2588 = vpack.c.b16 %v2563, %v2538
    %v2589 = vpack.c.b16 %v2564, %v2539
    %v2590 = vpack.c.b16 %v2565, %v2540
    %v2591 = vpack.c.b16 %v2566, %v2541
    %v2592 = vpack.c.b16 %v2567, %v2542
    %v2593 = vpack.c.b16 %v2568, %v2543
    %v2594 = vpack.c.b16 %v2569, %v2544
    %v2595 = vpack.c.b16 %v2570, %v2545
    %v2596 = vpack.c.b16 %v2571, %v2546
    %v2597 = vpack.c.b16 %v2572, %v2547
    %v2598 = vpack.c.b16 %v2573, %v2548
    %vm2599 = vcmask 80896
    %v2601 = vsel %vm2599, %v2338, 0
    %vm2603 = vcmask 1044480
    %v2605 = vsel %vm2603, %v2574, 0
    %v2608 = vsel %vm2603, %v2575, 0
    %v2611 = vsel %vm2603, %v2576, 0
    %v2614 = vsel %vm2603, %v2577, 0
    %v2617 = vsel %vm2603, %v2578, 0
    %v2620 = vsel %vm2603, %v2579, 0
    %v2623 = vsel %vm2603, %v2580, 0
    %v2626 = vsel %vm2603, %v2581, 0
    %v2629 = vsel %vm2603, %v2582, 0
    %v2632 = vsel %vm2603, %v2583, 0
    %v2635 = vsel %vm2603, %v2584, 0
    %v2638 = vsel %vm2603, %v2585, 0
    %v2641 = vsel %vm2603, %v2586, 0
    %v2644 = vsel %vm2603, %v2587, 0
    %v2647 = vsel %vm2603, %v2588, 0
    %v2650 = vsel %vm2603, %v2589, 0
    %v2653 = vsel %vm2603, %v2590, 0
    %v2656 = vsel %vm2603, %v2591, 0
    %v2659 = vsel %vm2603, %v2592, 0
    %v2662 = vsel %vm2603, %v2593, 0
    %v2665 = vsel %vm2603, %v2594, 0
    %v2668 = vsel %vm2603, %v2595, 0
    %v2671 = vsel %vm2603, %v2596, 0
    %v2674 = vsel %vm2603, %v2597, 0
    %v2677 = vsel %vm2603, %v2598, 0
    %2679 = vmatprep.subr.bf16.mxu0 %v2608
    %2680 = vmatpush1.bf16.msra.mxu0 %v2605
    %2681 = vmatprep.subr.bf16.mxu0 0
    %2682 = vmatpush1.bf16.msra.mxu0 0
    %2683 = vmatprep.subr.bf16.mxu0 0
    %2684 = vmatpush1.bf16.msra.mxu0 0
    %2685 = vmatprep.subr.bf16.mxu0 0
    %2686 = vmatpush1.bf16.msra.mxu0 0
    %2687 = vmatprep.subr.bf16.mxu0 0
    %2688 = vmatpush1.bf16.msra.mxu0 0
    %2689 = vmatprep.subr.bf16.mxu0 0
    %2690 = vmatpush1.bf16.msra.mxu0 0
    %2691 = vmatprep.subr.bf16.mxu0 0
    %2692 = vmatpush1.bf16.msra.mxu0 0
    %2693 = vmatprep.subr.bf16.mxu0 0
    %2694 = vmatpush1.bf16.msra.mxu0 0
    %2695 = vmatprep.subr.bf16.mxu0 0
    %2696 = vmatpush1.bf16.msra.mxu0 0
    %2697 = vmatprep.subr.bf16.mxu0 0
    %2698 = vmatpush1.bf16.msra.mxu0 0
    %2699 = vmatprep.subr.bf16.mxu0 0
    %2700 = vmatpush1.bf16.msra.mxu0 0
    %2701 = vmatprep.subr.bf16.mxu0 0
    %2702 = vmatpush1.bf16.msra.mxu0 0
    %2703 = vmatprep.subr.bf16.mxu0 0
    %2704 = vmatpush1.bf16.msra.mxu0 0
    %2705 = vmatprep.subr.bf16.mxu0 0
    %2706 = vmatpush1.bf16.msra.mxu0 0
    %2707 = vmatprep.subr.bf16.mxu0 0
    %2708 = vmatpush1.bf16.msra.mxu0 0
    %2709 = vmatprep.subr.bf16.mxu0 0
    %2710 = vmatpush1.bf16.msra.mxu0 0
    %2711 = vmatprep.mubr.bf16.mxu0 0
    %2712 = vmatmul.mubr.bf16.gmra.mrb[0].mxu0 %v2601
    %v2713 = vpop.f32.mrb[0].mxu0
    %v2714 = vadd.f32 %v2376, %v2713
    %v2715 = vpop.f32.mrb[0].mxu0
    %v2716 = vadd.f32 %v2380, %v2715
    %v2717 = vpop.f32.mrb[0].mxu0
    %v2718 = vpop.f32.mrb[0].mxu0
    %2719 = vdwg.mxu0
    %2720 = vmatprep.subr.bf16.mxu0 %v2614
    %2721 = vmatpush1.bf16.msra.mxu0 %v2611
    %2722 = vmatprep.subr.bf16.mxu0 0
    %2723 = vmatpush1.bf16.msra.mxu0 0
    %2724 = vmatprep.subr.bf16.mxu0 0
    %2725 = vmatpush1.bf16.msra.mxu0 0
    %2726 = vmatprep.subr.bf16.mxu0 0
    %2727 = vmatpush1.bf16.msra.mxu0 0
    %2728 = vmatprep.subr.bf16.mxu0 0
    %2729 = vmatpush1.bf16.msra.mxu0 0
    %2730 = vmatprep.subr.bf16.mxu0 0
    %2731 = vmatpush1.bf16.msra.mxu0 0
    %2732 = vmatprep.subr.bf16.mxu0 0
    %2733 = vmatpush1.bf16.msra.mxu0 0
    %2734 = vmatprep.subr.bf16.mxu0 0
    %2735 = vmatpush1.bf16.msra.mxu0 0
    %2736 = vmatprep.subr.bf16.mxu0 0
    %2737 = vmatpush1.bf16.msra.mxu0 0
    %2738 = vmatprep.subr.bf16.mxu0 0
    %2739 = vmatpush1.bf16.msra.mxu0 0
    %2740 = vmatprep.subr.bf16.mxu0 0
    %2741 = vmatpush1.bf16.msra.mxu0 0
    %2742 = vmatprep.subr.bf16.mxu0 0
    %2743 = vmatpush1.bf16.msra.mxu0 0
    %2744 = vmatprep.subr.bf16.mxu0 0
    %2745 = vmatpush1.bf16.msra.mxu0 0
    %2746 = vmatprep.subr.bf16.mxu0 0
    %2747 = vmatpush1.bf16.msra.mxu0 0
    %2748 = vmatprep.subr.bf16.mxu0 0
    %2749 = vmatpush1.bf16.msra.mxu0 0
    %2750 = vmatprep.subr.bf16.mxu0 0
    %2751 = vmatpush1.bf16.msra.mxu0 0
    %2752 = vmatprep.mubr.bf16.mxu0 0
    %2753 = vmatmul.mubr.bf16.gmra.mrb[0].mxu0 %v2601
    %v2754 = vpop.f32.mrb[0].mxu0
    %v2755 = vadd.f32 %v2384, %v2754
    %v2756 = vpop.f32.mrb[0].mxu0
    %v2757 = vadd.f32 %v2388, %v2756
    %v2758 = vpop.f32.mrb[0].mxu0
    %v2759 = vpop.f32.mrb[0].mxu0
    %2760 = vdwg.mxu0
    %2761 = vmatprep.subr.bf16.mxu0 %v2620
    %2762 = vmatpush1.bf16.msra.mxu0 %v2617
    %2763 = vmatprep.subr.bf16.mxu0 0
    %2764 = vmatpush1.bf16.msra.mxu0 0
    %2765 = vmatprep.subr.bf16.mxu0 0
    %2766 = vmatpush1.bf16.msra.mxu0 0
    %2767 = vmatprep.subr.bf16.mxu0 0
    %2768 = vmatpush1.bf16.msra.mxu0 0
    %2769 = vmatprep.subr.bf16.mxu0 0
    %2770 = vmatpush1.bf16.msra.mxu0 0
    %2771 = vmatprep.subr.bf16.mxu0 0
    %2772 = vmatpush1.bf16.msra.mxu0 0
    %2773 = vmatprep.subr.bf16.mxu0 0
    %2774 = vmatpush1.bf16.msra.mxu0 0
    %2775 = vmatprep.subr.bf16.mxu0 0
    %2776 = vmatpush1.bf16.msra.mxu0 0
    %2777 = vmatprep.subr.bf16.mxu0 0
    %2778 = vmatpush1.bf16.msra.mxu0 0
    %2779 = vmatprep.subr.bf16.mxu0 0
    %2780 = vmatpush1.bf16.msra.mxu0 0
    %2781 = vmatprep.subr.bf16.mxu0 0
    %2782 = vmatpush1.bf16.msra.mxu0 0
    %2783 = vmatprep.subr.bf16.mxu0 0
    %2784 = vmatpush1.bf16.msra.mxu0 0
    %2785 = vmatprep.subr.bf16.mxu0 0
    %2786 = vmatpush1.bf16.msra.mxu0 0
    %2787 = vmatprep.subr.bf16.mxu0 0
    %2788 = vmatpush1.bf16.msra.mxu0 0
    %2789 = vmatprep.subr.bf16.mxu0 0
    %2790 = vmatpush1.bf16.msra.mxu0 0
    %2791 = vmatprep.subr.bf16.mxu0 0
    %2792 = vmatpush1.bf16.msra.mxu0 0
    %2793 = vmatprep.mubr.bf16.mxu0 0
    %2794 = vmatmul.mubr.bf16.gmra.mrb[0].mxu0 %v2601
    %v2795 = vpop.f32.mrb[0].mxu0
    %v2796 = vadd.f32 %v2392, %v2795
    %v2797 = vpop.f32.mrb[0].mxu0
    %v2798 = vadd.f32 %v2396, %v2797
    %v2799 = vpop.f32.mrb[0].mxu0
    %v2800 = vpop.f32.mrb[0].mxu0
    %2801 = vdwg.mxu0
    %2802 = vmatprep.subr.bf16.mxu0 %v2626
    %2803 = vmatpush1.bf16.msra.mxu0 %v2623
    %2804 = vmatprep.subr.bf16.mxu0 0
    %2805 = vmatpush1.bf16.msra.mxu0 0
    %2806 = vmatprep.subr.bf16.mxu0 0
    %2807 = vmatpush1.bf16.msra.mxu0 0
    %2808 = vmatprep.subr.bf16.mxu0 0
    %2809 = vmatpush1.bf16.msra.mxu0 0
    %2810 = vmatprep.subr.bf16.mxu0 0
    %2811 = vmatpush1.bf16.msra.mxu0 0
    %2812 = vmatprep.subr.bf16.mxu0 0
    %2813 = vmatpush1.bf16.msra.mxu0 0
    %2814 = vmatprep.subr.bf16.mxu0 0
    %2815 = vmatpush1.bf16.msra.mxu0 0
    %2816 = vmatprep.subr.bf16.mxu0 0
    %2817 = vmatpush1.bf16.msra.mxu0 0
    %2818 = vmatprep.subr.bf16.mxu0 0
    %2819 = vmatpush1.bf16.msra.mxu0 0
    %2820 = vmatprep.subr.bf16.mxu0 0
    %2821 = vmatpush1.bf16.msra.mxu0 0
    %2822 = vmatprep.subr.bf16.mxu0 0
    %2823 = vmatpush1.bf16.msra.mxu0 0
    %2824 = vmatprep.subr.bf16.mxu0 0
    %2825 = vmatpush1.bf16.msra.mxu0 0
    %2826 = vmatprep.subr.bf16.mxu0 0
    %2827 = vmatpush1.bf16.msra.mxu0 0
    %2828 = vmatprep.subr.bf16.mxu0 0
    %2829 = vmatpush1.bf16.msra.mxu0 0
    %2830 = vmatprep.subr.bf16.mxu0 0
    %2831 = vmatpush1.bf16.msra.mxu0 0
    %2832 = vmatprep.subr.bf16.mxu0 0
    %2833 = vmatpush1.bf16.msra.mxu0 0
    %2834 = vmatprep.mubr.bf16.mxu0 0
    %2835 = vmatmul.mubr.bf16.gmra.mrb[0].mxu0 %v2601
    %v2836 = vpop.f32.mrb[0].mxu0
    %v2837 = vadd.f32 %v2400, %v2836
    %v2838 = vpop.f32.mrb[0].mxu0
    %v2839 = vadd.f32 %v2404, %v2838
    %v2840 = vpop.f32.mrb[0].mxu0
    %v2841 = vpop.f32.mrb[0].mxu0
    %2842 = vdwg.mxu0
    %2843 = vmatprep.subr.bf16.mxu0 %v2632
    %2844 = vmatpush1.bf16.msra.mxu0 %v2629
    %2845 = vmatprep.subr.bf16.mxu0 0
    %2846 = vmatpush1.bf16.msra.mxu0 0
    %2847 = vmatprep.subr.bf16.mxu0 0
    %2848 = vmatpush1.bf16.msra.mxu0 0
    %2849 = vmatprep.subr.bf16.mxu0 0
    %2850 = vmatpush1.bf16.msra.mxu0 0
    %2851 = vmatprep.subr.bf16.mxu0 0
    %2852 = vmatpush1.bf16.msra.mxu0 0
    %2853 = vmatprep.subr.bf16.mxu0 0
    %2854 = vmatpush1.bf16.msra.mxu0 0
    %2855 = vmatprep.subr.bf16.mxu0 0
    %2856 = vmatpush1.bf16.msra.mxu0 0
    %2857 = vmatprep.subr.bf16.mxu0 0
    %2858 = vmatpush1.bf16.msra.mxu0 0
    %2859 = vmatprep.subr.bf16.mxu0 0
    %2860 = vmatpush1.bf16.msra.mxu0 0
    %2861 = vmatprep.subr.bf16.mxu0 0
    %2862 = vmatpush1.bf16.msra.mxu0 0
    %2863 = vmatprep.subr.bf16.mxu0 0
    %2864 = vmatpush1.bf16.msra.mxu0 0
    %2865 = vmatprep.subr.bf16.mxu0 0
    %2866 = vmatpush1.bf16.msra.mxu0 0
    %2867 = vmatprep.subr.bf16.mxu0 0
    %2868 = vmatpush1.bf16.msra.mxu0 0
    %2869 = vmatprep.subr.bf16.mxu0 0
    %2870 = vmatpush1.bf16.msra.mxu0 0
    %2871 = vmatprep.subr.bf16.mxu0 0
    %2872 = vmatpush1.bf16.msra.mxu0 0
    %2873 = vmatprep.subr.bf16.mxu0 0
    %2874 = vmatpush1.bf16.msra.mxu0 0
    %2875 = vmatprep.mubr.bf16.mxu0 0
    %2876 = vmatmul.mubr.bf16.gmra.mrb[0].mxu0 %v2601
    %v2877 = vpop.f32.mrb[0].mxu0
    %v2878 = vadd.f32 %v2408, %v2877
    %v2879 = vpop.f32.mrb[0].mxu0
    %v2880 = vadd.f32 %v2412, %v2879
    %v2881 = vpop.f32.mrb[0].mxu0
    %v2882 = vpop.f32.mrb[0].mxu0
    %2883 = vdwg.mxu0
    %2884 = vmatprep.subr.bf16.mxu0 %v2638
    %2885 = vmatpush1.bf16.msra.mxu0 %v2635
    %2886 = vmatprep.subr.bf16.mxu0 0
    %2887 = vmatpush1.bf16.msra.mxu0 0
    %2888 = vmatprep.subr.bf16.mxu0 0
    %2889 = vmatpush1.bf16.msra.mxu0 0
    %2890 = vmatprep.subr.bf16.mxu0 0
    %2891 = vmatpush1.bf16.msra.mxu0 0
    %2892 = vmatprep.subr.bf16.mxu0 0
    %2893 = vmatpush1.bf16.msra.mxu0 0
    %2894 = vmatprep.subr.bf16.mxu0 0
    %2895 = vmatpush1.bf16.msra.mxu0 0
    %2896 = vmatprep.subr.bf16.mxu0 0
    %2897 = vmatpush1.bf16.msra.mxu0 0
    %2898 = vmatprep.subr.bf16.mxu0 0
    %2899 = vmatpush1.bf16.msra.mxu0 0
    %2900 = vmatprep.subr.bf16.mxu0 0
    %2901 = vmatpush1.bf16.msra.mxu0 0
    %2902 = vmatprep.subr.bf16.mxu0 0
    %2903 = vmatpush1.bf16.msra.mxu0 0
    %2904 = vmatprep.subr.bf16.mxu0 0
    %2905 = vmatpush1.bf16.msra.mxu0 0
    %2906 = vmatprep.subr.bf16.mxu0 0
    %2907 = vmatpush1.bf16.msra.mxu0 0
    %2908 = vmatprep.subr.bf16.mxu0 0
    %2909 = vmatpush1.bf16.msra.mxu0 0
    %2910 = vmatprep.subr.bf16.mxu0 0
    %2911 = vmatpush1.bf16.msra.mxu0 0
    %2912 = vmatprep.subr.bf16.mxu0 0
    %2913 = vmatpush1.bf16.msra.mxu0 0
    %2914 = vmatprep.subr.bf16.mxu0 0
    %2915 = vmatpush1.bf16.msra.mxu0 0
    %2916 = vmatprep.mubr.bf16.mxu0 0
    %2917 = vmatmul.mubr.bf16.gmra.mrb[0].mxu0 %v2601
    %v2918 = vpop.f32.mrb[0].mxu0
    %v2919 = vadd.f32 %v2416, %v2918
    %v2920 = vpop.f32.mrb[0].mxu0
    %v2921 = vadd.f32 %v2420, %v2920
    %v2922 = vpop.f32.mrb[0].mxu0
    %v2923 = vpop.f32.mrb[0].mxu0
    %2924 = vdwg.mxu0
    %2925 = vmatprep.subr.bf16.mxu0 %v2644
    %2926 = vmatpush1.bf16.msra.mxu0 %v2641
    %2927 = vmatprep.subr.bf16.mxu0 0
    %2928 = vmatpush1.bf16.msra.mxu0 0
    %2929 = vmatprep.subr.bf16.mxu0 0
    %2930 = vmatpush1.bf16.msra.mxu0 0
    %2931 = vmatprep.subr.bf16.mxu0 0
    %2932 = vmatpush1.bf16.msra.mxu0 0
    %2933 = vmatprep.subr.bf16.mxu0 0
    %2934 = vmatpush1.bf16.msra.mxu0 0
    %2935 = vmatprep.subr.bf16.mxu0 0
    %2936 = vmatpush1.bf16.msra.mxu0 0
    %2937 = vmatprep.subr.bf16.mxu0 0
    %2938 = vmatpush1.bf16.msra.mxu0 0
    %2939 = vmatprep.subr.bf16.mxu0 0
    %2940 = vmatpush1.bf16.msra.mxu0 0
    %2941 = vmatprep.subr.bf16.mxu0 0
    %2942 = vmatpush1.bf16.msra.mxu0 0
    %2943 = vmatprep.subr.bf16.mxu0 0
    %2944 = vmatpush1.bf16.msra.mxu0 0
    %2945 = vmatprep.subr.bf16.mxu0 0
    %2946 = vmatpush1.bf16.msra.mxu0 0
    %2947 = vmatprep.subr.bf16.mxu0 0
    %2948 = vmatpush1.bf16.msra.mxu0 0
    %2949 = vmatprep.subr.bf16.mxu0 0
    %2950 = vmatpush1.bf16.msra.mxu0 0
    %2951 = vmatprep.subr.bf16.mxu0 0
    %2952 = vmatpush1.bf16.msra.mxu0 0
    %2953 = vmatprep.subr.bf16.mxu0 0
    %2954 = vmatpush1.bf16.msra.mxu0 0
    %2955 = vmatprep.subr.bf16.mxu0 0
    %2956 = vmatpush1.bf16.msra.mxu0 0
    %2957 = vmatprep.mubr.bf16.mxu0 0
    %2958 = vmatmul.mubr.bf16.gmra.mrb[0].mxu0 %v2601
    %v2959 = vpop.f32.mrb[0].mxu0
    %v2960 = vadd.f32 %v2424, %v2959
    %v2961 = vpop.f32.mrb[0].mxu0
    %v2962 = vadd.f32 %v2428, %v2961
    %v2963 = vpop.f32.mrb[0].mxu0
    %v2964 = vpop.f32.mrb[0].mxu0
    %2965 = vdwg.mxu0
    %2966 = vmatprep.subr.bf16.mxu0 %v2650
    %2967 = vmatpush1.bf16.msra.mxu0 %v2647
    %2968 = vmatprep.subr.bf16.mxu0 0
    %2969 = vmatpush1.bf16.msra.mxu0 0
    %2970 = vmatprep.subr.bf16.mxu0 0
    %2971 = vmatpush1.bf16.msra.mxu0 0
    %2972 = vmatprep.subr.bf16.mxu0 0
    %2973 = vmatpush1.bf16.msra.mxu0 0
    %2974 = vmatprep.subr.bf16.mxu0 0
    %2975 = vmatpush1.bf16.msra.mxu0 0
    %2976 = vmatprep.subr.bf16.mxu0 0
    %2977 = vmatpush1.bf16.msra.mxu0 0
    %2978 = vmatprep.subr.bf16.mxu0 0
    %2979 = vmatpush1.bf16.msra.mxu0 0
    %2980 = vmatprep.subr.bf16.mxu0 0
    %2981 = vmatpush1.bf16.msra.mxu0 0
    %2982 = vmatprep.subr.bf16.mxu0 0
    %2983 = vmatpush1.bf16.msra.mxu0 0
    %2984 = vmatprep.subr.bf16.mxu0 0
    %2985 = vmatpush1.bf16.msra.mxu0 0
    %2986 = vmatprep.subr.bf16.mxu0 0
    %2987 = vmatpush1.bf16.msra.mxu0 0
    %2988 = vmatprep.subr.bf16.mxu0 0
    %2989 = vmatpush1.bf16.msra.mxu0 0
    %2990 = vmatprep.subr.bf16.mxu0 0
    %2991 = vmatpush1.bf16.msra.mxu0 0
    %2992 = vmatprep.subr.bf16.mxu0 0
    %2993 = vmatpush1.bf16.msra.mxu0 0
    %2994 = vmatprep.subr.bf16.mxu0 0
    %2995 = vmatpush1.bf16.msra.mxu0 0
    %2996 = vmatprep.subr.bf16.mxu0 0
    %2997 = vmatpush1.bf16.msra.mxu0 0
    %2998 = vmatprep.mubr.bf16.mxu0 0
    %2999 = vmatmul.mubr.bf16.gmra.mrb[0].mxu0 %v2601
    %v3000 = vpop.f32.mrb[0].mxu0
    %v3001 = vadd.f32 %v2432, %v3000
    %v3002 = vpop.f32.mrb[0].mxu0
    %v3003 = vadd.f32 %v2436, %v3002
    %v3004 = vpop.f32.mrb[0].mxu0
    %v3005 = vpop.f32.mrb[0].mxu0
    %3006 = vdwg.mxu0
    %3007 = vmatprep.subr.bf16.mxu0 %v2656
    %3008 = vmatpush1.bf16.msra.mxu0 %v2653
    %3009 = vmatprep.subr.bf16.mxu0 0
    %3010 = vmatpush1.bf16.msra.mxu0 0
    %3011 = vmatprep.subr.bf16.mxu0 0
    %3012 = vmatpush1.bf16.msra.mxu0 0
    %3013 = vmatprep.subr.bf16.mxu0 0
    %3014 = vmatpush1.bf16.msra.mxu0 0
    %3015 = vmatprep.subr.bf16.mxu0 0
    %3016 = vmatpush1.bf16.msra.mxu0 0
    %3017 = vmatprep.subr.bf16.mxu0 0
    %3018 = vmatpush1.bf16.msra.mxu0 0
    %3019 = vmatprep.subr.bf16.mxu0 0
    %3020 = vmatpush1.bf16.msra.mxu0 0
    %3021 = vmatprep.subr.bf16.mxu0 0
    %3022 = vmatpush1.bf16.msra.mxu0 0
    %3023 = vmatprep.subr.bf16.mxu0 0
    %3024 = vmatpush1.bf16.msra.mxu0 0
    %3025 = vmatprep.subr.bf16.mxu0 0
    %3026 = vmatpush1.bf16.msra.mxu0 0
    %3027 = vmatprep.subr.bf16.mxu0 0
    %3028 = vmatpush1.bf16.msra.mxu0 0
    %3029 = vmatprep.subr.bf16.mxu0 0
    %3030 = vmatpush1.bf16.msra.mxu0 0
    %3031 = vmatprep.subr.bf16.mxu0 0
    %3032 = vmatpush1.bf16.msra.mxu0 0
    %3033 = vmatprep.subr.bf16.mxu0 0
    %3034 = vmatpush1.bf16.msra.mxu0 0
    %3035 = vmatprep.subr.bf16.mxu0 0
    %3036 = vmatpush1.bf16.msra.mxu0 0
    %3037 = vmatprep.subr.bf16.mxu0 0
    %3038 = vmatpush1.bf16.msra.mxu0 0
    %3039 = vmatprep.mubr.bf16.mxu0 0
    %3040 = vmatmul.mubr.bf16.gmra.mrb[0].mxu0 %v2601
    %v3041 = vpop.f32.mrb[0].mxu0
    %v3042 = vadd.f32 %v2440, %v3041
    %v3043 = vpop.f32.mrb[0].mxu0
    %v3044 = vadd.f32 %v2444, %v3043
    %v3045 = vpop.f32.mrb[0].mxu0
    %v3046 = vpop.f32.mrb[0].mxu0
    %3047 = vdwg.mxu0
    %3048 = vmatprep.subr.bf16.mxu0 %v2662
    %3049 = vmatpush1.bf16.msra.mxu0 %v2659
    %3050 = vmatprep.subr.bf16.mxu0 0
    %3051 = vmatpush1.bf16.msra.mxu0 0
    %3052 = vmatprep.subr.bf16.mxu0 0
    %3053 = vmatpush1.bf16.msra.mxu0 0
    %3054 = vmatprep.subr.bf16.mxu0 0
    %3055 = vmatpush1.bf16.msra.mxu0 0
    %3056 = vmatprep.subr.bf16.mxu0 0
    %3057 = vmatpush1.bf16.msra.mxu0 0
    %3058 = vmatprep.subr.bf16.mxu0 0
    %3059 = vmatpush1.bf16.msra.mxu0 0
    %3060 = vmatprep.subr.bf16.mxu0 0
    %3061 = vmatpush1.bf16.msra.mxu0 0
    %3062 = vmatprep.subr.bf16.mxu0 0
    %3063 = vmatpush1.bf16.msra.mxu0 0
    %3064 = vmatprep.subr.bf16.mxu0 0
    %3065 = vmatpush1.bf16.msra.mxu0 0
    %3066 = vmatprep.subr.bf16.mxu0 0
    %3067 = vmatpush1.bf16.msra.mxu0 0
    %3068 = vmatprep.subr.bf16.mxu0 0
    %3069 = vmatpush1.bf16.msra.mxu0 0
    %3070 = vmatprep.subr.bf16.mxu0 0
    %3071 = vmatpush1.bf16.msra.mxu0 0
    %3072 = vmatprep.subr.bf16.mxu0 0
    %3073 = vmatpush1.bf16.msra.mxu0 0
    %3074 = vmatprep.subr.bf16.mxu0 0
    %3075 = vmatpush1.bf16.msra.mxu0 0
    %3076 = vmatprep.subr.bf16.mxu0 0
    %3077 = vmatpush1.bf16.msra.mxu0 0
    %3078 = vmatprep.subr.bf16.mxu0 0
    %3079 = vmatpush1.bf16.msra.mxu0 0
    %3080 = vmatprep.mubr.bf16.mxu0 0
    %3081 = vmatmul.mubr.bf16.gmra.mrb[0].mxu0 %v2601
    %v3082 = vpop.f32.mrb[0].mxu0
    %v3083 = vadd.f32 %v2448, %v3082
    %v3084 = vpop.f32.mrb[0].mxu0
    %v3085 = vadd.f32 %v2452, %v3084
    %v3086 = vpop.f32.mrb[0].mxu0
    %v3087 = vpop.f32.mrb[0].mxu0
    %3088 = vdwg.mxu0
    %3089 = vmatprep.subr.bf16.mxu0 %v2668
    %3090 = vmatpush1.bf16.msra.mxu0 %v2665
    %3091 = vmatprep.subr.bf16.mxu0 0
    %3092 = vmatpush1.bf16.msra.mxu0 0
    %3093 = vmatprep.subr.bf16.mxu0 0
    %3094 = vmatpush1.bf16.msra.mxu0 0
    %3095 = vmatprep.subr.bf16.mxu0 0
    %3096 = vmatpush1.bf16.msra.mxu0 0
    %3097 = vmatprep.subr.bf16.mxu0 0
    %3098 = vmatpush1.bf16.msra.mxu0 0
    %3099 = vmatprep.subr.bf16.mxu0 0
    %3100 = vmatpush1.bf16.msra.mxu0 0
    %3101 = vmatprep.subr.bf16.mxu0 0
    %3102 = vmatpush1.bf16.msra.mxu0 0
    %3103 = vmatprep.subr.bf16.mxu0 0
    %3104 = vmatpush1.bf16.msra.mxu0 0
    %3105 = vmatprep.subr.bf16.mxu0 0
    %3106 = vmatpush1.bf16.msra.mxu0 0
    %3107 = vmatprep.subr.bf16.mxu0 0
    %3108 = vmatpush1.bf16.msra.mxu0 0
    %3109 = vmatprep.subr.bf16.mxu0 0
    %3110 = vmatpush1.bf16.msra.mxu0 0
    %3111 = vmatprep.subr.bf16.mxu0 0
    %3112 = vmatpush1.bf16.msra.mxu0 0
    %3113 = vmatprep.subr.bf16.mxu0 0
    %3114 = vmatpush1.bf16.msra.mxu0 0
    %3115 = vmatprep.subr.bf16.mxu0 0
    %3116 = vmatpush1.bf16.msra.mxu0 0
    %3117 = vmatprep.subr.bf16.mxu0 0
    %3118 = vmatpush1.bf16.msra.mxu0 0
    %3119 = vmatprep.subr.bf16.mxu0 0
    %3120 = vmatpush1.bf16.msra.mxu0 0
    %3121 = vmatprep.mubr.bf16.mxu0 0
    %3122 = vmatmul.mubr.bf16.gmra.mrb[0].mxu0 %v2601
    %v3123 = vpop.f32.mrb[0].mxu0
    %v3124 = vadd.f32 %v2456, %v3123
    %v3125 = vpop.f32.mrb[0].mxu0
    %v3126 = vadd.f32 %v2460, %v3125
    %v3127 = vpop.f32.mrb[0].mxu0
    %v3128 = vpop.f32.mrb[0].mxu0
    %3129 = vdwg.mxu0
    %3130 = vmatprep.subr.bf16.mxu0 %v2674
    %3131 = vmatpush1.bf16.msra.mxu0 %v2671
    %3132 = vmatprep.subr.bf16.mxu0 0
    %3133 = vmatpush1.bf16.msra.mxu0 0
    %3134 = vmatprep.subr.bf16.mxu0 0
    %3135 = vmatpush1.bf16.msra.mxu0 0
    %3136 = vmatprep.subr.bf16.mxu0 0
    %3137 = vmatpush1.bf16.msra.mxu0 0
    %3138 = vmatprep.subr.bf16.mxu0 0
    %3139 = vmatpush1.bf16.msra.mxu0 0
    %3140 = vmatprep.subr.bf16.mxu0 0
    %3141 = vmatpush1.bf16.msra.mxu0 0
    %3142 = vmatprep.subr.bf16.mxu0 0
    %3143 = vmatpush1.bf16.msra.mxu0 0
    %3144 = vmatprep.subr.bf16.mxu0 0
    %3145 = vmatpush1.bf16.msra.mxu0 0
    %3146 = vmatprep.subr.bf16.mxu0 0
    %3147 = vmatpush1.bf16.msra.mxu0 0
    %3148 = vmatprep.subr.bf16.mxu0 0
    %3149 = vmatpush1.bf16.msra.mxu0 0
    %3150 = vmatprep.subr.bf16.mxu0 0
    %3151 = vmatpush1.bf16.msra.mxu0 0
    %3152 = vmatprep.subr.bf16.mxu0 0
    %3153 = vmatpush1.bf16.msra.mxu0 0
    %3154 = vmatprep.subr.bf16.mxu0 0
    %3155 = vmatpush1.bf16.msra.mxu0 0
    %3156 = vmatprep.subr.bf16.mxu0 0
    %3157 = vmatpush1.bf16.msra.mxu0 0
    %3158 = vmatprep.subr.bf16.mxu0 0
    %3159 = vmatpush1.bf16.msra.mxu0 0
    %3160 = vmatprep.subr.bf16.mxu0 0
    %3161 = vmatpush1.bf16.msra.mxu0 0
    %3162 = vmatprep.mubr.bf16.mxu0 0
    %3163 = vmatmul.mubr.bf16.gmra.mrb[0].mxu0 %v2601
    %v3164 = vpop.f32.mrb[0].mxu0
    %v3165 = vadd.f32 %v2464, %v3164
    %v3166 = vpop.f32.mrb[0].mxu0
    %v3167 = vadd.f32 %v2468, %v3166
    %v3168 = vpop.f32.mrb[0].mxu0
    %v3169 = vpop.f32.mrb[0].mxu0
    %3170 = vdwg.mxu0
    %3171 = vmatprep.subr.bf16.mxu0 0
    %3172 = vmatpush1.bf16.msra.mxu0 %v2677
    %3173 = vmatprep.subr.bf16.mxu0 0
    %3174 = vmatpush1.bf16.msra.mxu0 0
    %3175 = vmatprep.subr.bf16.mxu0 0
    %3176 = vmatpush1.bf16.msra.mxu0 0
    %3177 = vmatprep.subr.bf16.mxu0 0
    %3178 = vmatpush1.bf16.msra.mxu0 0
    %3179 = vmatprep.subr.bf16.mxu0 0
    %3180 = vmatpush1.bf16.msra.mxu0 0
    %3181 = vmatprep.subr.bf16.mxu0 0
    %3182 = vmatpush1.bf16.msra.mxu0 0
    %3183 = vmatprep.subr.bf16.mxu0 0
    %3184 = vmatpush1.bf16.msra.mxu0 0
    %3185 = vmatprep.subr.bf16.mxu0 0
    %3186 = vmatpush1.bf16.msra.mxu0 0
    %3187 = vmatprep.subr.bf16.mxu0 0
    %3188 = vmatpush1.bf16.msra.mxu0 0
    %3189 = vmatprep.subr.bf16.mxu0 0
    %3190 = vmatpush1.bf16.msra.mxu0 0
    %3191 = vmatprep.subr.bf16.mxu0 0
    %3192 = vmatpush1.bf16.msra.mxu0 0
    %3193 = vmatprep.subr.bf16.mxu0 0
    %3194 = vmatpush1.bf16.msra.mxu0 0
    %3195 = vmatprep.subr.bf16.mxu0 0
    %3196 = vmatpush1.bf16.msra.mxu0 0
    %3197 = vmatprep.subr.bf16.mxu0 0
    %3198 = vmatpush1.bf16.msra.mxu0 0
    %3199 = vmatprep.subr.bf16.mxu0 0
    %3200 = vmatpush1.bf16.msra.mxu0 0
    %3201 = vmatprep.subr.bf16.mxu0 0
    %3202 = vmatpush1.bf16.msra.mxu0 0
    %3203 = vmatprep.mubr.bf16.mxu0 0
    %3204 = vmatmul.mubr.bf16.gmra.mrb[0].mxu0 %v2601
    %v3205 = vpop.f32.mrb[0].mxu0
    %v3206 = vadd.f32 %v2472, %v3205
    %v3207 = vpop.f32.mrb[0].mxu0
    %v3208 = vpop.f32.mrb[0].mxu0
    %v3209 = vpop.f32.mrb[0].mxu0
    %3210 = vdwg.mxu0
    %v3211 = vpack.c.bf16 %v2714, %v2714
    %v3212 = vpack.c.bf16 %v2716, %v2716
    %v3213 = vpack.c.bf16 %v2755, %v2755
    %v3214 = vpack.c.bf16 %v2757, %v2757
    %v3215 = vpack.c.bf16 %v2796, %v2796
    %v3216 = vpack.c.bf16 %v2798, %v2798
    %v3217 = vpack.c.bf16 %v2837, %v2837
    %v3218 = vpack.c.bf16 %v2839, %v2839
    %v3219 = vpack.c.bf16 %v2878, %v2878
    %v3220 = vpack.c.bf16 %v2880, %v2880
    %v3221 = vpack.c.bf16 %v2919, %v2919
    %v3222 = vpack.c.bf16 %v2921, %v2921
    %v3223 = vpack.c.bf16 %v2960, %v2960
    %v3224 = vpack.c.bf16 %v2962, %v2962
    %v3225 = vpack.c.bf16 %v3001, %v3001
    %v3226 = vpack.c.bf16 %v3003, %v3003
    %v3227 = vpack.c.bf16 %v3042, %v3042
    %v3228 = vpack.c.bf16 %v3044, %v3044
    %v3229 = vpack.c.bf16 %v3083, %v3083
    %v3230 = vpack.c.bf16 %v3085, %v3085
    %v3231 = vpack.c.bf16 %v3124, %v3124
    %v3232 = vpack.c.bf16 %v3126, %v3126
    %v3233 = vpack.c.bf16 %v3165, %v3165
    %v3234 = vpack.c.bf16 %v3167, %v3167
    %v3235 = vpack.c.bf16 %v3206, %v3206
    %v3261 = vcombine.low %v3211, %v3212
    %v3262 = vcombine.low %v3213, %v3214
    %v3263 = vcombine.low %v3215, %v3216
    %v3264 = vcombine.low %v3217, %v3218
    %v3266 = vunpack.c.l.s4 1966171168
    %v3267 = vunpack.c.0.s8 %v3266
    %v3268 = vlaneseq
    %v3269 = vshrl.u32 %v3268, 7
    %v3270 = vsub.s32 %v3267, %v3269
    %v3271 = vrot.slane %v3261, %v3270
    %v3273 = vunpack.c.l.s4 1966171168
    %v3274 = vunpack.c.0.s8 %v3273
    %v3275 = vlaneseq
    %v3276 = vshrl.u32 %v3275, 7
    %v3277 = vsub.s32 %v3274, %v3276
    %v3278 = vrot.slane %v3262, %v3277
    %v3280 = vunpack.c.l.s4 1966171168
    %v3281 = vunpack.c.0.s8 %v3280
    %v3282 = vlaneseq
    %v3283 = vshrl.u32 %v3282, 7
    %v3284 = vsub.s32 %v3281, %v3283
    %v3285 = vrot.slane %v3263, %v3284
    %v3287 = vunpack.c.l.s4 1966171168
    %v3288 = vunpack.c.0.s8 %v3287
    %v3289 = vlaneseq
    %v3290 = vshrl.u32 %v3289, 7
    %v3291 = vsub.s32 %v3288, %v3290
    %v3292 = vrot.slane %v3264, %v3291
    %v3293 = vcombine.low %v3271, %v3278
    %v3294 = vcombine.low %v3285, %v3292
    %v3296 = vunpack.c.l.s4 1966171168
    %v3297 = vunpack.c.0.s8 %v3296
    %v3298 = vlaneseq
    %v3299 = vshrl.u32 %v3298, 7
    %v3300 = vsub.s32 %v3297, %v3299
    %v3301 = vrot.slane %v3293, %v3300
    %v3303 = vunpack.c.l.s4 1966171168
    %v3304 = vunpack.c.0.s8 %v3303
    %v3305 = vlaneseq
    %v3306 = vshrl.u32 %v3305, 7
    %v3307 = vsub.s32 %v3304, %v3306
    %v3308 = vrot.slane %v3294, %v3307
    %v3309 = vcombine.low %v3301, %v3308
    %v3310 = vcombine.low %v3219, %v3220
    %v3311 = vcombine.low %v3221, %v3222
    %v3312 = vcombine.low %v3223, %v3224
    %v3313 = vcombine.low %v3225, %v3226
    %v3315 = vunpack.c.l.s4 1966171168
    %v3316 = vunpack.c.0.s8 %v3315
    %v3317 = vlaneseq
    %v3318 = vshrl.u32 %v3317, 7
    %v3319 = vsub.s32 %v3316, %v3318
    %v3320 = vrot.slane %v3310, %v3319
    %v3322 = vunpack.c.l.s4 1966171168
    %v3323 = vunpack.c.0.s8 %v3322
    %v3324 = vlaneseq
    %v3325 = vshrl.u32 %v3324, 7
    %v3326 = vsub.s32 %v3323, %v3325
    %v3327 = vrot.slane %v3311, %v3326
    %v3329 = vunpack.c.l.s4 1966171168
    %v3330 = vunpack.c.0.s8 %v3329
    %v3331 = vlaneseq
    %v3332 = vshrl.u32 %v3331, 7
    %v3333 = vsub.s32 %v3330, %v3332
    %v3334 = vrot.slane %v3312, %v3333
    %v3336 = vunpack.c.l.s4 1966171168
    %v3337 = vunpack.c.0.s8 %v3336
    %v3338 = vlaneseq
    %v3339 = vshrl.u32 %v3338, 7
    %v3340 = vsub.s32 %v3337, %v3339
    %v3341 = vrot.slane %v3313, %v3340
    %v3342 = vcombine.low %v3320, %v3327
    %v3343 = vcombine.low %v3334, %v3341
    %v3345 = vunpack.c.l.s4 1966171168
    %v3346 = vunpack.c.0.s8 %v3345
    %v3347 = vlaneseq
    %v3348 = vshrl.u32 %v3347, 7
    %v3349 = vsub.s32 %v3346, %v3348
    %v3350 = vrot.slane %v3342, %v3349
    %v3352 = vunpack.c.l.s4 1966171168
    %v3353 = vunpack.c.0.s8 %v3352
    %v3354 = vlaneseq
    %v3355 = vshrl.u32 %v3354, 7
    %v3356 = vsub.s32 %v3353, %v3355
    %v3357 = vrot.slane %v3343, %v3356
    %v3358 = vcombine.low %v3350, %v3357
    %v3359 = vcombine.low %v3227, %v3228
    %v3360 = vcombine.low %v3229, %v3230
    %v3361 = vcombine.low %v3231, %v3232
    %v3362 = vcombine.low %v3233, %v3234
    %v3364 = vunpack.c.l.s4 1966171168
    %v3365 = vunpack.c.0.s8 %v3364
    %v3366 = vlaneseq
    %v3367 = vshrl.u32 %v3366, 7
    %v3368 = vsub.s32 %v3365, %v3367
    %v3369 = vrot.slane %v3359, %v3368
    %v3371 = vunpack.c.l.s4 1966171168
    %v3372 = vunpack.c.0.s8 %v3371
    %v3373 = vlaneseq
    %v3374 = vshrl.u32 %v3373, 7
    %v3375 = vsub.s32 %v3372, %v3374
    %v3376 = vrot.slane %v3360, %v3375
    %v3378 = vunpack.c.l.s4 1966171168
    %v3379 = vunpack.c.0.s8 %v3378
    %v3380 = vlaneseq
    %v3381 = vshrl.u32 %v3380, 7
    %v3382 = vsub.s32 %v3379, %v3381
    %v3383 = vrot.slane %v3361, %v3382
    %v3385 = vunpack.c.l.s4 1966171168
    %v3386 = vunpack.c.0.s8 %v3385
    %v3387 = vlaneseq
    %v3388 = vshrl.u32 %v3387, 7
    %v3389 = vsub.s32 %v3386, %v3388
    %v3390 = vrot.slane %v3362, %v3389
    %v3391 = vcombine.low %v3369, %v3376
    %v3392 = vcombine.low %v3383, %v3390
    %v3394 = vunpack.c.l.s4 1966171168
    %v3395 = vunpack.c.0.s8 %v3394
    %v3396 = vlaneseq
    %v3397 = vshrl.u32 %v3396, 7
    %v3398 = vsub.s32 %v3395, %v3397
    %v3399 = vrot.slane %v3391, %v3398
    %v3401 = vunpack.c.l.s4 1966171168
    %v3402 = vunpack.c.0.s8 %v3401
    %v3403 = vlaneseq
    %v3404 = vshrl.u32 %v3403, 7
    %v3405 = vsub.s32 %v3402, %v3404
    %v3406 = vrot.slane %v3392, %v3405
    %v3407 = vcombine.low %v3399, %v3406
    %v3409 = vunpack.c.l.s4 1966171168
    %v3410 = vunpack.c.0.s8 %v3409
    %v3411 = vlaneseq
    %v3412 = vshrl.u32 %v3411, 7
    %v3413 = vsub.s32 %v3410, %v3412
    %v3414 = vrot.slane %v3235, %v3413
    %v3416 = vunpack.c.l.s4 1966171168
    %v3417 = vunpack.c.0.s8 %v3416
    %v3418 = vlaneseq
    %v3419 = vshrl.u32 %v3418, 7
    %v3420 = vsub.s32 %v3417, %v3419
    %v3421 = vrot.slane %v3414, %v3420
    %3426 = vst [vmem:[%s8] sm:$0xff] %v3309
    %3427 = vst [vmem:[%s8 + $0x8] sm:$0xff] %v3358
    %3428 = vst [vmem:[%s8 + $0x10] sm:$0xff] %v3407
    %vm3429 = vcmask 516096
    %3430 = vst.msk [vmem:[%s8 + $0x18] sm:$0x1] %vm3429, %v3421
    // Predicated region
    $region26: #{vae_forward.8} parent=1 // pred_check
      _
    $region27: #{vae_forward.8} parent=1 // pred_check_branch
      %3432 = sbr.rel (0) target = $region29
    $region28: #{vae_forward.8} parent=1 // pred_region
      %s3434 = ssub.s32 32, 32
      %3435 = vsyncadd [#allocation3], %s3434
      %s3437 = sshll.u32 [#allocation2], 4
      %s3438 = int_to_ptr.vmem [resolvable:$true] %s3437
      %3440 = dma.vmem_to_hbm [thread:$0]  %s3438, 32, %s6, [#allocation3]
    $region29: #{vae_forward.8} parent=1 // pred_fallthru
      _
    // Predicated region
    $region30: #{vae_forward.8} parent=1 // pred_check
      _
    $region31: #{vae_forward.8} parent=1 // pred_check_branch
      %3442 = sbr.rel (0) target = $region33
    $region32: #{vae_forward.8} parent=1 // pred_region
      %s3444 = ssub.s32 32, 32
      %3445 = vsyncadd [#allocation5], %s3444
      %s3447 = sshll.u32 [#allocation4], 4
      %s3448 = int_to_ptr.vmem [resolvable:$true] %s3447
      %3450 = dma.vmem_to_hbm [thread:$0]  %s3448, 32, %s7, [#allocation5]
    $region33: #{vae_forward.8} parent=1 // pred_fallthru
      _
    // Predicated region
    $region34: #{vae_forward.8} parent=1 // pred_check
      _
    $region35: #{vae_forward.8} parent=1 // pred_check_branch
      %3452 = sbr.rel (0) target = $region37
    $region36: #{vae_forward.8} parent=1 // pred_region
      _
    $region37: #{vae_forward.8} parent=1 // pred_fallthru
      _
    // Predicated region
    $region38: #{vae_forward.8} parent=1 // pred_check
      _
    $region39: #{vae_forward.8} parent=1 // pred_check_branch
      %3454 = sbr.rel (0) target = $region41
    $region40: #{vae_forward.8} parent=1 // pred_region
      %3455 = dma.done [#allocation3], 32
    $region41: #{vae_forward.8} parent=1 // pred_fallthru
      _
    // Predicated region
    $region42: #{vae_forward.8} parent=1 // pred_check
      _
    $region43: #{vae_forward.8} parent=1 // pred_check_branch
      %3457 = sbr.rel (0) target = $region45
    $region44: #{vae_forward.8} parent=1 // pred_region
      %3458 = dma.done [#allocation5], 32
    $region45: #{vae_forward.8} parent=1 // pred_fallthru
      _
    // Predicated region
    $region46: #{vae_forward.8} parent=1 // pred_check
      _
    $region47: #{vae_forward.8} parent=1 // pred_check_branch
      %3460 = sbr.rel (0) target = $region49
    $region48: #{vae_forward.8} parent=1 // pred_region
      _
    $region49: #{vae_forward.8} parent=1 // pred_fallthru
      _
    %3461 = vsyncpa [#allocation3], 1
    %3462 = vsyncpa [#allocation5], 1

// kernel: vae_forward.10
$region0: #{vae_forward.10}
  #allocation0 [shape = 'u32[]', space=smem, size = 0x4, offset = 0x4, fixed_abs, tag = 'smem constant byte address 0x4 - core index']
  #allocation1 [shape = 'u32[144,128]{1,0:T(1,128)}', space=vmem, size = 0x12000, scoped, tag = 'internal scratch']
  %s0 = inlined_call_operand.vmem [shape: bf16[392,128], index: 0, kind: input, shape index: {}]
  %s1 = inlined_call_operand.vmem [shape: bf16[128,128], index: 1, kind: input, shape index: {}]
  %s2 = inlined_call_operand.vmem [shape: f32[1,32], index: 2, kind: input, shape index: {}]
  %s3 = inlined_call_operand.vmem [shape: f32[1,32], index: 3, kind: input, shape index: {}]
  %s4 = inlined_call_operand.vmem [shape: bf16[392,128], index: 4, kind: output, shape index: {}]
  %s5 = sld [smem:[#allocation0]]
  $region26: #{vae_forward.10} parent=0
    _
  %s7 = ssub.s32 1, %s5
  %s8 = scalar_select 0, %s7, %s5
  // Predicated region
  $region2: #{vae_forward.10} parent=0 // pred_check
    _
  $region3: #{vae_forward.10} parent=0 // pred_check_branch
    %10 = sbr.rel (0) target = $region5
  $region4: #{vae_forward.10} parent=0 // pred_region
    _
  $region5: #{vae_forward.10} parent=0 // pred_fallthru
    _
  // Predicated region
  $region6: #{vae_forward.10} parent=0 // pred_check
    _
  $region7: #{vae_forward.10} parent=0 // pred_check_branch
    %12 = sbr.rel (0) target = $region9
  $region8: #{vae_forward.10} parent=0 // pred_region
    _
  $region9: #{vae_forward.10} parent=0 // pred_fallthru
    _
  // Predicated region
  $region10: #{vae_forward.10} parent=0 // pred_check
    _
  $region11: #{vae_forward.10} parent=0 // pred_check_branch
    %14 = sbr.rel (0) target = $region13
  $region12: #{vae_forward.10} parent=0 // pred_region
    _
  $region13: #{vae_forward.10} parent=0 // pred_fallthru
    _
  // Predicated region
  $region14: #{vae_forward.10} parent=0 // pred_check
    _
  $region15: #{vae_forward.10} parent=0 // pred_check_branch
    %16 = sbr.rel (0) target = $region17
  $region16: #{vae_forward.10} parent=0 // pred_region
    _
  $region17: #{vae_forward.10} parent=0 // pred_fallthru
    _
  %v18 = vld [vmem:[%s0] sm:$0xf]
  %v19 = vld [vmem:[%s0 + $0x4] sm:$0xf]
  %v20 = vld [vmem:[%s0 + $0x8] sm:$0xf]
  %v21 = vld [vmem:[%s0 + $0xc] sm:$0xf]
  %v22 = vld [vmem:[%s0 + $0x10] sm:$0xf]
  %v23 = vld [vmem:[%s0 + $0x14] sm:$0xf]
  %v24 = vld [vmem:[%s0 + $0x18] sm:$0xf]
  %v25 = vld [vmem:[%s0 + $0x1c] sm:$0xf]
  %v26 = vld [vmem:[%s0 + $0x20] sm:$0xf]
  %v27 = vld [vmem:[%s0 + $0x24] sm:$0xf]
  %v28 = vld [vmem:[%s0 + $0x28] sm:$0xf]
  %v29 = vld [vmem:[%s0 + $0x2c] sm:$0xf]
  %v30 = vld [vmem:[%s0 + $0x30] sm:$0xf]
  %v31 = vld [vmem:[%s0 + $0x34] sm:$0xf]
  %v32 = vld [vmem:[%s0 + $0x38] sm:$0xf]
  %v33 = vld [vmem:[%s0 + $0x3c] sm:$0xf]
  %v34 = vld [vmem:[%s0 + $0x40] sm:$0xf]
  %v35 = vld [vmem:[%s0 + $0x44] sm:$0xf]
  %v36 = vld [vmem:[%s0 + $0x48] sm:$0xf]
  %v37 = vld [vmem:[%s0 + $0x4c] sm:$0xf]
  %v38 = vld [vmem:[%s0 + $0x50] sm:$0xf]
  %v39 = vld [vmem:[%s0 + $0x54] sm:$0xf]
  %v40 = vld [vmem:[%s0 + $0x58] sm:$0xf]
  %v41 = vld [vmem:[%s0 + $0x5c] sm:$0xf]
  %v42 = vld [vmem:[%s0 + $0x60] sm:$0xf]
  %v43 = vld [vmem:[%s0 + $0x64] sm:$0xf]
  %v44 = vld [vmem:[%s0 + $0x68] sm:$0xf]
  %v45 = vld [vmem:[%s0 + $0x6c] sm:$0xf]
  %v46 = vld [vmem:[%s0 + $0x70] sm:$0xf]
  %v47 = vld [vmem:[%s0 + $0x74] sm:$0xf]
  %v48 = vld [vmem:[%s0 + $0x78] sm:$0xf]
  %v49 = vld [vmem:[%s0 + $0x7c] sm:$0xf]
  %v50 = vld [vmem:[%s0 + $0x80] sm:$0xf]
  %v51 = vld [vmem:[%s0 + $0x84] sm:$0xf]
  %v52 = vld [vmem:[%s0 + $0x88] sm:$0xf]
  %v53 = vld [vmem:[%s0 + $0x8c] sm:$0xf]
  %v54 = vld [vmem:[%s0 + $0x90] sm:$0xf]
  %v55 = vld [vmem:[%s0 + $0x94] sm:$0xf]
  %v56 = vld [vmem:[%s0 + $0x98] sm:$0xf]
  %v57 = vld [vmem:[%s0 + $0x9c] sm:$0xf]
  %v58 = vld [vmem:[%s0 + $0xa0] sm:$0xf]
  %v59 = vld [vmem:[%s0 + $0xa4] sm:$0xf]
  %v60 = vld [vmem:[%s0 + $0xa8] sm:$0xf]
  %v61 = vld [vmem:[%s0 + $0xac] sm:$0xf]
  %v62 = vld [vmem:[%s0 + $0xb0] sm:$0xf]
  %v63 = vld [vmem:[%s0 + $0xb4] sm:$0xf]
  %v64 = vld [vmem:[%s0 + $0xb8] sm:$0xf]
  %v65 = vld [vmem:[%s0 + $0xbc] sm:$0xf]
  %v66 = vld [vmem:[%s0 + $0xc0] sm:$0xf]
  %v67 = vld [vmem:[%s1] sm:$0xf]
  %v68 = vld [vmem:[%s1 + $0x4] sm:$0xf]
  %v69 = vld [vmem:[%s1 + $0x8] sm:$0xf]
  %v70 = vld [vmem:[%s1 + $0xc] sm:$0xf]
  %v71 = vld [vmem:[%s1 + $0x10] sm:$0xf]
  %v72 = vld [vmem:[%s1 + $0x14] sm:$0xf]
  %v73 = vld [vmem:[%s1 + $0x18] sm:$0xf]
  %v74 = vld [vmem:[%s1 + $0x1c] sm:$0xf]
  %v75 = vld [vmem:[%s1 + $0x20] sm:$0xf]
  %v76 = vld [vmem:[%s1 + $0x24] sm:$0xf]
  %v77 = vld [vmem:[%s1 + $0x28] sm:$0xf]
  %v78 = vld [vmem:[%s1 + $0x2c] sm:$0xf]
  %v79 = vld [vmem:[%s1 + $0x30] sm:$0xf]
  %v80 = vld [vmem:[%s1 + $0x34] sm:$0xf]
  %v81 = vld [vmem:[%s1 + $0x38] sm:$0xf]
  %v82 = vld [vmem:[%s1 + $0x3c] sm:$0xf]
  %v132 = vunpack.c.l.b16 %v18
  %v133 = vunpack.c.l.b16 %v19
  %v134 = vunpack.c.l.b16 %v20
  %v135 = vunpack.c.l.b16 %v21
  %v136 = vunpack.c.l.b16 %v22
  %v137 = vunpack.c.l.b16 %v23
  %v138 = vunpack.c.l.b16 %v24
  %v139 = vunpack.c.l.b16 %v25
  %v140 = vunpack.c.l.b16 %v26
  %v141 = vunpack.c.l.b16 %v27
  %v142 = vunpack.c.l.b16 %v28
  %v143 = vunpack.c.l.b16 %v29
  %v144 = vunpack.c.l.b16 %v30
  %v145 = vunpack.c.l.b16 %v31
  %v146 = vunpack.c.l.b16 %v32
  %v147 = vunpack.c.l.b16 %v33
  %v148 = vunpack.c.l.b16 %v34
  %v149 = vunpack.c.l.b16 %v35
  %v150 = vunpack.c.l.b16 %v36
  %v151 = vunpack.c.l.b16 %v37
  %v152 = vunpack.c.l.b16 %v38
  %v153 = vunpack.c.l.b16 %v39
  %v154 = vunpack.c.l.b16 %v40
  %v155 = vunpack.c.l.b16 %v41
  %v156 = vunpack.c.l.b16 %v42
  %v157 = vunpack.c.l.b16 %v43
  %v158 = vunpack.c.l.b16 %v44
  %v159 = vunpack.c.l.b16 %v45
  %v160 = vunpack.c.l.b16 %v46
  %v161 = vunpack.c.l.b16 %v47
  %v162 = vunpack.c.l.b16 %v48
  %v163 = vunpack.c.l.b16 %v49
  %v164 = vunpack.c.l.b16 %v50
  %v165 = vunpack.c.l.b16 %v51
  %v166 = vunpack.c.l.b16 %v52
  %v167 = vunpack.c.l.b16 %v53
  %v168 = vunpack.c.l.b16 %v54
  %v169 = vunpack.c.l.b16 %v55
  %v170 = vunpack.c.l.b16 %v56
  %v171 = vunpack.c.l.b16 %v57
  %v172 = vunpack.c.l.b16 %v58
  %v173 = vunpack.c.l.b16 %v59
  %v174 = vunpack.c.l.b16 %v60
  %v175 = vunpack.c.l.b16 %v61
  %v176 = vunpack.c.l.b16 %v62
  %v177 = vunpack.c.l.b16 %v63
  %v178 = vunpack.c.l.b16 %v64
  %v179 = vunpack.c.l.b16 %v65
  %v180 = vunpack.c.l.b16 %v66
  %v181 = vpack.c.b16 %v133, %v132
  %v182 = vpack.c.b16 %v135, %v134
  %v183 = vpack.c.b16 %v137, %v136
  %v184 = vpack.c.b16 %v139, %v138
  %v185 = vpack.c.b16 %v141, %v140
  %v186 = vpack.c.b16 %v143, %v142
  %v187 = vpack.c.b16 %v145, %v144
  %v188 = vpack.c.b16 %v147, %v146
  %v189 = vpack.c.b16 %v149, %v148
  %v190 = vpack.c.b16 %v151, %v150
  %v191 = vpack.c.b16 %v153, %v152
  %v192 = vpack.c.b16 %v155, %v154
  %v193 = vpack.c.b16 %v157, %v156
  %v194 = vpack.c.b16 %v159, %v158
  %v195 = vpack.c.b16 %v161, %v160
  %v196 = vpack.c.b16 %v163, %v162
  %v197 = vpack.c.b16 %v165, %v164
  %v198 = vpack.c.b16 %v167, %v166
  %v199 = vpack.c.b16 %v169, %v168
  %v200 = vpack.c.b16 %v171, %v170
  %v201 = vpack.c.b16 %v173, %v172
  %v202 = vpack.c.b16 %v175, %v174
  %v203 = vpack.c.b16 %v177, %v176
  %v204 = vpack.c.b16 %v179, %v178
  %v205 = vpack.c.b16 %v180, %v180
  %v247 = vunpack.c.l.b16 %v67
  %v248 = vunpack.c.l.b16 %v68
  %v249 = vunpack.c.l.b16 %v69
  %v250 = vunpack.c.l.b16 %v70
  %v251 = vunpack.c.l.b16 %v71
  %v252 = vunpack.c.l.b16 %v72
  %v253 = vunpack.c.l.b16 %v73
  %v254 = vunpack.c.l.b16 %v74
  %v255 = vunpack.c.l.b16 %v75
  %v256 = vunpack.c.l.b16 %v76
  %v257 = vunpack.c.l.b16 %v77
  %v258 = vunpack.c.l.b16 %v78
  %v259 = vunpack.c.l.b16 %v79
  %v260 = vunpack.c.l.b16 %v80
  %v261 = vunpack.c.l.b16 %v81
  %v262 = vunpack.c.l.b16 %v82
  %v263 = vpack.c.b16 %v248, %v247
  %v264 = vpack.c.b16 %v250, %v249
  %v265 = vpack.c.b16 %v252, %v251
  %v266 = vpack.c.b16 %v254, %v253
  %v267 = vpack.c.b16 %v256, %v255
  %v268 = vpack.c.b16 %v258, %v257
  %v269 = vpack.c.b16 %v260, %v259
  %v270 = vpack.c.b16 %v262, %v261
  %279 = vmatprep.subr.bf16.mxu0 0
  %280 = vmatpush1.bf16.msra.mxu0 %v263
  %281 = vmatprep.subr.bf16.mxu0 0
  %282 = vmatpush1.bf16.msra.mxu0 %v264
  %283 = vmatprep.subr.bf16.mxu0 0
  %284 = vmatpush1.bf16.msra.mxu0 %v265
  %285 = vmatprep.subr.bf16.mxu0 0
  %286 = vmatpush1.bf16.msra.mxu0 %v266
  %287 = vmatprep.subr.bf16.mxu0 0
  %288 = vmatpush1.bf16.msra.mxu0 %v267
  %289 = vmatprep.subr.bf16.mxu0 0
  %290 = vmatpush1.bf16.msra.mxu0 %v268
  %291 = vmatprep.subr.bf16.mxu0 0
  %292 = vmatpush1.bf16.msra.mxu0 %v269
  %293 = vmatprep.subr.bf16.mxu0 0
  %294 = vmatpush1.bf16.msra.mxu0 %v270
  %295 = vmatprep.subr.bf16.mxu0 0
  %296 = vmatpush1.bf16.msra.mxu0 0
  %297 = vmatprep.subr.bf16.mxu0 0
  %298 = vmatpush1.bf16.msra.mxu0 0
  %299 = vmatprep.subr.bf16.mxu0 0
  %300 = vmatpush1.bf16.msra.mxu0 0
  %301 = vmatprep.subr.bf16.mxu0 0
  %302 = vmatpush1.bf16.msra.mxu0 0
  %303 = vmatprep.subr.bf16.mxu0 0
  %304 = vmatpush1.bf16.msra.mxu0 0
  %305 = vmatprep.subr.bf16.mxu0 0
  %306 = vmatpush1.bf16.msra.mxu0 0
  %307 = vmatprep.subr.bf16.mxu0 0
  %308 = vmatpush1.bf16.msra.mxu0 0
  %309 = vmatprep.subr.bf16.mxu0 0
  %310 = vmatpush1.bf16.msra.mxu0 0
  %311 = vmatprep.mubr.bf16.mxu0 0
  %312 = vmatmul.mubr.bf16.gmra.mrb[0].mxu0 %v181
  %v313 = vpop.f32.mrb[0].mxu0
  %v314 = vadd.f32 0.0, %v313
  %v315 = vpop.f32.mrb[0].mxu0
  %v316 = vpop.f32.mrb[0].mxu0
  %v317 = vadd.f32 0.0, %v316
  %v318 = vpop.f32.mrb[0].mxu0
  %319 = vmatprep.mubr.bf16.mxu0 0
  %320 = vmatmul.mubr.bf16.gmra.mrb[0].mxu0 %v182
  %v321 = vpop.f32.mrb[0].mxu0
  %v322 = vadd.f32 0.0, %v321
  %v323 = vpop.f32.mrb[0].mxu0
  %v324 = vpop.f32.mrb[0].mxu0
  %v325 = vadd.f32 0.0, %v324
  %v326 = vpop.f32.mrb[0].mxu0
  %327 = vmatprep.mubr.bf16.mxu0 0
  %328 = vmatmul.mubr.bf16.gmra.mrb[0].mxu0 %v183
  %v329 = vpop.f32.mrb[0].mxu0
  %v330 = vadd.f32 0.0, %v329
  %v331 = vpop.f32.mrb[0].mxu0
  %v332 = vpop.f32.mrb[0].mxu0
  %v333 = vadd.f32 0.0, %v332
  %v334 = vpop.f32.mrb[0].mxu0
  %335 = vmatprep.mubr.bf16.mxu0 0
  %336 = vmatmul.mubr.bf16.gmra.mrb[0].mxu0 %v184
  %v337 = vpop.f32.mrb[0].mxu0
  %v338 = vadd.f32 0.0, %v337
  %v339 = vpop.f32.mrb[0].mxu0
  %v340 = vpop.f32.mrb[0].mxu0
  %v341 = vadd.f32 0.0, %v340
  %v342 = vpop.f32.mrb[0].mxu0
  %343 = vmatprep.mubr.bf16.mxu0 0
  %344 = vmatmul.mubr.bf16.gmra.mrb[0].mxu0 %v185
  %v345 = vpop.f32.mrb[0].mxu0
  %v346 = vadd.f32 0.0, %v345
  %v347 = vpop.f32.mrb[0].mxu0
  %v348 = vpop.f32.mrb[0].mxu0
  %v349 = vadd.f32 0.0, %v348
  %v350 = vpop.f32.mrb[0].mxu0
  %351 = vmatprep.mubr.bf16.mxu0 0
  %352 = vmatmul.mubr.bf16.gmra.mrb[0].mxu0 %v186
  %v353 = vpop.f32.mrb[0].mxu0
  %v354 = vadd.f32 0.0, %v353
  %v355 = vpop.f32.mrb[0].mxu0
  %v356 = vpop.f32.mrb[0].mxu0
  %v357 = vadd.f32 0.0, %v356
  %v358 = vpop.f32.mrb[0].mxu0
  %359 = vmatprep.mubr.bf16.mxu0 0
  %360 = vmatmul.mubr.bf16.gmra.mrb[0].mxu0 %v187
  %v361 = vpop.f32.mrb[0].mxu0
  %v362 = vadd.f32 0.0, %v361
  %v363 = vpop.f32.mrb[0].mxu0
  %v364 = vpop.f32.mrb[0].mxu0
  %v365 = vadd.f32 0.0, %v364
  %v366 = vpop.f32.mrb[0].mxu0
  %367 = vmatprep.mubr.bf16.mxu0 0
  %368 = vmatmul.mubr.bf16.gmra.mrb[0].mxu0 %v188
  %v369 = vpop.f32.mrb[0].mxu0
  %v370 = vadd.f32 0.0, %v369
  %v371 = vpop.f32.mrb[0].mxu0
  %v372 = vpop.f32.mrb[0].mxu0
  %v373 = vadd.f32 0.0, %v372
  %v374 = vpop.f32.mrb[0].mxu0
  %375 = vmatprep.mubr.bf16.mxu0 0
  %376 = vmatmul.mubr.bf16.gmra.mrb[0].mxu0 %v189
  %v377 = vpop.f32.mrb[0].mxu0
  %v378 = vadd.f32 0.0, %v377
  %v379 = vpop.f32.mrb[0].mxu0
  %v380 = vpop.f32.mrb[0].mxu0
  %v381 = vadd.f32 0.0, %v380
  %v382 = vpop.f32.mrb[0].mxu0
  %383 = vmatprep.mubr.bf16.mxu0 0
  %384 = vmatmul.mubr.bf16.gmra.mrb[0].mxu0 %v190
  %v385 = vpop.f32.mrb[0].mxu0
  %v386 = vadd.f32 0.0, %v385
  %v387 = vpop.f32.mrb[0].mxu0
  %v388 = vpop.f32.mrb[0].mxu0
  %v389 = vadd.f32 0.0, %v388
  %v390 = vpop.f32.mrb[0].mxu0
  %391 = vmatprep.mubr.bf16.mxu0 0
  %392 = vmatmul.mubr.bf16.gmra.mrb[0].mxu0 %v191
  %v393 = vpop.f32.mrb[0].mxu0
  %v394 = vadd.f32 0.0, %v393
  %v395 = vpop.f32.mrb[0].mxu0
  %v396 = vpop.f32.mrb[0].mxu0
  %v397 = vadd.f32 0.0, %v396
  %v398 = vpop.f32.mrb[0].mxu0
  %399 = vmatprep.mubr.bf16.mxu0 0
  %400 = vmatmul.mubr.bf16.gmra.mrb[0].mxu0 %v192
  %v401 = vpop.f32.mrb[0].mxu0
  %v402 = vadd.f32 0.0, %v401
  %v403 = vpop.f32.mrb[0].mxu0
  %v404 = vpop.f32.mrb[0].mxu0
  %v405 = vadd.f32 0.0, %v404
  %v406 = vpop.f32.mrb[0].mxu0
  %407 = vmatprep.mubr.bf16.mxu0 0
  %408 = vmatmul.mubr.bf16.gmra.mrb[0].mxu0 %v193
  %v409 = vpop.f32.mrb[0].mxu0
  %v410 = vadd.f32 0.0, %v409
  %v411 = vpop.f32.mrb[0].mxu0
  %v412 = vpop.f32.mrb[0].mxu0
  %v413 = vadd.f32 0.0, %v412
  %v414 = vpop.f32.mrb[0].mxu0
  %415 = vmatprep.mubr.bf16.mxu0 0
  %416 = vmatmul.mubr.bf16.gmra.mrb[0].mxu0 %v194
  %v417 = vpop.f32.mrb[0].mxu0
  %v418 = vadd.f32 0.0, %v417
  %v419 = vpop.f32.mrb[0].mxu0
  %v420 = vpop.f32.mrb[0].mxu0
  %v421 = vadd.f32 0.0, %v420
  %v422 = vpop.f32.mrb[0].mxu0
  %423 = vmatprep.mubr.bf16.mxu0 0
  %424 = vmatmul.mubr.bf16.gmra.mrb[0].mxu0 %v195
  %v425 = vpop.f32.mrb[0].mxu0
  %v426 = vadd.f32 0.0, %v425
  %v427 = vpop.f32.mrb[0].mxu0
  %v428 = vpop.f32.mrb[0].mxu0
  %v429 = vadd.f32 0.0, %v428
  %v430 = vpop.f32.mrb[0].mxu0
  %431 = vmatprep.mubr.bf16.mxu0 0
  %432 = vmatmul.mubr.bf16.gmra.mrb[0].mxu0 %v196
  %v433 = vpop.f32.mrb[0].mxu0
  %v434 = vadd.f32 0.0, %v433
  %v435 = vpop.f32.mrb[0].mxu0
  %v436 = vpop.f32.mrb[0].mxu0
  %v437 = vadd.f32 0.0, %v436
  %v438 = vpop.f32.mrb[0].mxu0
  %439 = vmatprep.mubr.bf16.mxu0 0
  %440 = vmatmul.mubr.bf16.gmra.mrb[0].mxu0 %v197
  %v441 = vpop.f32.mrb[0].mxu0
  %v442 = vadd.f32 0.0, %v441
  %v443 = vpop.f32.mrb[0].mxu0
  %v444 = vpop.f32.mrb[0].mxu0
  %v445 = vadd.f32 0.0, %v444
  %v446 = vpop.f32.mrb[0].mxu0
  %447 = vmatprep.mubr.bf16.mxu0 0
  %448 = vmatmul.mubr.bf16.gmra.mrb[0].mxu0 %v198
  %v449 = vpop.f32.mrb[0].mxu0
  %v450 = vadd.f32 0.0, %v449
  %v451 = vpop.f32.mrb[0].mxu0
  %v452 = vpop.f32.mrb[0].mxu0
  %v453 = vadd.f32 0.0, %v452
  %v454 = vpop.f32.mrb[0].mxu0
  %455 = vmatprep.mubr.bf16.mxu0 0
  %456 = vmatmul.mubr.bf16.gmra.mrb[0].mxu0 %v199
  %v457 = vpop.f32.mrb[0].mxu0
  %v458 = vadd.f32 0.0, %v457
  %v459 = vpop.f32.mrb[0].mxu0
  %v460 = vpop.f32.mrb[0].mxu0
  %v461 = vadd.f32 0.0, %v460
  %v462 = vpop.f32.mrb[0].mxu0
  %463 = vmatprep.mubr.bf16.mxu0 0
  %464 = vmatmul.mubr.bf16.gmra.mrb[0].mxu0 %v200
  %v465 = vpop.f32.mrb[0].mxu0
  %v466 = vadd.f32 0.0, %v465
  %v467 = vpop.f32.mrb[0].mxu0
  %v468 = vpop.f32.mrb[0].mxu0
  %v469 = vadd.f32 0.0, %v468
  %v470 = vpop.f32.mrb[0].mxu0
  %471 = vmatprep.mubr.bf16.mxu0 0
  %472 = vmatmul.mubr.bf16.gmra.mrb[0].mxu0 %v201
  %v473 = vpop.f32.mrb[0].mxu0
  %v474 = vadd.f32 0.0, %v473
  %v475 = vpop.f32.mrb[0].mxu0
  %v476 = vpop.f32.mrb[0].mxu0
  %v477 = vadd.f32 0.0, %v476
  %v478 = vpop.f32.mrb[0].mxu0
  %479 = vmatprep.mubr.bf16.mxu0 0
  %480 = vmatmul.mubr.bf16.gmra.mrb[0].mxu0 %v202
  %v481 = vpop.f32.mrb[0].mxu0
  %v482 = vadd.f32 0.0, %v481
  %v483 = vpop.f32.mrb[0].mxu0
  %v484 = vpop.f32.mrb[0].mxu0
  %v485 = vadd.f32 0.0, %v484
  %v486 = vpop.f32.mrb[0].mxu0
  %487 = vmatprep.mubr.bf16.mxu0 0
  %488 = vmatmul.mubr.bf16.gmra.mrb[0].mxu0 %v203
  %v489 = vpop.f32.mrb[0].mxu0
  %v490 = vadd.f32 0.0, %v489
  %v491 = vpop.f32.mrb[0].mxu0
  %v492 = vpop.f32.mrb[0].mxu0
  %v493 = vadd.f32 0.0, %v492
  %v494 = vpop.f32.mrb[0].mxu0
  %495 = vmatprep.mubr.bf16.mxu0 0
  %496 = vmatmul.mubr.bf16.gmra.mrb[0].mxu0 %v204
  %v497 = vpop.f32.mrb[0].mxu0
  %v498 = vadd.f32 0.0, %v497
  %v499 = vpop.f32.mrb[0].mxu0
  %v500 = vpop.f32.mrb[0].mxu0
  %v501 = vadd.f32 0.0, %v500
  %v502 = vpop.f32.mrb[0].mxu0
  %503 = vmatprep.mubr.bf16.mxu0 0
  %504 = vmatmul.mubr.bf16.gmra.mrb[0].mxu0 %v205
  %v505 = vpop.f32.mrb[0].mxu0
  %v506 = vadd.f32 0.0, %v505
  %v507 = vpop.f32.mrb[0].mxu0
  %v508 = vpop.f32.mrb[0].mxu0
  %v509 = vpop.f32.mrb[0].mxu0
  %510 = vdwg.mxu0
  %v511 = vadd.f32 %v314, %v317
  %v512 = vadd.f32 %v511, %v322
  %v513 = vadd.f32 %v512, %v325
  %v514 = vadd.f32 %v513, %v330
  %v515 = vadd.f32 %v514, %v333
  %v516 = vadd.f32 %v515, %v338
  %v517 = vadd.f32 %v516, %v341
  %v518 = vadd.f32 %v517, %v346
  %v519 = vadd.f32 %v518, %v349
  %v520 = vadd.f32 %v519, %v354
  %v521 = vadd.f32 %v520, %v357
  %v522 = vadd.f32 %v521, %v362
  %v523 = vadd.f32 %v522, %v365
  %v524 = vadd.f32 %v523, %v370
  %v525 = vadd.f32 %v524, %v373
  %v526 = vadd.f32 %v525, %v378
  %v527 = vadd.f32 %v526, %v381
  %v528 = vadd.f32 %v527, %v386
  %v529 = vadd.f32 %v528, %v389
  %v530 = vadd.f32 %v529, %v394
  %v531 = vadd.f32 %v530, %v397
  %v532 = vadd.f32 %v531, %v402
  %v533 = vadd.f32 %v532, %v405
  %v534 = vadd.f32 %v533, %v410
  %v535 = vadd.f32 %v534, %v413
  %v536 = vadd.f32 %v535, %v418
  %v537 = vadd.f32 %v536, %v421
  %v538 = vadd.f32 %v537, %v426
  %v539 = vadd.f32 %v538, %v429
  %v540 = vadd.f32 %v539, %v434
  %v541 = vadd.f32 %v540, %v437
  %v542 = vadd.f32 %v541, %v442
  %v543 = vadd.f32 %v542, %v445
  %v544 = vadd.f32 %v543, %v450
  %v545 = vadd.f32 %v544, %v453
  %v546 = vadd.f32 %v545, %v458
  %v547 = vadd.f32 %v546, %v461
  %v548 = vadd.f32 %v547, %v466
  %v549 = vadd.f32 %v548, %v469
  %v550 = vadd.f32 %v549, %v474
  %v551 = vadd.f32 %v550, %v477
  %v552 = vadd.f32 %v551, %v482
  %v553 = vadd.f32 %v552, %v485
  %v554 = vadd.f32 %v553, %v490
  %v555 = vadd.f32 %v554, %v493
  %v556 = vadd.f32 %v555, %v498
  %v557 = vadd.f32 %v556, %v501
  %v558 = vadd.f32 %v557, %v506
  %v559 = vrot.slane %v558, 4
  %v560 = vadd.f32 %v558, %v559
  %v561 = vrot.slane %v560, 2
  %v562 = vadd.f32 %v560, %v561
  %v563 = vrot.slane %v562, 1
  %v564 = vadd.f32 %v562, %v563
  %v565 = vmul.f32 %v314, %v314
  %v566 = vmul.f32 %v317, %v317
  %v567 = vmul.f32 %v322, %v322
  %v568 = vmul.f32 %v325, %v325
  %v569 = vmul.f32 %v330, %v330
  %v570 = vmul.f32 %v333, %v333
  %v571 = vmul.f32 %v338, %v338
  %v572 = vmul.f32 %v341, %v341
  %v573 = vmul.f32 %v346, %v346
  %v574 = vmul.f32 %v349, %v349
  %v575 = vmul.f32 %v354, %v354
  %v576 = vmul.f32 %v357, %v357
  %v577 = vmul.f32 %v362, %v362
  %v578 = vmul.f32 %v365, %v365
  %v579 = vmul.f32 %v370, %v370
  %v580 = vmul.f32 %v373, %v373
  %v581 = vmul.f32 %v378, %v378
  %v582 = vmul.f32 %v381, %v381
  %v583 = vmul.f32 %v386, %v386
  %v584 = vmul.f32 %v389, %v389
  %v585 = vmul.f32 %v394, %v394
  %v586 = vmul.f32 %v397, %v397
  %v587 = vmul.f32 %v402, %v402
  %v588 = vmul.f32 %v405, %v405
  %v589 = vmul.f32 %v410, %v410
  %v590 = vmul.f32 %v413, %v413
  %v591 = vmul.f32 %v418, %v418
  %v592 = vmul.f32 %v421, %v421
  %v593 = vmul.f32 %v426, %v426
  %v594 = vmul.f32 %v429, %v429
  %v595 = vmul.f32 %v434, %v434
  %v596 = vmul.f32 %v437, %v437
  %v597 = vmul.f32 %v442, %v442
  %v598 = vmul.f32 %v445, %v445
  %v599 = vmul.f32 %v450, %v450
  %v600 = vmul.f32 %v453, %v453
  %v601 = vmul.f32 %v458, %v458
  %v602 = vmul.f32 %v461, %v461
  %v603 = vmul.f32 %v466, %v466
  %v604 = vmul.f32 %v469, %v469
  %v605 = vmul.f32 %v474, %v474
  %v606 = vmul.f32 %v477, %v477
  %v607 = vmul.f32 %v482, %v482
  %v608 = vmul.f32 %v485, %v485
  %v609 = vmul.f32 %v490, %v490
  %v610 = vmul.f32 %v493, %v493
  %v611 = vmul.f32 %v498, %v498
  %v612 = vmul.f32 %v501, %v501
  %v613 = vmul.f32 %v506, %v506
  %v614 = vadd.f32 %v565, %v566
  %v615 = vadd.f32 %v614, %v567
  %v616 = vadd.f32 %v615, %v568
  %v617 = vadd.f32 %v616, %v569
  %v618 = vadd.f32 %v617, %v570
  %v619 = vadd.f32 %v618, %v571
  %v620 = vadd.f32 %v619, %v572
  %v621 = vadd.f32 %v620, %v573
  %v622 = vadd.f32 %v621, %v574
  %v623 = vadd.f32 %v622, %v575
  %v624 = vadd.f32 %v623, %v576
  %v625 = vadd.f32 %v624, %v577
  %v626 = vadd.f32 %v625, %v578
  %v627 = vadd.f32 %v626, %v579
  %v628 = vadd.f32 %v627, %v580
  %v629 = vadd.f32 %v628, %v581
  %v630 = vadd.f32 %v629, %v582
  %v631 = vadd.f32 %v630, %v583
  %v632 = vadd.f32 %v631, %v584
  %v633 = vadd.f32 %v632, %v585
  %v634 = vadd.f32 %v633, %v586
  %v635 = vadd.f32 %v634, %v587
  %v636 = vadd.f32 %v635, %v588
  %v637 = vadd.f32 %v636, %v589
  %v638 = vadd.f32 %v637, %v590
  %v639 = vadd.f32 %v638, %v591
  %v640 = vadd.f32 %v639, %v592
  %v641 = vadd.f32 %v640, %v593
  %v642 = vadd.f32 %v641, %v594
  %v643 = vadd.f32 %v642, %v595
  %v644 = vadd.f32 %v643, %v596
  %v645 = vadd.f32 %v644, %v597
  %v646 = vadd.f32 %v645, %v598
  %v647 = vadd.f32 %v646, %v599
  %v648 = vadd.f32 %v647, %v600
  %v649 = vadd.f32 %v648, %v601
  %v650 = vadd.f32 %v649, %v602
  %v651 = vadd.f32 %v650, %v603
  %v652 = vadd.f32 %v651, %v604
  %v653 = vadd.f32 %v652, %v605
  %v654 = vadd.f32 %v653, %v606
  %v655 = vadd.f32 %v654, %v607
  %v656 = vadd.f32 %v655, %v608
  %v657 = vadd.f32 %v656, %v609
  %v658 = vadd.f32 %v657, %v610
  %v659 = vadd.f32 %v658, %v611
  %v660 = vadd.f32 %v659, %v612
  %v661 = vadd.f32 %v660, %v613
  %v662 = vrot.slane %v661, 4
  %v663 = vadd.f32 %v661, %v662
  %v664 = vrot.slane %v663, 2
  %v665 = vadd.f32 %v663, %v664
  %v666 = vrot.slane %v665, 1
  %v667 = vadd.f32 %v665, %v666
  %v668 = vadd.f32 %v564, 0.0
  %670 = vrot.lane.b32.xlu0 %v564, 96
  %v671 = vpop.permute.xlu0 %670
  %v673 = vadd.f32 %v668, %v671
  %674 = vrot.lane.b32.xlu0 %v564, 64
  %v675 = vpop.permute.xlu0 %674
  %v677 = vadd.f32 %v673, %v675
  %678 = vrot.lane.b32.xlu0 %v564, 32
  %v679 = vpop.permute.xlu0 %678
  %v681 = vadd.f32 %v677, %v679
  %v682 = vadd.f32 %v667, 0.0
  %684 = vrot.lane.b32.xlu0 %v667, 96
  %v685 = vpop.permute.xlu0 %684
  %v687 = vadd.f32 %v682, %v685
  %688 = vrot.lane.b32.xlu0 %v667, 64
  %v689 = vpop.permute.xlu0 %688
  %v691 = vadd.f32 %v687, %v689
  %692 = vrot.lane.b32.xlu0 %v667, 32
  %v693 = vpop.permute.xlu0 %692
  %v695 = vadd.f32 %v691, %v693
  %v696 = vrcp.pop 1568.0
  %v697 = vmul.f32 %v681, %v696
  %v698 = vmul.f32 %v695, %v696
  %v699 = vmul.f32 %v697, %v697
  %v700 = vsub.f32 %v698, %v699
  %v701 = vadd.f32 %v700, 1e-05
  %v702 = vrsqrt.pop %v701
  %v703 = vld [vmem:[%s2] sm:$0x1]
  %v704 = vmul.f32 %v703, %v702
  %v705 = vld [vmem:[%s3] sm:$0x1]
  %v706 = vmul.f32 %v697, %v704
  %v707 = vsub.f32 %v705, %v706
  %v709 = vlaneseq
  %v710 = vshrl.u32 %v709, 7
  %v711 = vsub.s32 0, %v710
  %v712 = vrot.slane %v704, %v711
  %713 = vrot.lane.b32.xlu0 %v712, 32
  %v714 = vpop.permute.xlu0 %713
  %716 = vrot.lane.b32.xlu0 %v712, 64
  %v717 = vpop.permute.xlu0 %716
  %719 = vrot.lane.b32.xlu0 %v712, 96
  %v720 = vpop.permute.xlu0 %719
  %vm722 = vcmask 261120
  %v723 = vsel %vm722, %v704, %v714
  %vm724 = vcmask 523264
  %v725 = vsel %vm724, %v723, %v717
  %vm726 = vcmask 785408
  %v727 = vsel %vm726, %v725, %v720
  %v729 = vlaneseq
  %v730 = vshrl.u32 %v729, 7
  %v731 = vsub.s32 0, %v730
  %v732 = vrot.slane %v707, %v731
  %733 = vrot.lane.b32.xlu0 %v732, 32
  %v734 = vpop.permute.xlu0 %733
  %736 = vrot.lane.b32.xlu0 %v732, 64
  %v737 = vpop.permute.xlu0 %736
  %739 = vrot.lane.b32.xlu0 %v732, 96
  %v740 = vpop.permute.xlu0 %739
  %v742 = vsel %vm722, %v707, %v734
  %v743 = vsel %vm724, %v742, %v737
  %v744 = vsel %vm726, %v743, %v740
  %v745 = vlaneseq
  %v746 = vshrl.u32 %v745, 7
  %v747 = vsub.s32 0, %v746
  %v748 = vrot.slane %v727, %v747
  %v749 = vmul.f32 %v314, %v748
  %v750 = vmul.f32 %v317, %v748
  %v751 = vmul.f32 %v322, %v748
  %v752 = vmul.f32 %v325, %v748
  %v753 = vmul.f32 %v330, %v748
  %v754 = vmul.f32 %v333, %v748
  %v755 = vmul.f32 %v338, %v748
  %v756 = vmul.f32 %v341, %v748
  %v757 = vmul.f32 %v346, %v748
  %v758 = vmul.f32 %v349, %v748
  %v759 = vmul.f32 %v354, %v748
  %v760 = vmul.f32 %v357, %v748
  %v761 = vmul.f32 %v362, %v748
  %v762 = vmul.f32 %v365, %v748
  %v763 = vmul.f32 %v370, %v748
  %v764 = vmul.f32 %v373, %v748
  %v765 = vmul.f32 %v378, %v748
  %v766 = vmul.f32 %v381, %v748
  %v767 = vmul.f32 %v386, %v748
  %v768 = vmul.f32 %v389, %v748
  %v769 = vmul.f32 %v394, %v748
  %v770 = vmul.f32 %v397, %v748
  %v771 = vmul.f32 %v402, %v748
  %v772 = vmul.f32 %v405, %v748
  %v773 = vmul.f32 %v410, %v748
  %v774 = vmul.f32 %v413, %v748
  %v775 = vmul.f32 %v418, %v748
  %v776 = vmul.f32 %v421, %v748
  %v777 = vmul.f32 %v426, %v748
  %v778 = vmul.f32 %v429, %v748
  %v779 = vmul.f32 %v434, %v748
  %v780 = vmul.f32 %v437, %v748
  %v781 = vmul.f32 %v442, %v748
  %v782 = vmul.f32 %v445, %v748
  %v783 = vmul.f32 %v450, %v748
  %v784 = vmul.f32 %v453, %v748
  %v785 = vmul.f32 %v458, %v748
  %v786 = vmul.f32 %v461, %v748
  %v787 = vmul.f32 %v466, %v748
  %v788 = vmul.f32 %v469, %v748
  %v789 = vmul.f32 %v474, %v748
  %v790 = vmul.f32 %v477, %v748
  %v791 = vmul.f32 %v482, %v748
  %v792 = vmul.f32 %v485, %v748
  %v793 = vmul.f32 %v490, %v748
  %v794 = vmul.f32 %v493, %v748
  %v795 = vmul.f32 %v498, %v748
  %v796 = vmul.f32 %v501, %v748
  %v797 = vmul.f32 %v506, %v748
  %v798 = vlaneseq
  %v799 = vshrl.u32 %v798, 7
  %v800 = vsub.s32 0, %v799
  %v801 = vrot.slane %v744, %v800
  %v802 = vadd.f32 %v749, %v801
  %v803 = vadd.f32 %v750, %v801
  %v804 = vadd.f32 %v751, %v801
  %v805 = vadd.f32 %v752, %v801
  %v806 = vadd.f32 %v753, %v801
  %v807 = vadd.f32 %v754, %v801
  %v808 = vadd.f32 %v755, %v801
  %v809 = vadd.f32 %v756, %v801
  %v810 = vadd.f32 %v757, %v801
  %v811 = vadd.f32 %v758, %v801
  %v812 = vadd.f32 %v759, %v801
  %v813 = vadd.f32 %v760, %v801
  %v814 = vadd.f32 %v761, %v801
  %v815 = vadd.f32 %v762, %v801
  %v816 = vadd.f32 %v763, %v801
  %v817 = vadd.f32 %v764, %v801
  %v818 = vadd.f32 %v765, %v801
  %v819 = vadd.f32 %v766, %v801
  %v820 = vadd.f32 %v767, %v801
  %v821 = vadd.f32 %v768, %v801
  %v822 = vadd.f32 %v769, %v801
  %v823 = vadd.f32 %v770, %v801
  %v824 = vadd.f32 %v771, %v801
  %v825 = vadd.f32 %v772, %v801
  %v826 = vadd.f32 %v773, %v801
  %v827 = vadd.f32 %v774, %v801
  %v828 = vadd.f32 %v775, %v801
  %v829 = vadd.f32 %v776, %v801
  %v830 = vadd.f32 %v777, %v801
  %v831 = vadd.f32 %v778, %v801
  %v832 = vadd.f32 %v779, %v801
  %v833 = vadd.f32 %v780, %v801
  %v834 = vadd.f32 %v781, %v801
  %v835 = vadd.f32 %v782, %v801
  %v836 = vadd.f32 %v783, %v801
  %v837 = vadd.f32 %v784, %v801
  %v838 = vadd.f32 %v785, %v801
  %v839 = vadd.f32 %v786, %v801
  %v840 = vadd.f32 %v787, %v801
  %v841 = vadd.f32 %v788, %v801
  %v842 = vadd.f32 %v789, %v801
  %v843 = vadd.f32 %v790, %v801
  %v844 = vadd.f32 %v791, %v801
  %v845 = vadd.f32 %v792, %v801
  %v846 = vadd.f32 %v793, %v801
  %v847 = vadd.f32 %v794, %v801
  %v848 = vadd.f32 %v795, %v801
  %v849 = vadd.f32 %v796, %v801
  %v850 = vadd.f32 %v797, %v801
  %vm851 = vcmp.ge.f32.partialorder %v802, 0.0
  %vm852 = vcmp.ge.f32.partialorder %v803, 0.0
  %vm853 = vcmp.ge.f32.partialorder %v804, 0.0
  %vm854 = vcmp.ge.f32.partialorder %v805, 0.0
  %vm855 = vcmp.ge.f32.partialorder %v806, 0.0
  %vm856 = vcmp.ge.f32.partialorder %v807, 0.0
  %vm857 = vcmp.ge.f32.partialorder %v808, 0.0
  %vm858 = vcmp.ge.f32.partialorder %v809, 0.0
  %vm859 = vcmp.ge.f32.partialorder %v810, 0.0
  %vm860 = vcmp.ge.f32.partialorder %v811, 0.0
  %vm861 = vcmp.ge.f32.partialorder %v812, 0.0
  %vm862 = vcmp.ge.f32.partialorder %v813, 0.0
  %vm863 = vcmp.ge.f32.partialorder %v814, 0.0
  %vm864 = vcmp.ge.f32.partialorder %v815, 0.0
  %vm865 = vcmp.ge.f32.partialorder %v816, 0.0
  %vm866 = vcmp.ge.f32.partialorder %v817, 0.0
  %vm867 = vcmp.ge.f32.partialorder %v818, 0.0
  %vm868 = vcmp.ge.f32.partialorder %v819, 0.0
  %vm869 = vcmp.ge.f32.partialorder %v820, 0.0
  %vm870 = vcmp.ge.f32.partialorder %v821, 0.0
  %vm871 = vcmp.ge.f32.partialorder %v822, 0.0
  %vm872 = vcmp.ge.f32.partialorder %v823, 0.0
  %vm873 = vcmp.ge.f32.partialorder %v824, 0.0
  %vm874 = vcmp.ge.f32.partialorder %v825, 0.0
  %vm875 = vcmp.ge.f32.partialorder %v826, 0.0
  %vm876 = vcmp.ge.f32.partialorder %v827, 0.0
  %vm877 = vcmp.ge.f32.partialorder %v828, 0.0
  %vm878 = vcmp.ge.f32.partialorder %v829, 0.0
  %vm879 = vcmp.ge.f32.partialorder %v830, 0.0
  %vm880 = vcmp.ge.f32.partialorder %v831, 0.0
  %vm881 = vcmp.ge.f32.partialorder %v832, 0.0
  %vm882 = vcmp.ge.f32.partialorder %v833, 0.0
  %vm883 = vcmp.ge.f32.partialorder %v834, 0.0
  %vm884 = vcmp.ge.f32.partialorder %v835, 0.0
  %vm885 = vcmp.ge.f32.partialorder %v836, 0.0
  %vm886 = vcmp.ge.f32.partialorder %v837, 0.0
  %vm887 = vcmp.ge.f32.partialorder %v838, 0.0
  %vm888 = vcmp.ge.f32.partialorder %v839, 0.0
  %vm889 = vcmp.ge.f32.partialorder %v840, 0.0
  %vm890 = vcmp.ge.f32.partialorder %v841, 0.0
  %vm891 = vcmp.ge.f32.partialorder %v842, 0.0
  %vm892 = vcmp.ge.f32.partialorder %v843, 0.0
  %vm893 = vcmp.ge.f32.partialorder %v844, 0.0
  %vm894 = vcmp.ge.f32.partialorder %v845, 0.0
  %vm895 = vcmp.ge.f32.partialorder %v846, 0.0
  %vm896 = vcmp.ge.f32.partialorder %v847, 0.0
  %vm897 = vcmp.ge.f32.partialorder %v848, 0.0
  %vm898 = vcmp.ge.f32.partialorder %v849, 0.0
  %vm899 = vcmp.ge.f32.partialorder %v850, 0.0
  %v900 = vmul.f32 %v802, 0.01
  %v901 = vmul.f32 %v803, 0.01
  %v902 = vmul.f32 %v804, 0.01
  %v903 = vmul.f32 %v805, 0.01
  %v904 = vmul.f32 %v806, 0.01
  %v905 = vmul.f32 %v807, 0.01
  %v906 = vmul.f32 %v808, 0.01
  %v907 = vmul.f32 %v809, 0.01
  %v908 = vmul.f32 %v810, 0.01
  %v909 = vmul.f32 %v811, 0.01
  %v910 = vmul.f32 %v812, 0.01
  %v911 = vmul.f32 %v813, 0.01
  %v912 = vmul.f32 %v814, 0.01
  %v913 = vmul.f32 %v815, 0.01
  %v914 = vmul.f32 %v816, 0.01
  %v915 = vmul.f32 %v817, 0.01
  %v916 = vmul.f32 %v818, 0.01
  %v917 = vmul.f32 %v819, 0.01
  %v918 = vmul.f32 %v820, 0.01
  %v919 = vmul.f32 %v821, 0.01
  %v920 = vmul.f32 %v822, 0.01
  %v921 = vmul.f32 %v823, 0.01
  %v922 = vmul.f32 %v824, 0.01
  %v923 = vmul.f32 %v825, 0.01
  %v924 = vmul.f32 %v826, 0.01
  %v925 = vmul.f32 %v827, 0.01
  %v926 = vmul.f32 %v828, 0.01
  %v927 = vmul.f32 %v829, 0.01
  %v928 = vmul.f32 %v830, 0.01
  %v929 = vmul.f32 %v831, 0.01
  %v930 = vmul.f32 %v832, 0.01
  %v931 = vmul.f32 %v833, 0.01
  %v932 = vmul.f32 %v834, 0.01
  %v933 = vmul.f32 %v835, 0.01
  %v934 = vmul.f32 %v836, 0.01
  %v935 = vmul.f32 %v837, 0.01
  %v936 = vmul.f32 %v838, 0.01
  %v937 = vmul.f32 %v839, 0.01
  %v938 = vmul.f32 %v840, 0.01
  %v939 = vmul.f32 %v841, 0.01
  %v940 = vmul.f32 %v842, 0.01
  %v941 = vmul.f32 %v843, 0.01
  %v942 = vmul.f32 %v844, 0.01
  %v943 = vmul.f32 %v845, 0.01
  %v944 = vmul.f32 %v846, 0.01
  %v945 = vmul.f32 %v847, 0.01
  %v946 = vmul.f32 %v848, 0.01
  %v947 = vmul.f32 %v849, 0.01
  %v948 = vmul.f32 %v850, 0.01
  %v949 = vsel %vm851, %v802, %v900
  %v950 = vsel %vm852, %v803, %v901
  %v951 = vsel %vm853, %v804, %v902
  %v952 = vsel %vm854, %v805, %v903
  %v953 = vsel %vm855, %v806, %v904
  %v954 = vsel %vm856, %v807, %v905
  %v955 = vsel %vm857, %v808, %v906
  %v956 = vsel %vm858, %v809, %v907
  %v957 = vsel %vm859, %v810, %v908
  %v958 = vsel %vm860, %v811, %v909
  %v959 = vsel %vm861, %v812, %v910
  %v960 = vsel %vm862, %v813, %v911
  %v961 = vsel %vm863, %v814, %v912
  %v962 = vsel %vm864, %v815, %v913
  %v963 = vsel %vm865, %v816, %v914
  %v964 = vsel %vm866, %v817, %v915
  %v965 = vsel %vm867, %v818, %v916
  %v966 = vsel %vm868, %v819, %v917
  %v967 = vsel %vm869, %v820, %v918
  %v968 = vsel %vm870, %v821, %v919
  %v969 = vsel %vm871, %v822, %v920
  %v970 = vsel %vm872, %v823, %v921
  %v971 = vsel %vm873, %v824, %v922
  %v972 = vsel %vm874, %v825, %v923
  %v973 = vsel %vm875, %v826, %v924
  %v974 = vsel %vm876, %v827, %v925
  %v975 = vsel %vm877, %v828, %v926
  %v976 = vsel %vm878, %v829, %v927
  %v977 = vsel %vm879, %v830, %v928
  %v978 = vsel %vm880, %v831, %v929
  %v979 = vsel %vm881, %v832, %v930
  %v980 = vsel %vm882, %v833, %v931
  %v981 = vsel %vm883, %v834, %v932
  %v982 = vsel %vm884, %v835, %v933
  %v983 = vsel %vm885, %v836, %v934
  %v984 = vsel %vm886, %v837, %v935
  %v985 = vsel %vm887, %v838, %v936
  %v986 = vsel %vm888, %v839, %v937
  %v987 = vsel %vm889, %v840, %v938
  %v988 = vsel %vm890, %v841, %v939
  %v989 = vsel %vm891, %v842, %v940
  %v990 = vsel %vm892, %v843, %v941
  %v991 = vsel %vm893, %v844, %v942
  %v992 = vsel %vm894, %v845, %v943
  %v993 = vsel %vm895, %v846, %v944
  %v994 = vsel %vm896, %v847, %v945
  %v995 = vsel %vm897, %v848, %v946
  %v996 = vsel %vm898, %v849, %v947
  %v997 = vsel %vm899, %v850, %v948
  %v998 = vpack.c.bf16 %v950, %v949
  %v999 = vpack.c.bf16 %v952, %v951
  %v1000 = vpack.c.bf16 %v954, %v953
  %v1001 = vpack.c.bf16 %v956, %v955
  %v1002 = vpack.c.bf16 %v958, %v957
  %v1003 = vpack.c.bf16 %v960, %v959
  %v1004 = vpack.c.bf16 %v962, %v961
  %v1005 = vpack.c.bf16 %v964, %v963
  %v1006 = vpack.c.bf16 %v966, %v965
  %v1007 = vpack.c.bf16 %v968, %v967
  %v1008 = vpack.c.bf16 %v970, %v969
  %v1009 = vpack.c.bf16 %v972, %v971
  %v1010 = vpack.c.bf16 %v974, %v973
  %v1011 = vpack.c.bf16 %v976, %v975
  %v1012 = vpack.c.bf16 %v978, %v977
  %v1013 = vpack.c.bf16 %v980, %v979
  %v1014 = vpack.c.bf16 %v982, %v981
  %v1015 = vpack.c.bf16 %v984, %v983
  %v1016 = vpack.c.bf16 %v986, %v985
  %v1017 = vpack.c.bf16 %v988, %v987
  %v1018 = vpack.c.bf16 %v990, %v989
  %v1019 = vpack.c.bf16 %v992, %v991
  %v1020 = vpack.c.bf16 %v994, %v993
  %v1021 = vpack.c.bf16 %v996, %v995
  %v1022 = vpack.c.bf16 %v997, %v997
  %v1048 = vunpack.c.l.b16 %v998
  %v1049 = vunpack.c.h.b16 %v998
  %v1050 = vunpack.c.l.b16 %v999
  %v1051 = vunpack.c.h.b16 %v999
  %v1052 = vunpack.c.l.b16 %v1000
  %v1053 = vunpack.c.h.b16 %v1000
  %v1054 = vunpack.c.l.b16 %v1001
  %v1055 = vunpack.c.h.b16 %v1001
  %v1056 = vunpack.c.l.b16 %v1002
  %v1057 = vunpack.c.h.b16 %v1002
  %v1058 = vunpack.c.l.b16 %v1003
  %v1059 = vunpack.c.h.b16 %v1003
  %v1060 = vunpack.c.l.b16 %v1004
  %v1061 = vunpack.c.h.b16 %v1004
  %v1062 = vunpack.c.l.b16 %v1005
  %v1063 = vunpack.c.h.b16 %v1005
  %v1064 = vunpack.c.l.b16 %v1006
  %v1065 = vunpack.c.h.b16 %v1006
  %v1066 = vunpack.c.l.b16 %v1007
  %v1067 = vunpack.c.h.b16 %v1007
  %v1068 = vunpack.c.l.b16 %v1008
  %v1069 = vunpack.c.h.b16 %v1008
  %v1070 = vunpack.c.l.b16 %v1009
  %v1071 = vunpack.c.h.b16 %v1009
  %v1072 = vunpack.c.l.b16 %v1010
  %v1073 = vunpack.c.h.b16 %v1010
  %v1074 = vunpack.c.l.b16 %v1011
  %v1075 = vunpack.c.h.b16 %v1011
  %v1076 = vunpack.c.l.b16 %v1012
  %v1077 = vunpack.c.h.b16 %v1012
  %v1078 = vunpack.c.l.b16 %v1013
  %v1079 = vunpack.c.h.b16 %v1013
  %v1080 = vunpack.c.l.b16 %v1014
  %v1081 = vunpack.c.h.b16 %v1014
  %v1082 = vunpack.c.l.b16 %v1015
  %v1083 = vunpack.c.h.b16 %v1015
  %v1084 = vunpack.c.l.b16 %v1016
  %v1085 = vunpack.c.h.b16 %v1016
  %v1086 = vunpack.c.l.b16 %v1017
  %v1087 = vunpack.c.h.b16 %v1017
  %v1088 = vunpack.c.l.b16 %v1018
  %v1089 = vunpack.c.h.b16 %v1018
  %v1090 = vunpack.c.l.b16 %v1019
  %v1091 = vunpack.c.h.b16 %v1019
  %v1092 = vunpack.c.l.b16 %v1020
  %v1093 = vunpack.c.h.b16 %v1020
  %v1094 = vunpack.c.l.b16 %v1021
  %v1095 = vunpack.c.h.b16 %v1021
  %v1096 = vunpack.c.l.b16 %v1022
  %v1097 = vpack.c.b16 %v1048, %v1048
  %v1098 = vpack.c.b16 %v1049, %v1049
  %v1099 = vpack.c.b16 %v1050, %v1050
  %v1100 = vpack.c.b16 %v1051, %v1051
  %v1101 = vpack.c.b16 %v1052, %v1052
  %v1102 = vpack.c.b16 %v1053, %v1053
  %v1103 = vpack.c.b16 %v1054, %v1054
  %v1104 = vpack.c.b16 %v1055, %v1055
  %v1105 = vpack.c.b16 %v1056, %v1056
  %v1106 = vpack.c.b16 %v1057, %v1057
  %v1107 = vpack.c.b16 %v1058, %v1058
  %v1108 = vpack.c.b16 %v1059, %v1059
  %v1109 = vpack.c.b16 %v1060, %v1060
  %v1110 = vpack.c.b16 %v1061, %v1061
  %v1111 = vpack.c.b16 %v1062, %v1062
  %v1112 = vpack.c.b16 %v1063, %v1063
  %v1113 = vpack.c.b16 %v1064, %v1064
  %v1114 = vpack.c.b16 %v1065, %v1065
  %v1115 = vpack.c.b16 %v1066, %v1066
  %v1116 = vpack.c.b16 %v1067, %v1067
  %v1117 = vpack.c.b16 %v1068, %v1068
  %v1118 = vpack.c.b16 %v1069, %v1069
  %v1119 = vpack.c.b16 %v1070, %v1070
  %v1120 = vpack.c.b16 %v1071, %v1071
  %v1121 = vpack.c.b16 %v1072, %v1072
  %v1122 = vpack.c.b16 %v1073, %v1073
  %v1123 = vpack.c.b16 %v1074, %v1074
  %v1124 = vpack.c.b16 %v1075, %v1075
  %v1125 = vpack.c.b16 %v1076, %v1076
  %v1126 = vpack.c.b16 %v1077, %v1077
  %v1127 = vpack.c.b16 %v1078, %v1078
  %v1128 = vpack.c.b16 %v1079, %v1079
  %v1129 = vpack.c.b16 %v1080, %v1080
  %v1130 = vpack.c.b16 %v1081, %v1081
  %v1131 = vpack.c.b16 %v1082, %v1082
  %v1132 = vpack.c.b16 %v1083, %v1083
  %v1133 = vpack.c.b16 %v1084, %v1084
  %v1134 = vpack.c.b16 %v1085, %v1085
  %v1135 = vpack.c.b16 %v1086, %v1086
  %v1136 = vpack.c.b16 %v1087, %v1087
  %v1137 = vpack.c.b16 %v1088, %v1088
  %v1138 = vpack.c.b16 %v1089, %v1089
  %v1139 = vpack.c.b16 %v1090, %v1090
  %v1140 = vpack.c.b16 %v1091, %v1091
  %v1141 = vpack.c.b16 %v1092, %v1092
  %v1142 = vpack.c.b16 %v1093, %v1093
  %v1143 = vpack.c.b16 %v1094, %v1094
  %v1144 = vpack.c.b16 %v1095, %v1095
  %v1145 = vpack.c.b16 %v1096, %v1096
  %1195 = vst [vmem:[%s4] sm:$0xf] %v1097
  %1196 = vst [vmem:[%s4 + $0x4] sm:$0xf] %v1098
  %1197 = vst [vmem:[%s4 + $0x8] sm:$0xf] %v1099
  %1198 = vst [vmem:[%s4 + $0xc] sm:$0xf] %v1100
  %1199 = vst [vmem:[%s4 + $0x10] sm:$0xf] %v1101
  %1200 = vst [vmem:[%s4 + $0x14] sm:$0xf] %v1102
  %1201 = vst [vmem:[%s4 + $0x18] sm:$0xf] %v1103
  %1202 = vst [vmem:[%s4 + $0x1c] sm:$0xf] %v1104
  %1203 = vst [vmem:[%s4 + $0x20] sm:$0xf] %v1105
  %1204 = vst [vmem:[%s4 + $0x24] sm:$0xf] %v1106
  %1205 = vst [vmem:[%s4 + $0x28] sm:$0xf] %v1107
  %1206 = vst [vmem:[%s4 + $0x2c] sm:$0xf] %v1108
  %1207 = vst [vmem:[%s4 + $0x30] sm:$0xf] %v1109
  %1208 = vst [vmem:[%s4 + $0x34] sm:$0xf] %v1110
  %1209 = vst [vmem:[%s4 + $0x38] sm:$0xf] %v1111
  %1210 = vst [vmem:[%s4 + $0x3c] sm:$0xf] %v1112
  %1211 = vst [vmem:[%s4 + $0x40] sm:$0xf] %v1113
  %1212 = vst [vmem:[%s4 + $0x44] sm:$0xf] %v1114
  %1213 = vst [vmem:[%s4 + $0x48] sm:$0xf] %v1115
  %1214 = vst [vmem:[%s4 + $0x4c] sm:$0xf] %v1116
  %1215 = vst [vmem:[%s4 + $0x50] sm:$0xf] %v1117
  %1216 = vst [vmem:[%s4 + $0x54] sm:$0xf] %v1118
  %1217 = vst [vmem:[%s4 + $0x58] sm:$0xf] %v1119
  %1218 = vst [vmem:[%s4 + $0x5c] sm:$0xf] %v1120
  %1219 = vst [vmem:[%s4 + $0x60] sm:$0xf] %v1121
  %1220 = vst [vmem:[%s4 + $0x64] sm:$0xf] %v1122
  %1221 = vst [vmem:[%s4 + $0x68] sm:$0xf] %v1123
  %1222 = vst [vmem:[%s4 + $0x6c] sm:$0xf] %v1124
  %1223 = vst [vmem:[%s4 + $0x70] sm:$0xf] %v1125
  %1224 = vst [vmem:[%s4 + $0x74] sm:$0xf] %v1126
  %1225 = vst [vmem:[%s4 + $0x78] sm:$0xf] %v1127
  %1226 = vst [vmem:[%s4 + $0x7c] sm:$0xf] %v1128
  %1227 = vst [vmem:[%s4 + $0x80] sm:$0xf] %v1129
  %1228 = vst [vmem:[%s4 + $0x84] sm:$0xf] %v1130
  %1229 = vst [vmem:[%s4 + $0x88] sm:$0xf] %v1131
  %1230 = vst [vmem:[%s4 + $0x8c] sm:$0xf] %v1132
  %1231 = vst [vmem:[%s4 + $0x90] sm:$0xf] %v1133
  %1232 = vst [vmem:[%s4 + $0x94] sm:$0xf] %v1134
  %1233 = vst [vmem:[%s4 + $0x98] sm:$0xf] %v1135
  %1234 = vst [vmem:[%s4 + $0x9c] sm:$0xf] %v1136
  %1235 = vst [vmem:[%s4 + $0xa0] sm:$0xf] %v1137
  %1236 = vst [vmem:[%s4 + $0xa4] sm:$0xf] %v1138
  %1237 = vst [vmem:[%s4 + $0xa8] sm:$0xf] %v1139
  %1238 = vst [vmem:[%s4 + $0xac] sm:$0xf] %v1140
  %1239 = vst [vmem:[%s4 + $0xb0] sm:$0xf] %v1141
  %1240 = vst [vmem:[%s4 + $0xb4] sm:$0xf] %v1142
  %1241 = vst [vmem:[%s4 + $0xb8] sm:$0xf] %v1143
  %1242 = vst [vmem:[%s4 + $0xbc] sm:$0xf] %v1144
  %1243 = vst [vmem:[%s4 + $0xc0] sm:$0xf] %v1145
  // Predicated region
  $region18: #{vae_forward.10} parent=0 // pred_check
    _
  $region19: #{vae_forward.10} parent=0 // pred_check_branch
    %1245 = sbr.rel (0) target = $region21
  $region20: #{vae_forward.10} parent=0 // pred_region
    _
  $region21: #{vae_forward.10} parent=0 // pred_fallthru
    _
  // Predicated region
  $region22: #{vae_forward.10} parent=0 // pred_check
    _
  $region23: #{vae_forward.10} parent=0 // pred_check_branch
    %1247 = sbr.rel (0) target = $region25
  $region24: #{vae_forward.10} parent=0 // pred_region
    _
  $region25: #{vae_forward.10} parent=0 // pred_fallthru
    _

// kernel: vae_forward.11
$region0: #{vae_forward.11}
  #allocation0 [shape = 'u32[]', space=smem, size = 0x4, offset = 0x4, fixed_abs, tag = 'smem constant byte address 0x4 - core index']
  #allocation1 [shape = 'u32[144,128]{1,0:T(1,128)}', space=vmem, size = 0x12000, scoped, tag = 'internal scratch']
  #allocation2 [shape = 'f32[1,1]{1,0:T(1,128)S(1)}', space=vmem, size = 0x200, scoped, tag = 'scoped memory for vae_forward.11']
  %s0 = inlined_call_operand.vmem [shape: bf16[1568,288], index: 0, kind: input, shape index: {}]
  %s1 = inlined_call_operand.vmem [shape: bf16[288,1], index: 1, kind: input, shape index: {}]
  %s2 = inlined_call_operand.<no memory space> [shape: f32[1,1], index: 2, kind: input, shape index: {}]
  %s3 = inlined_call_operand.vmem [shape: f32[1568,1], index: 3, kind: output, shape index: {}]
  %s4 = sld [smem:[#allocation0]]
  $region22: #{vae_forward.11} parent=0
    _
  %s6 = ssub.s32 1, %s4
  %s7 = scalar_select 0, %s6, %s4
  %v8 = vstv %s2
  %9 = vst [vmem:[#allocation2] sm:$0x1] %v8
  // Predicated region
  $region2: #{vae_forward.11} parent=0 // pred_check
    _
  $region3: #{vae_forward.11} parent=0 // pred_check_branch
    %11 = sbr.rel (0) target = $region5
  $region4: #{vae_forward.11} parent=0 // pred_region
    _
  $region5: #{vae_forward.11} parent=0 // pred_fallthru
    _
  // Predicated region
  $region6: #{vae_forward.11} parent=0 // pred_check
    _
  $region7: #{vae_forward.11} parent=0 // pred_check_branch
    %13 = sbr.rel (0) target = $region9
  $region8: #{vae_forward.11} parent=0 // pred_region
    _
  $region9: #{vae_forward.11} parent=0 // pred_fallthru
    _
  // Predicated region
  $region10: #{vae_forward.11} parent=0 // pred_check
    _
  $region11: #{vae_forward.11} parent=0 // pred_check_branch
    %15 = sbr.rel (0) target = $region13
  $region12: #{vae_forward.11} parent=0 // pred_region
    _
  $region13: #{vae_forward.11} parent=0 // pred_fallthru
    _
  %v17 = vld [vmem:[%s0] sm:$0xff]
  %v18 = vld [vmem:[%s0 + $0x8] sm:$0xf]
  %v19 = vld [vmem:[%s0 + $0xc] sm:$0xff]
  %v20 = vld [vmem:[%s0 + $0x14] sm:$0xf]
  %v21 = vld [vmem:[%s0 + $0x18] sm:$0xff]
  %v22 = vld [vmem:[%s0 + $0x20] sm:$0xf]
  %v23 = vld [vmem:[%s0 + $0x24] sm:$0xff]
  %v24 = vld [vmem:[%s0 + $0x2c] sm:$0xf]
  %v25 = vld [vmem:[%s0 + $0x30] sm:$0xff]
  %v26 = vld [vmem:[%s0 + $0x38] sm:$0xf]
  %v27 = vld [vmem:[%s0 + $0x3c] sm:$0xff]
  %v28 = vld [vmem:[%s0 + $0x44] sm:$0xf]
  %v29 = vld [vmem:[%s0 + $0x48] sm:$0xff]
  %v30 = vld [vmem:[%s0 + $0x50] sm:$0xf]
  %v31 = vld [vmem:[%s0 + $0x54] sm:$0xff]
  %v32 = vld [vmem:[%s0 + $0x5c] sm:$0xf]
  %v33 = vld [vmem:[%s0 + $0x60] sm:$0xff]
  %v34 = vld [vmem:[%s0 + $0x68] sm:$0xf]
  %v35 = vld [vmem:[%s0 + $0x6c] sm:$0xff]
  %v36 = vld [vmem:[%s0 + $0x74] sm:$0xf]
  %v37 = vld [vmem:[%s0 + $0x78] sm:$0xff]
  %v38 = vld [vmem:[%s0 + $0x80] sm:$0xf]
  %v39 = vld [vmem:[%s0 + $0x84] sm:$0xff]
  %v40 = vld [vmem:[%s0 + $0x8c] sm:$0xf]
  %v41 = vld [vmem:[%s0 + $0x90] sm:$0xff]
  %v42 = vld [vmem:[%s0 + $0x98] sm:$0xf]
  %v43 = vld [vmem:[%s0 + $0x9c] sm:$0xff]
  %v44 = vld [vmem:[%s0 + $0xa4] sm:$0xf]
  %v45 = vld [vmem:[%s0 + $0xa8] sm:$0xff]
  %v46 = vld [vmem:[%s0 + $0xb0] sm:$0xf]
  %v47 = vld [vmem:[%s0 + $0xb4] sm:$0xff]
  %v48 = vld [vmem:[%s0 + $0xbc] sm:$0xf]
  %v49 = vld [vmem:[%s0 + $0xc0] sm:$0xff]
  %v50 = vld [vmem:[%s0 + $0xc8] sm:$0xf]
  %v51 = vld [vmem:[%s0 + $0xcc] sm:$0xff]
  %v52 = vld [vmem:[%s0 + $0xd4] sm:$0xf]
  %v53 = vld [vmem:[%s0 + $0xd8] sm:$0xff]
  %v54 = vld [vmem:[%s0 + $0xe0] sm:$0xf]
  %v55 = vld [vmem:[%s0 + $0xe4] sm:$0xff]
  %v56 = vld [vmem:[%s0 + $0xec] sm:$0xf]
  %v57 = vld [vmem:[%s0 + $0xf0] sm:$0xff]
  %v58 = vld [vmem:[%s0 + $0xf8] sm:$0xf]
  %v59 = vld [vmem:[%s0 + $0xfc] sm:$0xff]
  %v60 = vld [vmem:[%s0 + $0x104] sm:$0xf]
  %v61 = vld [vmem:[%s0 + $0x108] sm:$0xff]
  %v62 = vld [vmem:[%s0 + $0x110] sm:$0xf]
  %v63 = vld [vmem:[%s0 + $0x114] sm:$0xff]
  %v64 = vld [vmem:[%s0 + $0x11c] sm:$0xf]
  %v65 = vld [vmem:[%s0 + $0x120] sm:$0xff]
  %v66 = vld [vmem:[%s0 + $0x128] sm:$0xf]
  %v67 = vld [vmem:[%s0 + $0x12c] sm:$0xff]
  %v68 = vld [vmem:[%s0 + $0x134] sm:$0xf]
  %v69 = vld [vmem:[%s0 + $0x138] sm:$0xff]
  %v70 = vld [vmem:[%s0 + $0x140] sm:$0xf]
  %v71 = vld [vmem:[%s0 + $0x144] sm:$0xff]
  %v72 = vld [vmem:[%s0 + $0x14c] sm:$0xf]
  %v73 = vld [vmem:[%s0 + $0x150] sm:$0xff]
  %v74 = vld [vmem:[%s0 + $0x158] sm:$0xf]
  %v75 = vld [vmem:[%s0 + $0x15c] sm:$0xff]
  %v76 = vld [vmem:[%s0 + $0x164] sm:$0xf]
  %v77 = vld [vmem:[%s0 + $0x168] sm:$0xff]
  %v78 = vld [vmem:[%s0 + $0x170] sm:$0xf]
  %v79 = vld [vmem:[%s0 + $0x174] sm:$0xff]
  %v80 = vld [vmem:[%s0 + $0x17c] sm:$0xf]
  %v81 = vld [vmem:[%s0 + $0x180] sm:$0xff]
  %v82 = vld [vmem:[%s0 + $0x188] sm:$0xf]
  %v83 = vld [vmem:[%s0 + $0x18c] sm:$0xff]
  %v84 = vld [vmem:[%s0 + $0x194] sm:$0xf]
  %v85 = vld [vmem:[%s0 + $0x198] sm:$0xff]
  %v86 = vld [vmem:[%s0 + $0x1a0] sm:$0xf]
  %v87 = vld [vmem:[%s0 + $0x1a4] sm:$0xff]
  %v88 = vld [vmem:[%s0 + $0x1ac] sm:$0xf]
  %v89 = vld [vmem:[%s0 + $0x1b0] sm:$0xff]
  %v90 = vld [vmem:[%s0 + $0x1b8] sm:$0xf]
  %v91 = vld [vmem:[%s0 + $0x1bc] sm:$0xff]
  %v92 = vld [vmem:[%s0 + $0x1c4] sm:$0xf]
  %v93 = vld [vmem:[%s0 + $0x1c8] sm:$0xff]
  %v94 = vld [vmem:[%s0 + $0x1d0] sm:$0xf]
  %v95 = vld [vmem:[%s0 + $0x1d4] sm:$0xff]
  %v96 = vld [vmem:[%s0 + $0x1dc] sm:$0xf]
  %v97 = vld [vmem:[%s0 + $0x1e0] sm:$0xff]
  %v98 = vld [vmem:[%s0 + $0x1e8] sm:$0xf]
  %v99 = vld [vmem:[%s0 + $0x1ec] sm:$0xff]
  %v100 = vld [vmem:[%s0 + $0x1f4] sm:$0xf]
  %v101 = vld [vmem:[%s0 + $0x1f8] sm:$0xff]
  %v102 = vld [vmem:[%s0 + $0x200] sm:$0xf]
  %v103 = vld [vmem:[%s0 + $0x204] sm:$0xff]
  %v104 = vld [vmem:[%s0 + $0x20c] sm:$0xf]
  %v105 = vld [vmem:[%s0 + $0x210] sm:$0xff]
  %v106 = vld [vmem:[%s0 + $0x218] sm:$0xf]
  %v107 = vld [vmem:[%s0 + $0x21c] sm:$0xff]
  %v108 = vld [vmem:[%s0 + $0x224] sm:$0xf]
  %v109 = vld [vmem:[%s0 + $0x228] sm:$0xff]
  %v110 = vld [vmem:[%s0 + $0x230] sm:$0xf]
  %v111 = vld [vmem:[%s0 + $0x234] sm:$0xff]
  %v112 = vld [vmem:[%s0 + $0x23c] sm:$0xf]
  %v113 = vld [vmem:[%s0 + $0x240] sm:$0xff]
  %v114 = vld [vmem:[%s0 + $0x248] sm:$0xf]
  %v115 = vld [vmem:[%s0 + $0x24c] sm:$0xff]
  %v116 = vld [vmem:[%s0 + $0x254] sm:$0xf]
  %v117 = vld [vmem:[%s0 + $0x258] sm:$0xff]
  %v118 = vld [vmem:[%s0 + $0x260] sm:$0xf]
  %v119 = vld [vmem:[%s0 + $0x264] sm:$0xff]
  %v120 = vld [vmem:[%s0 + $0x26c] sm:$0xf]
  %v121 = vld [vmem:[%s0 + $0x270] sm:$0xff]
  %v122 = vld [vmem:[%s0 + $0x278] sm:$0xf]
  %v123 = vld [vmem:[%s0 + $0x27c] sm:$0xff]
  %v124 = vld [vmem:[%s0 + $0x284] sm:$0xf]
  %v125 = vld [vmem:[%s0 + $0x288] sm:$0xff]
  %v126 = vld [vmem:[%s0 + $0x290] sm:$0xf]
  %v127 = vld [vmem:[%s0 + $0x294] sm:$0xff]
  %v128 = vld [vmem:[%s0 + $0x29c] sm:$0xf]
  %v129 = vld [vmem:[%s0 + $0x2a0] sm:$0xff]
  %v130 = vld [vmem:[%s0 + $0x2a8] sm:$0xf]
  %v131 = vld [vmem:[%s0 + $0x2ac] sm:$0xff]
  %v132 = vld [vmem:[%s0 + $0x2b4] sm:$0xf]
  %v133 = vld [vmem:[%s0 + $0x2b8] sm:$0xff]
  %v134 = vld [vmem:[%s0 + $0x2c0] sm:$0xf]
  %v135 = vld [vmem:[%s0 + $0x2c4] sm:$0xff]
  %v136 = vld [vmem:[%s0 + $0x2cc] sm:$0xf]
  %v137 = vld [vmem:[%s0 + $0x2d0] sm:$0xff]
  %v138 = vld [vmem:[%s0 + $0x2d8] sm:$0xf]
  %v139 = vld [vmem:[%s0 + $0x2dc] sm:$0xff]
  %v140 = vld [vmem:[%s0 + $0x2e4] sm:$0xf]
  %v141 = vld [vmem:[%s0 + $0x2e8] sm:$0xff]
  %v142 = vld [vmem:[%s0 + $0x2f0] sm:$0xf]
  %v143 = vld [vmem:[%s0 + $0x2f4] sm:$0xff]
  %v144 = vld [vmem:[%s0 + $0x2fc] sm:$0xf]
  %v145 = vld [vmem:[%s0 + $0x300] sm:$0xff]
  %v146 = vld [vmem:[%s0 + $0x308] sm:$0xf]
  %v147 = vld [vmem:[%s0 + $0x30c] sm:$0xff]
  %v148 = vld [vmem:[%s0 + $0x314] sm:$0xf]
  %v149 = vld [vmem:[%s0 + $0x318] sm:$0xff]
  %v150 = vld [vmem:[%s0 + $0x320] sm:$0xf]
  %v151 = vld [vmem:[%s0 + $0x324] sm:$0xff]
  %v152 = vld [vmem:[%s0 + $0x32c] sm:$0xf]
  %v153 = vld [vmem:[%s0 + $0x330] sm:$0xff]
  %v154 = vld [vmem:[%s0 + $0x338] sm:$0xf]
  %v155 = vld [vmem:[%s0 + $0x33c] sm:$0xff]
  %v156 = vld [vmem:[%s0 + $0x344] sm:$0xf]
  %v157 = vld [vmem:[%s0 + $0x348] sm:$0xff]
  %v158 = vld [vmem:[%s0 + $0x350] sm:$0xf]
  %v159 = vld [vmem:[%s0 + $0x354] sm:$0xff]
  %v160 = vld [vmem:[%s0 + $0x35c] sm:$0xf]
  %v161 = vld [vmem:[%s0 + $0x360] sm:$0xff]
  %v162 = vld [vmem:[%s0 + $0x368] sm:$0xf]
  %v163 = vld [vmem:[%s0 + $0x36c] sm:$0xff]
  %v164 = vld [vmem:[%s0 + $0x374] sm:$0xf]
  %v165 = vld [vmem:[%s0 + $0x378] sm:$0xff]
  %v166 = vld [vmem:[%s0 + $0x380] sm:$0xf]
  %v167 = vld [vmem:[%s0 + $0x384] sm:$0xff]
  %v168 = vld [vmem:[%s0 + $0x38c] sm:$0xf]
  %v169 = vld [vmem:[%s0 + $0x390] sm:$0xff]
  %v170 = vld [vmem:[%s0 + $0x398] sm:$0xf]
  %v171 = vld [vmem:[%s0 + $0x39c] sm:$0xff]
  %v172 = vld [vmem:[%s0 + $0x3a4] sm:$0xf]
  %v173 = vld [vmem:[%s0 + $0x3a8] sm:$0xff]
  %v174 = vld [vmem:[%s0 + $0x3b0] sm:$0xf]
  %v175 = vld [vmem:[%s0 + $0x3b4] sm:$0xff]
  %v176 = vld [vmem:[%s0 + $0x3bc] sm:$0xf]
  %v177 = vld [vmem:[%s0 + $0x3c0] sm:$0xff]
  %v178 = vld [vmem:[%s0 + $0x3c8] sm:$0xf]
  %v179 = vld [vmem:[%s0 + $0x3cc] sm:$0xff]
  %v180 = vld [vmem:[%s0 + $0x3d4] sm:$0xf]
  %v181 = vld [vmem:[%s0 + $0x3d8] sm:$0xff]
  %v182 = vld [vmem:[%s0 + $0x3e0] sm:$0xf]
  %v183 = vld [vmem:[%s0 + $0x3e4] sm:$0xff]
  %v184 = vld [vmem:[%s0 + $0x3ec] sm:$0xf]
  %v185 = vld [vmem:[%s0 + $0x3f0] sm:$0xff]
  %v186 = vld [vmem:[%s0 + $0x3f8] sm:$0xf]
  %v187 = vld [vmem:[%s0 + $0x3fc] sm:$0xff]
  %v188 = vld [vmem:[%s0 + $0x404] sm:$0xf]
  %v189 = vld [vmem:[%s0 + $0x408] sm:$0xff]
  %v190 = vld [vmem:[%s0 + $0x410] sm:$0xf]
  %v191 = vld [vmem:[%s0 + $0x414] sm:$0xff]
  %v192 = vld [vmem:[%s0 + $0x41c] sm:$0xf]
  %v193 = vld [vmem:[%s0 + $0x420] sm:$0xff]
  %v194 = vld [vmem:[%s0 + $0x428] sm:$0xf]
  %v195 = vld [vmem:[%s0 + $0x42c] sm:$0xff]
  %v196 = vld [vmem:[%s0 + $0x434] sm:$0xf]
  %v197 = vld [vmem:[%s0 + $0x438] sm:$0xff]
  %v198 = vld [vmem:[%s0 + $0x440] sm:$0xf]
  %v199 = vld [vmem:[%s0 + $0x444] sm:$0xff]
  %v200 = vld [vmem:[%s0 + $0x44c] sm:$0xf]
  %v201 = vld [vmem:[%s0 + $0x450] sm:$0xff]
  %v202 = vld [vmem:[%s0 + $0x458] sm:$0xf]
  %v203 = vld [vmem:[%s0 + $0x45c] sm:$0xff]
  %v204 = vld [vmem:[%s0 + $0x464] sm:$0xf]
  %v205 = vld [vmem:[%s0 + $0x468] sm:$0xff]
  %v206 = vld [vmem:[%s0 + $0x470] sm:$0xf]
  %v207 = vld [vmem:[%s0 + $0x474] sm:$0xff]
  %v208 = vld [vmem:[%s0 + $0x47c] sm:$0xf]
  %v209 = vld [vmem:[%s0 + $0x480] sm:$0xff]
  %v210 = vld [vmem:[%s0 + $0x488] sm:$0xf]
  %v211 = vld [vmem:[%s0 + $0x48c] sm:$0xff]
  %v212 = vld [vmem:[%s0 + $0x494] sm:$0xf]
  %v213 = vld [vmem:[%s0 + $0x498] sm:$0xff]
  %v214 = vld [vmem:[%s0 + $0x4a0] sm:$0xf]
  %v215 = vld [vmem:[%s0 + $0x4a4] sm:$0xff]
  %v216 = vld [vmem:[%s0 + $0x4ac] sm:$0xf]
  %v217 = vld [vmem:[%s0 + $0x4b0] sm:$0xff]
  %v218 = vld [vmem:[%s0 + $0x4b8] sm:$0xf]
  %v219 = vld [vmem:[%s0 + $0x4bc] sm:$0xff]
  %v220 = vld [vmem:[%s0 + $0x4c4] sm:$0xf]
  %v221 = vld [vmem:[%s0 + $0x4c8] sm:$0xff]
  %v222 = vld [vmem:[%s0 + $0x4d0] sm:$0xf]
  %v223 = vld [vmem:[%s0 + $0x4d4] sm:$0xff]
  %v224 = vld [vmem:[%s0 + $0x4dc] sm:$0xf]
  %v225 = vld [vmem:[%s0 + $0x4e0] sm:$0xff]
  %v226 = vld [vmem:[%s0 + $0x4e8] sm:$0xf]
  %v227 = vld [vmem:[%s0 + $0x4ec] sm:$0xff]
  %v228 = vld [vmem:[%s0 + $0x4f4] sm:$0xf]
  %v229 = vld [vmem:[%s0 + $0x4f8] sm:$0xff]
  %v230 = vld [vmem:[%s0 + $0x500] sm:$0xf]
  %v231 = vld [vmem:[%s0 + $0x504] sm:$0xff]
  %v232 = vld [vmem:[%s0 + $0x50c] sm:$0xf]
  %v233 = vld [vmem:[%s0 + $0x510] sm:$0xff]
  %v234 = vld [vmem:[%s0 + $0x518] sm:$0xf]
  %v235 = vld [vmem:[%s0 + $0x51c] sm:$0xff]
  %v236 = vld [vmem:[%s0 + $0x524] sm:$0xf]
  %v237 = vld [vmem:[%s0 + $0x528] sm:$0xff]
  %v238 = vld [vmem:[%s0 + $0x530] sm:$0xf]
  %v239 = vld [vmem:[%s0 + $0x534] sm:$0xff]
  %v240 = vld [vmem:[%s0 + $0x53c] sm:$0xf]
  %v241 = vld [vmem:[%s0 + $0x540] sm:$0xff]
  %v242 = vld [vmem:[%s0 + $0x548] sm:$0xf]
  %v243 = vld [vmem:[%s0 + $0x54c] sm:$0xff]
  %v244 = vld [vmem:[%s0 + $0x554] sm:$0xf]
  %v245 = vld [vmem:[%s0 + $0x558] sm:$0xff]
  %v246 = vld [vmem:[%s0 + $0x560] sm:$0xf]
  %v247 = vld [vmem:[%s0 + $0x564] sm:$0xff]
  %v248 = vld [vmem:[%s0 + $0x56c] sm:$0xf]
  %v249 = vld [vmem:[%s0 + $0x570] sm:$0xff]
  %v250 = vld [vmem:[%s0 + $0x578] sm:$0xf]
  %v251 = vld [vmem:[%s0 + $0x57c] sm:$0xff]
  %v252 = vld [vmem:[%s0 + $0x584] sm:$0xf]
  %v253 = vld [vmem:[%s0 + $0x588] sm:$0xff]
  %v254 = vld [vmem:[%s0 + $0x590] sm:$0xf]
  %v255 = vld [vmem:[%s0 + $0x594] sm:$0xff]
  %v256 = vld [vmem:[%s0 + $0x59c] sm:$0xf]
  %v257 = vld [vmem:[%s0 + $0x5a0] sm:$0xff]
  %v258 = vld [vmem:[%s0 + $0x5a8] sm:$0xf]
  %v259 = vld [vmem:[%s0 + $0x5ac] sm:$0xff]
  %v260 = vld [vmem:[%s0 + $0x5b4] sm:$0xf]
  %v261 = vld [vmem:[%s0 + $0x5b8] sm:$0xff]
  %v262 = vld [vmem:[%s0 + $0x5c0] sm:$0xf]
  %v263 = vld [vmem:[%s0 + $0x5c4] sm:$0xff]
  %v264 = vld [vmem:[%s0 + $0x5cc] sm:$0xf]
  %v265 = vld [vmem:[%s0 + $0x5d0] sm:$0xff]
  %v266 = vld [vmem:[%s0 + $0x5d8] sm:$0xf]
  %v267 = vld [vmem:[%s0 + $0x5dc] sm:$0xff]
  %v268 = vld [vmem:[%s0 + $0x5e4] sm:$0xf]
  %v269 = vld [vmem:[%s0 + $0x5e8] sm:$0xff]
  %v270 = vld [vmem:[%s0 + $0x5f0] sm:$0xf]
  %v271 = vld [vmem:[%s0 + $0x5f4] sm:$0xff]
  %v272 = vld [vmem:[%s0 + $0x5fc] sm:$0xf]
  %v273 = vld [vmem:[%s0 + $0x600] sm:$0xff]
  %v274 = vld [vmem:[%s0 + $0x608] sm:$0xf]
  %v275 = vld [vmem:[%s0 + $0x60c] sm:$0xff]
  %v276 = vld [vmem:[%s0 + $0x614] sm:$0xf]
  %v277 = vld [vmem:[%s0 + $0x618] sm:$0xff]
  %v278 = vld [vmem:[%s0 + $0x620] sm:$0xf]
  %v279 = vld [vmem:[%s0 + $0x624] sm:$0xff]
  %v280 = vld [vmem:[%s0 + $0x62c] sm:$0xf]
  %v281 = vld [vmem:[%s0 + $0x630] sm:$0xff]
  %v282 = vld [vmem:[%s0 + $0x638] sm:$0xf]
  %v283 = vld [vmem:[%s0 + $0x63c] sm:$0xff]
  %v284 = vld [vmem:[%s0 + $0x644] sm:$0xf]
  %v285 = vld [vmem:[%s0 + $0x648] sm:$0xff]
  %v286 = vld [vmem:[%s0 + $0x650] sm:$0xf]
  %v287 = vld [vmem:[%s0 + $0x654] sm:$0xff]
  %v288 = vld [vmem:[%s0 + $0x65c] sm:$0xf]
  %v289 = vld [vmem:[%s0 + $0x660] sm:$0xff]
  %v290 = vld [vmem:[%s0 + $0x668] sm:$0xf]
  %v291 = vld [vmem:[%s0 + $0x66c] sm:$0xff]
  %v292 = vld [vmem:[%s0 + $0x674] sm:$0xf]
  %v293 = vld [vmem:[%s0 + $0x678] sm:$0xff]
  %v294 = vld [vmem:[%s0 + $0x680] sm:$0xf]
  %v295 = vld [vmem:[%s0 + $0x684] sm:$0xff]
  %v296 = vld [vmem:[%s0 + $0x68c] sm:$0xf]
  %v297 = vld [vmem:[%s0 + $0x690] sm:$0xff]
  %v298 = vld [vmem:[%s0 + $0x698] sm:$0xf]
  %v299 = vld [vmem:[%s0 + $0x69c] sm:$0xff]
  %v300 = vld [vmem:[%s0 + $0x6a4] sm:$0xf]
  %v301 = vld [vmem:[%s0 + $0x6a8] sm:$0xff]
  %v302 = vld [vmem:[%s0 + $0x6b0] sm:$0xf]
  %v303 = vld [vmem:[%s0 + $0x6b4] sm:$0xff]
  %v304 = vld [vmem:[%s0 + $0x6bc] sm:$0xf]
  %v305 = vld [vmem:[%s0 + $0x6c0] sm:$0xff]
  %v306 = vld [vmem:[%s0 + $0x6c8] sm:$0xf]
  %v307 = vld [vmem:[%s0 + $0x6cc] sm:$0xff]
  %v308 = vld [vmem:[%s0 + $0x6d4] sm:$0xf]
  %v309 = vld [vmem:[%s0 + $0x6d8] sm:$0xff]
  %v310 = vld [vmem:[%s0 + $0x6e0] sm:$0xf]
  %v311 = vld [vmem:[%s0 + $0x6e4] sm:$0xff]
  %v312 = vld [vmem:[%s0 + $0x6ec] sm:$0xf]
  %v313 = vld [vmem:[%s0 + $0x6f0] sm:$0xff]
  %v314 = vld [vmem:[%s0 + $0x6f8] sm:$0xf]
  %v315 = vld [vmem:[%s0 + $0x6fc] sm:$0xff]
  %v316 = vld [vmem:[%s0 + $0x704] sm:$0xf]
  %v317 = vld [vmem:[%s0 + $0x708] sm:$0xff]
  %v318 = vld [vmem:[%s0 + $0x710] sm:$0xf]
  %v319 = vld [vmem:[%s0 + $0x714] sm:$0xff]
  %v320 = vld [vmem:[%s0 + $0x71c] sm:$0xf]
  %v321 = vld [vmem:[%s0 + $0x720] sm:$0xff]
  %v322 = vld [vmem:[%s0 + $0x728] sm:$0xf]
  %v323 = vld [vmem:[%s0 + $0x72c] sm:$0xff]
  %v324 = vld [vmem:[%s0 + $0x734] sm:$0xf]
  %v325 = vld [vmem:[%s0 + $0x738] sm:$0xff]
  %v326 = vld [vmem:[%s0 + $0x740] sm:$0xf]
  %v327 = vld [vmem:[%s0 + $0x744] sm:$0xff]
  %v328 = vld [vmem:[%s0 + $0x74c] sm:$0xf]
  %v329 = vld [vmem:[%s0 + $0x750] sm:$0xff]
  %v330 = vld [vmem:[%s0 + $0x758] sm:$0xf]
  %v331 = vld [vmem:[%s0 + $0x75c] sm:$0xff]
  %v332 = vld [vmem:[%s0 + $0x764] sm:$0xf]
  %v333 = vld [vmem:[%s0 + $0x768] sm:$0xff]
  %v334 = vld [vmem:[%s0 + $0x770] sm:$0xf]
  %v335 = vld [vmem:[%s0 + $0x774] sm:$0xff]
  %v336 = vld [vmem:[%s0 + $0x77c] sm:$0xf]
  %v337 = vld [vmem:[%s0 + $0x780] sm:$0xff]
  %v338 = vld [vmem:[%s0 + $0x788] sm:$0xf]
  %v339 = vld [vmem:[%s0 + $0x78c] sm:$0xff]
  %v340 = vld [vmem:[%s0 + $0x794] sm:$0xf]
  %v341 = vld [vmem:[%s0 + $0x798] sm:$0xff]
  %v342 = vld [vmem:[%s0 + $0x7a0] sm:$0xf]
  %v343 = vld [vmem:[%s0 + $0x7a4] sm:$0xff]
  %v344 = vld [vmem:[%s0 + $0x7ac] sm:$0xf]
  %v345 = vld [vmem:[%s0 + $0x7b0] sm:$0xff]
  %v346 = vld [vmem:[%s0 + $0x7b8] sm:$0xf]
  %v347 = vld [vmem:[%s0 + $0x7bc] sm:$0xff]
  %v348 = vld [vmem:[%s0 + $0x7c4] sm:$0xf]
  %v349 = vld [vmem:[%s0 + $0x7c8] sm:$0xff]
  %v350 = vld [vmem:[%s0 + $0x7d0] sm:$0xf]
  %v351 = vld [vmem:[%s0 + $0x7d4] sm:$0xff]
  %v352 = vld [vmem:[%s0 + $0x7dc] sm:$0xf]
  %v353 = vld [vmem:[%s0 + $0x7e0] sm:$0xff]
  %v354 = vld [vmem:[%s0 + $0x7e8] sm:$0xf]
  %v355 = vld [vmem:[%s0 + $0x7ec] sm:$0xff]
  %v356 = vld [vmem:[%s0 + $0x7f4] sm:$0xf]
  %v357 = vld [vmem:[%s0 + $0x7f8] sm:$0xff]
  %v358 = vld [vmem:[%s0 + $0x800] sm:$0xf]
  %v359 = vld [vmem:[%s0 + $0x804] sm:$0xff]
  %v360 = vld [vmem:[%s0 + $0x80c] sm:$0xf]
  %v361 = vld [vmem:[%s0 + $0x810] sm:$0xff]
  %v362 = vld [vmem:[%s0 + $0x818] sm:$0xf]
  %v363 = vld [vmem:[%s0 + $0x81c] sm:$0xff]
  %v364 = vld [vmem:[%s0 + $0x824] sm:$0xf]
  %v365 = vld [vmem:[%s0 + $0x828] sm:$0xff]
  %v366 = vld [vmem:[%s0 + $0x830] sm:$0xf]
  %v367 = vld [vmem:[%s0 + $0x834] sm:$0xff]
  %v368 = vld [vmem:[%s0 + $0x83c] sm:$0xf]
  %v369 = vld [vmem:[%s0 + $0x840] sm:$0xff]
  %v370 = vld [vmem:[%s0 + $0x848] sm:$0xf]
  %v371 = vld [vmem:[%s0 + $0x84c] sm:$0xff]
  %v372 = vld [vmem:[%s0 + $0x854] sm:$0xf]
  %v373 = vld [vmem:[%s0 + $0x858] sm:$0xff]
  %v374 = vld [vmem:[%s0 + $0x860] sm:$0xf]
  %v375 = vld [vmem:[%s0 + $0x864] sm:$0xff]
  %v376 = vld [vmem:[%s0 + $0x86c] sm:$0xf]
  %v377 = vld [vmem:[%s0 + $0x870] sm:$0xff]
  %v378 = vld [vmem:[%s0 + $0x878] sm:$0xf]
  %v379 = vld [vmem:[%s0 + $0x87c] sm:$0xff]
  %v380 = vld [vmem:[%s0 + $0x884] sm:$0xf]
  %v381 = vld [vmem:[%s0 + $0x888] sm:$0xff]
  %v382 = vld [vmem:[%s0 + $0x890] sm:$0xf]
  %v383 = vld [vmem:[%s0 + $0x894] sm:$0xff]
  %v384 = vld [vmem:[%s0 + $0x89c] sm:$0xf]
  %v385 = vld [vmem:[%s0 + $0x8a0] sm:$0xff]
  %v386 = vld [vmem:[%s0 + $0x8a8] sm:$0xf]
  %v387 = vld [vmem:[%s0 + $0x8ac] sm:$0xff]
  %v388 = vld [vmem:[%s0 + $0x8b4] sm:$0xf]
  %v389 = vld [vmem:[%s0 + $0x8b8] sm:$0xff]
  %v390 = vld [vmem:[%s0 + $0x8c0] sm:$0xf]
  %v391 = vld [vmem:[%s0 + $0x8c4] sm:$0xff]
  %v392 = vld [vmem:[%s0 + $0x8cc] sm:$0xf]
  %v393 = vld [vmem:[%s0 + $0x8d0] sm:$0xff]
  %v394 = vld [vmem:[%s0 + $0x8d8] sm:$0xf]
  %v395 = vld [vmem:[%s0 + $0x8dc] sm:$0xff]
  %v396 = vld [vmem:[%s0 + $0x8e4] sm:$0xf]
  %v397 = vld [vmem:[%s0 + $0x8e8] sm:$0xff]
  %v398 = vld [vmem:[%s0 + $0x8f0] sm:$0xf]
  %v399 = vld [vmem:[%s0 + $0x8f4] sm:$0xff]
  %v400 = vld [vmem:[%s0 + $0x8fc] sm:$0xf]
  %v401 = vld [vmem:[%s0 + $0x900] sm:$0xff]
  %v402 = vld [vmem:[%s0 + $0x908] sm:$0xf]
  %v403 = vld [vmem:[%s0 + $0x90c] sm:$0xff]
  %v404 = vld [vmem:[%s0 + $0x914] sm:$0xf]
  %v405 = vld [vmem:[%s0 + $0x918] sm:$0xff]
  %v406 = vld [vmem:[%s0 + $0x920] sm:$0xf]
  %v407 = vld [vmem:[%s0 + $0x924] sm:$0xff]
  %v408 = vld [vmem:[%s0 + $0x92c] sm:$0xf]
  %v409 = vld [vmem:[%s1] sm:$0xf]
  %v410 = vld [vmem:[%s1 + $0x4] sm:$0xf]
  %v411 = vld [vmem:[%s1 + $0x8] sm:$0xf]
  %v412 = vld [vmem:[%s1 + $0xc] sm:$0xf]
  %v413 = vld [vmem:[%s1 + $0x10] sm:$0xf]
  %v414 = vld [vmem:[%s1 + $0x14] sm:$0xf]
  %v415 = vld [vmem:[%s1 + $0x18] sm:$0xf]
  %v416 = vld [vmem:[%s1 + $0x1c] sm:$0xf]
  %v417 = vld [vmem:[%s1 + $0x20] sm:$0xf]
  %v418 = vld [vmem:[%s1 + $0x24] sm:$0xf]
  %v419 = vld [vmem:[%s1 + $0x28] sm:$0xf]
  %v420 = vld [vmem:[%s1 + $0x2c] sm:$0xf]
  %v421 = vld [vmem:[%s1 + $0x30] sm:$0xf]
  %v422 = vld [vmem:[%s1 + $0x34] sm:$0xf]
  %v423 = vld [vmem:[%s1 + $0x38] sm:$0xf]
  %v424 = vld [vmem:[%s1 + $0x3c] sm:$0xf]
  %v425 = vld [vmem:[%s1 + $0x40] sm:$0xf]
  %v426 = vld [vmem:[%s1 + $0x44] sm:$0xf]
  %v427 = vld [vmem:[%s1 + $0x48] sm:$0xf]
  %v428 = vld [vmem:[%s1 + $0x4c] sm:$0xf]
  %v429 = vld [vmem:[%s1 + $0x50] sm:$0xf]
  %v430 = vld [vmem:[%s1 + $0x54] sm:$0xf]
  %v431 = vld [vmem:[%s1 + $0x58] sm:$0xf]
  %v432 = vld [vmem:[%s1 + $0x5c] sm:$0xf]
  %v433 = vld [vmem:[%s1 + $0x60] sm:$0xf]
  %v434 = vld [vmem:[%s1 + $0x64] sm:$0xf]
  %v435 = vld [vmem:[%s1 + $0x68] sm:$0xf]
  %v436 = vld [vmem:[%s1 + $0x6c] sm:$0xf]
  %v437 = vld [vmem:[%s1 + $0x70] sm:$0xf]
  %v438 = vld [vmem:[%s1 + $0x74] sm:$0xf]
  %v439 = vld [vmem:[%s1 + $0x78] sm:$0xf]
  %v440 = vld [vmem:[%s1 + $0x7c] sm:$0xf]
  %v441 = vld [vmem:[%s1 + $0x80] sm:$0xf]
  %v442 = vld [vmem:[%s1 + $0x84] sm:$0xf]
  %v443 = vld [vmem:[%s1 + $0x88] sm:$0xf]
  %v444 = vld [vmem:[%s1 + $0x8c] sm:$0xf]
  %v445 = vld [vmem:[#allocation2] sm:$0x1]
  %v447 = vlaneseq
  %v448 = vshrl.u32 %v447, 7
  %v449 = vsub.s32 0, %v448
  %v450 = vrot.slane %v445, %v449
  %v844 = vunpack.c.l.b16 %v17
  %v845 = vunpack.c.h.b16 %v17
  %v846 = vunpack.c.l.b16 %v18
  %v847 = vunpack.c.l.b16 %v19
  %v848 = vunpack.c.h.b16 %v19
  %v849 = vunpack.c.l.b16 %v20
  %v850 = vunpack.c.l.b16 %v21
  %v851 = vunpack.c.h.b16 %v21
  %v852 = vunpack.c.l.b16 %v22
  %v853 = vunpack.c.l.b16 %v23
  %v854 = vunpack.c.h.b16 %v23
  %v855 = vunpack.c.l.b16 %v24
  %v856 = vunpack.c.l.b16 %v25
  %v857 = vunpack.c.h.b16 %v25
  %v858 = vunpack.c.l.b16 %v26
  %v859 = vunpack.c.l.b16 %v27
  %v860 = vunpack.c.h.b16 %v27
  %v861 = vunpack.c.l.b16 %v28
  %v862 = vunpack.c.l.b16 %v29
  %v863 = vunpack.c.h.b16 %v29
  %v864 = vunpack.c.l.b16 %v30
  %v865 = vunpack.c.l.b16 %v31
  %v866 = vunpack.c.h.b16 %v31
  %v867 = vunpack.c.l.b16 %v32
  %v868 = vunpack.c.l.b16 %v33
  %v869 = vunpack.c.h.b16 %v33
  %v870 = vunpack.c.l.b16 %v34
  %v871 = vunpack.c.l.b16 %v35
  %v872 = vunpack.c.h.b16 %v35
  %v873 = vunpack.c.l.b16 %v36
  %v874 = vunpack.c.l.b16 %v37
  %v875 = vunpack.c.h.b16 %v37
  %v876 = vunpack.c.l.b16 %v38
  %v877 = vunpack.c.l.b16 %v39
  %v878 = vunpack.c.h.b16 %v39
  %v879 = vunpack.c.l.b16 %v40
  %v880 = vunpack.c.l.b16 %v41
  %v881 = vunpack.c.h.b16 %v41
  %v882 = vunpack.c.l.b16 %v42
  %v883 = vunpack.c.l.b16 %v43
  %v884 = vunpack.c.h.b16 %v43
  %v885 = vunpack.c.l.b16 %v44
  %v886 = vunpack.c.l.b16 %v45
  %v887 = vunpack.c.h.b16 %v45
  %v888 = vunpack.c.l.b16 %v46
  %v889 = vunpack.c.l.b16 %v47
  %v890 = vunpack.c.h.b16 %v47
  %v891 = vunpack.c.l.b16 %v48
  %v892 = vunpack.c.l.b16 %v49
  %v893 = vunpack.c.h.b16 %v49
  %v894 = vunpack.c.l.b16 %v50
  %v895 = vunpack.c.l.b16 %v51
  %v896 = vunpack.c.h.b16 %v51
  %v897 = vunpack.c.l.b16 %v52
  %v898 = vunpack.c.l.b16 %v53
  %v899 = vunpack.c.h.b16 %v53
  %v900 = vunpack.c.l.b16 %v54
  %v901 = vunpack.c.l.b16 %v55
  %v902 = vunpack.c.h.b16 %v55
  %v903 = vunpack.c.l.b16 %v56
  %v904 = vunpack.c.l.b16 %v57
  %v905 = vunpack.c.h.b16 %v57
  %v906 = vunpack.c.l.b16 %v58
  %v907 = vunpack.c.l.b16 %v59
  %v908 = vunpack.c.h.b16 %v59
  %v909 = vunpack.c.l.b16 %v60
  %v910 = vunpack.c.l.b16 %v61
  %v911 = vunpack.c.h.b16 %v61
  %v912 = vunpack.c.l.b16 %v62
  %v913 = vunpack.c.l.b16 %v63
  %v914 = vunpack.c.h.b16 %v63
  %v915 = vunpack.c.l.b16 %v64
  %v916 = vunpack.c.l.b16 %v65
  %v917 = vunpack.c.h.b16 %v65
  %v918 = vunpack.c.l.b16 %v66
  %v919 = vunpack.c.l.b16 %v67
  %v920 = vunpack.c.h.b16 %v67
  %v921 = vunpack.c.l.b16 %v68
  %v922 = vunpack.c.l.b16 %v69
  %v923 = vunpack.c.h.b16 %v69
  %v924 = vunpack.c.l.b16 %v70
  %v925 = vunpack.c.l.b16 %v71
  %v926 = vunpack.c.h.b16 %v71
  %v927 = vunpack.c.l.b16 %v72
  %v928 = vunpack.c.l.b16 %v73
  %v929 = vunpack.c.h.b16 %v73
  %v930 = vunpack.c.l.b16 %v74
  %v931 = vunpack.c.l.b16 %v75
  %v932 = vunpack.c.h.b16 %v75
  %v933 = vunpack.c.l.b16 %v76
  %v934 = vunpack.c.l.b16 %v77
  %v935 = vunpack.c.h.b16 %v77
  %v936 = vunpack.c.l.b16 %v78
  %v937 = vunpack.c.l.b16 %v79
  %v938 = vunpack.c.h.b16 %v79
  %v939 = vunpack.c.l.b16 %v80
  %v940 = vunpack.c.l.b16 %v81
  %v941 = vunpack.c.h.b16 %v81
  %v942 = vunpack.c.l.b16 %v82
  %v943 = vunpack.c.l.b16 %v83
  %v944 = vunpack.c.h.b16 %v83
  %v945 = vunpack.c.l.b16 %v84
  %v946 = vunpack.c.l.b16 %v85
  %v947 = vunpack.c.h.b16 %v85
  %v948 = vunpack.c.l.b16 %v86
  %v949 = vunpack.c.l.b16 %v87
  %v950 = vunpack.c.h.b16 %v87
  %v951 = vunpack.c.l.b16 %v88
  %v952 = vunpack.c.l.b16 %v89
  %v953 = vunpack.c.h.b16 %v89
  %v954 = vunpack.c.l.b16 %v90
  %v955 = vunpack.c.l.b16 %v91
  %v956 = vunpack.c.h.b16 %v91
  %v957 = vunpack.c.l.b16 %v92
  %v958 = vunpack.c.l.b16 %v93
  %v959 = vunpack.c.h.b16 %v93
  %v960 = vunpack.c.l.b16 %v94
  %v961 = vunpack.c.l.b16 %v95
  %v962 = vunpack.c.h.b16 %v95
  %v963 = vunpack.c.l.b16 %v96
  %v964 = vunpack.c.l.b16 %v97
  %v965 = vunpack.c.h.b16 %v97
  %v966 = vunpack.c.l.b16 %v98
  %v967 = vunpack.c.l.b16 %v99
  %v968 = vunpack.c.h.b16 %v99
  %v969 = vunpack.c.l.b16 %v100
  %v970 = vunpack.c.l.b16 %v101
  %v971 = vunpack.c.h.b16 %v101
  %v972 = vunpack.c.l.b16 %v102
  %v973 = vunpack.c.l.b16 %v103
  %v974 = vunpack.c.h.b16 %v103
  %v975 = vunpack.c.l.b16 %v104
  %v976 = vunpack.c.l.b16 %v105
  %v977 = vunpack.c.h.b16 %v105
  %v978 = vunpack.c.l.b16 %v106
  %v979 = vunpack.c.l.b16 %v107
  %v980 = vunpack.c.h.b16 %v107
  %v981 = vunpack.c.l.b16 %v108
  %v982 = vunpack.c.l.b16 %v109
  %v983 = vunpack.c.h.b16 %v109
  %v984 = vunpack.c.l.b16 %v110
  %v985 = vunpack.c.l.b16 %v111
  %v986 = vunpack.c.h.b16 %v111
  %v987 = vunpack.c.l.b16 %v112
  %v988 = vunpack.c.l.b16 %v113
  %v989 = vunpack.c.h.b16 %v113
  %v990 = vunpack.c.l.b16 %v114
  %v991 = vunpack.c.l.b16 %v115
  %v992 = vunpack.c.h.b16 %v115
  %v993 = vunpack.c.l.b16 %v116
  %v994 = vunpack.c.l.b16 %v117
  %v995 = vunpack.c.h.b16 %v117
  %v996 = vunpack.c.l.b16 %v118
  %v997 = vunpack.c.l.b16 %v119
  %v998 = vunpack.c.h.b16 %v119
  %v999 = vunpack.c.l.b16 %v120
  %v1000 = vunpack.c.l.b16 %v121
  %v1001 = vunpack.c.h.b16 %v121
  %v1002 = vunpack.c.l.b16 %v122
  %v1003 = vunpack.c.l.b16 %v123
  %v1004 = vunpack.c.h.b16 %v123
  %v1005 = vunpack.c.l.b16 %v124
  %v1006 = vunpack.c.l.b16 %v125
  %v1007 = vunpack.c.h.b16 %v125
  %v1008 = vunpack.c.l.b16 %v126
  %v1009 = vunpack.c.l.b16 %v127
  %v1010 = vunpack.c.h.b16 %v127
  %v1011 = vunpack.c.l.b16 %v128
  %v1012 = vunpack.c.l.b16 %v129
  %v1013 = vunpack.c.h.b16 %v129
  %v1014 = vunpack.c.l.b16 %v130
  %v1015 = vunpack.c.l.b16 %v131
  %v1016 = vunpack.c.h.b16 %v131
  %v1017 = vunpack.c.l.b16 %v132
  %v1018 = vunpack.c.l.b16 %v133
  %v1019 = vunpack.c.h.b16 %v133
  %v1020 = vunpack.c.l.b16 %v134
  %v1021 = vunpack.c.l.b16 %v135
  %v1022 = vunpack.c.h.b16 %v135
  %v1023 = vunpack.c.l.b16 %v136
  %v1024 = vunpack.c.l.b16 %v137
  %v1025 = vunpack.c.h.b16 %v137
  %v1026 = vunpack.c.l.b16 %v138
  %v1027 = vunpack.c.l.b16 %v139
  %v1028 = vunpack.c.h.b16 %v139
  %v1029 = vunpack.c.l.b16 %v140
  %v1030 = vunpack.c.l.b16 %v141
  %v1031 = vunpack.c.h.b16 %v141
  %v1032 = vunpack.c.l.b16 %v142
  %v1033 = vunpack.c.l.b16 %v143
  %v1034 = vunpack.c.h.b16 %v143
  %v1035 = vunpack.c.l.b16 %v144
  %v1036 = vunpack.c.l.b16 %v145
  %v1037 = vunpack.c.h.b16 %v145
  %v1038 = vunpack.c.l.b16 %v146
  %v1039 = vunpack.c.l.b16 %v147
  %v1040 = vunpack.c.h.b16 %v147
  %v1041 = vunpack.c.l.b16 %v148
  %v1042 = vunpack.c.l.b16 %v149
  %v1043 = vunpack.c.h.b16 %v149
  %v1044 = vunpack.c.l.b16 %v150
  %v1045 = vunpack.c.l.b16 %v151
  %v1046 = vunpack.c.h.b16 %v151
  %v1047 = vunpack.c.l.b16 %v152
  %v1048 = vunpack.c.l.b16 %v153
  %v1049 = vunpack.c.h.b16 %v153
  %v1050 = vunpack.c.l.b16 %v154
  %v1051 = vunpack.c.l.b16 %v155
  %v1052 = vunpack.c.h.b16 %v155
  %v1053 = vunpack.c.l.b16 %v156
  %v1054 = vunpack.c.l.b16 %v157
  %v1055 = vunpack.c.h.b16 %v157
  %v1056 = vunpack.c.l.b16 %v158
  %v1057 = vunpack.c.l.b16 %v159
  %v1058 = vunpack.c.h.b16 %v159
  %v1059 = vunpack.c.l.b16 %v160
  %v1060 = vunpack.c.l.b16 %v161
  %v1061 = vunpack.c.h.b16 %v161
  %v1062 = vunpack.c.l.b16 %v162
  %v1063 = vunpack.c.l.b16 %v163
  %v1064 = vunpack.c.h.b16 %v163
  %v1065 = vunpack.c.l.b16 %v164
  %v1066 = vunpack.c.l.b16 %v165
  %v1067 = vunpack.c.h.b16 %v165
  %v1068 = vunpack.c.l.b16 %v166
  %v1069 = vunpack.c.l.b16 %v167
  %v1070 = vunpack.c.h.b16 %v167
  %v1071 = vunpack.c.l.b16 %v168
  %v1072 = vunpack.c.l.b16 %v169
  %v1073 = vunpack.c.h.b16 %v169
  %v1074 = vunpack.c.l.b16 %v170
  %v1075 = vunpack.c.l.b16 %v171
  %v1076 = vunpack.c.h.b16 %v171
  %v1077 = vunpack.c.l.b16 %v172
  %v1078 = vunpack.c.l.b16 %v173
  %v1079 = vunpack.c.h.b16 %v173
  %v1080 = vunpack.c.l.b16 %v174
  %v1081 = vunpack.c.l.b16 %v175
  %v1082 = vunpack.c.h.b16 %v175
  %v1083 = vunpack.c.l.b16 %v176
  %v1084 = vunpack.c.l.b16 %v177
  %v1085 = vunpack.c.h.b16 %v177
  %v1086 = vunpack.c.l.b16 %v178
  %v1087 = vunpack.c.l.b16 %v179
  %v1088 = vunpack.c.h.b16 %v179
  %v1089 = vunpack.c.l.b16 %v180
  %v1090 = vunpack.c.l.b16 %v181
  %v1091 = vunpack.c.h.b16 %v181
  %v1092 = vunpack.c.l.b16 %v182
  %v1093 = vunpack.c.l.b16 %v183
  %v1094 = vunpack.c.h.b16 %v183
  %v1095 = vunpack.c.l.b16 %v184
  %v1096 = vunpack.c.l.b16 %v185
  %v1097 = vunpack.c.h.b16 %v185
  %v1098 = vunpack.c.l.b16 %v186
  %v1099 = vunpack.c.l.b16 %v187
  %v1100 = vunpack.c.h.b16 %v187
  %v1101 = vunpack.c.l.b16 %v188
  %v1102 = vunpack.c.l.b16 %v189
  %v1103 = vunpack.c.h.b16 %v189
  %v1104 = vunpack.c.l.b16 %v190
  %v1105 = vunpack.c.l.b16 %v191
  %v1106 = vunpack.c.h.b16 %v191
  %v1107 = vunpack.c.l.b16 %v192
  %v1108 = vunpack.c.l.b16 %v193
  %v1109 = vunpack.c.h.b16 %v193
  %v1110 = vunpack.c.l.b16 %v194
  %v1111 = vunpack.c.l.b16 %v195
  %v1112 = vunpack.c.h.b16 %v195
  %v1113 = vunpack.c.l.b16 %v196
  %v1114 = vunpack.c.l.b16 %v197
  %v1115 = vunpack.c.h.b16 %v197
  %v1116 = vunpack.c.l.b16 %v198
  %v1117 = vunpack.c.l.b16 %v199
  %v1118 = vunpack.c.h.b16 %v199
  %v1119 = vunpack.c.l.b16 %v200
  %v1120 = vunpack.c.l.b16 %v201
  %v1121 = vunpack.c.h.b16 %v201
  %v1122 = vunpack.c.l.b16 %v202
  %v1123 = vunpack.c.l.b16 %v203
  %v1124 = vunpack.c.h.b16 %v203
  %v1125 = vunpack.c.l.b16 %v204
  %v1126 = vunpack.c.l.b16 %v205
  %v1127 = vunpack.c.h.b16 %v205
  %v1128 = vunpack.c.l.b16 %v206
  %v1129 = vunpack.c.l.b16 %v207
  %v1130 = vunpack.c.h.b16 %v207
  %v1131 = vunpack.c.l.b16 %v208
  %v1132 = vunpack.c.l.b16 %v209
  %v1133 = vunpack.c.h.b16 %v209
  %v1134 = vunpack.c.l.b16 %v210
  %v1135 = vunpack.c.l.b16 %v211
  %v1136 = vunpack.c.h.b16 %v211
  %v1137 = vunpack.c.l.b16 %v212
  %v1138 = vunpack.c.l.b16 %v213
  %v1139 = vunpack.c.h.b16 %v213
  %v1140 = vunpack.c.l.b16 %v214
  %v1141 = vunpack.c.l.b16 %v215
  %v1142 = vunpack.c.h.b16 %v215
  %v1143 = vunpack.c.l.b16 %v216
  %v1144 = vunpack.c.l.b16 %v217
  %v1145 = vunpack.c.h.b16 %v217
  %v1146 = vunpack.c.l.b16 %v218
  %v1147 = vunpack.c.l.b16 %v219
  %v1148 = vunpack.c.h.b16 %v219
  %v1149 = vunpack.c.l.b16 %v220
  %v1150 = vunpack.c.l.b16 %v221
  %v1151 = vunpack.c.h.b16 %v221
  %v1152 = vunpack.c.l.b16 %v222
  %v1153 = vunpack.c.l.b16 %v223
  %v1154 = vunpack.c.h.b16 %v223
  %v1155 = vunpack.c.l.b16 %v224
  %v1156 = vunpack.c.l.b16 %v225
  %v1157 = vunpack.c.h.b16 %v225
  %v1158 = vunpack.c.l.b16 %v226
  %v1159 = vunpack.c.l.b16 %v227
  %v1160 = vunpack.c.h.b16 %v227
  %v1161 = vunpack.c.l.b16 %v228
  %v1162 = vunpack.c.l.b16 %v229
  %v1163 = vunpack.c.h.b16 %v229
  %v1164 = vunpack.c.l.b16 %v230
  %v1165 = vunpack.c.l.b16 %v231
  %v1166 = vunpack.c.h.b16 %v231
  %v1167 = vunpack.c.l.b16 %v232
  %v1168 = vunpack.c.l.b16 %v233
  %v1169 = vunpack.c.h.b16 %v233
  %v1170 = vunpack.c.l.b16 %v234
  %v1171 = vunpack.c.l.b16 %v235
  %v1172 = vunpack.c.h.b16 %v235
  %v1173 = vunpack.c.l.b16 %v236
  %v1174 = vunpack.c.l.b16 %v237
  %v1175 = vunpack.c.h.b16 %v237
  %v1176 = vunpack.c.l.b16 %v238
  %v1177 = vunpack.c.l.b16 %v239
  %v1178 = vunpack.c.h.b16 %v239
  %v1179 = vunpack.c.l.b16 %v240
  %v1180 = vunpack.c.l.b16 %v241
  %v1181 = vunpack.c.h.b16 %v241
  %v1182 = vunpack.c.l.b16 %v242
  %v1183 = vunpack.c.l.b16 %v243
  %v1184 = vunpack.c.h.b16 %v243
  %v1185 = vunpack.c.l.b16 %v244
  %v1186 = vunpack.c.l.b16 %v245
  %v1187 = vunpack.c.h.b16 %v245
  %v1188 = vunpack.c.l.b16 %v246
  %v1189 = vunpack.c.l.b16 %v247
  %v1190 = vunpack.c.h.b16 %v247
  %v1191 = vunpack.c.l.b16 %v248
  %v1192 = vunpack.c.l.b16 %v249
  %v1193 = vunpack.c.h.b16 %v249
  %v1194 = vunpack.c.l.b16 %v250
  %v1195 = vunpack.c.l.b16 %v251
  %v1196 = vunpack.c.h.b16 %v251
  %v1197 = vunpack.c.l.b16 %v252
  %v1198 = vunpack.c.l.b16 %v253
  %v1199 = vunpack.c.h.b16 %v253
  %v1200 = vunpack.c.l.b16 %v254
  %v1201 = vunpack.c.l.b16 %v255
  %v1202 = vunpack.c.h.b16 %v255
  %v1203 = vunpack.c.l.b16 %v256
  %v1204 = vunpack.c.l.b16 %v257
  %v1205 = vunpack.c.h.b16 %v257
  %v1206 = vunpack.c.l.b16 %v258
  %v1207 = vunpack.c.l.b16 %v259
  %v1208 = vunpack.c.h.b16 %v259
  %v1209 = vunpack.c.l.b16 %v260
  %v1210 = vunpack.c.l.b16 %v261
  %v1211 = vunpack.c.h.b16 %v261
  %v1212 = vunpack.c.l.b16 %v262
  %v1213 = vunpack.c.l.b16 %v263
  %v1214 = vunpack.c.h.b16 %v263
  %v1215 = vunpack.c.l.b16 %v264
  %v1216 = vunpack.c.l.b16 %v265
  %v1217 = vunpack.c.h.b16 %v265
  %v1218 = vunpack.c.l.b16 %v266
  %v1219 = vunpack.c.l.b16 %v267
  %v1220 = vunpack.c.h.b16 %v267
  %v1221 = vunpack.c.l.b16 %v268
  %v1222 = vunpack.c.l.b16 %v269
  %v1223 = vunpack.c.h.b16 %v269
  %v1224 = vunpack.c.l.b16 %v270
  %v1225 = vunpack.c.l.b16 %v271
  %v1226 = vunpack.c.h.b16 %v271
  %v1227 = vunpack.c.l.b16 %v272
  %v1228 = vunpack.c.l.b16 %v273
  %v1229 = vunpack.c.h.b16 %v273
  %v1230 = vunpack.c.l.b16 %v274
  %v1231 = vunpack.c.l.b16 %v275
  %v1232 = vunpack.c.h.b16 %v275
  %v1233 = vunpack.c.l.b16 %v276
  %v1234 = vunpack.c.l.b16 %v277
  %v1235 = vunpack.c.h.b16 %v277
  %v1236 = vunpack.c.l.b16 %v278
  %v1237 = vunpack.c.l.b16 %v279
  %v1238 = vunpack.c.h.b16 %v279
  %v1239 = vunpack.c.l.b16 %v280
  %v1240 = vunpack.c.l.b16 %v281
  %v1241 = vunpack.c.h.b16 %v281
  %v1242 = vunpack.c.l.b16 %v282
  %v1243 = vunpack.c.l.b16 %v283
  %v1244 = vunpack.c.h.b16 %v283
  %v1245 = vunpack.c.l.b16 %v284
  %v1246 = vunpack.c.l.b16 %v285
  %v1247 = vunpack.c.h.b16 %v285
  %v1248 = vunpack.c.l.b16 %v286
  %v1249 = vunpack.c.l.b16 %v287
  %v1250 = vunpack.c.h.b16 %v287
  %v1251 = vunpack.c.l.b16 %v288
  %v1252 = vunpack.c.l.b16 %v289
  %v1253 = vunpack.c.h.b16 %v289
  %v1254 = vunpack.c.l.b16 %v290
  %v1255 = vunpack.c.l.b16 %v291
  %v1256 = vunpack.c.h.b16 %v291
  %v1257 = vunpack.c.l.b16 %v292
  %v1258 = vunpack.c.l.b16 %v293
  %v1259 = vunpack.c.h.b16 %v293
  %v1260 = vunpack.c.l.b16 %v294
  %v1261 = vunpack.c.l.b16 %v295
  %v1262 = vunpack.c.h.b16 %v295
  %v1263 = vunpack.c.l.b16 %v296
  %v1264 = vunpack.c.l.b16 %v297
  %v1265 = vunpack.c.h.b16 %v297
  %v1266 = vunpack.c.l.b16 %v298
  %v1267 = vunpack.c.l.b16 %v299
  %v1268 = vunpack.c.h.b16 %v299
  %v1269 = vunpack.c.l.b16 %v300
  %v1270 = vunpack.c.l.b16 %v301
  %v1271 = vunpack.c.h.b16 %v301
  %v1272 = vunpack.c.l.b16 %v302
  %v1273 = vunpack.c.l.b16 %v303
  %v1274 = vunpack.c.h.b16 %v303
  %v1275 = vunpack.c.l.b16 %v304
  %v1276 = vunpack.c.l.b16 %v305
  %v1277 = vunpack.c.h.b16 %v305
  %v1278 = vunpack.c.l.b16 %v306
  %v1279 = vunpack.c.l.b16 %v307
  %v1280 = vunpack.c.h.b16 %v307
  %v1281 = vunpack.c.l.b16 %v308
  %v1282 = vunpack.c.l.b16 %v309
  %v1283 = vunpack.c.h.b16 %v309
  %v1284 = vunpack.c.l.b16 %v310
  %v1285 = vunpack.c.l.b16 %v311
  %v1286 = vunpack.c.h.b16 %v311
  %v1287 = vunpack.c.l.b16 %v312
  %v1288 = vunpack.c.l.b16 %v313
  %v1289 = vunpack.c.h.b16 %v313
  %v1290 = vunpack.c.l.b16 %v314
  %v1291 = vunpack.c.l.b16 %v315
  %v1292 = vunpack.c.h.b16 %v315
  %v1293 = vunpack.c.l.b16 %v316
  %v1294 = vunpack.c.l.b16 %v317
  %v1295 = vunpack.c.h.b16 %v317
  %v1296 = vunpack.c.l.b16 %v318
  %v1297 = vunpack.c.l.b16 %v319
  %v1298 = vunpack.c.h.b16 %v319
  %v1299 = vunpack.c.l.b16 %v320
  %v1300 = vunpack.c.l.b16 %v321
  %v1301 = vunpack.c.h.b16 %v321
  %v1302 = vunpack.c.l.b16 %v322
  %v1303 = vunpack.c.l.b16 %v323
  %v1304 = vunpack.c.h.b16 %v323
  %v1305 = vunpack.c.l.b16 %v324
  %v1306 = vunpack.c.l.b16 %v325
  %v1307 = vunpack.c.h.b16 %v325
  %v1308 = vunpack.c.l.b16 %v326
  %v1309 = vunpack.c.l.b16 %v327
  %v1310 = vunpack.c.h.b16 %v327
  %v1311 = vunpack.c.l.b16 %v328
  %v1312 = vunpack.c.l.b16 %v329
  %v1313 = vunpack.c.h.b16 %v329
  %v1314 = vunpack.c.l.b16 %v330
  %v1315 = vunpack.c.l.b16 %v331
  %v1316 = vunpack.c.h.b16 %v331
  %v1317 = vunpack.c.l.b16 %v332
  %v1318 = vunpack.c.l.b16 %v333
  %v1319 = vunpack.c.h.b16 %v333
  %v1320 = vunpack.c.l.b16 %v334
  %v1321 = vunpack.c.l.b16 %v335
  %v1322 = vunpack.c.h.b16 %v335
  %v1323 = vunpack.c.l.b16 %v336
  %v1324 = vunpack.c.l.b16 %v337
  %v1325 = vunpack.c.h.b16 %v337
  %v1326 = vunpack.c.l.b16 %v338
  %v1327 = vunpack.c.l.b16 %v339
  %v1328 = vunpack.c.h.b16 %v339
  %v1329 = vunpack.c.l.b16 %v340
  %v1330 = vunpack.c.l.b16 %v341
  %v1331 = vunpack.c.h.b16 %v341
  %v1332 = vunpack.c.l.b16 %v342
  %v1333 = vunpack.c.l.b16 %v343
  %v1334 = vunpack.c.h.b16 %v343
  %v1335 = vunpack.c.l.b16 %v344
  %v1336 = vunpack.c.l.b16 %v345
  %v1337 = vunpack.c.h.b16 %v345
  %v1338 = vunpack.c.l.b16 %v346
  %v1339 = vunpack.c.l.b16 %v347
  %v1340 = vunpack.c.h.b16 %v347
  %v1341 = vunpack.c.l.b16 %v348
  %v1342 = vunpack.c.l.b16 %v349
  %v1343 = vunpack.c.h.b16 %v349
  %v1344 = vunpack.c.l.b16 %v350
  %v1345 = vunpack.c.l.b16 %v351
  %v1346 = vunpack.c.h.b16 %v351
  %v1347 = vunpack.c.l.b16 %v352
  %v1348 = vunpack.c.l.b16 %v353
  %v1349 = vunpack.c.h.b16 %v353
  %v1350 = vunpack.c.l.b16 %v354
  %v1351 = vunpack.c.l.b16 %v355
  %v1352 = vunpack.c.h.b16 %v355
  %v1353 = vunpack.c.l.b16 %v356
  %v1354 = vunpack.c.l.b16 %v357
  %v1355 = vunpack.c.h.b16 %v357
  %v1356 = vunpack.c.l.b16 %v358
  %v1357 = vunpack.c.l.b16 %v359
  %v1358 = vunpack.c.h.b16 %v359
  %v1359 = vunpack.c.l.b16 %v360
  %v1360 = vunpack.c.l.b16 %v361
  %v1361 = vunpack.c.h.b16 %v361
  %v1362 = vunpack.c.l.b16 %v362
  %v1363 = vunpack.c.l.b16 %v363
  %v1364 = vunpack.c.h.b16 %v363
  %v1365 = vunpack.c.l.b16 %v364
  %v1366 = vunpack.c.l.b16 %v365
  %v1367 = vunpack.c.h.b16 %v365
  %v1368 = vunpack.c.l.b16 %v366
  %v1369 = vunpack.c.l.b16 %v367
  %v1370 = vunpack.c.h.b16 %v367
  %v1371 = vunpack.c.l.b16 %v368
  %v1372 = vunpack.c.l.b16 %v369
  %v1373 = vunpack.c.h.b16 %v369
  %v1374 = vunpack.c.l.b16 %v370
  %v1375 = vunpack.c.l.b16 %v371
  %v1376 = vunpack.c.h.b16 %v371
  %v1377 = vunpack.c.l.b16 %v372
  %v1378 = vunpack.c.l.b16 %v373
  %v1379 = vunpack.c.h.b16 %v373
  %v1380 = vunpack.c.l.b16 %v374
  %v1381 = vunpack.c.l.b16 %v375
  %v1382 = vunpack.c.h.b16 %v375
  %v1383 = vunpack.c.l.b16 %v376
  %v1384 = vunpack.c.l.b16 %v377
  %v1385 = vunpack.c.h.b16 %v377
  %v1386 = vunpack.c.l.b16 %v378
  %v1387 = vunpack.c.l.b16 %v379
  %v1388 = vunpack.c.h.b16 %v379
  %v1389 = vunpack.c.l.b16 %v380
  %v1390 = vunpack.c.l.b16 %v381
  %v1391 = vunpack.c.h.b16 %v381
  %v1392 = vunpack.c.l.b16 %v382
  %v1393 = vunpack.c.l.b16 %v383
  %v1394 = vunpack.c.h.b16 %v383
  %v1395 = vunpack.c.l.b16 %v384
  %v1396 = vunpack.c.l.b16 %v385
  %v1397 = vunpack.c.h.b16 %v385
  %v1398 = vunpack.c.l.b16 %v386
  %v1399 = vunpack.c.l.b16 %v387
  %v1400 = vunpack.c.h.b16 %v387
  %v1401 = vunpack.c.l.b16 %v388
  %v1402 = vunpack.c.l.b16 %v389
  %v1403 = vunpack.c.h.b16 %v389
  %v1404 = vunpack.c.l.b16 %v390
  %v1405 = vunpack.c.l.b16 %v391
  %v1406 = vunpack.c.h.b16 %v391
  %v1407 = vunpack.c.l.b16 %v392
  %v1408 = vunpack.c.l.b16 %v393
  %v1409 = vunpack.c.h.b16 %v393
  %v1410 = vunpack.c.l.b16 %v394
  %v1411 = vunpack.c.l.b16 %v395
  %v1412 = vunpack.c.h.b16 %v395
  %v1413 = vunpack.c.l.b16 %v396
  %v1414 = vunpack.c.l.b16 %v397
  %v1415 = vunpack.c.h.b16 %v397
  %v1416 = vunpack.c.l.b16 %v398
  %v1417 = vunpack.c.l.b16 %v399
  %v1418 = vunpack.c.h.b16 %v399
  %v1419 = vunpack.c.l.b16 %v400
  %v1420 = vunpack.c.l.b16 %v401
  %v1421 = vunpack.c.h.b16 %v401
  %v1422 = vunpack.c.l.b16 %v402
  %v1423 = vunpack.c.l.b16 %v403
  %v1424 = vunpack.c.h.b16 %v403
  %v1425 = vunpack.c.l.b16 %v404
  %v1426 = vunpack.c.l.b16 %v405
  %v1427 = vunpack.c.h.b16 %v405
  %v1428 = vunpack.c.l.b16 %v406
  %v1429 = vunpack.c.l.b16 %v407
  %v1430 = vunpack.c.h.b16 %v407
  %v1431 = vunpack.c.l.b16 %v408
  %v1432 = vpack.c.b16 %v847, %v844
  %v1433 = vpack.c.b16 %v848, %v845
  %v1434 = vpack.c.b16 %v849, %v846
  %v1435 = vpack.c.b16 %v853, %v850
  %v1436 = vpack.c.b16 %v854, %v851
  %v1437 = vpack.c.b16 %v855, %v852
  %v1438 = vpack.c.b16 %v859, %v856
  %v1439 = vpack.c.b16 %v860, %v857
  %v1440 = vpack.c.b16 %v861, %v858
  %v1441 = vpack.c.b16 %v865, %v862
  %v1442 = vpack.c.b16 %v866, %v863
  %v1443 = vpack.c.b16 %v867, %v864
  %v1444 = vpack.c.b16 %v871, %v868
  %v1445 = vpack.c.b16 %v872, %v869
  %v1446 = vpack.c.b16 %v873, %v870
  %v1447 = vpack.c.b16 %v877, %v874
  %v1448 = vpack.c.b16 %v878, %v875
  %v1449 = vpack.c.b16 %v879, %v876
  %v1450 = vpack.c.b16 %v883, %v880
  %v1451 = vpack.c.b16 %v884, %v881
  %v1452 = vpack.c.b16 %v885, %v882
  %v1453 = vpack.c.b16 %v889, %v886
  %v1454 = vpack.c.b16 %v890, %v887
  %v1455 = vpack.c.b16 %v891, %v888
  %v1456 = vpack.c.b16 %v895, %v892
  %v1457 = vpack.c.b16 %v896, %v893
  %v1458 = vpack.c.b16 %v897, %v894
  %v1459 = vpack.c.b16 %v901, %v898
  %v1460 = vpack.c.b16 %v902, %v899
  %v1461 = vpack.c.b16 %v903, %v900
  %v1462 = vpack.c.b16 %v907, %v904
  %v1463 = vpack.c.b16 %v908, %v905
  %v1464 = vpack.c.b16 %v909, %v906
  %v1465 = vpack.c.b16 %v913, %v910
  %v1466 = vpack.c.b16 %v914, %v911
  %v1467 = vpack.c.b16 %v915, %v912
  %v1468 = vpack.c.b16 %v919, %v916
  %v1469 = vpack.c.b16 %v920, %v917
  %v1470 = vpack.c.b16 %v921, %v918
  %v1471 = vpack.c.b16 %v925, %v922
  %v1472 = vpack.c.b16 %v926, %v923
  %v1473 = vpack.c.b16 %v927, %v924
  %v1474 = vpack.c.b16 %v931, %v928
  %v1475 = vpack.c.b16 %v932, %v929
  %v1476 = vpack.c.b16 %v933, %v930
  %v1477 = vpack.c.b16 %v937, %v934
  %v1478 = vpack.c.b16 %v938, %v935
  %v1479 = vpack.c.b16 %v939, %v936
  %v1480 = vpack.c.b16 %v943, %v940
  %v1481 = vpack.c.b16 %v944, %v941
  %v1482 = vpack.c.b16 %v945, %v942
  %v1483 = vpack.c.b16 %v949, %v946
  %v1484 = vpack.c.b16 %v950, %v947
  %v1485 = vpack.c.b16 %v951, %v948
  %v1486 = vpack.c.b16 %v955, %v952
  %v1487 = vpack.c.b16 %v956, %v953
  %v1488 = vpack.c.b16 %v957, %v954
  %v1489 = vpack.c.b16 %v961, %v958
  %v1490 = vpack.c.b16 %v962, %v959
  %v1491 = vpack.c.b16 %v963, %v960
  %v1492 = vpack.c.b16 %v967, %v964
  %v1493 = vpack.c.b16 %v968, %v965
  %v1494 = vpack.c.b16 %v969, %v966
  %v1495 = vpack.c.b16 %v973, %v970
  %v1496 = vpack.c.b16 %v974, %v971
  %v1497 = vpack.c.b16 %v975, %v972
  %v1498 = vpack.c.b16 %v979, %v976
  %v1499 = vpack.c.b16 %v980, %v977
  %v1500 = vpack.c.b16 %v981, %v978
  %v1501 = vpack.c.b16 %v985, %v982
  %v1502 = vpack.c.b16 %v986, %v983
  %v1503 = vpack.c.b16 %v987, %v984
  %v1504 = vpack.c.b16 %v991, %v988
  %v1505 = vpack.c.b16 %v992, %v989
  %v1506 = vpack.c.b16 %v993, %v990
  %v1507 = vpack.c.b16 %v997, %v994
  %v1508 = vpack.c.b16 %v998, %v995
  %v1509 = vpack.c.b16 %v999, %v996
  %v1510 = vpack.c.b16 %v1003, %v1000
  %v1511 = vpack.c.b16 %v1004, %v1001
  %v1512 = vpack.c.b16 %v1005, %v1002
  %v1513 = vpack.c.b16 %v1009, %v1006
  %v1514 = vpack.c.b16 %v1010, %v1007
  %v1515 = vpack.c.b16 %v1011, %v1008
  %v1516 = vpack.c.b16 %v1015, %v1012
  %v1517 = vpack.c.b16 %v1016, %v1013
  %v1518 = vpack.c.b16 %v1017, %v1014
  %v1519 = vpack.c.b16 %v1021, %v1018
  %v1520 = vpack.c.b16 %v1022, %v1019
  %v1521 = vpack.c.b16 %v1023, %v1020
  %v1522 = vpack.c.b16 %v1027, %v1024
  %v1523 = vpack.c.b16 %v1028, %v1025
  %v1524 = vpack.c.b16 %v1029, %v1026
  %v1525 = vpack.c.b16 %v1033, %v1030
  %v1526 = vpack.c.b16 %v1034, %v1031
  %v1527 = vpack.c.b16 %v1035, %v1032
  %v1528 = vpack.c.b16 %v1039, %v1036
  %v1529 = vpack.c.b16 %v1040, %v1037
  %v1530 = vpack.c.b16 %v1041, %v1038
  %v1531 = vpack.c.b16 %v1045, %v1042
  %v1532 = vpack.c.b16 %v1046, %v1043
  %v1533 = vpack.c.b16 %v1047, %v1044
  %v1534 = vpack.c.b16 %v1051, %v1048
  %v1535 = vpack.c.b16 %v1052, %v1049
  %v1536 = vpack.c.b16 %v1053, %v1050
  %v1537 = vpack.c.b16 %v1057, %v1054
  %v1538 = vpack.c.b16 %v1058, %v1055
  %v1539 = vpack.c.b16 %v1059, %v1056
  %v1540 = vpack.c.b16 %v1063, %v1060
  %v1541 = vpack.c.b16 %v1064, %v1061
  %v1542 = vpack.c.b16 %v1065, %v1062
  %v1543 = vpack.c.b16 %v1069, %v1066
  %v1544 = vpack.c.b16 %v1070, %v1067
  %v1545 = vpack.c.b16 %v1071, %v1068
  %v1546 = vpack.c.b16 %v1075, %v1072
  %v1547 = vpack.c.b16 %v1076, %v1073
  %v1548 = vpack.c.b16 %v1077, %v1074
  %v1549 = vpack.c.b16 %v1081, %v1078
  %v1550 = vpack.c.b16 %v1082, %v1079
  %v1551 = vpack.c.b16 %v1083, %v1080
  %v1552 = vpack.c.b16 %v1087, %v1084
  %v1553 = vpack.c.b16 %v1088, %v1085
  %v1554 = vpack.c.b16 %v1089, %v1086
  %v1555 = vpack.c.b16 %v1093, %v1090
  %v1556 = vpack.c.b16 %v1094, %v1091
  %v1557 = vpack.c.b16 %v1095, %v1092
  %v1558 = vpack.c.b16 %v1099, %v1096
  %v1559 = vpack.c.b16 %v1100, %v1097
  %v1560 = vpack.c.b16 %v1101, %v1098
  %v1561 = vpack.c.b16 %v1105, %v1102
  %v1562 = vpack.c.b16 %v1106, %v1103
  %v1563 = vpack.c.b16 %v1107, %v1104
  %v1564 = vpack.c.b16 %v1111, %v1108
  %v1565 = vpack.c.b16 %v1112, %v1109
  %v1566 = vpack.c.b16 %v1113, %v1110
  %v1567 = vpack.c.b16 %v1117, %v1114
  %v1568 = vpack.c.b16 %v1118, %v1115
  %v1569 = vpack.c.b16 %v1119, %v1116
  %v1570 = vpack.c.b16 %v1123, %v1120
  %v1571 = vpack.c.b16 %v1124, %v1121
  %v1572 = vpack.c.b16 %v1125, %v1122
  %v1573 = vpack.c.b16 %v1129, %v1126
  %v1574 = vpack.c.b16 %v1130, %v1127
  %v1575 = vpack.c.b16 %v1131, %v1128
  %v1576 = vpack.c.b16 %v1135, %v1132
  %v1577 = vpack.c.b16 %v1136, %v1133
  %v1578 = vpack.c.b16 %v1137, %v1134
  %v1579 = vpack.c.b16 %v1141, %v1138
  %v1580 = vpack.c.b16 %v1142, %v1139
  %v1581 = vpack.c.b16 %v1143, %v1140
  %v1582 = vpack.c.b16 %v1147, %v1144
  %v1583 = vpack.c.b16 %v1148, %v1145
  %v1584 = vpack.c.b16 %v1149, %v1146
  %v1585 = vpack.c.b16 %v1153, %v1150
  %v1586 = vpack.c.b16 %v1154, %v1151
  %v1587 = vpack.c.b16 %v1155, %v1152
  %v1588 = vpack.c.b16 %v1159, %v1156
  %v1589 = vpack.c.b16 %v1160, %v1157
  %v1590 = vpack.c.b16 %v1161, %v1158
  %v1591 = vpack.c.b16 %v1165, %v1162
  %v1592 = vpack.c.b16 %v1166, %v1163
  %v1593 = vpack.c.b16 %v1167, %v1164
  %v1594 = vpack.c.b16 %v1171, %v1168
  %v1595 = vpack.c.b16 %v1172, %v1169
  %v1596 = vpack.c.b16 %v1173, %v1170
  %v1597 = vpack.c.b16 %v1177, %v1174
  %v1598 = vpack.c.b16 %v1178, %v1175
  %v1599 = vpack.c.b16 %v1179, %v1176
  %v1600 = vpack.c.b16 %v1183, %v1180
  %v1601 = vpack.c.b16 %v1184, %v1181
  %v1602 = vpack.c.b16 %v1185, %v1182
  %v1603 = vpack.c.b16 %v1189, %v1186
  %v1604 = vpack.c.b16 %v1190, %v1187
  %v1605 = vpack.c.b16 %v1191, %v1188
  %v1606 = vpack.c.b16 %v1195, %v1192
  %v1607 = vpack.c.b16 %v1196, %v1193
  %v1608 = vpack.c.b16 %v1197, %v1194
  %v1609 = vpack.c.b16 %v1201, %v1198
  %v1610 = vpack.c.b16 %v1202, %v1199
  %v1611 = vpack.c.b16 %v1203, %v1200
  %v1612 = vpack.c.b16 %v1207, %v1204
  %v1613 = vpack.c.b16 %v1208, %v1205
  %v1614 = vpack.c.b16 %v1209, %v1206
  %v1615 = vpack.c.b16 %v1213, %v1210
  %v1616 = vpack.c.b16 %v1214, %v1211
  %v1617 = vpack.c.b16 %v1215, %v1212
  %v1618 = vpack.c.b16 %v1219, %v1216
  %v1619 = vpack.c.b16 %v1220, %v1217
  %v1620 = vpack.c.b16 %v1221, %v1218
  %v1621 = vpack.c.b16 %v1225, %v1222
  %v1622 = vpack.c.b16 %v1226, %v1223
  %v1623 = vpack.c.b16 %v1227, %v1224
  %v1624 = vpack.c.b16 %v1231, %v1228
  %v1625 = vpack.c.b16 %v1232, %v1229
  %v1626 = vpack.c.b16 %v1233, %v1230
  %v1627 = vpack.c.b16 %v1237, %v1234
  %v1628 = vpack.c.b16 %v1238, %v1235
  %v1629 = vpack.c.b16 %v1239, %v1236
  %v1630 = vpack.c.b16 %v1243, %v1240
  %v1631 = vpack.c.b16 %v1244, %v1241
  %v1632 = vpack.c.b16 %v1245, %v1242
  %v1633 = vpack.c.b16 %v1249, %v1246
  %v1634 = vpack.c.b16 %v1250, %v1247
  %v1635 = vpack.c.b16 %v1251, %v1248
  %v1636 = vpack.c.b16 %v1255, %v1252
  %v1637 = vpack.c.b16 %v1256, %v1253
  %v1638 = vpack.c.b16 %v1257, %v1254
  %v1639 = vpack.c.b16 %v1261, %v1258
  %v1640 = vpack.c.b16 %v1262, %v1259
  %v1641 = vpack.c.b16 %v1263, %v1260
  %v1642 = vpack.c.b16 %v1267, %v1264
  %v1643 = vpack.c.b16 %v1268, %v1265
  %v1644 = vpack.c.b16 %v1269, %v1266
  %v1645 = vpack.c.b16 %v1273, %v1270
  %v1646 = vpack.c.b16 %v1274, %v1271
  %v1647 = vpack.c.b16 %v1275, %v1272
  %v1648 = vpack.c.b16 %v1279, %v1276
  %v1649 = vpack.c.b16 %v1280, %v1277
  %v1650 = vpack.c.b16 %v1281, %v1278
  %v1651 = vpack.c.b16 %v1285, %v1282
  %v1652 = vpack.c.b16 %v1286, %v1283
  %v1653 = vpack.c.b16 %v1287, %v1284
  %v1654 = vpack.c.b16 %v1291, %v1288
  %v1655 = vpack.c.b16 %v1292, %v1289
  %v1656 = vpack.c.b16 %v1293, %v1290
  %v1657 = vpack.c.b16 %v1297, %v1294
  %v1658 = vpack.c.b16 %v1298, %v1295
  %v1659 = vpack.c.b16 %v1299, %v1296
  %v1660 = vpack.c.b16 %v1303, %v1300
  %v1661 = vpack.c.b16 %v1304, %v1301
  %v1662 = vpack.c.b16 %v1305, %v1302
  %v1663 = vpack.c.b16 %v1309, %v1306
  %v1664 = vpack.c.b16 %v1310, %v1307
  %v1665 = vpack.c.b16 %v1311, %v1308
  %v1666 = vpack.c.b16 %v1315, %v1312
  %v1667 = vpack.c.b16 %v1316, %v1313
  %v1668 = vpack.c.b16 %v1317, %v1314
  %v1669 = vpack.c.b16 %v1321, %v1318
  %v1670 = vpack.c.b16 %v1322, %v1319
  %v1671 = vpack.c.b16 %v1323, %v1320
  %v1672 = vpack.c.b16 %v1327, %v1324
  %v1673 = vpack.c.b16 %v1328, %v1325
  %v1674 = vpack.c.b16 %v1329, %v1326
  %v1675 = vpack.c.b16 %v1333, %v1330
  %v1676 = vpack.c.b16 %v1334, %v1331
  %v1677 = vpack.c.b16 %v1335, %v1332
  %v1678 = vpack.c.b16 %v1339, %v1336
  %v1679 = vpack.c.b16 %v1340, %v1337
  %v1680 = vpack.c.b16 %v1341, %v1338
  %v1681 = vpack.c.b16 %v1345, %v1342
  %v1682 = vpack.c.b16 %v1346, %v1343
  %v1683 = vpack.c.b16 %v1347, %v1344
  %v1684 = vpack.c.b16 %v1351, %v1348
  %v1685 = vpack.c.b16 %v1352, %v1349
  %v1686 = vpack.c.b16 %v1353, %v1350
  %v1687 = vpack.c.b16 %v1357, %v1354
  %v1688 = vpack.c.b16 %v1358, %v1355
  %v1689 = vpack.c.b16 %v1359, %v1356
  %v1690 = vpack.c.b16 %v1363, %v1360
  %v1691 = vpack.c.b16 %v1364, %v1361
  %v1692 = vpack.c.b16 %v1365, %v1362
  %v1693 = vpack.c.b16 %v1369, %v1366
  %v1694 = vpack.c.b16 %v1370, %v1367
  %v1695 = vpack.c.b16 %v1371, %v1368
  %v1696 = vpack.c.b16 %v1375, %v1372
  %v1697 = vpack.c.b16 %v1376, %v1373
  %v1698 = vpack.c.b16 %v1377, %v1374
  %v1699 = vpack.c.b16 %v1381, %v1378
  %v1700 = vpack.c.b16 %v1382, %v1379
  %v1701 = vpack.c.b16 %v1383, %v1380
  %v1702 = vpack.c.b16 %v1387, %v1384
  %v1703 = vpack.c.b16 %v1388, %v1385
  %v1704 = vpack.c.b16 %v1389, %v1386
  %v1705 = vpack.c.b16 %v1393, %v1390
  %v1706 = vpack.c.b16 %v1394, %v1391
  %v1707 = vpack.c.b16 %v1395, %v1392
  %v1708 = vpack.c.b16 %v1399, %v1396
  %v1709 = vpack.c.b16 %v1400, %v1397
  %v1710 = vpack.c.b16 %v1401, %v1398
  %v1711 = vpack.c.b16 %v1405, %v1402
  %v1712 = vpack.c.b16 %v1406, %v1403
  %v1713 = vpack.c.b16 %v1407, %v1404
  %v1714 = vpack.c.b16 %v1411, %v1408
  %v1715 = vpack.c.b16 %v1412, %v1409
  %v1716 = vpack.c.b16 %v1413, %v1410
  %v1717 = vpack.c.b16 %v1417, %v1414
  %v1718 = vpack.c.b16 %v1418, %v1415
  %v1719 = vpack.c.b16 %v1419, %v1416
  %v1720 = vpack.c.b16 %v1423, %v1420
  %v1721 = vpack.c.b16 %v1424, %v1421
  %v1722 = vpack.c.b16 %v1425, %v1422
  %v1723 = vpack.c.b16 %v1429, %v1426
  %v1724 = vpack.c.b16 %v1430, %v1427
  %v1725 = vpack.c.b16 %v1431, %v1428
  %v1958 = vunpack.c.l.b16 %v409
  %v1959 = vunpack.c.l.b16 %v410
  %v1960 = vunpack.c.l.b16 %v411
  %v1961 = vunpack.c.l.b16 %v412
  %v1962 = vunpack.c.l.b16 %v413
  %v1963 = vunpack.c.l.b16 %v414
  %v1964 = vunpack.c.l.b16 %v415
  %v1965 = vunpack.c.l.b16 %v416
  %v1966 = vunpack.c.l.b16 %v417
  %v1967 = vunpack.c.l.b16 %v418
  %v1968 = vunpack.c.l.b16 %v419
  %v1969 = vunpack.c.l.b16 %v420
  %v1970 = vunpack.c.l.b16 %v421
  %v1971 = vunpack.c.l.b16 %v422
  %v1972 = vunpack.c.l.b16 %v423
  %v1973 = vunpack.c.l.b16 %v424
  %v1974 = vunpack.c.l.b16 %v425
  %v1975 = vunpack.c.l.b16 %v426
  %v1976 = vunpack.c.l.b16 %v427
  %v1977 = vunpack.c.l.b16 %v428
  %v1978 = vunpack.c.l.b16 %v429
  %v1979 = vunpack.c.l.b16 %v430
  %v1980 = vunpack.c.l.b16 %v431
  %v1981 = vunpack.c.l.b16 %v432
  %v1982 = vunpack.c.l.b16 %v433
  %v1983 = vunpack.c.l.b16 %v434
  %v1984 = vunpack.c.l.b16 %v435
  %v1985 = vunpack.c.l.b16 %v436
  %v1986 = vunpack.c.l.b16 %v437
  %v1987 = vunpack.c.l.b16 %v438
  %v1988 = vunpack.c.l.b16 %v439
  %v1989 = vunpack.c.l.b16 %v440
  %v1990 = vunpack.c.l.b16 %v441
  %v1991 = vunpack.c.l.b16 %v442
  %v1992 = vunpack.c.l.b16 %v443
  %v1993 = vunpack.c.l.b16 %v444
  %v1994 = vpack.c.b16 %v1959, %v1958
  %v1995 = vpack.c.b16 %v1961, %v1960
  %v1996 = vpack.c.b16 %v1963, %v1962
  %v1997 = vpack.c.b16 %v1965, %v1964
  %v1998 = vpack.c.b16 %v1967, %v1966
  %v1999 = vpack.c.b16 %v1969, %v1968
  %v2000 = vpack.c.b16 %v1971, %v1970
  %v2001 = vpack.c.b16 %v1973, %v1972
  %v2002 = vpack.c.b16 %v1975, %v1974
  %v2003 = vpack.c.b16 %v1977, %v1976
  %v2004 = vpack.c.b16 %v1979, %v1978
  %v2005 = vpack.c.b16 %v1981, %v1980
  %v2006 = vpack.c.b16 %v1983, %v1982
  %v2007 = vpack.c.b16 %v1985, %v1984
  %v2008 = vpack.c.b16 %v1987, %v1986
  %v2009 = vpack.c.b16 %v1989, %v1988
  %v2010 = vpack.c.b16 %v1991, %v1990
  %v2011 = vpack.c.b16 %v1993, %v1992
  %vm2030 = vcmask 261120
  %v2032 = vsel %vm2030, %v1434, 0
  %v2035 = vsel %vm2030, %v1437, 0
  %v2038 = vsel %vm2030, %v1440, 0
  %v2041 = vsel %vm2030, %v1443, 0
  %v2044 = vsel %vm2030, %v1446, 0
  %v2047 = vsel %vm2030, %v1449, 0
  %v2050 = vsel %vm2030, %v1452, 0
  %v2053 = vsel %vm2030, %v1455, 0
  %v2056 = vsel %vm2030, %v1458, 0
  %v2059 = vsel %vm2030, %v1461, 0
  %v2062 = vsel %vm2030, %v1464, 0
  %v2065 = vsel %vm2030, %v1467, 0
  %v2068 = vsel %vm2030, %v1470, 0
  %v2071 = vsel %vm2030, %v1473, 0
  %v2074 = vsel %vm2030, %v1476, 0
  %v2077 = vsel %vm2030, %v1479, 0
  %v2080 = vsel %vm2030, %v1482, 0
  %v2083 = vsel %vm2030, %v1485, 0
  %v2086 = vsel %vm2030, %v1488, 0
  %v2089 = vsel %vm2030, %v1491, 0
  %v2092 = vsel %vm2030, %v1494, 0
  %v2095 = vsel %vm2030, %v1497, 0
  %v2098 = vsel %vm2030, %v1500, 0
  %v2101 = vsel %vm2030, %v1503, 0
  %v2104 = vsel %vm2030, %v1506, 0
  %v2107 = vsel %vm2030, %v1509, 0
  %v2110 = vsel %vm2030, %v1512, 0
  %v2113 = vsel %vm2030, %v1515, 0
  %v2116 = vsel %vm2030, %v1518, 0
  %v2119 = vsel %vm2030, %v1521, 0
  %v2122 = vsel %vm2030, %v1524, 0
  %v2125 = vsel %vm2030, %v1527, 0
  %v2128 = vsel %vm2030, %v1530, 0
  %v2131 = vsel %vm2030, %v1533, 0
  %v2134 = vsel %vm2030, %v1536, 0
  %v2137 = vsel %vm2030, %v1539, 0
  %v2140 = vsel %vm2030, %v1542, 0
  %v2143 = vsel %vm2030, %v1545, 0
  %v2146 = vsel %vm2030, %v1548, 0
  %v2149 = vsel %vm2030, %v1551, 0
  %v2152 = vsel %vm2030, %v1554, 0
  %v2155 = vsel %vm2030, %v1557, 0
  %v2158 = vsel %vm2030, %v1560, 0
  %v2161 = vsel %vm2030, %v1563, 0
  %v2164 = vsel %vm2030, %v1566, 0
  %v2167 = vsel %vm2030, %v1569, 0
  %v2170 = vsel %vm2030, %v1572, 0
  %v2173 = vsel %vm2030, %v1575, 0
  %v2176 = vsel %vm2030, %v1578, 0
  %v2179 = vsel %vm2030, %v1581, 0
  %v2182 = vsel %vm2030, %v1584, 0
  %v2185 = vsel %vm2030, %v1587, 0
  %v2188 = vsel %vm2030, %v1590, 0
  %v2191 = vsel %vm2030, %v1593, 0
  %v2194 = vsel %vm2030, %v1596, 0
  %v2197 = vsel %vm2030, %v1599, 0
  %v2200 = vsel %vm2030, %v1602, 0
  %v2203 = vsel %vm2030, %v1605, 0
  %v2206 = vsel %vm2030, %v1608, 0
  %v2209 = vsel %vm2030, %v1611, 0
  %v2212 = vsel %vm2030, %v1614, 0
  %v2215 = vsel %vm2030, %v1617, 0
  %v2218 = vsel %vm2030, %v1620, 0
  %v2221 = vsel %vm2030, %v1623, 0
  %v2224 = vsel %vm2030, %v1626, 0
  %v2227 = vsel %vm2030, %v1629, 0
  %v2230 = vsel %vm2030, %v1632, 0
  %v2233 = vsel %vm2030, %v1635, 0
  %v2236 = vsel %vm2030, %v1638, 0
  %v2239 = vsel %vm2030, %v1641, 0
  %v2242 = vsel %vm2030, %v1644, 0
  %v2245 = vsel %vm2030, %v1647, 0
  %v2248 = vsel %vm2030, %v1650, 0
  %v2251 = vsel %vm2030, %v1653, 0
  %v2254 = vsel %vm2030, %v1656, 0
  %v2257 = vsel %vm2030, %v1659, 0
  %v2260 = vsel %vm2030, %v1662, 0
  %v2263 = vsel %vm2030, %v1665, 0
  %v2266 = vsel %vm2030, %v1668, 0
  %v2269 = vsel %vm2030, %v1671, 0
  %v2272 = vsel %vm2030, %v1674, 0
  %v2275 = vsel %vm2030, %v1677, 0
  %v2278 = vsel %vm2030, %v1680, 0
  %v2281 = vsel %vm2030, %v1683, 0
  %v2284 = vsel %vm2030, %v1686, 0
  %v2287 = vsel %vm2030, %v1689, 0
  %v2290 = vsel %vm2030, %v1692, 0
  %v2293 = vsel %vm2030, %v1695, 0
  %v2296 = vsel %vm2030, %v1698, 0
  %v2299 = vsel %vm2030, %v1701, 0
  %v2302 = vsel %vm2030, %v1704, 0
  %v2305 = vsel %vm2030, %v1707, 0
  %v2308 = vsel %vm2030, %v1710, 0
  %v2311 = vsel %vm2030, %v1713, 0
  %v2314 = vsel %vm2030, %v1716, 0
  %v2317 = vsel %vm2030, %v1719, 0
  %v2320 = vsel %vm2030, %v1722, 0
  %v2323 = vsel %vm2030, %v1725, 0
  %2325 = vmatprep.subr.bf16.mxu0 0
  %2326 = vmatpush1.bf16.msra.mxu0 %v1994
  %2327 = vmatprep.subr.bf16.mxu0 0
  %2328 = vmatpush1.bf16.msra.mxu0 %v1995
  %2329 = vmatprep.subr.bf16.mxu0 0
  %2330 = vmatpush1.bf16.msra.mxu0 %v1996
  %2331 = vmatprep.subr.bf16.mxu0 0
  %2332 = vmatpush1.bf16.msra.mxu0 %v1997
  %2333 = vmatprep.subr.bf16.mxu0 0
  %2334 = vmatpush1.bf16.msra.mxu0 %v1998
  %2335 = vmatprep.subr.bf16.mxu0 0
  %2336 = vmatpush1.bf16.msra.mxu0 %v1999
  %2337 = vmatprep.subr.bf16.mxu0 0
  %2338 = vmatpush1.bf16.msra.mxu0 %v2000
  %2339 = vmatprep.subr.bf16.mxu0 0
  %2340 = vmatpush1.bf16.msra.mxu0 %v2001
  %2341 = vmatprep.subr.bf16.mxu0 0
  %2342 = vmatpush1.bf16.msra.mxu0 %v2002
  %2343 = vmatprep.subr.bf16.mxu0 0
  %2344 = vmatpush1.bf16.msra.mxu0 %v2003
  %2345 = vmatprep.subr.bf16.mxu0 0
  %2346 = vmatpush1.bf16.msra.mxu0 %v2004
  %2347 = vmatprep.subr.bf16.mxu0 0
  %2348 = vmatpush1.bf16.msra.mxu0 %v2005
  %2349 = vmatprep.subr.bf16.mxu0 0
  %2350 = vmatpush1.bf16.msra.mxu0 %v2006
  %2351 = vmatprep.subr.bf16.mxu0 0
  %2352 = vmatpush1.bf16.msra.mxu0 %v2007
  %2353 = vmatprep.subr.bf16.mxu0 0
  %2354 = vmatpush1.bf16.msra.mxu0 %v2008
  %2355 = vmatprep.subr.bf16.mxu0 0
  %2356 = vmatpush1.bf16.msra.mxu0 %v2009
  %2357 = vmatprep.mubr.bf16.mxu0 %v1433
  %2358 = vmatmul.mubr.bf16.gmra.mrb[0].mxu0 %v1432
  %v2359 = vpop.f32.mrb[0].mxu0
  %v2360 = vadd.f32 %v450, %v2359
  %v2361 = vpop.f32.mrb[0].mxu0
  %v2362 = vpop.f32.mrb[0].mxu0
  %v2363 = vadd.f32 %v450, %v2362
  %v2364 = vpop.f32.mrb[0].mxu0
  %2365 = vmatprep.mubr.bf16.mxu0 %v1436
  %2366 = vmatmul.mubr.bf16.gmra.mrb[0].mxu0 %v1435
  %v2367 = vpop.f32.mrb[0].mxu0
  %v2368 = vadd.f32 %v450, %v2367
  %v2369 = vpop.f32.mrb[0].mxu0
  %v2370 = vpop.f32.mrb[0].mxu0
  %v2371 = vadd.f32 %v450, %v2370
  %v2372 = vpop.f32.mrb[0].mxu0
  %2373 = vmatprep.mubr.bf16.mxu0 %v1439
  %2374 = vmatmul.mubr.bf16.gmra.mrb[0].mxu0 %v1438
  %v2375 = vpop.f32.mrb[0].mxu0
  %v2376 = vadd.f32 %v450, %v2375
  %v2377 = vpop.f32.mrb[0].mxu0
  %v2378 = vpop.f32.mrb[0].mxu0
  %v2379 = vadd.f32 %v450, %v2378
  %v2380 = vpop.f32.mrb[0].mxu0
  %2381 = vmatprep.mubr.bf16.mxu0 %v1442
  %2382 = vmatmul.mubr.bf16.gmra.mrb[0].mxu0 %v1441
  %v2383 = vpop.f32.mrb[0].mxu0
  %v2384 = vadd.f32 %v450, %v2383
  %v2385 = vpop.f32.mrb[0].mxu0
  %v2386 = vpop.f32.mrb[0].mxu0
  %v2387 = vadd.f32 %v450, %v2386
  %v2388 = vpop.f32.mrb[0].mxu0
  %2389 = vmatprep.mubr.bf16.mxu0 %v1445
  %2390 = vmatmul.mubr.bf16.gmra.mrb[0].mxu0 %v1444
  %v2391 = vpop.f32.mrb[0].mxu0
  %v2392 = vadd.f32 %v450, %v2391
  %v2393 = vpop.f32.mrb[0].mxu0
  %v2394 = vpop.f32.mrb[0].mxu0
  %v2395 = vadd.f32 %v450, %v2394
  %v2396 = vpop.f32.mrb[0].mxu0
  %2397 = vmatprep.mubr.bf16.mxu0 %v1448
  %2398 = vmatmul.mubr.bf16.gmra.mrb[0].mxu0 %v1447
  %v2399 = vpop.f32.mrb[0].mxu0
  %v2400 = vadd.f32 %v450, %v2399
  %v2401 = vpop.f32.mrb[0].mxu0
  %v2402 = vpop.f32.mrb[0].mxu0
  %v2403 = vadd.f32 %v450, %v2402
  %v2404 = vpop.f32.mrb[0].mxu0
  %2405 = vmatprep.mubr.bf16.mxu0 %v1451
  %2406 = vmatmul.mubr.bf16.gmra.mrb[0].mxu0 %v1450
  %v2407 = vpop.f32.mrb[0].mxu0
  %v2408 = vadd.f32 %v450, %v2407
  %v2409 = vpop.f32.mrb[0].mxu0
  %v2410 = vpop.f32.mrb[0].mxu0
  %v2411 = vadd.f32 %v450, %v2410
  %v2412 = vpop.f32.mrb[0].mxu0
  %2413 = vmatprep.mubr.bf16.mxu0 %v1454
  %2414 = vmatmul.mubr.bf16.gmra.mrb[0].mxu0 %v1453
  %v2415 = vpop.f32.mrb[0].mxu0
  %v2416 = vadd.f32 %v450, %v2415
  %v2417 = vpop.f32.mrb[0].mxu0
  %v2418 = vpop.f32.mrb[0].mxu0
  %v2419 = vadd.f32 %v450, %v2418
  %v2420 = vpop.f32.mrb[0].mxu0
  %2421 = vmatprep.mubr.bf16.mxu0 %v1457
  %2422 = vmatmul.mubr.bf16.gmra.mrb[0].mxu0 %v1456
  %v2423 = vpop.f32.mrb[0].mxu0
  %v2424 = vadd.f32 %v450, %v2423
  %v2425 = vpop.f32.mrb[0].mxu0
  %v2426 = vpop.f32.mrb[0].mxu0
  %v2427 = vadd.f32 %v450, %v2426
  %v2428 = vpop.f32.mrb[0].mxu0
  %2429 = vmatprep.mubr.bf16.mxu0 %v1460
  %2430 = vmatmul.mubr.bf16.gmra.mrb[0].mxu0 %v1459
  %v2431 = vpop.f32.mrb[0].mxu0
  %v2432 = vadd.f32 %v450, %v2431
  %v2433 = vpop.f32.mrb[0].mxu0
  %v2434 = vpop.f32.mrb[0].mxu0
  %v2435 = vadd.f32 %v450, %v2434
  %v2436 = vpop.f32.mrb[0].mxu0
  %2437 = vmatprep.mubr.bf16.mxu0 %v1463
  %2438 = vmatmul.mubr.bf16.gmra.mrb[0].mxu0 %v1462
  %v2439 = vpop.f32.mrb[0].mxu0
  %v2440 = vadd.f32 %v450, %v2439
  %v2441 = vpop.f32.mrb[0].mxu0
  %v2442 = vpop.f32.mrb[0].mxu0
  %v2443 = vadd.f32 %v450, %v2442
  %v2444 = vpop.f32.mrb[0].mxu0
  %2445 = vmatprep.mubr.bf16.mxu0 %v1466
  %2446 = vmatmul.mubr.bf16.gmra.mrb[0].mxu0 %v1465
  %v2447 = vpop.f32.mrb[0].mxu0
  %v2448 = vadd.f32 %v450, %v2447
  %v2449 = vpop.f32.mrb[0].mxu0
  %v2450 = vpop.f32.mrb[0].mxu0
  %v2451 = vadd.f32 %v450, %v2450
  %v2452 = vpop.f32.mrb[0].mxu0
  %2453 = vmatprep.mubr.bf16.mxu0 %v1469
  %2454 = vmatmul.mubr.bf16.gmra.mrb[0].mxu0 %v1468
  %v2455 = vpop.f32.mrb[0].mxu0
  %v2456 = vadd.f32 %v450, %v2455
  %v2457 = vpop.f32.mrb[0].mxu0
  %v2458 = vpop.f32.mrb[0].mxu0
  %v2459 = vadd.f32 %v450, %v2458
  %v2460 = vpop.f32.mrb[0].mxu0
  %2461 = vmatprep.mubr.bf16.mxu0 %v1472
  %2462 = vmatmul.mubr.bf16.gmra.mrb[0].mxu0 %v1471
  %v2463 = vpop.f32.mrb[0].mxu0
  %v2464 = vadd.f32 %v450, %v2463
  %v2465 = vpop.f32.mrb[0].mxu0
  %v2466 = vpop.f32.mrb[0].mxu0
  %v2467 = vadd.f32 %v450, %v2466
  %v2468 = vpop.f32.mrb[0].mxu0
  %2469 = vmatprep.mubr.bf16.mxu0 %v1475
  %2470 = vmatmul.mubr.bf16.gmra.mrb[0].mxu0 %v1474
  %v2471 = vpop.f32.mrb[0].mxu0
  %v2472 = vadd.f32 %v450, %v2471
  %v2473 = vpop.f32.mrb[0].mxu0
  %v2474 = vpop.f32.mrb[0].mxu0
  %v2475 = vadd.f32 %v450, %v2474
  %v2476 = vpop.f32.mrb[0].mxu0
  %2477 = vmatprep.mubr.bf16.mxu0 %v1478
  %2478 = vmatmul.mubr.bf16.gmra.mrb[0].mxu0 %v1477
  %v2479 = vpop.f32.mrb[0].mxu0
  %v2480 = vadd.f32 %v450, %v2479
  %v2481 = vpop.f32.mrb[0].mxu0
  %v2482 = vpop.f32.mrb[0].mxu0
  %v2483 = vadd.f32 %v450, %v2482
  %v2484 = vpop.f32.mrb[0].mxu0
  %2485 = vmatprep.mubr.bf16.mxu0 %v1481
  %2486 = vmatmul.mubr.bf16.gmra.mrb[0].mxu0 %v1480
  %v2487 = vpop.f32.mrb[0].mxu0
  %v2488 = vadd.f32 %v450, %v2487
  %v2489 = vpop.f32.mrb[0].mxu0
  %v2490 = vpop.f32.mrb[0].mxu0
  %v2491 = vadd.f32 %v450, %v2490
  %v2492 = vpop.f32.mrb[0].mxu0
  %2493 = vmatprep.mubr.bf16.mxu0 %v1484
  %2494 = vmatmul.mubr.bf16.gmra.mrb[0].mxu0 %v1483
  %v2495 = vpop.f32.mrb[0].mxu0
  %v2496 = vadd.f32 %v450, %v2495
  %v2497 = vpop.f32.mrb[0].mxu0
  %v2498 = vpop.f32.mrb[0].mxu0
  %v2499 = vadd.f32 %v450, %v2498
  %v2500 = vpop.f32.mrb[0].mxu0
  %2501 = vmatprep.mubr.bf16.mxu0 %v1487
  %2502 = vmatmul.mubr.bf16.gmra.mrb[0].mxu0 %v1486
  %v2503 = vpop.f32.mrb[0].mxu0
  %v2504 = vadd.f32 %v450, %v2503
  %v2505 = vpop.f32.mrb[0].mxu0
  %v2506 = vpop.f32.mrb[0].mxu0
  %v2507 = vadd.f32 %v450, %v2506
  %v2508 = vpop.f32.mrb[0].mxu0
  %2509 = vmatprep.mubr.bf16.mxu0 %v1490
  %2510 = vmatmul.mubr.bf16.gmra.mrb[0].mxu0 %v1489
  %v2511 = vpop.f32.mrb[0].mxu0
  %v2512 = vadd.f32 %v450, %v2511
  %v2513 = vpop.f32.mrb[0].mxu0
  %v2514 = vpop.f32.mrb[0].mxu0
  %v2515 = vadd.f32 %v450, %v2514
  %v2516 = vpop.f32.mrb[0].mxu0
  %2517 = vmatprep.mubr.bf16.mxu0 %v1493
  %2518 = vmatmul.mubr.bf16.gmra.mrb[0].mxu0 %v1492
  %v2519 = vpop.f32.mrb[0].mxu0
  %v2520 = vadd.f32 %v450, %v2519
  %v2521 = vpop.f32.mrb[0].mxu0
  %v2522 = vpop.f32.mrb[0].mxu0
  %v2523 = vadd.f32 %v450, %v2522
  %v2524 = vpop.f32.mrb[0].mxu0
  %2525 = vmatprep.mubr.bf16.mxu0 %v1496
  %2526 = vmatmul.mubr.bf16.gmra.mrb[0].mxu0 %v1495
  %v2527 = vpop.f32.mrb[0].mxu0
  %v2528 = vadd.f32 %v450, %v2527
  %v2529 = vpop.f32.mrb[0].mxu0
  %v2530 = vpop.f32.mrb[0].mxu0
  %v2531 = vadd.f32 %v450, %v2530
  %v2532 = vpop.f32.mrb[0].mxu0
  %2533 = vmatprep.mubr.bf16.mxu0 %v1499
  %2534 = vmatmul.mubr.bf16.gmra.mrb[0].mxu0 %v1498
  %v2535 = vpop.f32.mrb[0].mxu0
  %v2536 = vadd.f32 %v450, %v2535
  %v2537 = vpop.f32.mrb[0].mxu0
  %v2538 = vpop.f32.mrb[0].mxu0
  %v2539 = vadd.f32 %v450, %v2538
  %v2540 = vpop.f32.mrb[0].mxu0
  %2541 = vmatprep.mubr.bf16.mxu0 %v1502
  %2542 = vmatmul.mubr.bf16.gmra.mrb[0].mxu0 %v1501
  %v2543 = vpop.f32.mrb[0].mxu0
  %v2544 = vadd.f32 %v450, %v2543
  %v2545 = vpop.f32.mrb[0].mxu0
  %v2546 = vpop.f32.mrb[0].mxu0
  %v2547 = vadd.f32 %v450, %v2546
  %v2548 = vpop.f32.mrb[0].mxu0
  %2549 = vmatprep.mubr.bf16.mxu0 %v1505
  %2550 = vmatmul.mubr.bf16.gmra.mrb[0].mxu0 %v1504
  %v2551 = vpop.f32.mrb[0].mxu0
  %v2552 = vadd.f32 %v450, %v2551
  %v2553 = vpop.f32.mrb[0].mxu0
  %v2554 = vpop.f32.mrb[0].mxu0
  %v2555 = vadd.f32 %v450, %v2554
  %v2556 = vpop.f32.mrb[0].mxu0
  %2557 = vmatprep.mubr.bf16.mxu0 %v1508
  %2558 = vmatmul.mubr.bf16.gmra.mrb[0].mxu0 %v1507
  %v2559 = vpop.f32.mrb[0].mxu0
  %v2560 = vadd.f32 %v450, %v2559
  %v2561 = vpop.f32.mrb[0].mxu0
  %v2562 = vpop.f32.mrb[0].mxu0
  %v2563 = vadd.f32 %v450, %v2562
  %v2564 = vpop.f32.mrb[0].mxu0
  %2565 = vmatprep.mubr.bf16.mxu0 %v1511
  %2566 = vmatmul.mubr.bf16.gmra.mrb[0].mxu0 %v1510
  %v2567 = vpop.f32.mrb[0].mxu0
  %v2568 = vadd.f32 %v450, %v2567
  %v2569 = vpop.f32.mrb[0].mxu0
  %v2570 = vpop.f32.mrb[0].mxu0
  %v2571 = vadd.f32 %v450, %v2570
  %v2572 = vpop.f32.mrb[0].mxu0
  %2573 = vmatprep.mubr.bf16.mxu0 %v1514
  %2574 = vmatmul.mubr.bf16.gmra.mrb[0].mxu0 %v1513
  %v2575 = vpop.f32.mrb[0].mxu0
  %v2576 = vadd.f32 %v450, %v2575
  %v2577 = vpop.f32.mrb[0].mxu0
  %v2578 = vpop.f32.mrb[0].mxu0
  %v2579 = vadd.f32 %v450, %v2578
  %v2580 = vpop.f32.mrb[0].mxu0
  %2581 = vmatprep.mubr.bf16.mxu0 %v1517
  %2582 = vmatmul.mubr.bf16.gmra.mrb[0].mxu0 %v1516
  %v2583 = vpop.f32.mrb[0].mxu0
  %v2584 = vadd.f32 %v450, %v2583
  %v2585 = vpop.f32.mrb[0].mxu0
  %v2586 = vpop.f32.mrb[0].mxu0
  %v2587 = vadd.f32 %v450, %v2586
  %v2588 = vpop.f32.mrb[0].mxu0
  %2589 = vmatprep.mubr.bf16.mxu0 %v1520
  %2590 = vmatmul.mubr.bf16.gmra.mrb[0].mxu0 %v1519
  %v2591 = vpop.f32.mrb[0].mxu0
  %v2592 = vadd.f32 %v450, %v2591
  %v2593 = vpop.f32.mrb[0].mxu0
  %v2594 = vpop.f32.mrb[0].mxu0
  %v2595 = vadd.f32 %v450, %v2594
  %v2596 = vpop.f32.mrb[0].mxu0
  %2597 = vmatprep.mubr.bf16.mxu0 %v1523
  %2598 = vmatmul.mubr.bf16.gmra.mrb[0].mxu0 %v1522
  %v2599 = vpop.f32.mrb[0].mxu0
  %v2600 = vadd.f32 %v450, %v2599
  %v2601 = vpop.f32.mrb[0].mxu0
  %v2602 = vpop.f32.mrb[0].mxu0
  %v2603 = vadd.f32 %v450, %v2602
  %v2604 = vpop.f32.mrb[0].mxu0
  %2605 = vmatprep.mubr.bf16.mxu0 %v1526
  %2606 = vmatmul.mubr.bf16.gmra.mrb[0].mxu0 %v1525
  %v2607 = vpop.f32.mrb[0].mxu0
  %v2608 = vadd.f32 %v450, %v2607
  %v2609 = vpop.f32.mrb[0].mxu0
  %v2610 = vpop.f32.mrb[0].mxu0
  %v2611 = vadd.f32 %v450, %v2610
  %v2612 = vpop.f32.mrb[0].mxu0
  %2613 = vmatprep.mubr.bf16.mxu0 %v1529
  %2614 = vmatmul.mubr.bf16.gmra.mrb[0].mxu0 %v1528
  %v2615 = vpop.f32.mrb[0].mxu0
  %v2616 = vadd.f32 %v450, %v2615
  %v2617 = vpop.f32.mrb[0].mxu0
  %v2618 = vpop.f32.mrb[0].mxu0
  %v2619 = vadd.f32 %v450, %v2618
  %v2620 = vpop.f32.mrb[0].mxu0
  %2621 = vmatprep.mubr.bf16.mxu0 %v1532
  %2622 = vmatmul.mubr.bf16.gmra.mrb[0].mxu0 %v1531
  %v2623 = vpop.f32.mrb[0].mxu0
  %v2624 = vadd.f32 %v450, %v2623
  %v2625 = vpop.f32.mrb[0].mxu0
  %v2626 = vpop.f32.mrb[0].mxu0
  %v2627 = vadd.f32 %v450, %v2626
  %v2628 = vpop.f32.mrb[0].mxu0
  %2629 = vmatprep.mubr.bf16.mxu0 %v1535
  %2630 = vmatmul.mubr.bf16.gmra.mrb[0].mxu0 %v1534
  %v2631 = vpop.f32.mrb[0].mxu0
  %v2632 = vadd.f32 %v450, %v2631
  %v2633 = vpop.f32.mrb[0].mxu0
  %v2634 = vpop.f32.mrb[0].mxu0
  %v2635 = vadd.f32 %v450, %v2634
  %v2636 = vpop.f32.mrb[0].mxu0
  %2637 = vmatprep.mubr.bf16.mxu0 %v1538
  %2638 = vmatmul.mubr.bf16.gmra.mrb[0].mxu0 %v1537
  %v2639 = vpop.f32.mrb[0].mxu0
  %v2640 = vadd.f32 %v450, %v2639
  %v2641 = vpop.f32.mrb[0].mxu0
  %v2642 = vpop.f32.mrb[0].mxu0
  %v2643 = vadd.f32 %v450, %v2642
  %v2644 = vpop.f32.mrb[0].mxu0
  %2645 = vmatprep.mubr.bf16.mxu0 %v1541
  %2646 = vmatmul.mubr.bf16.gmra.mrb[0].mxu0 %v1540
  %v2647 = vpop.f32.mrb[0].mxu0
  %v2648 = vadd.f32 %v450, %v2647
  %v2649 = vpop.f32.mrb[0].mxu0
  %v2650 = vpop.f32.mrb[0].mxu0
  %v2651 = vadd.f32 %v450, %v2650
  %v2652 = vpop.f32.mrb[0].mxu0
  %2653 = vmatprep.mubr.bf16.mxu0 %v1544
  %2654 = vmatmul.mubr.bf16.gmra.mrb[0].mxu0 %v1543
  %v2655 = vpop.f32.mrb[0].mxu0
  %v2656 = vadd.f32 %v450, %v2655
  %v2657 = vpop.f32.mrb[0].mxu0
  %v2658 = vpop.f32.mrb[0].mxu0
  %v2659 = vadd.f32 %v450, %v2658
  %v2660 = vpop.f32.mrb[0].mxu0
  %2661 = vmatprep.mubr.bf16.mxu0 %v1547
  %2662 = vmatmul.mubr.bf16.gmra.mrb[0].mxu0 %v1546
  %v2663 = vpop.f32.mrb[0].mxu0
  %v2664 = vadd.f32 %v450, %v2663
  %v2665 = vpop.f32.mrb[0].mxu0
  %v2666 = vpop.f32.mrb[0].mxu0
  %v2667 = vadd.f32 %v450, %v2666
  %v2668 = vpop.f32.mrb[0].mxu0
  %2669 = vmatprep.mubr.bf16.mxu0 %v1550
  %2670 = vmatmul.mubr.bf16.gmra.mrb[0].mxu0 %v1549
  %v2671 = vpop.f32.mrb[0].mxu0
  %v2672 = vadd.f32 %v450, %v2671
  %v2673 = vpop.f32.mrb[0].mxu0
  %v2674 = vpop.f32.mrb[0].mxu0
  %v2675 = vadd.f32 %v450, %v2674
  %v2676 = vpop.f32.mrb[0].mxu0
  %2677 = vmatprep.mubr.bf16.mxu0 %v1553
  %2678 = vmatmul.mubr.bf16.gmra.mrb[0].mxu0 %v1552
  %v2679 = vpop.f32.mrb[0].mxu0
  %v2680 = vadd.f32 %v450, %v2679
  %v2681 = vpop.f32.mrb[0].mxu0
  %v2682 = vpop.f32.mrb[0].mxu0
  %v2683 = vadd.f32 %v450, %v2682
  %v2684 = vpop.f32.mrb[0].mxu0
  %2685 = vmatprep.mubr.bf16.mxu0 %v1556
  %2686 = vmatmul.mubr.bf16.gmra.mrb[0].mxu0 %v1555
  %v2687 = vpop.f32.mrb[0].mxu0
  %v2688 = vadd.f32 %v450, %v2687
  %v2689 = vpop.f32.mrb[0].mxu0
  %v2690 = vpop.f32.mrb[0].mxu0
  %v2691 = vadd.f32 %v450, %v2690
  %v2692 = vpop.f32.mrb[0].mxu0
  %2693 = vmatprep.mubr.bf16.mxu0 %v1559
  %2694 = vmatmul.mubr.bf16.gmra.mrb[0].mxu0 %v1558
  %v2695 = vpop.f32.mrb[0].mxu0
  %v2696 = vadd.f32 %v450, %v2695
  %v2697 = vpop.f32.mrb[0].mxu0
  %v2698 = vpop.f32.mrb[0].mxu0
  %v2699 = vadd.f32 %v450, %v2698
  %v2700 = vpop.f32.mrb[0].mxu0
  %2701 = vmatprep.mubr.bf16.mxu0 %v1562
  %2702 = vmatmul.mubr.bf16.gmra.mrb[0].mxu0 %v1561
  %v2703 = vpop.f32.mrb[0].mxu0
  %v2704 = vadd.f32 %v450, %v2703
  %v2705 = vpop.f32.mrb[0].mxu0
  %v2706 = vpop.f32.mrb[0].mxu0
  %v2707 = vadd.f32 %v450, %v2706
  %v2708 = vpop.f32.mrb[0].mxu0
  %2709 = vmatprep.mubr.bf16.mxu0 %v1565
  %2710 = vmatmul.mubr.bf16.gmra.mrb[0].mxu0 %v1564
  %v2711 = vpop.f32.mrb[0].mxu0
  %v2712 = vadd.f32 %v450, %v2711
  %v2713 = vpop.f32.mrb[0].mxu0
  %v2714 = vpop.f32.mrb[0].mxu0
  %v2715 = vadd.f32 %v450, %v2714
  %v2716 = vpop.f32.mrb[0].mxu0
  %2717 = vmatprep.mubr.bf16.mxu0 %v1568
  %2718 = vmatmul.mubr.bf16.gmra.mrb[0].mxu0 %v1567
  %v2719 = vpop.f32.mrb[0].mxu0
  %v2720 = vadd.f32 %v450, %v2719
  %v2721 = vpop.f32.mrb[0].mxu0
  %v2722 = vpop.f32.mrb[0].mxu0
  %v2723 = vadd.f32 %v450, %v2722
  %v2724 = vpop.f32.mrb[0].mxu0
  %2725 = vmatprep.mubr.bf16.mxu0 %v1571
  %2726 = vmatmul.mubr.bf16.gmra.mrb[0].mxu0 %v1570
  %v2727 = vpop.f32.mrb[0].mxu0
  %v2728 = vadd.f32 %v450, %v2727
  %v2729 = vpop.f32.mrb[0].mxu0
  %v2730 = vpop.f32.mrb[0].mxu0
  %v2731 = vadd.f32 %v450, %v2730
  %v2732 = vpop.f32.mrb[0].mxu0
  %2733 = vmatprep.mubr.bf16.mxu0 %v1574
  %2734 = vmatmul.mubr.bf16.gmra.mrb[0].mxu0 %v1573
  %v2735 = vpop.f32.mrb[0].mxu0
  %v2736 = vadd.f32 %v450, %v2735
  %v2737 = vpop.f32.mrb[0].mxu0
  %v2738 = vpop.f32.mrb[0].mxu0
  %v2739 = vadd.f32 %v450, %v2738
  %v2740 = vpop.f32.mrb[0].mxu0
  %2741 = vmatprep.mubr.bf16.mxu0 %v1577
  %2742 = vmatmul.mubr.bf16.gmra.mrb[0].mxu0 %v1576
  %v2743 = vpop.f32.mrb[0].mxu0
  %v2744 = vadd.f32 %v450, %v2743
  %v2745 = vpop.f32.mrb[0].mxu0
  %v2746 = vpop.f32.mrb[0].mxu0
  %v2747 = vadd.f32 %v450, %v2746
  %v2748 = vpop.f32.mrb[0].mxu0
  %2749 = vmatprep.mubr.bf16.mxu0 %v1580
  %2750 = vmatmul.mubr.bf16.gmra.mrb[0].mxu0 %v1579
  %v2751 = vpop.f32.mrb[0].mxu0
  %v2752 = vadd.f32 %v450, %v2751
  %v2753 = vpop.f32.mrb[0].mxu0
  %v2754 = vpop.f32.mrb[0].mxu0
  %v2755 = vadd.f32 %v450, %v2754
  %v2756 = vpop.f32.mrb[0].mxu0
  %2757 = vmatprep.mubr.bf16.mxu0 %v1583
  %2758 = vmatmul.mubr.bf16.gmra.mrb[0].mxu0 %v1582
  %v2759 = vpop.f32.mrb[0].mxu0
  %v2760 = vadd.f32 %v450, %v2759
  %v2761 = vpop.f32.mrb[0].mxu0
  %v2762 = vpop.f32.mrb[0].mxu0
  %v2763 = vadd.f32 %v450, %v2762
  %v2764 = vpop.f32.mrb[0].mxu0
  %2765 = vmatprep.mubr.bf16.mxu0 %v1586
  %2766 = vmatmul.mubr.bf16.gmra.mrb[0].mxu0 %v1585
  %v2767 = vpop.f32.mrb[0].mxu0
  %v2768 = vadd.f32 %v450, %v2767
  %v2769 = vpop.f32.mrb[0].mxu0
  %v2770 = vpop.f32.mrb[0].mxu0
  %v2771 = vadd.f32 %v450, %v2770
  %v2772 = vpop.f32.mrb[0].mxu0
  %2773 = vmatprep.mubr.bf16.mxu0 %v1589
  %2774 = vmatmul.mubr.bf16.gmra.mrb[0].mxu0 %v1588
  %v2775 = vpop.f32.mrb[0].mxu0
  %v2776 = vadd.f32 %v450, %v2775
  %v2777 = vpop.f32.mrb[0].mxu0
  %v2778 = vpop.f32.mrb[0].mxu0
  %v2779 = vadd.f32 %v450, %v2778
  %v2780 = vpop.f32.mrb[0].mxu0
  %2781 = vmatprep.mubr.bf16.mxu0 %v1592
  %2782 = vmatmul.mubr.bf16.gmra.mrb[0].mxu0 %v1591
  %v2783 = vpop.f32.mrb[0].mxu0
  %v2784 = vadd.f32 %v450, %v2783
  %v2785 = vpop.f32.mrb[0].mxu0
  %v2786 = vpop.f32.mrb[0].mxu0
  %v2787 = vadd.f32 %v450, %v2786
  %v2788 = vpop.f32.mrb[0].mxu0
  %2789 = vmatprep.mubr.bf16.mxu0 %v1595
  %2790 = vmatmul.mubr.bf16.gmra.mrb[0].mxu0 %v1594
  %v2791 = vpop.f32.mrb[0].mxu0
  %v2792 = vadd.f32 %v450, %v2791
  %v2793 = vpop.f32.mrb[0].mxu0
  %v2794 = vpop.f32.mrb[0].mxu0
  %v2795 = vadd.f32 %v450, %v2794
  %v2796 = vpop.f32.mrb[0].mxu0
  %2797 = vmatprep.mubr.bf16.mxu0 %v1598
  %2798 = vmatmul.mubr.bf16.gmra.mrb[0].mxu0 %v1597
  %v2799 = vpop.f32.mrb[0].mxu0
  %v2800 = vadd.f32 %v450, %v2799
  %v2801 = vpop.f32.mrb[0].mxu0
  %v2802 = vpop.f32.mrb[0].mxu0
  %v2803 = vadd.f32 %v450, %v2802
  %v2804 = vpop.f32.mrb[0].mxu0
  %2805 = vmatprep.mubr.bf16.mxu0 %v1601
  %2806 = vmatmul.mubr.bf16.gmra.mrb[0].mxu0 %v1600
  %v2807 = vpop.f32.mrb[0].mxu0
  %v2808 = vadd.f32 %v450, %v2807
  %v2809 = vpop.f32.mrb[0].mxu0
  %v2810 = vpop.f32.mrb[0].mxu0
  %v2811 = vadd.f32 %v450, %v2810
  %v2812 = vpop.f32.mrb[0].mxu0
  %2813 = vmatprep.mubr.bf16.mxu0 %v1604
  %2814 = vmatmul.mubr.bf16.gmra.mrb[0].mxu0 %v1603
  %v2815 = vpop.f32.mrb[0].mxu0
  %v2816 = vadd.f32 %v450, %v2815
  %v2817 = vpop.f32.mrb[0].mxu0
  %v2818 = vpop.f32.mrb[0].mxu0
  %v2819 = vadd.f32 %v450, %v2818
  %v2820 = vpop.f32.mrb[0].mxu0
  %2821 = vmatprep.mubr.bf16.mxu0 %v1607
  %2822 = vmatmul.mubr.bf16.gmra.mrb[0].mxu0 %v1606
  %v2823 = vpop.f32.mrb[0].mxu0
  %v2824 = vadd.f32 %v450, %v2823
  %v2825 = vpop.f32.mrb[0].mxu0
  %v2826 = vpop.f32.mrb[0].mxu0
  %v2827 = vadd.f32 %v450, %v2826
  %v2828 = vpop.f32.mrb[0].mxu0
  %2829 = vmatprep.mubr.bf16.mxu0 %v1610
  %2830 = vmatmul.mubr.bf16.gmra.mrb[0].mxu0 %v1609
  %v2831 = vpop.f32.mrb[0].mxu0
  %v2832 = vadd.f32 %v450, %v2831
  %v2833 = vpop.f32.mrb[0].mxu0
  %v2834 = vpop.f32.mrb[0].mxu0
  %v2835 = vadd.f32 %v450, %v2834
  %v2836 = vpop.f32.mrb[0].mxu0
  %2837 = vmatprep.mubr.bf16.mxu0 %v1613
  %2838 = vmatmul.mubr.bf16.gmra.mrb[0].mxu0 %v1612
  %v2839 = vpop.f32.mrb[0].mxu0
  %v2840 = vadd.f32 %v450, %v2839
  %v2841 = vpop.f32.mrb[0].mxu0
  %v2842 = vpop.f32.mrb[0].mxu0
  %v2843 = vadd.f32 %v450, %v2842
  %v2844 = vpop.f32.mrb[0].mxu0
  %2845 = vmatprep.mubr.bf16.mxu0 %v1616
  %2846 = vmatmul.mubr.bf16.gmra.mrb[0].mxu0 %v1615
  %v2847 = vpop.f32.mrb[0].mxu0
  %v2848 = vadd.f32 %v450, %v2847
  %v2849 = vpop.f32.mrb[0].mxu0
  %v2850 = vpop.f32.mrb[0].mxu0
  %v2851 = vadd.f32 %v450, %v2850
  %v2852 = vpop.f32.mrb[0].mxu0
  %2853 = vmatprep.mubr.bf16.mxu0 %v1619
  %2854 = vmatmul.mubr.bf16.gmra.mrb[0].mxu0 %v1618
  %v2855 = vpop.f32.mrb[0].mxu0
  %v2856 = vadd.f32 %v450, %v2855
  %v2857 = vpop.f32.mrb[0].mxu0
  %v2858 = vpop.f32.mrb[0].mxu0
  %v2859 = vadd.f32 %v450, %v2858
  %v2860 = vpop.f32.mrb[0].mxu0
  %2861 = vmatprep.mubr.bf16.mxu0 %v1622
  %2862 = vmatmul.mubr.bf16.gmra.mrb[0].mxu0 %v1621
  %v2863 = vpop.f32.mrb[0].mxu0
  %v2864 = vadd.f32 %v450, %v2863
  %v2865 = vpop.f32.mrb[0].mxu0
  %v2866 = vpop.f32.mrb[0].mxu0
  %v2867 = vadd.f32 %v450, %v2866
  %v2868 = vpop.f32.mrb[0].mxu0
  %2869 = vmatprep.mubr.bf16.mxu0 %v1625
  %2870 = vmatmul.mubr.bf16.gmra.mrb[0].mxu0 %v1624
  %v2871 = vpop.f32.mrb[0].mxu0
  %v2872 = vadd.f32 %v450, %v2871
  %v2873 = vpop.f32.mrb[0].mxu0
  %v2874 = vpop.f32.mrb[0].mxu0
  %v2875 = vadd.f32 %v450, %v2874
  %v2876 = vpop.f32.mrb[0].mxu0
  %2877 = vmatprep.mubr.bf16.mxu0 %v1628
  %2878 = vmatmul.mubr.bf16.gmra.mrb[0].mxu0 %v1627
  %v2879 = vpop.f32.mrb[0].mxu0
  %v2880 = vadd.f32 %v450, %v2879
  %v2881 = vpop.f32.mrb[0].mxu0
  %v2882 = vpop.f32.mrb[0].mxu0
  %v2883 = vadd.f32 %v450, %v2882
  %v2884 = vpop.f32.mrb[0].mxu0
  %2885 = vmatprep.mubr.bf16.mxu0 %v1631
  %2886 = vmatmul.mubr.bf16.gmra.mrb[0].mxu0 %v1630
  %v2887 = vpop.f32.mrb[0].mxu0
  %v2888 = vadd.f32 %v450, %v2887
  %v2889 = vpop.f32.mrb[0].mxu0
  %v2890 = vpop.f32.mrb[0].mxu0
  %v2891 = vadd.f32 %v450, %v2890
  %v2892 = vpop.f32.mrb[0].mxu0
  %2893 = vmatprep.mubr.bf16.mxu0 %v1634
  %2894 = vmatmul.mubr.bf16.gmra.mrb[0].mxu0 %v1633
  %v2895 = vpop.f32.mrb[0].mxu0
  %v2896 = vadd.f32 %v450, %v2895
  %v2897 = vpop.f32.mrb[0].mxu0
  %v2898 = vpop.f32.mrb[0].mxu0
  %v2899 = vadd.f32 %v450, %v2898
  %v2900 = vpop.f32.mrb[0].mxu0
  %2901 = vmatprep.mubr.bf16.mxu0 %v1637
  %2902 = vmatmul.mubr.bf16.gmra.mrb[0].mxu0 %v1636
  %v2903 = vpop.f32.mrb[0].mxu0
  %v2904 = vadd.f32 %v450, %v2903
  %v2905 = vpop.f32.mrb[0].mxu0
  %v2906 = vpop.f32.mrb[0].mxu0
  %v2907 = vadd.f32 %v450, %v2906
  %v2908 = vpop.f32.mrb[0].mxu0
  %2909 = vmatprep.mubr.bf16.mxu0 %v1640
  %2910 = vmatmul.mubr.bf16.gmra.mrb[0].mxu0 %v1639
  %v2911 = vpop.f32.mrb[0].mxu0
  %v2912 = vadd.f32 %v450, %v2911
  %v2913 = vpop.f32.mrb[0].mxu0
  %v2914 = vpop.f32.mrb[0].mxu0
  %v2915 = vadd.f32 %v450, %v2914
  %v2916 = vpop.f32.mrb[0].mxu0
  %2917 = vmatprep.mubr.bf16.mxu0 %v1643
  %2918 = vmatmul.mubr.bf16.gmra.mrb[0].mxu0 %v1642
  %v2919 = vpop.f32.mrb[0].mxu0
  %v2920 = vadd.f32 %v450, %v2919
  %v2921 = vpop.f32.mrb[0].mxu0
  %v2922 = vpop.f32.mrb[0].mxu0
  %v2923 = vadd.f32 %v450, %v2922
  %v2924 = vpop.f32.mrb[0].mxu0
  %2925 = vmatprep.mubr.bf16.mxu0 %v1646
  %2926 = vmatmul.mubr.bf16.gmra.mrb[0].mxu0 %v1645
  %v2927 = vpop.f32.mrb[0].mxu0
  %v2928 = vadd.f32 %v450, %v2927
  %v2929 = vpop.f32.mrb[0].mxu0
  %v2930 = vpop.f32.mrb[0].mxu0
  %v2931 = vadd.f32 %v450, %v2930
  %v2932 = vpop.f32.mrb[0].mxu0
  %2933 = vmatprep.mubr.bf16.mxu0 %v1649
  %2934 = vmatmul.mubr.bf16.gmra.mrb[0].mxu0 %v1648
  %v2935 = vpop.f32.mrb[0].mxu0
  %v2936 = vadd.f32 %v450, %v2935
  %v2937 = vpop.f32.mrb[0].mxu0
  %v2938 = vpop.f32.mrb[0].mxu0
  %v2939 = vadd.f32 %v450, %v2938
  %v2940 = vpop.f32.mrb[0].mxu0
  %2941 = vmatprep.mubr.bf16.mxu0 %v1652
  %2942 = vmatmul.mubr.bf16.gmra.mrb[0].mxu0 %v1651
  %v2943 = vpop.f32.mrb[0].mxu0
  %v2944 = vadd.f32 %v450, %v2943
  %v2945 = vpop.f32.mrb[0].mxu0
  %v2946 = vpop.f32.mrb[0].mxu0
  %v2947 = vadd.f32 %v450, %v2946
  %v2948 = vpop.f32.mrb[0].mxu0
  %2949 = vmatprep.mubr.bf16.mxu0 %v1655
  %2950 = vmatmul.mubr.bf16.gmra.mrb[0].mxu0 %v1654
  %v2951 = vpop.f32.mrb[0].mxu0
  %v2952 = vadd.f32 %v450, %v2951
  %v2953 = vpop.f32.mrb[0].mxu0
  %v2954 = vpop.f32.mrb[0].mxu0
  %v2955 = vadd.f32 %v450, %v2954
  %v2956 = vpop.f32.mrb[0].mxu0
  %2957 = vmatprep.mubr.bf16.mxu0 %v1658
  %2958 = vmatmul.mubr.bf16.gmra.mrb[0].mxu0 %v1657
  %v2959 = vpop.f32.mrb[0].mxu0
  %v2960 = vadd.f32 %v450, %v2959
  %v2961 = vpop.f32.mrb[0].mxu0
  %v2962 = vpop.f32.mrb[0].mxu0
  %v2963 = vadd.f32 %v450, %v2962
  %v2964 = vpop.f32.mrb[0].mxu0
  %2965 = vmatprep.mubr.bf16.mxu0 %v1661
  %2966 = vmatmul.mubr.bf16.gmra.mrb[0].mxu0 %v1660
  %v2967 = vpop.f32.mrb[0].mxu0
  %v2968 = vadd.f32 %v450, %v2967
  %v2969 = vpop.f32.mrb[0].mxu0
  %v2970 = vpop.f32.mrb[0].mxu0
  %v2971 = vadd.f32 %v450, %v2970
  %v2972 = vpop.f32.mrb[0].mxu0
  %2973 = vmatprep.mubr.bf16.mxu0 %v1664
  %2974 = vmatmul.mubr.bf16.gmra.mrb[0].mxu0 %v1663
  %v2975 = vpop.f32.mrb[0].mxu0
  %v2976 = vadd.f32 %v450, %v2975
  %v2977 = vpop.f32.mrb[0].mxu0
  %v2978 = vpop.f32.mrb[0].mxu0
  %v2979 = vadd.f32 %v450, %v2978
  %v2980 = vpop.f32.mrb[0].mxu0
  %2981 = vmatprep.mubr.bf16.mxu0 %v1667
  %2982 = vmatmul.mubr.bf16.gmra.mrb[0].mxu0 %v1666
  %v2983 = vpop.f32.mrb[0].mxu0
  %v2984 = vadd.f32 %v450, %v2983
  %v2985 = vpop.f32.mrb[0].mxu0
  %v2986 = vpop.f32.mrb[0].mxu0
  %v2987 = vadd.f32 %v450, %v2986
  %v2988 = vpop.f32.mrb[0].mxu0
  %2989 = vmatprep.mubr.bf16.mxu0 %v1670
  %2990 = vmatmul.mubr.bf16.gmra.mrb[0].mxu0 %v1669
  %v2991 = vpop.f32.mrb[0].mxu0
  %v2992 = vadd.f32 %v450, %v2991
  %v2993 = vpop.f32.mrb[0].mxu0
  %v2994 = vpop.f32.mrb[0].mxu0
  %v2995 = vadd.f32 %v450, %v2994
  %v2996 = vpop.f32.mrb[0].mxu0
  %2997 = vmatprep.mubr.bf16.mxu0 %v1673
  %2998 = vmatmul.mubr.bf16.gmra.mrb[0].mxu0 %v1672
  %v2999 = vpop.f32.mrb[0].mxu0
  %v3000 = vadd.f32 %v450, %v2999
  %v3001 = vpop.f32.mrb[0].mxu0
  %v3002 = vpop.f32.mrb[0].mxu0
  %v3003 = vadd.f32 %v450, %v3002
  %v3004 = vpop.f32.mrb[0].mxu0
  %3005 = vmatprep.mubr.bf16.mxu0 %v1676
  %3006 = vmatmul.mubr.bf16.gmra.mrb[0].mxu0 %v1675
  %v3007 = vpop.f32.mrb[0].mxu0
  %v3008 = vadd.f32 %v450, %v3007
  %v3009 = vpop.f32.mrb[0].mxu0
  %v3010 = vpop.f32.mrb[0].mxu0
  %v3011 = vadd.f32 %v450, %v3010
  %v3012 = vpop.f32.mrb[0].mxu0
  %3013 = vmatprep.mubr.bf16.mxu0 %v1679
  %3014 = vmatmul.mubr.bf16.gmra.mrb[0].mxu0 %v1678
  %v3015 = vpop.f32.mrb[0].mxu0
  %v3016 = vadd.f32 %v450, %v3015
  %v3017 = vpop.f32.mrb[0].mxu0
  %v3018 = vpop.f32.mrb[0].mxu0
  %v3019 = vadd.f32 %v450, %v3018
  %v3020 = vpop.f32.mrb[0].mxu0
  %3021 = vmatprep.mubr.bf16.mxu0 %v1682
  %3022 = vmatmul.mubr.bf16.gmra.mrb[0].mxu0 %v1681
  %v3023 = vpop.f32.mrb[0].mxu0
  %v3024 = vadd.f32 %v450, %v3023
  %v3025 = vpop.f32.mrb[0].mxu0
  %v3026 = vpop.f32.mrb[0].mxu0
  %v3027 = vadd.f32 %v450, %v3026
  %v3028 = vpop.f32.mrb[0].mxu0
  %3029 = vmatprep.mubr.bf16.mxu0 %v1685
  %3030 = vmatmul.mubr.bf16.gmra.mrb[0].mxu0 %v1684
  %v3031 = vpop.f32.mrb[0].mxu0
  %v3032 = vadd.f32 %v450, %v3031
  %v3033 = vpop.f32.mrb[0].mxu0
  %v3034 = vpop.f32.mrb[0].mxu0
  %v3035 = vadd.f32 %v450, %v3034
  %v3036 = vpop.f32.mrb[0].mxu0
  %3037 = vmatprep.mubr.bf16.mxu0 %v1688
  %3038 = vmatmul.mubr.bf16.gmra.mrb[0].mxu0 %v1687
  %v3039 = vpop.f32.mrb[0].mxu0
  %v3040 = vadd.f32 %v450, %v3039
  %v3041 = vpop.f32.mrb[0].mxu0
  %v3042 = vpop.f32.mrb[0].mxu0
  %v3043 = vadd.f32 %v450, %v3042
  %v3044 = vpop.f32.mrb[0].mxu0
  %3045 = vmatprep.mubr.bf16.mxu0 %v1691
  %3046 = vmatmul.mubr.bf16.gmra.mrb[0].mxu0 %v1690
  %v3047 = vpop.f32.mrb[0].mxu0
  %v3048 = vadd.f32 %v450, %v3047
  %v3049 = vpop.f32.mrb[0].mxu0
  %v3050 = vpop.f32.mrb[0].mxu0
  %v3051 = vadd.f32 %v450, %v3050
  %v3052 = vpop.f32.mrb[0].mxu0
  %3053 = vmatprep.mubr.bf16.mxu0 %v1694
  %3054 = vmatmul.mubr.bf16.gmra.mrb[0].mxu0 %v1693
  %v3055 = vpop.f32.mrb[0].mxu0
  %v3056 = vadd.f32 %v450, %v3055
  %v3057 = vpop.f32.mrb[0].mxu0
  %v3058 = vpop.f32.mrb[0].mxu0
  %v3059 = vadd.f32 %v450, %v3058
  %v3060 = vpop.f32.mrb[0].mxu0
  %3061 = vmatprep.mubr.bf16.mxu0 %v1697
  %3062 = vmatmul.mubr.bf16.gmra.mrb[0].mxu0 %v1696
  %v3063 = vpop.f32.mrb[0].mxu0
  %v3064 = vadd.f32 %v450, %v3063
  %v3065 = vpop.f32.mrb[0].mxu0
  %v3066 = vpop.f32.mrb[0].mxu0
  %v3067 = vadd.f32 %v450, %v3066
  %v3068 = vpop.f32.mrb[0].mxu0
  %3069 = vmatprep.mubr.bf16.mxu0 %v1700
  %3070 = vmatmul.mubr.bf16.gmra.mrb[0].mxu0 %v1699
  %v3071 = vpop.f32.mrb[0].mxu0
  %v3072 = vadd.f32 %v450, %v3071
  %v3073 = vpop.f32.mrb[0].mxu0
  %v3074 = vpop.f32.mrb[0].mxu0
  %v3075 = vadd.f32 %v450, %v3074
  %v3076 = vpop.f32.mrb[0].mxu0
  %3077 = vmatprep.mubr.bf16.mxu0 %v1703
  %3078 = vmatmul.mubr.bf16.gmra.mrb[0].mxu0 %v1702
  %v3079 = vpop.f32.mrb[0].mxu0
  %v3080 = vadd.f32 %v450, %v3079
  %v3081 = vpop.f32.mrb[0].mxu0
  %v3082 = vpop.f32.mrb[0].mxu0
  %v3083 = vadd.f32 %v450, %v3082
  %v3084 = vpop.f32.mrb[0].mxu0
  %3085 = vmatprep.mubr.bf16.mxu0 %v1706
  %3086 = vmatmul.mubr.bf16.gmra.mrb[0].mxu0 %v1705
  %v3087 = vpop.f32.mrb[0].mxu0
  %v3088 = vadd.f32 %v450, %v3087
  %v3089 = vpop.f32.mrb[0].mxu0
  %v3090 = vpop.f32.mrb[0].mxu0
  %v3091 = vadd.f32 %v450, %v3090
  %v3092 = vpop.f32.mrb[0].mxu0
  %3093 = vmatprep.mubr.bf16.mxu0 %v1709
  %3094 = vmatmul.mubr.bf16.gmra.mrb[0].mxu0 %v1708
  %v3095 = vpop.f32.mrb[0].mxu0
  %v3096 = vadd.f32 %v450, %v3095
  %v3097 = vpop.f32.mrb[0].mxu0
  %v3098 = vpop.f32.mrb[0].mxu0
  %v3099 = vadd.f32 %v450, %v3098
  %v3100 = vpop.f32.mrb[0].mxu0
  %3101 = vmatprep.mubr.bf16.mxu0 %v1712
  %3102 = vmatmul.mubr.bf16.gmra.mrb[0].mxu0 %v1711
  %v3103 = vpop.f32.mrb[0].mxu0
  %v3104 = vadd.f32 %v450, %v3103
  %v3105 = vpop.f32.mrb[0].mxu0
  %v3106 = vpop.f32.mrb[0].mxu0
  %v3107 = vadd.f32 %v450, %v3106
  %v3108 = vpop.f32.mrb[0].mxu0
  %3109 = vmatprep.mubr.bf16.mxu0 %v1715
  %3110 = vmatmul.mubr.bf16.gmra.mrb[0].mxu0 %v1714
  %v3111 = vpop.f32.mrb[0].mxu0
  %v3112 = vadd.f32 %v450, %v3111
  %v3113 = vpop.f32.mrb[0].mxu0
  %v3114 = vpop.f32.mrb[0].mxu0
  %v3115 = vadd.f32 %v450, %v3114
  %v3116 = vpop.f32.mrb[0].mxu0
  %3117 = vmatprep.mubr.bf16.mxu0 %v1718
  %3118 = vmatmul.mubr.bf16.gmra.mrb[0].mxu0 %v1717
  %v3119 = vpop.f32.mrb[0].mxu0
  %v3120 = vadd.f32 %v450, %v3119
  %v3121 = vpop.f32.mrb[0].mxu0
  %v3122 = vpop.f32.mrb[0].mxu0
  %v3123 = vadd.f32 %v450, %v3122
  %v3124 = vpop.f32.mrb[0].mxu0
  %3125 = vmatprep.mubr.bf16.mxu0 %v1721
  %3126 = vmatmul.mubr.bf16.gmra.mrb[0].mxu0 %v1720
  %v3127 = vpop.f32.mrb[0].mxu0
  %v3128 = vadd.f32 %v450, %v3127
  %v3129 = vpop.f32.mrb[0].mxu0
  %v3130 = vpop.f32.mrb[0].mxu0
  %v3131 = vadd.f32 %v450, %v3130
  %v3132 = vpop.f32.mrb[0].mxu0
  %3133 = vmatprep.mubr.bf16.mxu0 %v1724
  %3134 = vmatmul.mubr.bf16.gmra.mrb[0].mxu0 %v1723
  %v3135 = vpop.f32.mrb[0].mxu0
  %v3136 = vadd.f32 %v450, %v3135
  %v3137 = vpop.f32.mrb[0].mxu0
  %v3138 = vpop.f32.mrb[0].mxu0
  %v3139 = vadd.f32 %v450, %v3138
  %v3140 = vpop.f32.mrb[0].mxu0
  %3141 = vdwg.mxu0
  %3142 = vmatprep.subr.bf16.mxu0 0
  %3143 = vmatpush1.bf16.msra.mxu0 %v2010
  %3144 = vmatprep.subr.bf16.mxu0 0
  %3145 = vmatpush1.bf16.msra.mxu0 %v2011
  %3146 = vmatprep.subr.bf16.mxu0 0
  %3147 = vmatpush1.bf16.msra.mxu0 0
  %3148 = vmatprep.subr.bf16.mxu0 0
  %3149 = vmatpush1.bf16.msra.mxu0 0
  %3150 = vmatprep.subr.bf16.mxu0 0
  %3151 = vmatpush1.bf16.msra.mxu0 0
  %3152 = vmatprep.subr.bf16.mxu0 0
  %3153 = vmatpush1.bf16.msra.mxu0 0
  %3154 = vmatprep.subr.bf16.mxu0 0
  %3155 = vmatpush1.bf16.msra.mxu0 0
  %3156 = vmatprep.subr.bf16.mxu0 0
  %3157 = vmatpush1.bf16.msra.mxu0 0
  %3158 = vmatprep.subr.bf16.mxu0 0
  %3159 = vmatpush1.bf16.msra.mxu0 0
  %3160 = vmatprep.subr.bf16.mxu0 0
  %3161 = vmatpush1.bf16.msra.mxu0 0
  %3162 = vmatprep.subr.bf16.mxu0 0
  %3163 = vmatpush1.bf16.msra.mxu0 0
  %3164 = vmatprep.subr.bf16.mxu0 0
  %3165 = vmatpush1.bf16.msra.mxu0 0
  %3166 = vmatprep.subr.bf16.mxu0 0
  %3167 = vmatpush1.bf16.msra.mxu0 0
  %3168 = vmatprep.subr.bf16.mxu0 0
  %3169 = vmatpush1.bf16.msra.mxu0 0
  %3170 = vmatprep.subr.bf16.mxu0 0
  %3171 = vmatpush1.bf16.msra.mxu0 0
  %3172 = vmatprep.subr.bf16.mxu0 0
  %3173 = vmatpush1.bf16.msra.mxu0 0
  %3174 = vmatprep.mubr.bf16.mxu0 0
  %3175 = vmatmul.mubr.bf16.gmra.mrb[0].mxu0 %v2032
  %v3176 = vpop.f32.mrb[0].mxu0
  %v3177 = vadd.f32 %v2360, %v3176
  %v3178 = vpop.f32.mrb[0].mxu0
  %v3179 = vpop.f32.mrb[0].mxu0
  %v3180 = vadd.f32 %v2363, %v3179
  %v3181 = vpop.f32.mrb[0].mxu0
  %3182 = vmatprep.mubr.bf16.mxu0 0
  %3183 = vmatmul.mubr.bf16.gmra.mrb[0].mxu0 %v2035
  %v3184 = vpop.f32.mrb[0].mxu0
  %v3185 = vadd.f32 %v2368, %v3184
  %v3186 = vpop.f32.mrb[0].mxu0
  %v3187 = vpop.f32.mrb[0].mxu0
  %v3188 = vadd.f32 %v2371, %v3187
  %v3189 = vpop.f32.mrb[0].mxu0
  %3190 = vmatprep.mubr.bf16.mxu0 0
  %3191 = vmatmul.mubr.bf16.gmra.mrb[0].mxu0 %v2038
  %v3192 = vpop.f32.mrb[0].mxu0
  %v3193 = vadd.f32 %v2376, %v3192
  %v3194 = vpop.f32.mrb[0].mxu0
  %v3195 = vpop.f32.mrb[0].mxu0
  %v3196 = vadd.f32 %v2379, %v3195
  %v3197 = vpop.f32.mrb[0].mxu0
  %3198 = vmatprep.mubr.bf16.mxu0 0
  %3199 = vmatmul.mubr.bf16.gmra.mrb[0].mxu0 %v2041
  %v3200 = vpop.f32.mrb[0].mxu0
  %v3201 = vadd.f32 %v2384, %v3200
  %v3202 = vpop.f32.mrb[0].mxu0
  %v3203 = vpop.f32.mrb[0].mxu0
  %v3204 = vadd.f32 %v2387, %v3203
  %v3205 = vpop.f32.mrb[0].mxu0
  %3206 = vmatprep.mubr.bf16.mxu0 0
  %3207 = vmatmul.mubr.bf16.gmra.mrb[0].mxu0 %v2044
  %v3208 = vpop.f32.mrb[0].mxu0
  %v3209 = vadd.f32 %v2392, %v3208
  %v3210 = vpop.f32.mrb[0].mxu0
  %v3211 = vpop.f32.mrb[0].mxu0
  %v3212 = vadd.f32 %v2395, %v3211
  %v3213 = vpop.f32.mrb[0].mxu0
  %3214 = vmatprep.mubr.bf16.mxu0 0
  %3215 = vmatmul.mubr.bf16.gmra.mrb[0].mxu0 %v2047
  %v3216 = vpop.f32.mrb[0].mxu0
  %v3217 = vadd.f32 %v2400, %v3216
  %v3218 = vpop.f32.mrb[0].mxu0
  %v3219 = vpop.f32.mrb[0].mxu0
  %v3220 = vadd.f32 %v2403, %v3219
  %v3221 = vpop.f32.mrb[0].mxu0
  %3222 = vmatprep.mubr.bf16.mxu0 0
  %3223 = vmatmul.mubr.bf16.gmra.mrb[0].mxu0 %v2050
  %v3224 = vpop.f32.mrb[0].mxu0
  %v3225 = vadd.f32 %v2408, %v3224
  %v3226 = vpop.f32.mrb[0].mxu0
  %v3227 = vpop.f32.mrb[0].mxu0
  %v3228 = vadd.f32 %v2411, %v3227
  %v3229 = vpop.f32.mrb[0].mxu0
  %3230 = vmatprep.mubr.bf16.mxu0 0
  %3231 = vmatmul.mubr.bf16.gmra.mrb[0].mxu0 %v2053
  %v3232 = vpop.f32.mrb[0].mxu0
  %v3233 = vadd.f32 %v2416, %v3232
  %v3234 = vpop.f32.mrb[0].mxu0
  %v3235 = vpop.f32.mrb[0].mxu0
  %v3236 = vadd.f32 %v2419, %v3235
  %v3237 = vpop.f32.mrb[0].mxu0
  %3238 = vmatprep.mubr.bf16.mxu0 0
  %3239 = vmatmul.mubr.bf16.gmra.mrb[0].mxu0 %v2056
  %v3240 = vpop.f32.mrb[0].mxu0
  %v3241 = vadd.f32 %v2424, %v3240
  %v3242 = vpop.f32.mrb[0].mxu0
  %v3243 = vpop.f32.mrb[0].mxu0
  %v3244 = vadd.f32 %v2427, %v3243
  %v3245 = vpop.f32.mrb[0].mxu0
  %3246 = vmatprep.mubr.bf16.mxu0 0
  %3247 = vmatmul.mubr.bf16.gmra.mrb[0].mxu0 %v2059
  %v3248 = vpop.f32.mrb[0].mxu0
  %v3249 = vadd.f32 %v2432, %v3248
  %v3250 = vpop.f32.mrb[0].mxu0
  %v3251 = vpop.f32.mrb[0].mxu0
  %v3252 = vadd.f32 %v2435, %v3251
  %v3253 = vpop.f32.mrb[0].mxu0
  %3254 = vmatprep.mubr.bf16.mxu0 0
  %3255 = vmatmul.mubr.bf16.gmra.mrb[0].mxu0 %v2062
  %v3256 = vpop.f32.mrb[0].mxu0
  %v3257 = vadd.f32 %v2440, %v3256
  %v3258 = vpop.f32.mrb[0].mxu0
  %v3259 = vpop.f32.mrb[0].mxu0
  %v3260 = vadd.f32 %v2443, %v3259
  %v3261 = vpop.f32.mrb[0].mxu0
  %3262 = vmatprep.mubr.bf16.mxu0 0
  %3263 = vmatmul.mubr.bf16.gmra.mrb[0].mxu0 %v2065
  %v3264 = vpop.f32.mrb[0].mxu0
  %v3265 = vadd.f32 %v2448, %v3264
  %v3266 = vpop.f32.mrb[0].mxu0
  %v3267 = vpop.f32.mrb[0].mxu0
  %v3268 = vadd.f32 %v2451, %v3267
  %v3269 = vpop.f32.mrb[0].mxu0
  %3270 = vmatprep.mubr.bf16.mxu0 0
  %3271 = vmatmul.mubr.bf16.gmra.mrb[0].mxu0 %v2068
  %v3272 = vpop.f32.mrb[0].mxu0
  %v3273 = vadd.f32 %v2456, %v3272
  %v3274 = vpop.f32.mrb[0].mxu0
  %v3275 = vpop.f32.mrb[0].mxu0
  %v3276 = vadd.f32 %v2459, %v3275
  %v3277 = vpop.f32.mrb[0].mxu0
  %3278 = vmatprep.mubr.bf16.mxu0 0
  %3279 = vmatmul.mubr.bf16.gmra.mrb[0].mxu0 %v2071
  %v3280 = vpop.f32.mrb[0].mxu0
  %v3281 = vadd.f32 %v2464, %v3280
  %v3282 = vpop.f32.mrb[0].mxu0
  %v3283 = vpop.f32.mrb[0].mxu0
  %v3284 = vadd.f32 %v2467, %v3283
  %v3285 = vpop.f32.mrb[0].mxu0
  %3286 = vmatprep.mubr.bf16.mxu0 0
  %3287 = vmatmul.mubr.bf16.gmra.mrb[0].mxu0 %v2074
  %v3288 = vpop.f32.mrb[0].mxu0
  %v3289 = vadd.f32 %v2472, %v3288
  %v3290 = vpop.f32.mrb[0].mxu0
  %v3291 = vpop.f32.mrb[0].mxu0
  %v3292 = vadd.f32 %v2475, %v3291
  %v3293 = vpop.f32.mrb[0].mxu0
  %3294 = vmatprep.mubr.bf16.mxu0 0
  %3295 = vmatmul.mubr.bf16.gmra.mrb[0].mxu0 %v2077
  %v3296 = vpop.f32.mrb[0].mxu0
  %v3297 = vadd.f32 %v2480, %v3296
  %v3298 = vpop.f32.mrb[0].mxu0
  %v3299 = vpop.f32.mrb[0].mxu0
  %v3300 = vadd.f32 %v2483, %v3299
  %v3301 = vpop.f32.mrb[0].mxu0
  %3302 = vmatprep.mubr.bf16.mxu0 0
  %3303 = vmatmul.mubr.bf16.gmra.mrb[0].mxu0 %v2080
  %v3304 = vpop.f32.mrb[0].mxu0
  %v3305 = vadd.f32 %v2488, %v3304
  %v3306 = vpop.f32.mrb[0].mxu0
  %v3307 = vpop.f32.mrb[0].mxu0
  %v3308 = vadd.f32 %v2491, %v3307
  %v3309 = vpop.f32.mrb[0].mxu0
  %3310 = vmatprep.mubr.bf16.mxu0 0
  %3311 = vmatmul.mubr.bf16.gmra.mrb[0].mxu0 %v2083
  %v3312 = vpop.f32.mrb[0].mxu0
  %v3313 = vadd.f32 %v2496, %v3312
  %v3314 = vpop.f32.mrb[0].mxu0
  %v3315 = vpop.f32.mrb[0].mxu0
  %v3316 = vadd.f32 %v2499, %v3315
  %v3317 = vpop.f32.mrb[0].mxu0
  %3318 = vmatprep.mubr.bf16.mxu0 0
  %3319 = vmatmul.mubr.bf16.gmra.mrb[0].mxu0 %v2086
  %v3320 = vpop.f32.mrb[0].mxu0
  %v3321 = vadd.f32 %v2504, %v3320
  %v3322 = vpop.f32.mrb[0].mxu0
  %v3323 = vpop.f32.mrb[0].mxu0
  %v3324 = vadd.f32 %v2507, %v3323
  %v3325 = vpop.f32.mrb[0].mxu0
  %3326 = vmatprep.mubr.bf16.mxu0 0
  %3327 = vmatmul.mubr.bf16.gmra.mrb[0].mxu0 %v2089
  %v3328 = vpop.f32.mrb[0].mxu0
  %v3329 = vadd.f32 %v2512, %v3328
  %v3330 = vpop.f32.mrb[0].mxu0
  %v3331 = vpop.f32.mrb[0].mxu0
  %v3332 = vadd.f32 %v2515, %v3331
  %v3333 = vpop.f32.mrb[0].mxu0
  %3334 = vmatprep.mubr.bf16.mxu0 0
  %3335 = vmatmul.mubr.bf16.gmra.mrb[0].mxu0 %v2092
  %v3336 = vpop.f32.mrb[0].mxu0
  %v3337 = vadd.f32 %v2520, %v3336
  %v3338 = vpop.f32.mrb[0].mxu0
  %v3339 = vpop.f32.mrb[0].mxu0
  %v3340 = vadd.f32 %v2523, %v3339
  %v3341 = vpop.f32.mrb[0].mxu0
  %3342 = vmatprep.mubr.bf16.mxu0 0
  %3343 = vmatmul.mubr.bf16.gmra.mrb[0].mxu0 %v2095
  %v3344 = vpop.f32.mrb[0].mxu0
  %v3345 = vadd.f32 %v2528, %v3344
  %v3346 = vpop.f32.mrb[0].mxu0
  %v3347 = vpop.f32.mrb[0].mxu0
  %v3348 = vadd.f32 %v2531, %v3347
  %v3349 = vpop.f32.mrb[0].mxu0
  %3350 = vmatprep.mubr.bf16.mxu0 0
  %3351 = vmatmul.mubr.bf16.gmra.mrb[0].mxu0 %v2098
  %v3352 = vpop.f32.mrb[0].mxu0
  %v3353 = vadd.f32 %v2536, %v3352
  %v3354 = vpop.f32.mrb[0].mxu0
  %v3355 = vpop.f32.mrb[0].mxu0
  %v3356 = vadd.f32 %v2539, %v3355
  %v3357 = vpop.f32.mrb[0].mxu0
  %3358 = vmatprep.mubr.bf16.mxu0 0
  %3359 = vmatmul.mubr.bf16.gmra.mrb[0].mxu0 %v2101
  %v3360 = vpop.f32.mrb[0].mxu0
  %v3361 = vadd.f32 %v2544, %v3360
  %v3362 = vpop.f32.mrb[0].mxu0
  %v3363 = vpop.f32.mrb[0].mxu0
  %v3364 = vadd.f32 %v2547, %v3363
  %v3365 = vpop.f32.mrb[0].mxu0
  %3366 = vmatprep.mubr.bf16.mxu0 0
  %3367 = vmatmul.mubr.bf16.gmra.mrb[0].mxu0 %v2104
  %v3368 = vpop.f32.mrb[0].mxu0
  %v3369 = vadd.f32 %v2552, %v3368
  %v3370 = vpop.f32.mrb[0].mxu0
  %v3371 = vpop.f32.mrb[0].mxu0
  %v3372 = vadd.f32 %v2555, %v3371
  %v3373 = vpop.f32.mrb[0].mxu0
  %3374 = vmatprep.mubr.bf16.mxu0 0
  %3375 = vmatmul.mubr.bf16.gmra.mrb[0].mxu0 %v2107
  %v3376 = vpop.f32.mrb[0].mxu0
  %v3377 = vadd.f32 %v2560, %v3376
  %v3378 = vpop.f32.mrb[0].mxu0
  %v3379 = vpop.f32.mrb[0].mxu0
  %v3380 = vadd.f32 %v2563, %v3379
  %v3381 = vpop.f32.mrb[0].mxu0
  %3382 = vmatprep.mubr.bf16.mxu0 0
  %3383 = vmatmul.mubr.bf16.gmra.mrb[0].mxu0 %v2110
  %v3384 = vpop.f32.mrb[0].mxu0
  %v3385 = vadd.f32 %v2568, %v3384
  %v3386 = vpop.f32.mrb[0].mxu0
  %v3387 = vpop.f32.mrb[0].mxu0
  %v3388 = vadd.f32 %v2571, %v3387
  %v3389 = vpop.f32.mrb[0].mxu0
  %3390 = vmatprep.mubr.bf16.mxu0 0
  %3391 = vmatmul.mubr.bf16.gmra.mrb[0].mxu0 %v2113
  %v3392 = vpop.f32.mrb[0].mxu0
  %v3393 = vadd.f32 %v2576, %v3392
  %v3394 = vpop.f32.mrb[0].mxu0
  %v3395 = vpop.f32.mrb[0].mxu0
  %v3396 = vadd.f32 %v2579, %v3395
  %v3397 = vpop.f32.mrb[0].mxu0
  %3398 = vmatprep.mubr.bf16.mxu0 0
  %3399 = vmatmul.mubr.bf16.gmra.mrb[0].mxu0 %v2116
  %v3400 = vpop.f32.mrb[0].mxu0
  %v3401 = vadd.f32 %v2584, %v3400
  %v3402 = vpop.f32.mrb[0].mxu0
  %v3403 = vpop.f32.mrb[0].mxu0
  %v3404 = vadd.f32 %v2587, %v3403
  %v3405 = vpop.f32.mrb[0].mxu0
  %3406 = vmatprep.mubr.bf16.mxu0 0
  %3407 = vmatmul.mubr.bf16.gmra.mrb[0].mxu0 %v2119
  %v3408 = vpop.f32.mrb[0].mxu0
  %v3409 = vadd.f32 %v2592, %v3408
  %v3410 = vpop.f32.mrb[0].mxu0
  %v3411 = vpop.f32.mrb[0].mxu0
  %v3412 = vadd.f32 %v2595, %v3411
  %v3413 = vpop.f32.mrb[0].mxu0
  %3414 = vmatprep.mubr.bf16.mxu0 0
  %3415 = vmatmul.mubr.bf16.gmra.mrb[0].mxu0 %v2122
  %v3416 = vpop.f32.mrb[0].mxu0
  %v3417 = vadd.f32 %v2600, %v3416
  %v3418 = vpop.f32.mrb[0].mxu0
  %v3419 = vpop.f32.mrb[0].mxu0
  %v3420 = vadd.f32 %v2603, %v3419
  %v3421 = vpop.f32.mrb[0].mxu0
  %3422 = vmatprep.mubr.bf16.mxu0 0
  %3423 = vmatmul.mubr.bf16.gmra.mrb[0].mxu0 %v2125
  %v3424 = vpop.f32.mrb[0].mxu0
  %v3425 = vadd.f32 %v2608, %v3424
  %v3426 = vpop.f32.mrb[0].mxu0
  %v3427 = vpop.f32.mrb[0].mxu0
  %v3428 = vadd.f32 %v2611, %v3427
  %v3429 = vpop.f32.mrb[0].mxu0
  %3430 = vmatprep.mubr.bf16.mxu0 0
  %3431 = vmatmul.mubr.bf16.gmra.mrb[0].mxu0 %v2128
  %v3432 = vpop.f32.mrb[0].mxu0
  %v3433 = vadd.f32 %v2616, %v3432
  %v3434 = vpop.f32.mrb[0].mxu0
  %v3435 = vpop.f32.mrb[0].mxu0
  %v3436 = vadd.f32 %v2619, %v3435
  %v3437 = vpop.f32.mrb[0].mxu0
  %3438 = vmatprep.mubr.bf16.mxu0 0
  %3439 = vmatmul.mubr.bf16.gmra.mrb[0].mxu0 %v2131
  %v3440 = vpop.f32.mrb[0].mxu0
  %v3441 = vadd.f32 %v2624, %v3440
  %v3442 = vpop.f32.mrb[0].mxu0
  %v3443 = vpop.f32.mrb[0].mxu0
  %v3444 = vadd.f32 %v2627, %v3443
  %v3445 = vpop.f32.mrb[0].mxu0
  %3446 = vmatprep.mubr.bf16.mxu0 0
  %3447 = vmatmul.mubr.bf16.gmra.mrb[0].mxu0 %v2134
  %v3448 = vpop.f32.mrb[0].mxu0
  %v3449 = vadd.f32 %v2632, %v3448
  %v3450 = vpop.f32.mrb[0].mxu0
  %v3451 = vpop.f32.mrb[0].mxu0
  %v3452 = vadd.f32 %v2635, %v3451
  %v3453 = vpop.f32.mrb[0].mxu0
  %3454 = vmatprep.mubr.bf16.mxu0 0
  %3455 = vmatmul.mubr.bf16.gmra.mrb[0].mxu0 %v2137
  %v3456 = vpop.f32.mrb[0].mxu0
  %v3457 = vadd.f32 %v2640, %v3456
  %v3458 = vpop.f32.mrb[0].mxu0
  %v3459 = vpop.f32.mrb[0].mxu0
  %v3460 = vadd.f32 %v2643, %v3459
  %v3461 = vpop.f32.mrb[0].mxu0
  %3462 = vmatprep.mubr.bf16.mxu0 0
  %3463 = vmatmul.mubr.bf16.gmra.mrb[0].mxu0 %v2140
  %v3464 = vpop.f32.mrb[0].mxu0
  %v3465 = vadd.f32 %v2648, %v3464
  %v3466 = vpop.f32.mrb[0].mxu0
  %v3467 = vpop.f32.mrb[0].mxu0
  %v3468 = vadd.f32 %v2651, %v3467
  %v3469 = vpop.f32.mrb[0].mxu0
  %3470 = vmatprep.mubr.bf16.mxu0 0
  %3471 = vmatmul.mubr.bf16.gmra.mrb[0].mxu0 %v2143
  %v3472 = vpop.f32.mrb[0].mxu0
  %v3473 = vadd.f32 %v2656, %v3472
  %v3474 = vpop.f32.mrb[0].mxu0
  %v3475 = vpop.f32.mrb[0].mxu0
  %v3476 = vadd.f32 %v2659, %v3475
  %v3477 = vpop.f32.mrb[0].mxu0
  %3478 = vmatprep.mubr.bf16.mxu0 0
  %3479 = vmatmul.mubr.bf16.gmra.mrb[0].mxu0 %v2146
  %v3480 = vpop.f32.mrb[0].mxu0
  %v3481 = vadd.f32 %v2664, %v3480
  %v3482 = vpop.f32.mrb[0].mxu0
  %v3483 = vpop.f32.mrb[0].mxu0
  %v3484 = vadd.f32 %v2667, %v3483
  %v3485 = vpop.f32.mrb[0].mxu0
  %3486 = vmatprep.mubr.bf16.mxu0 0
  %3487 = vmatmul.mubr.bf16.gmra.mrb[0].mxu0 %v2149
  %v3488 = vpop.f32.mrb[0].mxu0
  %v3489 = vadd.f32 %v2672, %v3488
  %v3490 = vpop.f32.mrb[0].mxu0
  %v3491 = vpop.f32.mrb[0].mxu0
  %v3492 = vadd.f32 %v2675, %v3491
  %v3493 = vpop.f32.mrb[0].mxu0
  %3494 = vmatprep.mubr.bf16.mxu0 0
  %3495 = vmatmul.mubr.bf16.gmra.mrb[0].mxu0 %v2152
  %v3496 = vpop.f32.mrb[0].mxu0
  %v3497 = vadd.f32 %v2680, %v3496
  %v3498 = vpop.f32.mrb[0].mxu0
  %v3499 = vpop.f32.mrb[0].mxu0
  %v3500 = vadd.f32 %v2683, %v3499
  %v3501 = vpop.f32.mrb[0].mxu0
  %3502 = vmatprep.mubr.bf16.mxu0 0
  %3503 = vmatmul.mubr.bf16.gmra.mrb[0].mxu0 %v2155
  %v3504 = vpop.f32.mrb[0].mxu0
  %v3505 = vadd.f32 %v2688, %v3504
  %v3506 = vpop.f32.mrb[0].mxu0
  %v3507 = vpop.f32.mrb[0].mxu0
  %v3508 = vadd.f32 %v2691, %v3507
  %v3509 = vpop.f32.mrb[0].mxu0
  %3510 = vmatprep.mubr.bf16.mxu0 0
  %3511 = vmatmul.mubr.bf16.gmra.mrb[0].mxu0 %v2158
  %v3512 = vpop.f32.mrb[0].mxu0
  %v3513 = vadd.f32 %v2696, %v3512
  %v3514 = vpop.f32.mrb[0].mxu0
  %v3515 = vpop.f32.mrb[0].mxu0
  %v3516 = vadd.f32 %v2699, %v3515
  %v3517 = vpop.f32.mrb[0].mxu0
  %3518 = vmatprep.mubr.bf16.mxu0 0
  %3519 = vmatmul.mubr.bf16.gmra.mrb[0].mxu0 %v2161
  %v3520 = vpop.f32.mrb[0].mxu0
  %v3521 = vadd.f32 %v2704, %v3520
  %v3522 = vpop.f32.mrb[0].mxu0
  %v3523 = vpop.f32.mrb[0].mxu0
  %v3524 = vadd.f32 %v2707, %v3523
  %v3525 = vpop.f32.mrb[0].mxu0
  %3526 = vmatprep.mubr.bf16.mxu0 0
  %3527 = vmatmul.mubr.bf16.gmra.mrb[0].mxu0 %v2164
  %v3528 = vpop.f32.mrb[0].mxu0
  %v3529 = vadd.f32 %v2712, %v3528
  %v3530 = vpop.f32.mrb[0].mxu0
  %v3531 = vpop.f32.mrb[0].mxu0
  %v3532 = vadd.f32 %v2715, %v3531
  %v3533 = vpop.f32.mrb[0].mxu0
  %3534 = vmatprep.mubr.bf16.mxu0 0
  %3535 = vmatmul.mubr.bf16.gmra.mrb[0].mxu0 %v2167
  %v3536 = vpop.f32.mrb[0].mxu0
  %v3537 = vadd.f32 %v2720, %v3536
  %v3538 = vpop.f32.mrb[0].mxu0
  %v3539 = vpop.f32.mrb[0].mxu0
  %v3540 = vadd.f32 %v2723, %v3539
  %v3541 = vpop.f32.mrb[0].mxu0
  %3542 = vmatprep.mubr.bf16.mxu0 0
  %3543 = vmatmul.mubr.bf16.gmra.mrb[0].mxu0 %v2170
  %v3544 = vpop.f32.mrb[0].mxu0
  %v3545 = vadd.f32 %v2728, %v3544
  %v3546 = vpop.f32.mrb[0].mxu0
  %v3547 = vpop.f32.mrb[0].mxu0
  %v3548 = vadd.f32 %v2731, %v3547
  %v3549 = vpop.f32.mrb[0].mxu0
  %3550 = vmatprep.mubr.bf16.mxu0 0
  %3551 = vmatmul.mubr.bf16.gmra.mrb[0].mxu0 %v2173
  %v3552 = vpop.f32.mrb[0].mxu0
  %v3553 = vadd.f32 %v2736, %v3552
  %v3554 = vpop.f32.mrb[0].mxu0
  %v3555 = vpop.f32.mrb[0].mxu0
  %v3556 = vadd.f32 %v2739, %v3555
  %v3557 = vpop.f32.mrb[0].mxu0
  %3558 = vmatprep.mubr.bf16.mxu0 0
  %3559 = vmatmul.mubr.bf16.gmra.mrb[0].mxu0 %v2176
  %v3560 = vpop.f32.mrb[0].mxu0
  %v3561 = vadd.f32 %v2744, %v3560
  %v3562 = vpop.f32.mrb[0].mxu0
  %v3563 = vpop.f32.mrb[0].mxu0
  %v3564 = vadd.f32 %v2747, %v3563
  %v3565 = vpop.f32.mrb[0].mxu0
  %3566 = vmatprep.mubr.bf16.mxu0 0
  %3567 = vmatmul.mubr.bf16.gmra.mrb[0].mxu0 %v2179
  %v3568 = vpop.f32.mrb[0].mxu0
  %v3569 = vadd.f32 %v2752, %v3568
  %v3570 = vpop.f32.mrb[0].mxu0
  %v3571 = vpop.f32.mrb[0].mxu0
  %v3572 = vadd.f32 %v2755, %v3571
  %v3573 = vpop.f32.mrb[0].mxu0
  %3574 = vmatprep.mubr.bf16.mxu0 0
  %3575 = vmatmul.mubr.bf16.gmra.mrb[0].mxu0 %v2182
  %v3576 = vpop.f32.mrb[0].mxu0
  %v3577 = vadd.f32 %v2760, %v3576
  %v3578 = vpop.f32.mrb[0].mxu0
  %v3579 = vpop.f32.mrb[0].mxu0
  %v3580 = vadd.f32 %v2763, %v3579
  %v3581 = vpop.f32.mrb[0].mxu0
  %3582 = vmatprep.mubr.bf16.mxu0 0
  %3583 = vmatmul.mubr.bf16.gmra.mrb[0].mxu0 %v2185
  %v3584 = vpop.f32.mrb[0].mxu0
  %v3585 = vadd.f32 %v2768, %v3584
  %v3586 = vpop.f32.mrb[0].mxu0
  %v3587 = vpop.f32.mrb[0].mxu0
  %v3588 = vadd.f32 %v2771, %v3587
  %v3589 = vpop.f32.mrb[0].mxu0
  %3590 = vmatprep.mubr.bf16.mxu0 0
  %3591 = vmatmul.mubr.bf16.gmra.mrb[0].mxu0 %v2188
  %v3592 = vpop.f32.mrb[0].mxu0
  %v3593 = vadd.f32 %v2776, %v3592
  %v3594 = vpop.f32.mrb[0].mxu0
  %v3595 = vpop.f32.mrb[0].mxu0
  %v3596 = vadd.f32 %v2779, %v3595
  %v3597 = vpop.f32.mrb[0].mxu0
  %3598 = vmatprep.mubr.bf16.mxu0 0
  %3599 = vmatmul.mubr.bf16.gmra.mrb[0].mxu0 %v2191
  %v3600 = vpop.f32.mrb[0].mxu0
  %v3601 = vadd.f32 %v2784, %v3600
  %v3602 = vpop.f32.mrb[0].mxu0
  %v3603 = vpop.f32.mrb[0].mxu0
  %v3604 = vadd.f32 %v2787, %v3603
  %v3605 = vpop.f32.mrb[0].mxu0
  %3606 = vmatprep.mubr.bf16.mxu0 0
  %3607 = vmatmul.mubr.bf16.gmra.mrb[0].mxu0 %v2194
  %v3608 = vpop.f32.mrb[0].mxu0
  %v3609 = vadd.f32 %v2792, %v3608
  %v3610 = vpop.f32.mrb[0].mxu0
  %v3611 = vpop.f32.mrb[0].mxu0
  %v3612 = vadd.f32 %v2795, %v3611
  %v3613 = vpop.f32.mrb[0].mxu0
  %3614 = vmatprep.mubr.bf16.mxu0 0
  %3615 = vmatmul.mubr.bf16.gmra.mrb[0].mxu0 %v2197
  %v3616 = vpop.f32.mrb[0].mxu0
  %v3617 = vadd.f32 %v2800, %v3616
  %v3618 = vpop.f32.mrb[0].mxu0
  %v3619 = vpop.f32.mrb[0].mxu0
  %v3620 = vadd.f32 %v2803, %v3619
  %v3621 = vpop.f32.mrb[0].mxu0
  %3622 = vmatprep.mubr.bf16.mxu0 0
  %3623 = vmatmul.mubr.bf16.gmra.mrb[0].mxu0 %v2200
  %v3624 = vpop.f32.mrb[0].mxu0
  %v3625 = vadd.f32 %v2808, %v3624
  %v3626 = vpop.f32.mrb[0].mxu0
  %v3627 = vpop.f32.mrb[0].mxu0
  %v3628 = vadd.f32 %v2811, %v3627
  %v3629 = vpop.f32.mrb[0].mxu0
  %3630 = vmatprep.mubr.bf16.mxu0 0
  %3631 = vmatmul.mubr.bf16.gmra.mrb[0].mxu0 %v2203
  %v3632 = vpop.f32.mrb[0].mxu0
  %v3633 = vadd.f32 %v2816, %v3632
  %v3634 = vpop.f32.mrb[0].mxu0
  %v3635 = vpop.f32.mrb[0].mxu0
  %v3636 = vadd.f32 %v2819, %v3635
  %v3637 = vpop.f32.mrb[0].mxu0
  %3638 = vmatprep.mubr.bf16.mxu0 0
  %3639 = vmatmul.mubr.bf16.gmra.mrb[0].mxu0 %v2206
  %v3640 = vpop.f32.mrb[0].mxu0
  %v3641 = vadd.f32 %v2824, %v3640
  %v3642 = vpop.f32.mrb[0].mxu0
  %v3643 = vpop.f32.mrb[0].mxu0
  %v3644 = vadd.f32 %v2827, %v3643
  %v3645 = vpop.f32.mrb[0].mxu0
  %3646 = vmatprep.mubr.bf16.mxu0 0
  %3647 = vmatmul.mubr.bf16.gmra.mrb[0].mxu0 %v2209
  %v3648 = vpop.f32.mrb[0].mxu0
  %v3649 = vadd.f32 %v2832, %v3648
  %v3650 = vpop.f32.mrb[0].mxu0
  %v3651 = vpop.f32.mrb[0].mxu0
  %v3652 = vadd.f32 %v2835, %v3651
  %v3653 = vpop.f32.mrb[0].mxu0
  %3654 = vmatprep.mubr.bf16.mxu0 0
  %3655 = vmatmul.mubr.bf16.gmra.mrb[0].mxu0 %v2212
  %v3656 = vpop.f32.mrb[0].mxu0
  %v3657 = vadd.f32 %v2840, %v3656
  %v3658 = vpop.f32.mrb[0].mxu0
  %v3659 = vpop.f32.mrb[0].mxu0
  %v3660 = vadd.f32 %v2843, %v3659
  %v3661 = vpop.f32.mrb[0].mxu0
  %3662 = vmatprep.mubr.bf16.mxu0 0
  %3663 = vmatmul.mubr.bf16.gmra.mrb[0].mxu0 %v2215
  %v3664 = vpop.f32.mrb[0].mxu0
  %v3665 = vadd.f32 %v2848, %v3664
  %v3666 = vpop.f32.mrb[0].mxu0
  %v3667 = vpop.f32.mrb[0].mxu0
  %v3668 = vadd.f32 %v2851, %v3667
  %v3669 = vpop.f32.mrb[0].mxu0
  %3670 = vmatprep.mubr.bf16.mxu0 0
  %3671 = vmatmul.mubr.bf16.gmra.mrb[0].mxu0 %v2218
  %v3672 = vpop.f32.mrb[0].mxu0
  %v3673 = vadd.f32 %v2856, %v3672
  %v3674 = vpop.f32.mrb[0].mxu0
  %v3675 = vpop.f32.mrb[0].mxu0
  %v3676 = vadd.f32 %v2859, %v3675
  %v3677 = vpop.f32.mrb[0].mxu0
  %3678 = vmatprep.mubr.bf16.mxu0 0
  %3679 = vmatmul.mubr.bf16.gmra.mrb[0].mxu0 %v2221
  %v3680 = vpop.f32.mrb[0].mxu0
  %v3681 = vadd.f32 %v2864, %v3680
  %v3682 = vpop.f32.mrb[0].mxu0
  %v3683 = vpop.f32.mrb[0].mxu0
  %v3684 = vadd.f32 %v2867, %v3683
  %v3685 = vpop.f32.mrb[0].mxu0
  %3686 = vmatprep.mubr.bf16.mxu0 0
  %3687 = vmatmul.mubr.bf16.gmra.mrb[0].mxu0 %v2224
  %v3688 = vpop.f32.mrb[0].mxu0
  %v3689 = vadd.f32 %v2872, %v3688
  %v3690 = vpop.f32.mrb[0].mxu0
  %v3691 = vpop.f32.mrb[0].mxu0
  %v3692 = vadd.f32 %v2875, %v3691
  %v3693 = vpop.f32.mrb[0].mxu0
  %3694 = vmatprep.mubr.bf16.mxu0 0
  %3695 = vmatmul.mubr.bf16.gmra.mrb[0].mxu0 %v2227
  %v3696 = vpop.f32.mrb[0].mxu0
  %v3697 = vadd.f32 %v2880, %v3696
  %v3698 = vpop.f32.mrb[0].mxu0
  %v3699 = vpop.f32.mrb[0].mxu0
  %v3700 = vadd.f32 %v2883, %v3699
  %v3701 = vpop.f32.mrb[0].mxu0
  %3702 = vmatprep.mubr.bf16.mxu0 0
  %3703 = vmatmul.mubr.bf16.gmra.mrb[0].mxu0 %v2230
  %v3704 = vpop.f32.mrb[0].mxu0
  %v3705 = vadd.f32 %v2888, %v3704
  %v3706 = vpop.f32.mrb[0].mxu0
  %v3707 = vpop.f32.mrb[0].mxu0
  %v3708 = vadd.f32 %v2891, %v3707
  %v3709 = vpop.f32.mrb[0].mxu0
  %3710 = vmatprep.mubr.bf16.mxu0 0
  %3711 = vmatmul.mubr.bf16.gmra.mrb[0].mxu0 %v2233
  %v3712 = vpop.f32.mrb[0].mxu0
  %v3713 = vadd.f32 %v2896, %v3712
  %v3714 = vpop.f32.mrb[0].mxu0
  %v3715 = vpop.f32.mrb[0].mxu0
  %v3716 = vadd.f32 %v2899, %v3715
  %v3717 = vpop.f32.mrb[0].mxu0
  %3718 = vmatprep.mubr.bf16.mxu0 0
  %3719 = vmatmul.mubr.bf16.gmra.mrb[0].mxu0 %v2236
  %v3720 = vpop.f32.mrb[0].mxu0
  %v3721 = vadd.f32 %v2904, %v3720
  %v3722 = vpop.f32.mrb[0].mxu0
  %v3723 = vpop.f32.mrb[0].mxu0
  %v3724 = vadd.f32 %v2907, %v3723
  %v3725 = vpop.f32.mrb[0].mxu0
  %3726 = vmatprep.mubr.bf16.mxu0 0
  %3727 = vmatmul.mubr.bf16.gmra.mrb[0].mxu0 %v2239
  %v3728 = vpop.f32.mrb[0].mxu0
  %v3729 = vadd.f32 %v2912, %v3728
  %v3730 = vpop.f32.mrb[0].mxu0
  %v3731 = vpop.f32.mrb[0].mxu0
  %v3732 = vadd.f32 %v2915, %v3731
  %v3733 = vpop.f32.mrb[0].mxu0
  %3734 = vmatprep.mubr.bf16.mxu0 0
  %3735 = vmatmul.mubr.bf16.gmra.mrb[0].mxu0 %v2242
  %v3736 = vpop.f32.mrb[0].mxu0
  %v3737 = vadd.f32 %v2920, %v3736
  %v3738 = vpop.f32.mrb[0].mxu0
  %v3739 = vpop.f32.mrb[0].mxu0
  %v3740 = vadd.f32 %v2923, %v3739
  %v3741 = vpop.f32.mrb[0].mxu0
  %3742 = vmatprep.mubr.bf16.mxu0 0
  %3743 = vmatmul.mubr.bf16.gmra.mrb[0].mxu0 %v2245
  %v3744 = vpop.f32.mrb[0].mxu0
  %v3745 = vadd.f32 %v2928, %v3744
  %v3746 = vpop.f32.mrb[0].mxu0
  %v3747 = vpop.f32.mrb[0].mxu0
  %v3748 = vadd.f32 %v2931, %v3747
  %v3749 = vpop.f32.mrb[0].mxu0
  %3750 = vmatprep.mubr.bf16.mxu0 0
  %3751 = vmatmul.mubr.bf16.gmra.mrb[0].mxu0 %v2248
  %v3752 = vpop.f32.mrb[0].mxu0
  %v3753 = vadd.f32 %v2936, %v3752
  %v3754 = vpop.f32.mrb[0].mxu0
  %v3755 = vpop.f32.mrb[0].mxu0
  %v3756 = vadd.f32 %v2939, %v3755
  %v3757 = vpop.f32.mrb[0].mxu0
  %3758 = vmatprep.mubr.bf16.mxu0 0
  %3759 = vmatmul.mubr.bf16.gmra.mrb[0].mxu0 %v2251
  %v3760 = vpop.f32.mrb[0].mxu0
  %v3761 = vadd.f32 %v2944, %v3760
  %v3762 = vpop.f32.mrb[0].mxu0
  %v3763 = vpop.f32.mrb[0].mxu0
  %v3764 = vadd.f32 %v2947, %v3763
  %v3765 = vpop.f32.mrb[0].mxu0
  %3766 = vmatprep.mubr.bf16.mxu0 0
  %3767 = vmatmul.mubr.bf16.gmra.mrb[0].mxu0 %v2254
  %v3768 = vpop.f32.mrb[0].mxu0
  %v3769 = vadd.f32 %v2952, %v3768
  %v3770 = vpop.f32.mrb[0].mxu0
  %v3771 = vpop.f32.mrb[0].mxu0
  %v3772 = vadd.f32 %v2955, %v3771
  %v3773 = vpop.f32.mrb[0].mxu0
  %3774 = vmatprep.mubr.bf16.mxu0 0
  %3775 = vmatmul.mubr.bf16.gmra.mrb[0].mxu0 %v2257
  %v3776 = vpop.f32.mrb[0].mxu0
  %v3777 = vadd.f32 %v2960, %v3776
  %v3778 = vpop.f32.mrb[0].mxu0
  %v3779 = vpop.f32.mrb[0].mxu0
  %v3780 = vadd.f32 %v2963, %v3779
  %v3781 = vpop.f32.mrb[0].mxu0
  %3782 = vmatprep.mubr.bf16.mxu0 0
  %3783 = vmatmul.mubr.bf16.gmra.mrb[0].mxu0 %v2260
  %v3784 = vpop.f32.mrb[0].mxu0
  %v3785 = vadd.f32 %v2968, %v3784
  %v3786 = vpop.f32.mrb[0].mxu0
  %v3787 = vpop.f32.mrb[0].mxu0
  %v3788 = vadd.f32 %v2971, %v3787
  %v3789 = vpop.f32.mrb[0].mxu0
  %3790 = vmatprep.mubr.bf16.mxu0 0
  %3791 = vmatmul.mubr.bf16.gmra.mrb[0].mxu0 %v2263
  %v3792 = vpop.f32.mrb[0].mxu0
  %v3793 = vadd.f32 %v2976, %v3792
  %v3794 = vpop.f32.mrb[0].mxu0
  %v3795 = vpop.f32.mrb[0].mxu0
  %v3796 = vadd.f32 %v2979, %v3795
  %v3797 = vpop.f32.mrb[0].mxu0
  %3798 = vmatprep.mubr.bf16.mxu0 0
  %3799 = vmatmul.mubr.bf16.gmra.mrb[0].mxu0 %v2266
  %v3800 = vpop.f32.mrb[0].mxu0
  %v3801 = vadd.f32 %v2984, %v3800
  %v3802 = vpop.f32.mrb[0].mxu0
  %v3803 = vpop.f32.mrb[0].mxu0
  %v3804 = vadd.f32 %v2987, %v3803
  %v3805 = vpop.f32.mrb[0].mxu0
  %3806 = vmatprep.mubr.bf16.mxu0 0
  %3807 = vmatmul.mubr.bf16.gmra.mrb[0].mxu0 %v2269
  %v3808 = vpop.f32.mrb[0].mxu0
  %v3809 = vadd.f32 %v2992, %v3808
  %v3810 = vpop.f32.mrb[0].mxu0
  %v3811 = vpop.f32.mrb[0].mxu0
  %v3812 = vadd.f32 %v2995, %v3811
  %v3813 = vpop.f32.mrb[0].mxu0
  %3814 = vmatprep.mubr.bf16.mxu0 0
  %3815 = vmatmul.mubr.bf16.gmra.mrb[0].mxu0 %v2272
  %v3816 = vpop.f32.mrb[0].mxu0
  %v3817 = vadd.f32 %v3000, %v3816
  %v3818 = vpop.f32.mrb[0].mxu0
  %v3819 = vpop.f32.mrb[0].mxu0
  %v3820 = vadd.f32 %v3003, %v3819
  %v3821 = vpop.f32.mrb[0].mxu0
  %3822 = vmatprep.mubr.bf16.mxu0 0
  %3823 = vmatmul.mubr.bf16.gmra.mrb[0].mxu0 %v2275
  %v3824 = vpop.f32.mrb[0].mxu0
  %v3825 = vadd.f32 %v3008, %v3824
  %v3826 = vpop.f32.mrb[0].mxu0
  %v3827 = vpop.f32.mrb[0].mxu0
  %v3828 = vadd.f32 %v3011, %v3827
  %v3829 = vpop.f32.mrb[0].mxu0
  %3830 = vmatprep.mubr.bf16.mxu0 0
  %3831 = vmatmul.mubr.bf16.gmra.mrb[0].mxu0 %v2278
  %v3832 = vpop.f32.mrb[0].mxu0
  %v3833 = vadd.f32 %v3016, %v3832
  %v3834 = vpop.f32.mrb[0].mxu0
  %v3835 = vpop.f32.mrb[0].mxu0
  %v3836 = vadd.f32 %v3019, %v3835
  %v3837 = vpop.f32.mrb[0].mxu0
  %3838 = vmatprep.mubr.bf16.mxu0 0
  %3839 = vmatmul.mubr.bf16.gmra.mrb[0].mxu0 %v2281
  %v3840 = vpop.f32.mrb[0].mxu0
  %v3841 = vadd.f32 %v3024, %v3840
  %v3842 = vpop.f32.mrb[0].mxu0
  %v3843 = vpop.f32.mrb[0].mxu0
  %v3844 = vadd.f32 %v3027, %v3843
  %v3845 = vpop.f32.mrb[0].mxu0
  %3846 = vmatprep.mubr.bf16.mxu0 0
  %3847 = vmatmul.mubr.bf16.gmra.mrb[0].mxu0 %v2284
  %v3848 = vpop.f32.mrb[0].mxu0
  %v3849 = vadd.f32 %v3032, %v3848
  %v3850 = vpop.f32.mrb[0].mxu0
  %v3851 = vpop.f32.mrb[0].mxu0
  %v3852 = vadd.f32 %v3035, %v3851
  %v3853 = vpop.f32.mrb[0].mxu0
  %3854 = vmatprep.mubr.bf16.mxu0 0
  %3855 = vmatmul.mubr.bf16.gmra.mrb[0].mxu0 %v2287
  %v3856 = vpop.f32.mrb[0].mxu0
  %v3857 = vadd.f32 %v3040, %v3856
  %v3858 = vpop.f32.mrb[0].mxu0
  %v3859 = vpop.f32.mrb[0].mxu0
  %v3860 = vadd.f32 %v3043, %v3859
  %v3861 = vpop.f32.mrb[0].mxu0
  %3862 = vmatprep.mubr.bf16.mxu0 0
  %3863 = vmatmul.mubr.bf16.gmra.mrb[0].mxu0 %v2290
  %v3864 = vpop.f32.mrb[0].mxu0
  %v3865 = vadd.f32 %v3048, %v3864
  %v3866 = vpop.f32.mrb[0].mxu0
  %v3867 = vpop.f32.mrb[0].mxu0
  %v3868 = vadd.f32 %v3051, %v3867
  %v3869 = vpop.f32.mrb[0].mxu0
  %3870 = vmatprep.mubr.bf16.mxu0 0
  %3871 = vmatmul.mubr.bf16.gmra.mrb[0].mxu0 %v2293
  %v3872 = vpop.f32.mrb[0].mxu0
  %v3873 = vadd.f32 %v3056, %v3872
  %v3874 = vpop.f32.mrb[0].mxu0
  %v3875 = vpop.f32.mrb[0].mxu0
  %v3876 = vadd.f32 %v3059, %v3875
  %v3877 = vpop.f32.mrb[0].mxu0
  %3878 = vmatprep.mubr.bf16.mxu0 0
  %3879 = vmatmul.mubr.bf16.gmra.mrb[0].mxu0 %v2296
  %v3880 = vpop.f32.mrb[0].mxu0
  %v3881 = vadd.f32 %v3064, %v3880
  %v3882 = vpop.f32.mrb[0].mxu0
  %v3883 = vpop.f32.mrb[0].mxu0
  %v3884 = vadd.f32 %v3067, %v3883
  %v3885 = vpop.f32.mrb[0].mxu0
  %3886 = vmatprep.mubr.bf16.mxu0 0
  %3887 = vmatmul.mubr.bf16.gmra.mrb[0].mxu0 %v2299
  %v3888 = vpop.f32.mrb[0].mxu0
  %v3889 = vadd.f32 %v3072, %v3888
  %v3890 = vpop.f32.mrb[0].mxu0
  %v3891 = vpop.f32.mrb[0].mxu0
  %v3892 = vadd.f32 %v3075, %v3891
  %v3893 = vpop.f32.mrb[0].mxu0
  %3894 = vmatprep.mubr.bf16.mxu0 0
  %3895 = vmatmul.mubr.bf16.gmra.mrb[0].mxu0 %v2302
  %v3896 = vpop.f32.mrb[0].mxu0
  %v3897 = vadd.f32 %v3080, %v3896
  %v3898 = vpop.f32.mrb[0].mxu0
  %v3899 = vpop.f32.mrb[0].mxu0
  %v3900 = vadd.f32 %v3083, %v3899
  %v3901 = vpop.f32.mrb[0].mxu0
  %3902 = vmatprep.mubr.bf16.mxu0 0
  %3903 = vmatmul.mubr.bf16.gmra.mrb[0].mxu0 %v2305
  %v3904 = vpop.f32.mrb[0].mxu0
  %v3905 = vadd.f32 %v3088, %v3904
  %v3906 = vpop.f32.mrb[0].mxu0
  %v3907 = vpop.f32.mrb[0].mxu0
  %v3908 = vadd.f32 %v3091, %v3907
  %v3909 = vpop.f32.mrb[0].mxu0
  %3910 = vmatprep.mubr.bf16.mxu0 0
  %3911 = vmatmul.mubr.bf16.gmra.mrb[0].mxu0 %v2308
  %v3912 = vpop.f32.mrb[0].mxu0
  %v3913 = vadd.f32 %v3096, %v3912
  %v3914 = vpop.f32.mrb[0].mxu0
  %v3915 = vpop.f32.mrb[0].mxu0
  %v3916 = vadd.f32 %v3099, %v3915
  %v3917 = vpop.f32.mrb[0].mxu0
  %3918 = vmatprep.mubr.bf16.mxu0 0
  %3919 = vmatmul.mubr.bf16.gmra.mrb[0].mxu0 %v2311
  %v3920 = vpop.f32.mrb[0].mxu0
  %v3921 = vadd.f32 %v3104, %v3920
  %v3922 = vpop.f32.mrb[0].mxu0
  %v3923 = vpop.f32.mrb[0].mxu0
  %v3924 = vadd.f32 %v3107, %v3923
  %v3925 = vpop.f32.mrb[0].mxu0
  %3926 = vmatprep.mubr.bf16.mxu0 0
  %3927 = vmatmul.mubr.bf16.gmra.mrb[0].mxu0 %v2314
  %v3928 = vpop.f32.mrb[0].mxu0
  %v3929 = vadd.f32 %v3112, %v3928
  %v3930 = vpop.f32.mrb[0].mxu0
  %v3931 = vpop.f32.mrb[0].mxu0
  %v3932 = vadd.f32 %v3115, %v3931
  %v3933 = vpop.f32.mrb[0].mxu0
  %3934 = vmatprep.mubr.bf16.mxu0 0
  %3935 = vmatmul.mubr.bf16.gmra.mrb[0].mxu0 %v2317
  %v3936 = vpop.f32.mrb[0].mxu0
  %v3937 = vadd.f32 %v3120, %v3936
  %v3938 = vpop.f32.mrb[0].mxu0
  %v3939 = vpop.f32.mrb[0].mxu0
  %v3940 = vadd.f32 %v3123, %v3939
  %v3941 = vpop.f32.mrb[0].mxu0
  %3942 = vmatprep.mubr.bf16.mxu0 0
  %3943 = vmatmul.mubr.bf16.gmra.mrb[0].mxu0 %v2320
  %v3944 = vpop.f32.mrb[0].mxu0
  %v3945 = vadd.f32 %v3128, %v3944
  %v3946 = vpop.f32.mrb[0].mxu0
  %v3947 = vpop.f32.mrb[0].mxu0
  %v3948 = vadd.f32 %v3131, %v3947
  %v3949 = vpop.f32.mrb[0].mxu0
  %3950 = vmatprep.mubr.bf16.mxu0 0
  %3951 = vmatmul.mubr.bf16.gmra.mrb[0].mxu0 %v2323
  %v3952 = vpop.f32.mrb[0].mxu0
  %v3953 = vadd.f32 %v3136, %v3952
  %v3954 = vpop.f32.mrb[0].mxu0
  %v3955 = vpop.f32.mrb[0].mxu0
  %v3956 = vadd.f32 %v3139, %v3955
  %v3957 = vpop.f32.mrb[0].mxu0
  %3958 = vdwg.mxu0
  %v3959 = vtanh.pop %v3177
  %v3960 = vtanh.pop %v3180
  %v3961 = vtanh.pop %v3185
  %v3962 = vtanh.pop %v3188
  %v3963 = vtanh.pop %v3193
  %v3964 = vtanh.pop %v3196
  %v3965 = vtanh.pop %v3201
  %v3966 = vtanh.pop %v3204
  %v3967 = vtanh.pop %v3209
  %v3968 = vtanh.pop %v3212
  %v3969 = vtanh.pop %v3217
  %v3970 = vtanh.pop %v3220
  %v3971 = vtanh.pop %v3225
  %v3972 = vtanh.pop %v3228
  %v3973 = vtanh.pop %v3233
  %v3974 = vtanh.pop %v3236
  %v3975 = vtanh.pop %v3241
  %v3976 = vtanh.pop %v3244
  %v3977 = vtanh.pop %v3249
  %v3978 = vtanh.pop %v3252
  %v3979 = vtanh.pop %v3257
  %v3980 = vtanh.pop %v3260
  %v3981 = vtanh.pop %v3265
  %v3982 = vtanh.pop %v3268
  %v3983 = vtanh.pop %v3273
  %v3984 = vtanh.pop %v3276
  %v3985 = vtanh.pop %v3281
  %v3986 = vtanh.pop %v3284
  %v3987 = vtanh.pop %v3289
  %v3988 = vtanh.pop %v3292
  %v3989 = vtanh.pop %v3297
  %v3990 = vtanh.pop %v3300
  %v3991 = vtanh.pop %v3305
  %v3992 = vtanh.pop %v3308
  %v3993 = vtanh.pop %v3313
  %v3994 = vtanh.pop %v3316
  %v3995 = vtanh.pop %v3321
  %v3996 = vtanh.pop %v3324
  %v3997 = vtanh.pop %v3329
  %v3998 = vtanh.pop %v3332
  %v3999 = vtanh.pop %v3337
  %v4000 = vtanh.pop %v3340
  %v4001 = vtanh.pop %v3345
  %v4002 = vtanh.pop %v3348
  %v4003 = vtanh.pop %v3353
  %v4004 = vtanh.pop %v3356
  %v4005 = vtanh.pop %v3361
  %v4006 = vtanh.pop %v3364
  %v4007 = vtanh.pop %v3369
  %v4008 = vtanh.pop %v3372
  %v4009 = vtanh.pop %v3377
  %v4010 = vtanh.pop %v3380
  %v4011 = vtanh.pop %v3385
  %v4012 = vtanh.pop %v3388
  %v4013 = vtanh.pop %v3393
  %v4014 = vtanh.pop %v3396
  %v4015 = vtanh.pop %v3401
  %v4016 = vtanh.pop %v3404
  %v4017 = vtanh.pop %v3409
  %v4018 = vtanh.pop %v3412
  %v4019 = vtanh.pop %v3417
  %v4020 = vtanh.pop %v3420
  %v4021 = vtanh.pop %v3425
  %v4022 = vtanh.pop %v3428
  %v4023 = vtanh.pop %v3433
  %v4024 = vtanh.pop %v3436
  %v4025 = vtanh.pop %v3441
  %v4026 = vtanh.pop %v3444
  %v4027 = vtanh.pop %v3449
  %v4028 = vtanh.pop %v3452
  %v4029 = vtanh.pop %v3457
  %v4030 = vtanh.pop %v3460
  %v4031 = vtanh.pop %v3465
  %v4032 = vtanh.pop %v3468
  %v4033 = vtanh.pop %v3473
  %v4034 = vtanh.pop %v3476
  %v4035 = vtanh.pop %v3481
  %v4036 = vtanh.pop %v3484
  %v4037 = vtanh.pop %v3489
  %v4038 = vtanh.pop %v3492
  %v4039 = vtanh.pop %v3497
  %v4040 = vtanh.pop %v3500
  %v4041 = vtanh.pop %v3505
  %v4042 = vtanh.pop %v3508
  %v4043 = vtanh.pop %v3513
  %v4044 = vtanh.pop %v3516
  %v4045 = vtanh.pop %v3521
  %v4046 = vtanh.pop %v3524
  %v4047 = vtanh.pop %v3529
  %v4048 = vtanh.pop %v3532
  %v4049 = vtanh.pop %v3537
  %v4050 = vtanh.pop %v3540
  %v4051 = vtanh.pop %v3545
  %v4052 = vtanh.pop %v3548
  %v4053 = vtanh.pop %v3553
  %v4054 = vtanh.pop %v3556
  %v4055 = vtanh.pop %v3561
  %v4056 = vtanh.pop %v3564
  %v4057 = vtanh.pop %v3569
  %v4058 = vtanh.pop %v3572
  %v4059 = vtanh.pop %v3577
  %v4060 = vtanh.pop %v3580
  %v4061 = vtanh.pop %v3585
  %v4062 = vtanh.pop %v3588
  %v4063 = vtanh.pop %v3593
  %v4064 = vtanh.pop %v3596
  %v4065 = vtanh.pop %v3601
  %v4066 = vtanh.pop %v3604
  %v4067 = vtanh.pop %v3609
  %v4068 = vtanh.pop %v3612
  %v4069 = vtanh.pop %v3617
  %v4070 = vtanh.pop %v3620
  %v4071 = vtanh.pop %v3625
  %v4072 = vtanh.pop %v3628
  %v4073 = vtanh.pop %v3633
  %v4074 = vtanh.pop %v3636
  %v4075 = vtanh.pop %v3641
  %v4076 = vtanh.pop %v3644
  %v4077 = vtanh.pop %v3649
  %v4078 = vtanh.pop %v3652
  %v4079 = vtanh.pop %v3657
  %v4080 = vtanh.pop %v3660
  %v4081 = vtanh.pop %v3665
  %v4082 = vtanh.pop %v3668
  %v4083 = vtanh.pop %v3673
  %v4084 = vtanh.pop %v3676
  %v4085 = vtanh.pop %v3681
  %v4086 = vtanh.pop %v3684
  %v4087 = vtanh.pop %v3689
  %v4088 = vtanh.pop %v3692
  %v4089 = vtanh.pop %v3697
  %v4090 = vtanh.pop %v3700
  %v4091 = vtanh.pop %v3705
  %v4092 = vtanh.pop %v3708
  %v4093 = vtanh.pop %v3713
  %v4094 = vtanh.pop %v3716
  %v4095 = vtanh.pop %v3721
  %v4096 = vtanh.pop %v3724
  %v4097 = vtanh.pop %v3729
  %v4098 = vtanh.pop %v3732
  %v4099 = vtanh.pop %v3737
  %v4100 = vtanh.pop %v3740
  %v4101 = vtanh.pop %v3745
  %v4102 = vtanh.pop %v3748
  %v4103 = vtanh.pop %v3753
  %v4104 = vtanh.pop %v3756
  %v4105 = vtanh.pop %v3761
  %v4106 = vtanh.pop %v3764
  %v4107 = vtanh.pop %v3769
  %v4108 = vtanh.pop %v3772
  %v4109 = vtanh.pop %v3777
  %v4110 = vtanh.pop %v3780
  %v4111 = vtanh.pop %v3785
  %v4112 = vtanh.pop %v3788
  %v4113 = vtanh.pop %v3793
  %v4114 = vtanh.pop %v3796
  %v4115 = vtanh.pop %v3801
  %v4116 = vtanh.pop %v3804
  %v4117 = vtanh.pop %v3809
  %v4118 = vtanh.pop %v3812
  %v4119 = vtanh.pop %v3817
  %v4120 = vtanh.pop %v3820
  %v4121 = vtanh.pop %v3825
  %v4122 = vtanh.pop %v3828
  %v4123 = vtanh.pop %v3833
  %v4124 = vtanh.pop %v3836
  %v4125 = vtanh.pop %v3841
  %v4126 = vtanh.pop %v3844
  %v4127 = vtanh.pop %v3849
  %v4128 = vtanh.pop %v3852
  %v4129 = vtanh.pop %v3857
  %v4130 = vtanh.pop %v3860
  %v4131 = vtanh.pop %v3865
  %v4132 = vtanh.pop %v3868
  %v4133 = vtanh.pop %v3873
  %v4134 = vtanh.pop %v3876
  %v4135 = vtanh.pop %v3881
  %v4136 = vtanh.pop %v3884
  %v4137 = vtanh.pop %v3889
  %v4138 = vtanh.pop %v3892
  %v4139 = vtanh.pop %v3897
  %v4140 = vtanh.pop %v3900
  %v4141 = vtanh.pop %v3905
  %v4142 = vtanh.pop %v3908
  %v4143 = vtanh.pop %v3913
  %v4144 = vtanh.pop %v3916
  %v4145 = vtanh.pop %v3921
  %v4146 = vtanh.pop %v3924
  %v4147 = vtanh.pop %v3929
  %v4148 = vtanh.pop %v3932
  %v4149 = vtanh.pop %v3937
  %v4150 = vtanh.pop %v3940
  %v4151 = vtanh.pop %v3945
  %v4152 = vtanh.pop %v3948
  %v4153 = vtanh.pop %v3953
  %v4154 = vtanh.pop %v3956
  %vm4155 = vcmask 7168
  %4156 = vst.msk [vmem:[%s3] sm:$0xff] %vm4155, %v3959
  %4157 = vst.msk [vmem:[%s3 + $0x8] sm:$0xff] %vm4155, %v3960
  %4158 = vst.msk [vmem:[%s3 + $0x10] sm:$0xff] %vm4155, %v3961
  %4159 = vst.msk [vmem:[%s3 + $0x18] sm:$0xff] %vm4155, %v3962
  %4160 = vst.msk [vmem:[%s3 + $0x20] sm:$0xff] %vm4155, %v3963
  %4161 = vst.msk [vmem:[%s3 + $0x28] sm:$0xff] %vm4155, %v3964
  %4162 = vst.msk [vmem:[%s3 + $0x30] sm:$0xff] %vm4155, %v3965
  %4163 = vst.msk [vmem:[%s3 + $0x38] sm:$0xff] %vm4155, %v3966
  %4164 = vst.msk [vmem:[%s3 + $0x40] sm:$0xff] %vm4155, %v3967
  %4165 = vst.msk [vmem:[%s3 + $0x48] sm:$0xff] %vm4155, %v3968
  %4166 = vst.msk [vmem:[%s3 + $0x50] sm:$0xff] %vm4155, %v3969
  %4167 = vst.msk [vmem:[%s3 + $0x58] sm:$0xff] %vm4155, %v3970
  %4168 = vst.msk [vmem:[%s3 + $0x60] sm:$0xff] %vm4155, %v3971
  %4169 = vst.msk [vmem:[%s3 + $0x68] sm:$0xff] %vm4155, %v3972
  %4170 = vst.msk [vmem:[%s3 + $0x70] sm:$0xff] %vm4155, %v3973
  %4171 = vst.msk [vmem:[%s3 + $0x78] sm:$0xff] %vm4155, %v3974
  %4172 = vst.msk [vmem:[%s3 + $0x80] sm:$0xff] %vm4155, %v3975
  %4173 = vst.msk [vmem:[%s3 + $0x88] sm:$0xff] %vm4155, %v3976
  %4174 = vst.msk [vmem:[%s3 + $0x90] sm:$0xff] %vm4155, %v3977
  %4175 = vst.msk [vmem:[%s3 + $0x98] sm:$0xff] %vm4155, %v3978
  %4176 = vst.msk [vmem:[%s3 + $0xa0] sm:$0xff] %vm4155, %v3979
  %4177 = vst.msk [vmem:[%s3 + $0xa8] sm:$0xff] %vm4155, %v3980
  %4178 = vst.msk [vmem:[%s3 + $0xb0] sm:$0xff] %vm4155, %v3981
  %4179 = vst.msk [vmem:[%s3 + $0xb8] sm:$0xff] %vm4155, %v3982
  %4180 = vst.msk [vmem:[%s3 + $0xc0] sm:$0xff] %vm4155, %v3983
  %4181 = vst.msk [vmem:[%s3 + $0xc8] sm:$0xff] %vm4155, %v3984
  %4182 = vst.msk [vmem:[%s3 + $0xd0] sm:$0xff] %vm4155, %v3985
  %4183 = vst.msk [vmem:[%s3 + $0xd8] sm:$0xff] %vm4155, %v3986
  %4184 = vst.msk [vmem:[%s3 + $0xe0] sm:$0xff] %vm4155, %v3987
  %4185 = vst.msk [vmem:[%s3 + $0xe8] sm:$0xff] %vm4155, %v3988
  %4186 = vst.msk [vmem:[%s3 + $0xf0] sm:$0xff] %vm4155, %v3989
  %4187 = vst.msk [vmem:[%s3 + $0xf8] sm:$0xff] %vm4155, %v3990
  %4188 = vst.msk [vmem:[%s3 + $0x100] sm:$0xff] %vm4155, %v3991
  %4189 = vst.msk [vmem:[%s3 + $0x108] sm:$0xff] %vm4155, %v3992
  %4190 = vst.msk [vmem:[%s3 + $0x110] sm:$0xff] %vm4155, %v3993
  %4191 = vst.msk [vmem:[%s3 + $0x118] sm:$0xff] %vm4155, %v3994
  %4192 = vst.msk [vmem:[%s3 + $0x120] sm:$0xff] %vm4155, %v3995
  %4193 = vst.msk [vmem:[%s3 + $0x128] sm:$0xff] %vm4155, %v3996
  %4194 = vst.msk [vmem:[%s3 + $0x130] sm:$0xff] %vm4155, %v3997
  %4195 = vst.msk [vmem:[%s3 + $0x138] sm:$0xff] %vm4155, %v3998
  %4196 = vst.msk [vmem:[%s3 + $0x140] sm:$0xff] %vm4155, %v3999
  %4197 = vst.msk [vmem:[%s3 + $0x148] sm:$0xff] %vm4155, %v4000
  %4198 = vst.msk [vmem:[%s3 + $0x150] sm:$0xff] %vm4155, %v4001
  %4199 = vst.msk [vmem:[%s3 + $0x158] sm:$0xff] %vm4155, %v4002
  %4200 = vst.msk [vmem:[%s3 + $0x160] sm:$0xff] %vm4155, %v4003
  %4201 = vst.msk [vmem:[%s3 + $0x168] sm:$0xff] %vm4155, %v4004
  %4202 = vst.msk [vmem:[%s3 + $0x170] sm:$0xff] %vm4155, %v4005
  %4203 = vst.msk [vmem:[%s3 + $0x178] sm:$0xff] %vm4155, %v4006
  %4204 = vst.msk [vmem:[%s3 + $0x180] sm:$0xff] %vm4155, %v4007
  %4205 = vst.msk [vmem:[%s3 + $0x188] sm:$0xff] %vm4155, %v4008
  %4206 = vst.msk [vmem:[%s3 + $0x190] sm:$0xff] %vm4155, %v4009
  %4207 = vst.msk [vmem:[%s3 + $0x198] sm:$0xff] %vm4155, %v4010
  %4208 = vst.msk [vmem:[%s3 + $0x1a0] sm:$0xff] %vm4155, %v4011
  %4209 = vst.msk [vmem:[%s3 + $0x1a8] sm:$0xff] %vm4155, %v4012
  %4210 = vst.msk [vmem:[%s3 + $0x1b0] sm:$0xff] %vm4155, %v4013
  %4211 = vst.msk [vmem:[%s3 + $0x1b8] sm:$0xff] %vm4155, %v4014
  %4212 = vst.msk [vmem:[%s3 + $0x1c0] sm:$0xff] %vm4155, %v4015
  %4213 = vst.msk [vmem:[%s3 + $0x1c8] sm:$0xff] %vm4155, %v4016
  %4214 = vst.msk [vmem:[%s3 + $0x1d0] sm:$0xff] %vm4155, %v4017
  %4215 = vst.msk [vmem:[%s3 + $0x1d8] sm:$0xff] %vm4155, %v4018
  %4216 = vst.msk [vmem:[%s3 + $0x1e0] sm:$0xff] %vm4155, %v4019
  %4217 = vst.msk [vmem:[%s3 + $0x1e8] sm:$0xff] %vm4155, %v4020
  %4218 = vst.msk [vmem:[%s3 + $0x1f0] sm:$0xff] %vm4155, %v4021
  %4219 = vst.msk [vmem:[%s3 + $0x1f8] sm:$0xff] %vm4155, %v4022
  %4220 = vst.msk [vmem:[%s3 + $0x200] sm:$0xff] %vm4155, %v4023
  %4221 = vst.msk [vmem:[%s3 + $0x208] sm:$0xff] %vm4155, %v4024
  %4222 = vst.msk [vmem:[%s3 + $0x210] sm:$0xff] %vm4155, %v4025
  %4223 = vst.msk [vmem:[%s3 + $0x218] sm:$0xff] %vm4155, %v4026
  %4224 = vst.msk [vmem:[%s3 + $0x220] sm:$0xff] %vm4155, %v4027
  %4225 = vst.msk [vmem:[%s3 + $0x228] sm:$0xff] %vm4155, %v4028
  %4226 = vst.msk [vmem:[%s3 + $0x230] sm:$0xff] %vm4155, %v4029
  %4227 = vst.msk [vmem:[%s3 + $0x238] sm:$0xff] %vm4155, %v4030
  %4228 = vst.msk [vmem:[%s3 + $0x240] sm:$0xff] %vm4155, %v4031
  %4229 = vst.msk [vmem:[%s3 + $0x248] sm:$0xff] %vm4155, %v4032
  %4230 = vst.msk [vmem:[%s3 + $0x250] sm:$0xff] %vm4155, %v4033
  %4231 = vst.msk [vmem:[%s3 + $0x258] sm:$0xff] %vm4155, %v4034
  %4232 = vst.msk [vmem:[%s3 + $0x260] sm:$0xff] %vm4155, %v4035
  %4233 = vst.msk [vmem:[%s3 + $0x268] sm:$0xff] %vm4155, %v4036
  %4234 = vst.msk [vmem:[%s3 + $0x270] sm:$0xff] %vm4155, %v4037
  %4235 = vst.msk [vmem:[%s3 + $0x278] sm:$0xff] %vm4155, %v4038
  %4236 = vst.msk [vmem:[%s3 + $0x280] sm:$0xff] %vm4155, %v4039
  %4237 = vst.msk [vmem:[%s3 + $0x288] sm:$0xff] %vm4155, %v4040
  %4238 = vst.msk [vmem:[%s3 + $0x290] sm:$0xff] %vm4155, %v4041
  %4239 = vst.msk [vmem:[%s3 + $0x298] sm:$0xff] %vm4155, %v4042
  %4240 = vst.msk [vmem:[%s3 + $0x2a0] sm:$0xff] %vm4155, %v4043
  %4241 = vst.msk [vmem:[%s3 + $0x2a8] sm:$0xff] %vm4155, %v4044
  %4242 = vst.msk [vmem:[%s3 + $0x2b0] sm:$0xff] %vm4155, %v4045
  %4243 = vst.msk [vmem:[%s3 + $0x2b8] sm:$0xff] %vm4155, %v4046
  %4244 = vst.msk [vmem:[%s3 + $0x2c0] sm:$0xff] %vm4155, %v4047
  %4245 = vst.msk [vmem:[%s3 + $0x2c8] sm:$0xff] %vm4155, %v4048
  %4246 = vst.msk [vmem:[%s3 + $0x2d0] sm:$0xff] %vm4155, %v4049
  %4247 = vst.msk [vmem:[%s3 + $0x2d8] sm:$0xff] %vm4155, %v4050
  %4248 = vst.msk [vmem:[%s3 + $0x2e0] sm:$0xff] %vm4155, %v4051
  %4249 = vst.msk [vmem:[%s3 + $0x2e8] sm:$0xff] %vm4155, %v4052
  %4250 = vst.msk [vmem:[%s3 + $0x2f0] sm:$0xff] %vm4155, %v4053
  %4251 = vst.msk [vmem:[%s3 + $0x2f8] sm:$0xff] %vm4155, %v4054
  %4252 = vst.msk [vmem:[%s3 + $0x300] sm:$0xff] %vm4155, %v4055
  %4253 = vst.msk [vmem:[%s3 + $0x308] sm:$0xff] %vm4155, %v4056
  %4254 = vst.msk [vmem:[%s3 + $0x310] sm:$0xff] %vm4155, %v4057
  %4255 = vst.msk [vmem:[%s3 + $0x318] sm:$0xff] %vm4155, %v4058
  %4256 = vst.msk [vmem:[%s3 + $0x320] sm:$0xff] %vm4155, %v4059
  %4257 = vst.msk [vmem:[%s3 + $0x328] sm:$0xff] %vm4155, %v4060
  %4258 = vst.msk [vmem:[%s3 + $0x330] sm:$0xff] %vm4155, %v4061
  %4259 = vst.msk [vmem:[%s3 + $0x338] sm:$0xff] %vm4155, %v4062
  %4260 = vst.msk [vmem:[%s3 + $0x340] sm:$0xff] %vm4155, %v4063
  %4261 = vst.msk [vmem:[%s3 + $0x348] sm:$0xff] %vm4155, %v4064
  %4262 = vst.msk [vmem:[%s3 + $0x350] sm:$0xff] %vm4155, %v4065
  %4263 = vst.msk [vmem:[%s3 + $0x358] sm:$0xff] %vm4155, %v4066
  %4264 = vst.msk [vmem:[%s3 + $0x360] sm:$0xff] %vm4155, %v4067
  %4265 = vst.msk [vmem:[%s3 + $0x368] sm:$0xff] %vm4155, %v4068
  %4266 = vst.msk [vmem:[%s3 + $0x370] sm:$0xff] %vm4155, %v4069
  %4267 = vst.msk [vmem:[%s3 + $0x378] sm:$0xff] %vm4155, %v4070
  %4268 = vst.msk [vmem:[%s3 + $0x380] sm:$0xff] %vm4155, %v4071
  %4269 = vst.msk [vmem:[%s3 + $0x388] sm:$0xff] %vm4155, %v4072
  %4270 = vst.msk [vmem:[%s3 + $0x390] sm:$0xff] %vm4155, %v4073
  %4271 = vst.msk [vmem:[%s3 + $0x398] sm:$0xff] %vm4155, %v4074
  %4272 = vst.msk [vmem:[%s3 + $0x3a0] sm:$0xff] %vm4155, %v4075
  %4273 = vst.msk [vmem:[%s3 + $0x3a8] sm:$0xff] %vm4155, %v4076
  %4274 = vst.msk [vmem:[%s3 + $0x3b0] sm:$0xff] %vm4155, %v4077
  %4275 = vst.msk [vmem:[%s3 + $0x3b8] sm:$0xff] %vm4155, %v4078
  %4276 = vst.msk [vmem:[%s3 + $0x3c0] sm:$0xff] %vm4155, %v4079
  %4277 = vst.msk [vmem:[%s3 + $0x3c8] sm:$0xff] %vm4155, %v4080
  %4278 = vst.msk [vmem:[%s3 + $0x3d0] sm:$0xff] %vm4155, %v4081
  %4279 = vst.msk [vmem:[%s3 + $0x3d8] sm:$0xff] %vm4155, %v4082
  %4280 = vst.msk [vmem:[%s3 + $0x3e0] sm:$0xff] %vm4155, %v4083
  %4281 = vst.msk [vmem:[%s3 + $0x3e8] sm:$0xff] %vm4155, %v4084
  %4282 = vst.msk [vmem:[%s3 + $0x3f0] sm:$0xff] %vm4155, %v4085
  %4283 = vst.msk [vmem:[%s3 + $0x3f8] sm:$0xff] %vm4155, %v4086
  %4284 = vst.msk [vmem:[%s3 + $0x400] sm:$0xff] %vm4155, %v4087
  %4285 = vst.msk [vmem:[%s3 + $0x408] sm:$0xff] %vm4155, %v4088
  %4286 = vst.msk [vmem:[%s3 + $0x410] sm:$0xff] %vm4155, %v4089
  %4287 = vst.msk [vmem:[%s3 + $0x418] sm:$0xff] %vm4155, %v4090
  %4288 = vst.msk [vmem:[%s3 + $0x420] sm:$0xff] %vm4155, %v4091
  %4289 = vst.msk [vmem:[%s3 + $0x428] sm:$0xff] %vm4155, %v4092
  %4290 = vst.msk [vmem:[%s3 + $0x430] sm:$0xff] %vm4155, %v4093
  %4291 = vst.msk [vmem:[%s3 + $0x438] sm:$0xff] %vm4155, %v4094
  %4292 = vst.msk [vmem:[%s3 + $0x440] sm:$0xff] %vm4155, %v4095
  %4293 = vst.msk [vmem:[%s3 + $0x448] sm:$0xff] %vm4155, %v4096
  %4294 = vst.msk [vmem:[%s3 + $0x450] sm:$0xff] %vm4155, %v4097
  %4295 = vst.msk [vmem:[%s3 + $0x458] sm:$0xff] %vm4155, %v4098
  %4296 = vst.msk [vmem:[%s3 + $0x460] sm:$0xff] %vm4155, %v4099
  %4297 = vst.msk [vmem:[%s3 + $0x468] sm:$0xff] %vm4155, %v4100
  %4298 = vst.msk [vmem:[%s3 + $0x470] sm:$0xff] %vm4155, %v4101
  %4299 = vst.msk [vmem:[%s3 + $0x478] sm:$0xff] %vm4155, %v4102
  %4300 = vst.msk [vmem:[%s3 + $0x480] sm:$0xff] %vm4155, %v4103
  %4301 = vst.msk [vmem:[%s3 + $0x488] sm:$0xff] %vm4155, %v4104
  %4302 = vst.msk [vmem:[%s3 + $0x490] sm:$0xff] %vm4155, %v4105
  %4303 = vst.msk [vmem:[%s3 + $0x498] sm:$0xff] %vm4155, %v4106
  %4304 = vst.msk [vmem:[%s3 + $0x4a0] sm:$0xff] %vm4155, %v4107
  %4305 = vst.msk [vmem:[%s3 + $0x4a8] sm:$0xff] %vm4155, %v4108
  %4306 = vst.msk [vmem:[%s3 + $0x4b0] sm:$0xff] %vm4155, %v4109
  %4307 = vst.msk [vmem:[%s3 + $0x4b8] sm:$0xff] %vm4155, %v4110
  %4308 = vst.msk [vmem:[%s3 + $0x4c0] sm:$0xff] %vm4155, %v4111
  %4309 = vst.msk [vmem:[%s3 + $0x4c8] sm:$0xff] %vm4155, %v4112
  %4310 = vst.msk [vmem:[%s3 + $0x4d0] sm:$0xff] %vm4155, %v4113
  %4311 = vst.msk [vmem:[%s3 + $0x4d8] sm:$0xff] %vm4155, %v4114
  %4312 = vst.msk [vmem:[%s3 + $0x4e0] sm:$0xff] %vm4155, %v4115
  %4313 = vst.msk [vmem:[%s3 + $0x4e8] sm:$0xff] %vm4155, %v4116
  %4314 = vst.msk [vmem:[%s3 + $0x4f0] sm:$0xff] %vm4155, %v4117
  %4315 = vst.msk [vmem:[%s3 + $0x4f8] sm:$0xff] %vm4155, %v4118
  %4316 = vst.msk [vmem:[%s3 + $0x500] sm:$0xff] %vm4155, %v4119
  %4317 = vst.msk [vmem:[%s3 + $0x508] sm:$0xff] %vm4155, %v4120
  %4318 = vst.msk [vmem:[%s3 + $0x510] sm:$0xff] %vm4155, %v4121
  %4319 = vst.msk [vmem:[%s3 + $0x518] sm:$0xff] %vm4155, %v4122
  %4320 = vst.msk [vmem:[%s3 + $0x520] sm:$0xff] %vm4155, %v4123
  %4321 = vst.msk [vmem:[%s3 + $0x528] sm:$0xff] %vm4155, %v4124
  %4322 = vst.msk [vmem:[%s3 + $0x530] sm:$0xff] %vm4155, %v4125
  %4323 = vst.msk [vmem:[%s3 + $0x538] sm:$0xff] %vm4155, %v4126
  %4324 = vst.msk [vmem:[%s3 + $0x540] sm:$0xff] %vm4155, %v4127
  %4325 = vst.msk [vmem:[%s3 + $0x548] sm:$0xff] %vm4155, %v4128
  %4326 = vst.msk [vmem:[%s3 + $0x550] sm:$0xff] %vm4155, %v4129
  %4327 = vst.msk [vmem:[%s3 + $0x558] sm:$0xff] %vm4155, %v4130
  %4328 = vst.msk [vmem:[%s3 + $0x560] sm:$0xff] %vm4155, %v4131
  %4329 = vst.msk [vmem:[%s3 + $0x568] sm:$0xff] %vm4155, %v4132
  %4330 = vst.msk [vmem:[%s3 + $0x570] sm:$0xff] %vm4155, %v4133
  %4331 = vst.msk [vmem:[%s3 + $0x578] sm:$0xff] %vm4155, %v4134
  %4332 = vst.msk [vmem:[%s3 + $0x580] sm:$0xff] %vm4155, %v4135
  %4333 = vst.msk [vmem:[%s3 + $0x588] sm:$0xff] %vm4155, %v4136
  %4334 = vst.msk [vmem:[%s3 + $0x590] sm:$0xff] %vm4155, %v4137
  %4335 = vst.msk [vmem:[%s3 + $0x598] sm:$0xff] %vm4155, %v4138
  %4336 = vst.msk [vmem:[%s3 + $0x5a0] sm:$0xff] %vm4155, %v4139
  %4337 = vst.msk [vmem:[%s3 + $0x5a8] sm:$0xff] %vm4155, %v4140
  %4338 = vst.msk [vmem:[%s3 + $0x5b0] sm:$0xff] %vm4155, %v4141
  %4339 = vst.msk [vmem:[%s3 + $0x5b8] sm:$0xff] %vm4155, %v4142
  %4340 = vst.msk [vmem:[%s3 + $0x5c0] sm:$0xff] %vm4155, %v4143
  %4341 = vst.msk [vmem:[%s3 + $0x5c8] sm:$0xff] %vm4155, %v4144
  %4342 = vst.msk [vmem:[%s3 + $0x5d0] sm:$0xff] %vm4155, %v4145
  %4343 = vst.msk [vmem:[%s3 + $0x5d8] sm:$0xff] %vm4155, %v4146
  %4344 = vst.msk [vmem:[%s3 + $0x5e0] sm:$0xff] %vm4155, %v4147
  %4345 = vst.msk [vmem:[%s3 + $0x5e8] sm:$0xff] %vm4155, %v4148
  %4346 = vst.msk [vmem:[%s3 + $0x5f0] sm:$0xff] %vm4155, %v4149
  %4347 = vst.msk [vmem:[%s3 + $0x5f8] sm:$0xff] %vm4155, %v4150
  %4348 = vst.msk [vmem:[%s3 + $0x600] sm:$0xff] %vm4155, %v4151
  %4349 = vst.msk [vmem:[%s3 + $0x608] sm:$0xff] %vm4155, %v4152
  %4350 = vst.msk [vmem:[%s3 + $0x610] sm:$0xff] %vm4155, %v4153
  %4351 = vst.msk [vmem:[%s3 + $0x618] sm:$0xff] %vm4155, %v4154
  // Predicated region
  $region14: #{vae_forward.11} parent=0 // pred_check
    _
  $region15: #{vae_forward.11} parent=0 // pred_check_branch
    %4353 = sbr.rel (0) target = $region17
  $region16: #{vae_forward.11} parent=0 // pred_region
    _
  $region17: #{vae_forward.11} parent=0 // pred_fallthru
    _
  // Predicated region
  $region18: #{vae_forward.11} parent=0 // pred_check
    _
  $region19: #{vae_forward.11} parent=0 // pred_check_branch
    %4355 = sbr.rel (0) target = $region21
  $region20: #{vae_forward.11} parent=0 // pred_region
    _
  $region21: #{vae_forward.11} parent=0 // pred_fallthru
    _

</llo_original>
